<compile_context>
chip_gen: v5e
topology: v5e:2x2
jax: 0.10.0
libtpu: 0.0.40
codegen_flags: <defaults>
</compile_context>

<pallas_src>
import jax
import jax.numpy as jnp
from jax import lax
from jax.experimental import pallas as pl
from jax.experimental.pallas import tpu as pltpu


def _round_up(n, m):
    return ((n + m - 1) // m) * m


# ----------------------------- fused LSTM+FC kernel ---------------------------
def _make_fused_kernel(num_layers, t_chunk, hp, seq_len, unroll, needs_mask):
    def kernel(*refs):
        x_ref = refs[0]                                   # (Tc, Bc, Dp)      bf16
        wih = refs[1:1 + num_layers]                      # (Din_p, 4Hp)      bf16
        whh = refs[1 + num_layers:1 + 2 * num_layers]     # (Hp, 4Hp)         bf16
        b_ref = refs[1 + 2 * num_layers]                  # (L, 1, 4Hp)       f32
        fcw_ref = refs[2 + 2 * num_layers]                # (Hp, OutP)        f32
        fcb_ref = refs[3 + 2 * num_layers]                # (1, OutP)         f32
        out_ref = refs[4 + 2 * num_layers]                # (Bc, OutP)        f32
        h_scr = refs[5 + 2 * num_layers]                  # (L, Bc, Hp)       f32
        c_scr = refs[6 + 2 * num_layers]                  # (L, Bc, Hp)       f32
        xh_scr = refs[7 + 2 * num_layers]                 # (Tc, Bc, Hp)      bf16
        g_scr = refs[8 + 2 * num_layers]                  # (Tc, Bc, 4Hp)     f32

        chunk = pl.program_id(1)
        nb = h_scr.shape[1]
        hp4 = 4 * hp

        @pl.when(chunk == 0)
        def _init():
            h_scr[...] = jnp.zeros_like(h_scr)
            c_scr[...] = jnp.zeros_like(c_scr)

        t0 = chunk * t_chunk

        for l in range(num_layers):
            # ---- batched (non-recurrent) projection for the whole chunk: one MXU
            # matmul with M = t_chunk * Bc rows, bias added once.
            if l == 0:
                x_flat = x_ref[...].reshape(t_chunk * nb, x_ref.shape[-1])
            else:
                x_flat = xh_scr[...].reshape(t_chunk * nb, hp)
            g_scr[...] = (
                jnp.dot(x_flat, wih[l][...], preferred_element_type=jnp.float32)
                + b_ref[l]
            ).reshape(t_chunk, nb, hp4)

            w_hh = whh[l][...]                 # hoisted out of the time loop
            write_handoff = l < num_layers - 1

            def step(j, carry):
                h, c = carry
                # only the K=Hp recurrent matmul sits on the serial chain
                g = g_scr[j] + jnp.dot(h.astype(jnp.bfloat16), w_hh,
                                       preferred_element_type=jnp.float32)
                # sigmoid(x) = 0.5*tanh(0.5*x)+0.5  (1 EUP op per gate)
                i_g = 0.5 * jnp.tanh(0.5 * g[:, 0 * hp:1 * hp]) + 0.5
                f_g = 0.5 * jnp.tanh(0.5 * g[:, 1 * hp:2 * hp]) + 0.5
                g_g = jnp.tanh(g[:, 2 * hp:3 * hp])
                o_g = 0.5 * jnp.tanh(0.5 * g[:, 3 * hp:4 * hp]) + 0.5
                c_new = f_g * c + i_g * g_g
                h_new = o_g * jnp.tanh(c_new)
                if needs_mask:
                    valid = (t0 + j) < seq_len          # tail-step guard
                    c_new = jnp.where(valid, c_new, c)
                    h_new = jnp.where(valid, h_new, h)
                if write_handoff:
                    xh_scr[j] = h_new.astype(jnp.bfloat16)
                return (h_new, c_new)

            h_f, c_f = lax.fori_loop(0, t_chunk, step, (h_scr[l], c_scr[l]),
                                     unroll=unroll)
            h_scr[l] = h_f
            c_scr[l] = c_f

        # Fused FC on the last timestep of the top layer; only (Bc, OutP) hits HBM.
        @pl.when(chunk == pl.num_programs(1) - 1)
        def _finalize():
            h_top = h_scr[num_layers - 1]
            out_ref[...] = (
                jnp.dot(h_top, fcw_ref[...], preferred_element_type=jnp.float32)
                + fcb_ref[...]
            ).astype(out_ref.dtype)

    return kernel


# ----------------------------- host-side weight packing -----------------------
def pack_params(params, input_size, hidden_size):
    """Pre-transpose / pad the torch-layout params for the kernel (W_ih, W_hh kept
    separate; gate columns [i|f|g|o] each padded to a 128-lane tile)."""
    H = hidden_size
    Hp = _round_up(H, 128)
    Dp = _round_up(input_size, 128)

    wih_list, whh_list, b_list = [], [], []
    for li, (w_ih, w_hh, b_ih, b_hh) in enumerate(params["lstm"]):
        d_in = w_ih.shape[1]
        din_p = Dp if li == 0 else Hp
        wih = jnp.zeros((din_p, 4 * Hp), jnp.float32)
        whh = jnp.zeros((Hp, 4 * Hp), jnp.float32)
        b = jnp.zeros((1, 4 * Hp), jnp.float32)
        for g in range(4):
            wih = wih.at[:d_in, g * Hp:g * Hp + H].set(w_ih[g * H:(g + 1) * H, :].T)
            whh = whh.at[:H, g * Hp:g * Hp + H].set(w_hh[g * H:(g + 1) * H, :].T)
            b = b.at[0, g * Hp:g * Hp + H].set(
                b_ih[g * H:(g + 1) * H] + b_hh[g * H:(g + 1) * H])
        wih_list.append(wih.astype(jnp.bfloat16))
        whh_list.append(whh.astype(jnp.bfloat16))
        b_list.append(b)

    out_features = params["fc_w"].shape[0]
    out_p = _round_up(out_features, 128)        # lane-dense FC output block
    fc_w = jnp.zeros((Hp, out_p), jnp.float32).at[:H, :out_features].set(params["fc_w"].T)
    fc_b = jnp.zeros((1, out_p), jnp.float32).at[0, :out_features].set(params["fc_b"])
    return {"wih": wih_list, "whh": whh_list, "b": jnp.stack(b_list),
            "fc_w": fc_w, "fc_b": fc_b, "out_features": out_features}


# --------------------------------- forward ------------------------------------
def lstm_model_forward(x, packed):
    # Match PyTorch: 2-D input gets a batch dim; permute(0,1,2) is an identity.
    if x.ndim == 2:
        x = x[None]
    B, T, D = x.shape

    Hp = packed["whh"][0].shape[0]
    Dp = packed["wih"][0].shape[0]
    num_layers = len(packed["whh"])
    out_p = packed["fc_w"].shape[1]
    out_features = packed["out_features"]

    # Batch padded to a multiple of 16 (full bf16 vregs); split into >=2 chunks for
    # the parallel grid axis (second TensorCore on v7x) only when B is big enough.
    n_bc = 2 if B > 16 else 1
    Bp = _round_up(B, 16 * n_bc)
    Bc = Bp // n_bc

    # Time chunking: grid = cdiv(T, t_chunk); tail steps are masked in-kernel
    # (time padding is not safe for LSTM state, masking is).
    t_chunk = max(1, min(T, 16))
    num_chunks = pl.cdiv(T, t_chunk)
    Tp = num_chunks * t_chunk
    needs_mask = Tp != T

    # Single fused XLA copy: zero-pad to (Tp, Bp, Dp), time-major, bf16.
    x_pad = jnp.zeros((Tp, Bp, Dp), jnp.bfloat16)
    x_pad = x_pad.at[:T, :B, :D].set(jnp.swapaxes(x, 0, 1).astype(jnp.bfloat16))

    # Adaptive unroll: full unroll only while the per-cell live set fits the vreg file.
    unroll = True if (Bc * Hp * 32) <= (96 << 10) else 2

    kernel = _make_fused_kernel(num_layers, t_chunk, Hp, T, unroll, needs_mask)

    # VMEM budgeting.
    weights_bytes = sum(int(w.size) * w.dtype.itemsize
                        for w in packed["wih"] + packed["whh"])
    const_bytes = sum(int(a.size) * a.dtype.itemsize
                      for a in (packed["b"], packed["fc_w"], packed["fc_b"]))
    x_chunk_bytes = t_chunk * Bc * Dp * 2
    out_bytes = Bc * out_p * 4
    scratch_bytes = (2 * num_layers * Bc * Hp * 4          # h, c
                     + t_chunk * Bc * Hp * 2               # layer handoff (bf16)
                     + t_chunk * Bc * 4 * Hp * 4)          # gate scratch (f32)
    try:
        phys_vmem = int(pltpu.get_tpu_info().vmem_capacity_bytes)
    except Exception:
        phys_vmem = 64 << 20

    def _run(single_buffer):
        buf_mult = 1 if single_buffer else 2
        needed = (buf_mult * (weights_bytes + const_bytes)
                  + 2 * x_chunk_bytes + 2 * out_bytes + scratch_bytes)
        vmem_limit = int(min(max(needed + needed // 4 + (2 << 20), 16 << 20),
                             phys_vmem))
        const_kw = {"pipeline_mode": pl.Buffered(1)} if single_buffer else {}

        in_specs = [pl.BlockSpec((t_chunk, Bc, Dp), lambda b, t: (t, b, 0))]
        for w in packed["wih"]:
            in_specs.append(pl.BlockSpec(w.shape, lambda b, t: (0, 0), **const_kw))
        for w in packed["whh"]:
            in_specs.append(pl.BlockSpec(w.shape, lambda b, t: (0, 0), **const_kw))
        in_specs.append(pl.BlockSpec(packed["b"].shape, lambda b, t: (0, 0, 0), **const_kw))
        in_specs.append(pl.BlockSpec(packed["fc_w"].shape, lambda b, t: (0, 0), **const_kw))
        in_specs.append(pl.BlockSpec(packed["fc_b"].shape, lambda b, t: (0, 0), **const_kw))

        call = pl.pallas_call(
            kernel,
            out_shape=jax.ShapeDtypeStruct((Bp, out_p), jnp.float32),
            grid_spec=pltpu.PrefetchScalarGridSpec(
                num_scalar_prefetch=0,
                grid=(n_bc, num_chunks),
                in_specs=in_specs,
                out_specs=pl.BlockSpec((Bc, out_p), lambda b, t: (b, 0)),
                scratch_shapes=[
                    pltpu.VMEM((num_layers, Bc, Hp), jnp.float32),   # h per layer
                    pltpu.VMEM((num_layers, Bc, Hp), jnp.float32),   # c per layer
                    pltpu.VMEM((t_chunk, Bc, Hp), jnp.bfloat16),     # layer handoff
                    pltpu.VMEM((t_chunk, Bc, 4 * Hp), jnp.float32),  # chunk gates
                ],
            ),
            compiler_params=pltpu.CompilerParams(
                # batch chunks are independent (megacore); time recurrence is serial.
                dimension_semantics=("parallel", "arbitrary"),
                vmem_limit_bytes=vmem_limit,
            ),
        )
        res = call(x_pad, *packed["wih"], *packed["whh"],
                   packed["b"], packed["fc_w"], packed["fc_b"])
        jax.block_until_ready(res)
        return res

    try:
        out = _run(True)          # single-buffered constant-index weights
    except Exception:
        out = _run(False)         # fallback: default double-buffering

    return out[:B, :out_features]


# ------------------------------ params + reference -----------------------------
def init_params(key, input_size, hidden_size, num_layers, out_features=96):
    params = {"lstm": []}
    bound = float(hidden_size) ** -0.5
    for layer in range(num_layers):
        d_in = input_size if layer == 0 else hidden_size
        key, k1, k2, k3, k4 = jax.random.split(key, 5)
        w_ih = jax.random.uniform(k1, (4 * hidden_size, d_in), jnp.float32, -bound, bound)
        w_hh = jax.random.uniform(k2, (4 * hidden_size, hidden_size), jnp.float32, -bound, bound)
        b_ih = jax.random.uniform(k3, (4 * hidden_size,), jnp.float32, -bound, bound)
        b_hh = jax.random.uniform(k4, (4 * hidden_size,), jnp.float32, -bound, bound)
        params["lstm"].append((w_ih, w_hh, b_ih, b_hh))
    key, k5, k6 = jax.random.split(key, 3)
    params["fc_w"] = jax.random.uniform(k5, (out_features, hidden_size), jnp.float32, -bound, bound)
    params["fc_b"] = jax.random.uniform(k6, (out_features,), jnp.float32, -bound, bound)
    return params


def lstm_model_reference(x, params):
    """Pure-JAX f32 reference matching the PyTorch module."""
    if x.ndim == 2:
        x = x[None]
    B = x.shape[0]
    seq = jnp.swapaxes(x, 0, 1)  # (T, B, D)
    for (w_ih, w_hh, b_ih, b_hh) in params["lstm"]:
        H = w_hh.shape[1]

        def cell(carry, x_t, w_ih=w_ih, w_hh=w_hh, b_ih=b_ih, b_hh=b_hh, H=H):
            h, c = carry
            gates = x_t @ w_ih.T + h @ w_hh.T + b_ih + b_hh
            i = jax.nn.sigmoid(gates[:, 0 * H:1 * H])
            f = jax.nn.sigmoid(gates[:, 1 * H:2 * H])
            g = jnp.tanh(gates[:, 2 * H:3 * H])
            o = jax.nn.sigmoid(gates[:, 3 * H:4 * H])
            c = f * c + i * g
            h = o * jnp.tanh(c)
            return (h, c), h

        (_, _), seq = lax.scan(cell, (jnp.zeros((B, H)), jnp.zeros((B, H))), seq)
    return seq[-1] @ params["fc_w"].T + params["fc_b"]


if __name__ == "__main__":
    B, T, INPUT_SIZE, HIDDEN, NUM_LAYERS = 2, 8, 16, 32, 2

    key = jax.random.PRNGKey(0)
    key, kx = jax.random.split(key)
    x = jax.random.normal(kx, (B, T, INPUT_SIZE), jnp.float32)
    params = init_params(key, INPUT_SIZE, HIDDEN, NUM_LAYERS, out_features=96)
    packed = pack_params(params, INPUT_SIZE, HIDDEN)

    out = lstm_model_forward(x, packed)
    jax.block_until_ready(out)
    assert out.shape == (B, 96), out.shape

    # NOTE: matmul inputs are bf16 (f32 accumulation); re-validate tolerance at
    # production T / H, or keep h in f32 for the W_hh contraction if accuracy demands.
    ref = lstm_model_reference(x, params)
    err = float(jnp.max(jnp.abs(out - ref)))
    assert err < 5e-2, f"max abs err {err}"
    print("KERNEL_OK")
</pallas_src>

<mosaic_0001>
module attributes {stable_mosaic.version = 11 : i64} {
  func.func @kernel(%arg0: i32, %arg1: i32, %arg2: memref<8x16x128xbf16, #tpu.memory_space<vmem>>, %arg3: memref<128x512xbf16, #tpu.memory_space<vmem>>, %arg4: memref<128x512xbf16, #tpu.memory_space<vmem>>, %arg5: memref<128x512xbf16, #tpu.memory_space<vmem>>, %arg6: memref<128x512xbf16, #tpu.memory_space<vmem>>, %arg7: memref<2x1x512xf32, #tpu.memory_space<vmem>>, %arg8: memref<128x128xf32, #tpu.memory_space<vmem>>, %arg9: memref<1x128xf32, #tpu.memory_space<vmem>>, %arg10: memref<16x128xf32, #tpu.memory_space<vmem>>, %arg11: memref<2x16x128xf32, #tpu.memory_space<vmem>>, %arg12: memref<2x16x128xf32, #tpu.memory_space<vmem>>, %arg13: memref<8x16x128xbf16, #tpu.memory_space<vmem>>, %arg14: memref<8x16x512xf32, #tpu.memory_space<vmem>>) attributes {dimension_semantics = [#tpu.dimension_semantics<parallel>, #tpu.dimension_semantics<arbitrary>], iteration_bounds = array<i64: 1, 1>, scalar_prefetch = 0 : i64, scratch_operands = 4 : i64, tpu.core_type = #tpu.core_type<tc>, window_params = [{transform_indices = @transform_0, window_bounds = array<i64: 8, 16, 128>}, {pipeline_mode = #tpu.pipeline_mode<synchronous>, transform_indices = @transform_1, window_bounds = array<i64: 128, 512>}, {pipeline_mode = #tpu.pipeline_mode<synchronous>, transform_indices = @transform_2, window_bounds = array<i64: 128, 512>}, {pipeline_mode = #tpu.pipeline_mode<synchronous>, transform_indices = @transform_3, window_bounds = array<i64: 128, 512>}, {pipeline_mode = #tpu.pipeline_mode<synchronous>, transform_indices = @transform_4, window_bounds = array<i64: 128, 512>}, {pipeline_mode = #tpu.pipeline_mode<synchronous>, transform_indices = @transform_5, window_bounds = array<i64: 2, 1, 512>}, {pipeline_mode = #tpu.pipeline_mode<synchronous>, transform_indices = @transform_6, window_bounds = array<i64: 128, 128>}, {pipeline_mode = #tpu.pipeline_mode<synchronous>, transform_indices = @transform_7, window_bounds = array<i64: 1, 128>}, {transform_indices = @transform_8, window_bounds = array<i64: 16, 128>}]} {
    %c0_i32 = arith.constant 0 : i32
    %0 = arith.cmpi eq, %arg1, %c0_i32 : i32
    %1 = arith.extui %0 : i1 to i32
    %c0_i32_0 = arith.constant 0 : i32
    %2 = arith.cmpi ne, %1, %c0_i32_0 : i32
    scf.if %2 {
      %cst_270 = arith.constant 0.000000e+00 : f32
      %680 = vector.broadcast %cst_270 : f32 to vector<2x16x128xf32>
      %c0_271 = arith.constant 0 : index
      %c0_272 = arith.constant 0 : index
      %c0_273 = arith.constant 0 : index
      %681 = vector.load %arg11[%c0_271, %c0_272, %c0_273] : memref<2x16x128xf32, #tpu.memory_space<vmem>>, vector<2x16x128xf32>
      tpu.vector_store %arg11[%c0_271, %c0_272, %c0_273], %680 {strides = array<i32>} : memref<2x16x128xf32, #tpu.memory_space<vmem>>, vector<2x16x128xf32>,
      %cst_274 = arith.constant 0.000000e+00 : f32
      %682 = vector.broadcast %cst_274 : f32 to vector<2x16x128xf32>
      %c0_275 = arith.constant 0 : index
      %c0_276 = arith.constant 0 : index
      %c0_277 = arith.constant 0 : index
      %683 = vector.load %arg12[%c0_275, %c0_276, %c0_277] : memref<2x16x128xf32, #tpu.memory_space<vmem>>, vector<2x16x128xf32>
      tpu.vector_store %arg12[%c0_275, %c0_276, %c0_277], %682 {strides = array<i32>} : memref<2x16x128xf32, #tpu.memory_space<vmem>>, vector<2x16x128xf32>,
    } else {
    }
    %c0 = arith.constant 0 : index
    %c0_1 = arith.constant 0 : index
    %c0_2 = arith.constant 0 : index
    %3 = vector.load %arg2[%c0, %c0_1, %c0_2] : memref<8x16x128xbf16, #tpu.memory_space<vmem>>, vector<8x16x128xbf16>
    %4 = vector.shape_cast %3 : vector<8x16x128xbf16> to vector<128x128xbf16>
    %c0_3 = arith.constant 0 : index
    %c0_4 = arith.constant 0 : index
    %5 = vector.load %arg3[%c0_3, %c0_4] : memref<128x512xbf16, #tpu.memory_space<vmem>>, vector<128x512xbf16>
    %cst = arith.constant dense<0.000000e+00> : vector<128x512xf32>
    %6 = tpu.matmul %4, %5, %cst {dimension_numbers = #tpu.dot_dimension_numbers<[1], [0], [0], [1], [0, 0, 1, 1], [], []>} : vector<128x128xbf16>, vector<128x512xbf16>, vector<128x512xf32> -> vector<128x512xf32>
    %c0_5 = arith.constant 0 : index
    %c0_6 = arith.constant 0 : index
    %c0_7 = arith.constant 0 : index
    %7 = vector.load %arg7[%c0_5, %c0_6, %c0_7] : memref<2x1x512xf32, #tpu.memory_space<vmem>>, vector<1x1x512xf32>
    %8 = vector.shape_cast %7 : vector<1x1x512xf32> to vector<1x512xf32>
    %9 = vector.broadcast %8 : vector<1x512xf32> to vector<128x512xf32>
    %10 = arith.addf %6, %9 : vector<128x512xf32>
    %11 = vector.shape_cast %10 : vector<128x512xf32> to vector<8x16x512xf32>
    %c0_8 = arith.constant 0 : index
    %c0_9 = arith.constant 0 : index
    %c0_10 = arith.constant 0 : index
    %12 = vector.load %arg14[%c0_8, %c0_9, %c0_10] : memref<8x16x512xf32, #tpu.memory_space<vmem>>, vector<8x16x512xf32>
    tpu.vector_store %arg14[%c0_8, %c0_9, %c0_10], %11 {strides = array<i32>} : memref<8x16x512xf32, #tpu.memory_space<vmem>>, vector<8x16x512xf32>,
    %c0_11 = arith.constant 0 : index
    %c0_12 = arith.constant 0 : index
    %13 = vector.load %arg5[%c0_11, %c0_12] : memref<128x512xbf16, #tpu.memory_space<vmem>>, vector<128x512xbf16>
    %c0_13 = arith.constant 0 : index
    %c0_14 = arith.constant 0 : index
    %c0_15 = arith.constant 0 : index
    %14 = vector.load %arg11[%c0_13, %c0_14, %c0_15] : memref<2x16x128xf32, #tpu.memory_space<vmem>>, vector<1x16x128xf32>
    %15 = vector.shape_cast %14 : vector<1x16x128xf32> to vector<16x128xf32>
    %c0_16 = arith.constant 0 : index
    %c0_17 = arith.constant 0 : index
    %c0_18 = arith.constant 0 : index
    %16 = vector.load %arg12[%c0_16, %c0_17, %c0_18] : memref<2x16x128xf32, #tpu.memory_space<vmem>>, vector<1x16x128xf32>
    %17 = vector.shape_cast %16 : vector<1x16x128xf32> to vector<16x128xf32>
    %c0_i32_19 = arith.constant 0 : i32
    %18 = arith.index_cast %c0_i32_19 : i32 to index
    %c0_20 = arith.constant 0 : index
    %c0_21 = arith.constant 0 : index
    %19 = vector.load %arg14[%18, %c0_20, %c0_21] : memref<8x16x512xf32, #tpu.memory_space<vmem>>, vector<1x16x512xf32>
    %20 = vector.shape_cast %19 : vector<1x16x512xf32> to vector<16x512xf32>
    %21 = arith.truncf %15 : vector<16x128xf32> to vector<16x128xbf16>
    %cst_22 = arith.constant dense<0.000000e+00> : vector<16x512xf32>
    %22 = tpu.matmul %21, %13, %cst_22 {dimension_numbers = #tpu.dot_dimension_numbers<[1], [0], [0], [1], [0, 0, 1, 1], [], []>} : vector<16x128xbf16>, vector<128x512xbf16>, vector<16x512xf32> -> vector<16x512xf32>
    %23 = arith.addf %20, %22 : vector<16x512xf32>
    %24 = vector.extract_strided_slice %23 {offsets = [0, 0], sizes = [16, 128], strides = [1, 1]} : vector<16x512xf32> to vector<16x128xf32>
    %cst_23 = arith.constant 5.000000e-01 : f32
    %25 = vector.broadcast %cst_23 : f32 to vector<16x128xf32>
    %26 = arith.mulf %25, %24 : vector<16x128xf32>
    %27 = math.tanh %26 : vector<16x128xf32>
    %cst_24 = arith.constant 5.000000e-01 : f32
    %28 = vector.broadcast %cst_24 : f32 to vector<16x128xf32>
    %29 = arith.mulf %28, %27 : vector<16x128xf32>
    %cst_25 = arith.constant 5.000000e-01 : f32
    %30 = vector.broadcast %cst_25 : f32 to vector<16x128xf32>
    %31 = arith.addf %29, %30 : vector<16x128xf32>
    %32 = vector.extract_strided_slice %23 {offsets = [0, 128], sizes = [16, 128], strides = [1, 1]} : vector<16x512xf32> to vector<16x128xf32>
    %cst_26 = arith.constant 5.000000e-01 : f32
    %33 = vector.broadcast %cst_26 : f32 to vector<16x128xf32>
    %34 = arith.mulf %33, %32 : vector<16x128xf32>
    %35 = math.tanh %34 : vector<16x128xf32>
    %cst_27 = arith.constant 5.000000e-01 : f32
    %36 = vector.broadcast %cst_27 : f32 to vector<16x128xf32>
    %37 = arith.mulf %36, %35 : vector<16x128xf32>
    %cst_28 = arith.constant 5.000000e-01 : f32
    %38 = vector.broadcast %cst_28 : f32 to vector<16x128xf32>
    %39 = arith.addf %37, %38 : vector<16x128xf32>
    %40 = vector.extract_strided_slice %23 {offsets = [0, 256], sizes = [16, 128], strides = [1, 1]} : vector<16x512xf32> to vector<16x128xf32>
    %41 = math.tanh %40 : vector<16x128xf32>
    %42 = vector.extract_strided_slice %23 {offsets = [0, 384], sizes = [16, 128], strides = [1, 1]} : vector<16x512xf32> to vector<16x128xf32>
    %cst_29 = arith.constant 5.000000e-01 : f32
    %43 = vector.broadcast %cst_29 : f32 to vector<16x128xf32>
    %44 = arith.mulf %43, %42 : vector<16x128xf32>
    %45 = math.tanh %44 : vector<16x128xf32>
    %cst_30 = arith.constant 5.000000e-01 : f32
    %46 = vector.broadcast %cst_30 : f32 to vector<16x128xf32>
    %47 = arith.mulf %46, %45 : vector<16x128xf32>
    %cst_31 = arith.constant 5.000000e-01 : f32
    %48 = vector.broadcast %cst_31 : f32 to vector<16x128xf32>
    %49 = arith.addf %47, %48 : vector<16x128xf32>
    %50 = arith.mulf %39, %17 : vector<16x128xf32>
    %51 = arith.mulf %31, %41 : vector<16x128xf32>
    %52 = arith.addf %50, %51 : vector<16x128xf32>
    %53 = math.tanh %52 : vector<16x128xf32>
    %54 = arith.mulf %49, %53 : vector<16x128xf32>
    %55 = arith.truncf %54 : vector<16x128xf32> to vector<16x128xbf16>
    %56 = arith.index_cast %c0_i32_19 : i32 to index
    %c0_32 = arith.constant 0 : index
    %c0_33 = arith.constant 0 : index
    %57 = vector.load %arg13[%56, %c0_32, %c0_33] : memref<8x16x128xbf16, #tpu.memory_space<vmem>>, vector<1x16x128xbf16>
    %58 = vector.shape_cast %57 : vector<1x16x128xbf16> to vector<16x128xbf16>
    %59 = vector.shape_cast %55 : vector<16x128xbf16> to vector<1x16x128xbf16>
    tpu.vector_store %arg13[%56, %c0_32, %c0_33], %59 {strides = array<i32>} : memref<8x16x128xbf16, #tpu.memory_space<vmem>>, vector<1x16x128xbf16>,
    %c1_i32 = arith.constant 1 : i32
    %60 = arith.index_cast %c1_i32 : i32 to index
    %c0_34 = arith.constant 0 : index
    %c0_35 = arith.constant 0 : index
    %61 = vector.load %arg14[%60, %c0_34, %c0_35] : memref<8x16x512xf32, #tpu.memory_space<vmem>>, vector<1x16x512xf32>
    %62 = vector.shape_cast %61 : vector<1x16x512xf32> to vector<16x512xf32>
    %63 = arith.truncf %54 : vector<16x128xf32> to vector<16x128xbf16>
    %cst_36 = arith.constant dense<0.000000e+00> : vector<16x512xf32>
    %64 = tpu.matmul %63, %13, %cst_36 {dimension_numbers = #tpu.dot_dimension_numbers<[1], [0], [0], [1], [0, 0, 1, 1], [], []>} : vector<16x128xbf16>, vector<128x512xbf16>, vector<16x512xf32> -> vector<16x512xf32>
    %65 = arith.addf %62, %64 : vector<16x512xf32>
    %66 = vector.extract_strided_slice %65 {offsets = [0, 0], sizes = [16, 128], strides = [1, 1]} : vector<16x512xf32> to vector<16x128xf32>
    %cst_37 = arith.constant 5.000000e-01 : f32
    %67 = vector.broadcast %cst_37 : f32 to vector<16x128xf32>
    %68 = arith.mulf %67, %66 : vector<16x128xf32>
    %69 = math.tanh %68 : vector<16x128xf32>
    %cst_38 = arith.constant 5.000000e-01 : f32
    %70 = vector.broadcast %cst_38 : f32 to vector<16x128xf32>
    %71 = arith.mulf %70, %69 : vector<16x128xf32>
    %cst_39 = arith.constant 5.000000e-01 : f32
    %72 = vector.broadcast %cst_39 : f32 to vector<16x128xf32>
    %73 = arith.addf %71, %72 : vector<16x128xf32>
    %74 = vector.extract_strided_slice %65 {offsets = [0, 128], sizes = [16, 128], strides = [1, 1]} : vector<16x512xf32> to vector<16x128xf32>
    %cst_40 = arith.constant 5.000000e-01 : f32
    %75 = vector.broadcast %cst_40 : f32 to vector<16x128xf32>
    %76 = arith.mulf %75, %74 : vector<16x128xf32>
    %77 = math.tanh %76 : vector<16x128xf32>
    %cst_41 = arith.constant 5.000000e-01 : f32
    %78 = vector.broadcast %cst_41 : f32 to vector<16x128xf32>
    %79 = arith.mulf %78, %77 : vector<16x128xf32>
    %cst_42 = arith.constant 5.000000e-01 : f32
    %80 = vector.broadcast %cst_42 : f32 to vector<16x128xf32>
    %81 = arith.addf %79, %80 : vector<16x128xf32>
    %82 = vector.extract_strided_slice %65 {offsets = [0, 256], sizes = [16, 128], strides = [1, 1]} : vector<16x512xf32> to vector<16x128xf32>
    %83 = math.tanh %82 : vector<16x128xf32>
    %84 = vector.extract_strided_slice %65 {offsets = [0, 384], sizes = [16, 128], strides = [1, 1]} : vector<16x512xf32> to vector<16x128xf32>
    %cst_43 = arith.constant 5.000000e-01 : f32
    %85 = vector.broadcast %cst_43 : f32 to vector<16x128xf32>
    %86 = arith.mulf %85, %84 : vector<16x128xf32>
    %87 = math.tanh %86 : vector<16x128xf32>
    %cst_44 = arith.constant 5.000000e-01 : f32
    %88 = vector.broadcast %cst_44 : f32 to vector<16x128xf32>
    %89 = arith.mulf %88, %87 : vector<16x128xf32>
    %cst_45 = arith.constant 5.000000e-01 : f32
    %90 = vector.broadcast %cst_45 : f32 to vector<16x128xf32>
    %91 = arith.addf %89, %90 : vector<16x128xf32>
    %92 = arith.mulf %81, %52 : vector<16x128xf32>
    %93 = arith.mulf %73, %83 : vector<16x128xf32>
    %94 = arith.addf %92, %93 : vector<16x128xf32>
    %95 = math.tanh %94 : vector<16x128xf32>
    %96 = arith.mulf %91, %95 : vector<16x128xf32>
    %97 = arith.truncf %96 : vector<16x128xf32> to vector<16x128xbf16>
    %98 = arith.index_cast %c1_i32 : i32 to index
    %c0_46 = arith.constant 0 : index
    %c0_47 = arith.constant 0 : index
    %99 = vector.load %arg13[%98, %c0_46, %c0_47] : memref<8x16x128xbf16, #tpu.memory_space<vmem>>, vector<1x16x128xbf16>
    %100 = vector.shape_cast %99 : vector<1x16x128xbf16> to vector<16x128xbf16>
    %101 = vector.shape_cast %97 : vector<16x128xbf16> to vector<1x16x128xbf16>
    tpu.vector_store %arg13[%98, %c0_46, %c0_47], %101 {strides = array<i32>} : memref<8x16x128xbf16, #tpu.memory_space<vmem>>, vector<1x16x128xbf16>,
    %c2_i32 = arith.constant 2 : i32
    %102 = arith.index_cast %c2_i32 : i32 to index
    %c0_48 = arith.constant 0 : index
    %c0_49 = arith.constant 0 : index
    %103 = vector.load %arg14[%102, %c0_48, %c0_49] : memref<8x16x512xf32, #tpu.memory_space<vmem>>, vector<1x16x512xf32>
    %104 = vector.shape_cast %103 : vector<1x16x512xf32> to vector<16x512xf32>
    %105 = arith.truncf %96 : vector<16x128xf32> to vector<16x128xbf16>
    %cst_50 = arith.constant dense<0.000000e+00> : vector<16x512xf32>
    %106 = tpu.matmul %105, %13, %cst_50 {dimension_numbers = #tpu.dot_dimension_numbers<[1], [0], [0], [1], [0, 0, 1, 1], [], []>} : vector<16x128xbf16>, vector<128x512xbf16>, vector<16x512xf32> -> vector<16x512xf32>
    %107 = arith.addf %104, %106 : vector<16x512xf32>
    %108 = vector.extract_strided_slice %107 {offsets = [0, 0], sizes = [16, 128], strides = [1, 1]} : vector<16x512xf32> to vector<16x128xf32>
    %cst_51 = arith.constant 5.000000e-01 : f32
    %109 = vector.broadcast %cst_51 : f32 to vector<16x128xf32>
    %110 = arith.mulf %109, %108 : vector<16x128xf32>
    %111 = math.tanh %110 : vector<16x128xf32>
    %cst_52 = arith.constant 5.000000e-01 : f32
    %112 = vector.broadcast %cst_52 : f32 to vector<16x128xf32>
    %113 = arith.mulf %112, %111 : vector<16x128xf32>
    %cst_53 = arith.constant 5.000000e-01 : f32
    %114 = vector.broadcast %cst_53 : f32 to vector<16x128xf32>
    %115 = arith.addf %113, %114 : vector<16x128xf32>
    %116 = vector.extract_strided_slice %107 {offsets = [0, 128], sizes = [16, 128], strides = [1, 1]} : vector<16x512xf32> to vector<16x128xf32>
    %cst_54 = arith.constant 5.000000e-01 : f32
    %117 = vector.broadcast %cst_54 : f32 to vector<16x128xf32>
    %118 = arith.mulf %117, %116 : vector<16x128xf32>
    %119 = math.tanh %118 : vector<16x128xf32>
    %cst_55 = arith.constant 5.000000e-01 : f32
    %120 = vector.broadcast %cst_55 : f32 to vector<16x128xf32>
    %121 = arith.mulf %120, %119 : vector<16x128xf32>
    %cst_56 = arith.constant 5.000000e-01 : f32
    %122 = vector.broadcast %cst_56 : f32 to vector<16x128xf32>
    %123 = arith.addf %121, %122 : vector<16x128xf32>
    %124 = vector.extract_strided_slice %107 {offsets = [0, 256], sizes = [16, 128], strides = [1, 1]} : vector<16x512xf32> to vector<16x128xf32>
    %125 = math.tanh %124 : vector<16x128xf32>
    %126 = vector.extract_strided_slice %107 {offsets = [0, 384], sizes = [16, 128], strides = [1, 1]} : vector<16x512xf32> to vector<16x128xf32>
    %cst_57 = arith.constant 5.000000e-01 : f32
    %127 = vector.broadcast %cst_57 : f32 to vector<16x128xf32>
    %128 = arith.mulf %127, %126 : vector<16x128xf32>
    %129 = math.tanh %128 : vector<16x128xf32>
    %cst_58 = arith.constant 5.000000e-01 : f32
    %130 = vector.broadcast %cst_58 : f32 to vector<16x128xf32>
    %131 = arith.mulf %130, %129 : vector<16x128xf32>
    %cst_59 = arith.constant 5.000000e-01 : f32
    %132 = vector.broadcast %cst_59 : f32 to vector<16x128xf32>
    %133 = arith.addf %131, %132 : vector<16x128xf32>
    %134 = arith.mulf %123, %94 : vector<16x128xf32>
    %135 = arith.mulf %115, %125 : vector<16x128xf32>
    %136 = arith.addf %134, %135 : vector<16x128xf32>
    %137 = math.tanh %136 : vector<16x128xf32>
    %138 = arith.mulf %133, %137 : vector<16x128xf32>
    %139 = arith.truncf %138 : vector<16x128xf32> to vector<16x128xbf16>
    %140 = arith.index_cast %c2_i32 : i32 to index
    %c0_60 = arith.constant 0 : index
    %c0_61 = arith.constant 0 : index
    %141 = vector.load %arg13[%140, %c0_60, %c0_61] : memref<8x16x128xbf16, #tpu.memory_space<vmem>>, vector<1x16x128xbf16>
    %142 = vector.shape_cast %141 : vector<1x16x128xbf16> to vector<16x128xbf16>
    %143 = vector.shape_cast %139 : vector<16x128xbf16> to vector<1x16x128xbf16>
    tpu.vector_store %arg13[%140, %c0_60, %c0_61], %143 {strides = array<i32>} : memref<8x16x128xbf16, #tpu.memory_space<vmem>>, vector<1x16x128xbf16>,
    %c3_i32 = arith.constant 3 : i32
    %144 = arith.index_cast %c3_i32 : i32 to index
    %c0_62 = arith.constant 0 : index
    %c0_63 = arith.constant 0 : index
    %145 = vector.load %arg14[%144, %c0_62, %c0_63] : memref<8x16x512xf32, #tpu.memory_space<vmem>>, vector<1x16x512xf32>
    %146 = vector.shape_cast %145 : vector<1x16x512xf32> to vector<16x512xf32>
    %147 = arith.truncf %138 : vector<16x128xf32> to vector<16x128xbf16>
    %cst_64 = arith.constant dense<0.000000e+00> : vector<16x512xf32>
    %148 = tpu.matmul %147, %13, %cst_64 {dimension_numbers = #tpu.dot_dimension_numbers<[1], [0], [0], [1], [0, 0, 1, 1], [], []>} : vector<16x128xbf16>, vector<128x512xbf16>, vector<16x512xf32> -> vector<16x512xf32>
    %149 = arith.addf %146, %148 : vector<16x512xf32>
    %150 = vector.extract_strided_slice %149 {offsets = [0, 0], sizes = [16, 128], strides = [1, 1]} : vector<16x512xf32> to vector<16x128xf32>
    %cst_65 = arith.constant 5.000000e-01 : f32
    %151 = vector.broadcast %cst_65 : f32 to vector<16x128xf32>
    %152 = arith.mulf %151, %150 : vector<16x128xf32>
    %153 = math.tanh %152 : vector<16x128xf32>
    %cst_66 = arith.constant 5.000000e-01 : f32
    %154 = vector.broadcast %cst_66 : f32 to vector<16x128xf32>
    %155 = arith.mulf %154, %153 : vector<16x128xf32>
    %cst_67 = arith.constant 5.000000e-01 : f32
    %156 = vector.broadcast %cst_67 : f32 to vector<16x128xf32>
    %157 = arith.addf %155, %156 : vector<16x128xf32>
    %158 = vector.extract_strided_slice %149 {offsets = [0, 128], sizes = [16, 128], strides = [1, 1]} : vector<16x512xf32> to vector<16x128xf32>
    %cst_68 = arith.constant 5.000000e-01 : f32
    %159 = vector.broadcast %cst_68 : f32 to vector<16x128xf32>
    %160 = arith.mulf %159, %158 : vector<16x128xf32>
    %161 = math.tanh %160 : vector<16x128xf32>
    %cst_69 = arith.constant 5.000000e-01 : f32
    %162 = vector.broadcast %cst_69 : f32 to vector<16x128xf32>
    %163 = arith.mulf %162, %161 : vector<16x128xf32>
    %cst_70 = arith.constant 5.000000e-01 : f32
    %164 = vector.broadcast %cst_70 : f32 to vector<16x128xf32>
    %165 = arith.addf %163, %164 : vector<16x128xf32>
    %166 = vector.extract_strided_slice %149 {offsets = [0, 256], sizes = [16, 128], strides = [1, 1]} : vector<16x512xf32> to vector<16x128xf32>
    %167 = math.tanh %166 : vector<16x128xf32>
    %168 = vector.extract_strided_slice %149 {offsets = [0, 384], sizes = [16, 128], strides = [1, 1]} : vector<16x512xf32> to vector<16x128xf32>
    %cst_71 = arith.constant 5.000000e-01 : f32
    %169 = vector.broadcast %cst_71 : f32 to vector<16x128xf32>
    %170 = arith.mulf %169, %168 : vector<16x128xf32>
    %171 = math.tanh %170 : vector<16x128xf32>
    %cst_72 = arith.constant 5.000000e-01 : f32
    %172 = vector.broadcast %cst_72 : f32 to vector<16x128xf32>
    %173 = arith.mulf %172, %171 : vector<16x128xf32>
    %cst_73 = arith.constant 5.000000e-01 : f32
    %174 = vector.broadcast %cst_73 : f32 to vector<16x128xf32>
    %175 = arith.addf %173, %174 : vector<16x128xf32>
    %176 = arith.mulf %165, %136 : vector<16x128xf32>
    %177 = arith.mulf %157, %167 : vector<16x128xf32>
    %178 = arith.addf %176, %177 : vector<16x128xf32>
    %179 = math.tanh %178 : vector<16x128xf32>
    %180 = arith.mulf %175, %179 : vector<16x128xf32>
    %181 = arith.truncf %180 : vector<16x128xf32> to vector<16x128xbf16>
    %182 = arith.index_cast %c3_i32 : i32 to index
    %c0_74 = arith.constant 0 : index
    %c0_75 = arith.constant 0 : index
    %183 = vector.load %arg13[%182, %c0_74, %c0_75] : memref<8x16x128xbf16, #tpu.memory_space<vmem>>, vector<1x16x128xbf16>
    %184 = vector.shape_cast %183 : vector<1x16x128xbf16> to vector<16x128xbf16>
    %185 = vector.shape_cast %181 : vector<16x128xbf16> to vector<1x16x128xbf16>
    tpu.vector_store %arg13[%182, %c0_74, %c0_75], %185 {strides = array<i32>} : memref<8x16x128xbf16, #tpu.memory_space<vmem>>, vector<1x16x128xbf16>,
    %c4_i32 = arith.constant 4 : i32
    %186 = arith.index_cast %c4_i32 : i32 to index
    %c0_76 = arith.constant 0 : index
    %c0_77 = arith.constant 0 : index
    %187 = vector.load %arg14[%186, %c0_76, %c0_77] : memref<8x16x512xf32, #tpu.memory_space<vmem>>, vector<1x16x512xf32>
    %188 = vector.shape_cast %187 : vector<1x16x512xf32> to vector<16x512xf32>
    %189 = arith.truncf %180 : vector<16x128xf32> to vector<16x128xbf16>
    %cst_78 = arith.constant dense<0.000000e+00> : vector<16x512xf32>
    %190 = tpu.matmul %189, %13, %cst_78 {dimension_numbers = #tpu.dot_dimension_numbers<[1], [0], [0], [1], [0, 0, 1, 1], [], []>} : vector<16x128xbf16>, vector<128x512xbf16>, vector<16x512xf32> -> vector<16x512xf32>
    %191 = arith.addf %188, %190 : vector<16x512xf32>
    %192 = vector.extract_strided_slice %191 {offsets = [0, 0], sizes = [16, 128], strides = [1, 1]} : vector<16x512xf32> to vector<16x128xf32>
    %cst_79 = arith.constant 5.000000e-01 : f32
    %193 = vector.broadcast %cst_79 : f32 to vector<16x128xf32>
    %194 = arith.mulf %193, %192 : vector<16x128xf32>
    %195 = math.tanh %194 : vector<16x128xf32>
    %cst_80 = arith.constant 5.000000e-01 : f32
    %196 = vector.broadcast %cst_80 : f32 to vector<16x128xf32>
    %197 = arith.mulf %196, %195 : vector<16x128xf32>
    %cst_81 = arith.constant 5.000000e-01 : f32
    %198 = vector.broadcast %cst_81 : f32 to vector<16x128xf32>
    %199 = arith.addf %197, %198 : vector<16x128xf32>
    %200 = vector.extract_strided_slice %191 {offsets = [0, 128], sizes = [16, 128], strides = [1, 1]} : vector<16x512xf32> to vector<16x128xf32>
    %cst_82 = arith.constant 5.000000e-01 : f32
    %201 = vector.broadcast %cst_82 : f32 to vector<16x128xf32>
    %202 = arith.mulf %201, %200 : vector<16x128xf32>
    %203 = math.tanh %202 : vector<16x128xf32>
    %cst_83 = arith.constant 5.000000e-01 : f32
    %204 = vector.broadcast %cst_83 : f32 to vector<16x128xf32>
    %205 = arith.mulf %204, %203 : vector<16x128xf32>
    %cst_84 = arith.constant 5.000000e-01 : f32
    %206 = vector.broadcast %cst_84 : f32 to vector<16x128xf32>
    %207 = arith.addf %205, %206 : vector<16x128xf32>
    %208 = vector.extract_strided_slice %191 {offsets = [0, 256], sizes = [16, 128], strides = [1, 1]} : vector<16x512xf32> to vector<16x128xf32>
    %209 = math.tanh %208 : vector<16x128xf32>
    %210 = vector.extract_strided_slice %191 {offsets = [0, 384], sizes = [16, 128], strides = [1, 1]} : vector<16x512xf32> to vector<16x128xf32>
    %cst_85 = arith.constant 5.000000e-01 : f32
    %211 = vector.broadcast %cst_85 : f32 to vector<16x128xf32>
    %212 = arith.mulf %211, %210 : vector<16x128xf32>
    %213 = math.tanh %212 : vector<16x128xf32>
    %cst_86 = arith.constant 5.000000e-01 : f32
    %214 = vector.broadcast %cst_86 : f32 to vector<16x128xf32>
    %215 = arith.mulf %214, %213 : vector<16x128xf32>
    %cst_87 = arith.constant 5.000000e-01 : f32
    %216 = vector.broadcast %cst_87 : f32 to vector<16x128xf32>
    %217 = arith.addf %215, %216 : vector<16x128xf32>
    %218 = arith.mulf %207, %178 : vector<16x128xf32>
    %219 = arith.mulf %199, %209 : vector<16x128xf32>
    %220 = arith.addf %218, %219 : vector<16x128xf32>
    %221 = math.tanh %220 : vector<16x128xf32>
    %222 = arith.mulf %217, %221 : vector<16x128xf32>
    %223 = arith.truncf %222 : vector<16x128xf32> to vector<16x128xbf16>
    %224 = arith.index_cast %c4_i32 : i32 to index
    %c0_88 = arith.constant 0 : index
    %c0_89 = arith.constant 0 : index
    %225 = vector.load %arg13[%224, %c0_88, %c0_89] : memref<8x16x128xbf16, #tpu.memory_space<vmem>>, vector<1x16x128xbf16>
    %226 = vector.shape_cast %225 : vector<1x16x128xbf16> to vector<16x128xbf16>
    %227 = vector.shape_cast %223 : vector<16x128xbf16> to vector<1x16x128xbf16>
    tpu.vector_store %arg13[%224, %c0_88, %c0_89], %227 {strides = array<i32>} : memref<8x16x128xbf16, #tpu.memory_space<vmem>>, vector<1x16x128xbf16>,
    %c5_i32 = arith.constant 5 : i32
    %228 = arith.index_cast %c5_i32 : i32 to index
    %c0_90 = arith.constant 0 : index
    %c0_91 = arith.constant 0 : index
    %229 = vector.load %arg14[%228, %c0_90, %c0_91] : memref<8x16x512xf32, #tpu.memory_space<vmem>>, vector<1x16x512xf32>
    %230 = vector.shape_cast %229 : vector<1x16x512xf32> to vector<16x512xf32>
    %231 = arith.truncf %222 : vector<16x128xf32> to vector<16x128xbf16>
    %cst_92 = arith.constant dense<0.000000e+00> : vector<16x512xf32>
    %232 = tpu.matmul %231, %13, %cst_92 {dimension_numbers = #tpu.dot_dimension_numbers<[1], [0], [0], [1], [0, 0, 1, 1], [], []>} : vector<16x128xbf16>, vector<128x512xbf16>, vector<16x512xf32> -> vector<16x512xf32>
    %233 = arith.addf %230, %232 : vector<16x512xf32>
    %234 = vector.extract_strided_slice %233 {offsets = [0, 0], sizes = [16, 128], strides = [1, 1]} : vector<16x512xf32> to vector<16x128xf32>
    %cst_93 = arith.constant 5.000000e-01 : f32
    %235 = vector.broadcast %cst_93 : f32 to vector<16x128xf32>
    %236 = arith.mulf %235, %234 : vector<16x128xf32>
    %237 = math.tanh %236 : vector<16x128xf32>
    %cst_94 = arith.constant 5.000000e-01 : f32
    %238 = vector.broadcast %cst_94 : f32 to vector<16x128xf32>
    %239 = arith.mulf %238, %237 : vector<16x128xf32>
    %cst_95 = arith.constant 5.000000e-01 : f32
    %240 = vector.broadcast %cst_95 : f32 to vector<16x128xf32>
    %241 = arith.addf %239, %240 : vector<16x128xf32>
    %242 = vector.extract_strided_slice %233 {offsets = [0, 128], sizes = [16, 128], strides = [1, 1]} : vector<16x512xf32> to vector<16x128xf32>
    %cst_96 = arith.constant 5.000000e-01 : f32
    %243 = vector.broadcast %cst_96 : f32 to vector<16x128xf32>
    %244 = arith.mulf %243, %242 : vector<16x128xf32>
    %245 = math.tanh %244 : vector<16x128xf32>
    %cst_97 = arith.constant 5.000000e-01 : f32
    %246 = vector.broadcast %cst_97 : f32 to vector<16x128xf32>
    %247 = arith.mulf %246, %245 : vector<16x128xf32>
    %cst_98 = arith.constant 5.000000e-01 : f32
    %248 = vector.broadcast %cst_98 : f32 to vector<16x128xf32>
    %249 = arith.addf %247, %248 : vector<16x128xf32>
    %250 = vector.extract_strided_slice %233 {offsets = [0, 256], sizes = [16, 128], strides = [1, 1]} : vector<16x512xf32> to vector<16x128xf32>
    %251 = math.tanh %250 : vector<16x128xf32>
    %252 = vector.extract_strided_slice %233 {offsets = [0, 384], sizes = [16, 128], strides = [1, 1]} : vector<16x512xf32> to vector<16x128xf32>
    %cst_99 = arith.constant 5.000000e-01 : f32
    %253 = vector.broadcast %cst_99 : f32 to vector<16x128xf32>
    %254 = arith.mulf %253, %252 : vector<16x128xf32>
    %255 = math.tanh %254 : vector<16x128xf32>
    %cst_100 = arith.constant 5.000000e-01 : f32
    %256 = vector.broadcast %cst_100 : f32 to vector<16x128xf32>
    %257 = arith.mulf %256, %255 : vector<16x128xf32>
    %cst_101 = arith.constant 5.000000e-01 : f32
    %258 = vector.broadcast %cst_101 : f32 to vector<16x128xf32>
    %259 = arith.addf %257, %258 : vector<16x128xf32>
    %260 = arith.mulf %249, %220 : vector<16x128xf32>
    %261 = arith.mulf %241, %251 : vector<16x128xf32>
    %262 = arith.addf %260, %261 : vector<16x128xf32>
    %263 = math.tanh %262 : vector<16x128xf32>
    %264 = arith.mulf %259, %263 : vector<16x128xf32>
    %265 = arith.truncf %264 : vector<16x128xf32> to vector<16x128xbf16>
    %266 = arith.index_cast %c5_i32 : i32 to index
    %c0_102 = arith.constant 0 : index
    %c0_103 = arith.constant 0 : index
    %267 = vector.load %arg13[%266, %c0_102, %c0_103] : memref<8x16x128xbf16, #tpu.memory_space<vmem>>, vector<1x16x128xbf16>
    %268 = vector.shape_cast %267 : vector<1x16x128xbf16> to vector<16x128xbf16>
    %269 = vector.shape_cast %265 : vector<16x128xbf16> to vector<1x16x128xbf16>
    tpu.vector_store %arg13[%266, %c0_102, %c0_103], %269 {strides = array<i32>} : memref<8x16x128xbf16, #tpu.memory_space<vmem>>, vector<1x16x128xbf16>,
    %c6_i32 = arith.constant 6 : i32
    %270 = arith.index_cast %c6_i32 : i32 to index
    %c0_104 = arith.constant 0 : index
    %c0_105 = arith.constant 0 : index
    %271 = vector.load %arg14[%270, %c0_104, %c0_105] : memref<8x16x512xf32, #tpu.memory_space<vmem>>, vector<1x16x512xf32>
    %272 = vector.shape_cast %271 : vector<1x16x512xf32> to vector<16x512xf32>
    %273 = arith.truncf %264 : vector<16x128xf32> to vector<16x128xbf16>
    %cst_106 = arith.constant dense<0.000000e+00> : vector<16x512xf32>
    %274 = tpu.matmul %273, %13, %cst_106 {dimension_numbers = #tpu.dot_dimension_numbers<[1], [0], [0], [1], [0, 0, 1, 1], [], []>} : vector<16x128xbf16>, vector<128x512xbf16>, vector<16x512xf32> -> vector<16x512xf32>
    %275 = arith.addf %272, %274 : vector<16x512xf32>
    %276 = vector.extract_strided_slice %275 {offsets = [0, 0], sizes = [16, 128], strides = [1, 1]} : vector<16x512xf32> to vector<16x128xf32>
    %cst_107 = arith.constant 5.000000e-01 : f32
    %277 = vector.broadcast %cst_107 : f32 to vector<16x128xf32>
    %278 = arith.mulf %277, %276 : vector<16x128xf32>
    %279 = math.tanh %278 : vector<16x128xf32>
    %cst_108 = arith.constant 5.000000e-01 : f32
    %280 = vector.broadcast %cst_108 : f32 to vector<16x128xf32>
    %281 = arith.mulf %280, %279 : vector<16x128xf32>
    %cst_109 = arith.constant 5.000000e-01 : f32
    %282 = vector.broadcast %cst_109 : f32 to vector<16x128xf32>
    %283 = arith.addf %281, %282 : vector<16x128xf32>
    %284 = vector.extract_strided_slice %275 {offsets = [0, 128], sizes = [16, 128], strides = [1, 1]} : vector<16x512xf32> to vector<16x128xf32>
    %cst_110 = arith.constant 5.000000e-01 : f32
    %285 = vector.broadcast %cst_110 : f32 to vector<16x128xf32>
    %286 = arith.mulf %285, %284 : vector<16x128xf32>
    %287 = math.tanh %286 : vector<16x128xf32>
    %cst_111 = arith.constant 5.000000e-01 : f32
    %288 = vector.broadcast %cst_111 : f32 to vector<16x128xf32>
    %289 = arith.mulf %288, %287 : vector<16x128xf32>
    %cst_112 = arith.constant 5.000000e-01 : f32
    %290 = vector.broadcast %cst_112 : f32 to vector<16x128xf32>
    %291 = arith.addf %289, %290 : vector<16x128xf32>
    %292 = vector.extract_strided_slice %275 {offsets = [0, 256], sizes = [16, 128], strides = [1, 1]} : vector<16x512xf32> to vector<16x128xf32>
    %293 = math.tanh %292 : vector<16x128xf32>
    %294 = vector.extract_strided_slice %275 {offsets = [0, 384], sizes = [16, 128], strides = [1, 1]} : vector<16x512xf32> to vector<16x128xf32>
    %cst_113 = arith.constant 5.000000e-01 : f32
    %295 = vector.broadcast %cst_113 : f32 to vector<16x128xf32>
    %296 = arith.mulf %295, %294 : vector<16x128xf32>
    %297 = math.tanh %296 : vector<16x128xf32>
    %cst_114 = arith.constant 5.000000e-01 : f32
    %298 = vector.broadcast %cst_114 : f32 to vector<16x128xf32>
    %299 = arith.mulf %298, %297 : vector<16x128xf32>
    %cst_115 = arith.constant 5.000000e-01 : f32
    %300 = vector.broadcast %cst_115 : f32 to vector<16x128xf32>
    %301 = arith.addf %299, %300 : vector<16x128xf32>
    %302 = arith.mulf %291, %262 : vector<16x128xf32>
    %303 = arith.mulf %283, %293 : vector<16x128xf32>
    %304 = arith.addf %302, %303 : vector<16x128xf32>
    %305 = math.tanh %304 : vector<16x128xf32>
    %306 = arith.mulf %301, %305 : vector<16x128xf32>
    %307 = arith.truncf %306 : vector<16x128xf32> to vector<16x128xbf16>
    %308 = arith.index_cast %c6_i32 : i32 to index
    %c0_116 = arith.constant 0 : index
    %c0_117 = arith.constant 0 : index
    %309 = vector.load %arg13[%308, %c0_116, %c0_117] : memref<8x16x128xbf16, #tpu.memory_space<vmem>>, vector<1x16x128xbf16>
    %310 = vector.shape_cast %309 : vector<1x16x128xbf16> to vector<16x128xbf16>
    %311 = vector.shape_cast %307 : vector<16x128xbf16> to vector<1x16x128xbf16>
    tpu.vector_store %arg13[%308, %c0_116, %c0_117], %311 {strides = array<i32>} : memref<8x16x128xbf16, #tpu.memory_space<vmem>>, vector<1x16x128xbf16>,
    %c7_i32 = arith.constant 7 : i32
    %312 = arith.index_cast %c7_i32 : i32 to index
    %c0_118 = arith.constant 0 : index
    %c0_119 = arith.constant 0 : index
    %313 = vector.load %arg14[%312, %c0_118, %c0_119] : memref<8x16x512xf32, #tpu.memory_space<vmem>>, vector<1x16x512xf32>
    %314 = vector.shape_cast %313 : vector<1x16x512xf32> to vector<16x512xf32>
    %315 = arith.truncf %306 : vector<16x128xf32> to vector<16x128xbf16>
    %cst_120 = arith.constant dense<0.000000e+00> : vector<16x512xf32>
    %316 = tpu.matmul %315, %13, %cst_120 {dimension_numbers = #tpu.dot_dimension_numbers<[1], [0], [0], [1], [0, 0, 1, 1], [], []>} : vector<16x128xbf16>, vector<128x512xbf16>, vector<16x512xf32> -> vector<16x512xf32>
    %317 = arith.addf %314, %316 : vector<16x512xf32>
    %318 = vector.extract_strided_slice %317 {offsets = [0, 0], sizes = [16, 128], strides = [1, 1]} : vector<16x512xf32> to vector<16x128xf32>
    %cst_121 = arith.constant 5.000000e-01 : f32
    %319 = vector.broadcast %cst_121 : f32 to vector<16x128xf32>
    %320 = arith.mulf %319, %318 : vector<16x128xf32>
    %321 = math.tanh %320 : vector<16x128xf32>
    %cst_122 = arith.constant 5.000000e-01 : f32
    %322 = vector.broadcast %cst_122 : f32 to vector<16x128xf32>
    %323 = arith.mulf %322, %321 : vector<16x128xf32>
    %cst_123 = arith.constant 5.000000e-01 : f32
    %324 = vector.broadcast %cst_123 : f32 to vector<16x128xf32>
    %325 = arith.addf %323, %324 : vector<16x128xf32>
    %326 = vector.extract_strided_slice %317 {offsets = [0, 128], sizes = [16, 128], strides = [1, 1]} : vector<16x512xf32> to vector<16x128xf32>
    %cst_124 = arith.constant 5.000000e-01 : f32
    %327 = vector.broadcast %cst_124 : f32 to vector<16x128xf32>
    %328 = arith.mulf %327, %326 : vector<16x128xf32>
    %329 = math.tanh %328 : vector<16x128xf32>
    %cst_125 = arith.constant 5.000000e-01 : f32
    %330 = vector.broadcast %cst_125 : f32 to vector<16x128xf32>
    %331 = arith.mulf %330, %329 : vector<16x128xf32>
    %cst_126 = arith.constant 5.000000e-01 : f32
    %332 = vector.broadcast %cst_126 : f32 to vector<16x128xf32>
    %333 = arith.addf %331, %332 : vector<16x128xf32>
    %334 = vector.extract_strided_slice %317 {offsets = [0, 256], sizes = [16, 128], strides = [1, 1]} : vector<16x512xf32> to vector<16x128xf32>
    %335 = math.tanh %334 : vector<16x128xf32>
    %336 = vector.extract_strided_slice %317 {offsets = [0, 384], sizes = [16, 128], strides = [1, 1]} : vector<16x512xf32> to vector<16x128xf32>
    %cst_127 = arith.constant 5.000000e-01 : f32
    %337 = vector.broadcast %cst_127 : f32 to vector<16x128xf32>
    %338 = arith.mulf %337, %336 : vector<16x128xf32>
    %339 = math.tanh %338 : vector<16x128xf32>
    %cst_128 = arith.constant 5.000000e-01 : f32
    %340 = vector.broadcast %cst_128 : f32 to vector<16x128xf32>
    %341 = arith.mulf %340, %339 : vector<16x128xf32>
    %cst_129 = arith.constant 5.000000e-01 : f32
    %342 = vector.broadcast %cst_129 : f32 to vector<16x128xf32>
    %343 = arith.addf %341, %342 : vector<16x128xf32>
    %344 = arith.mulf %333, %304 : vector<16x128xf32>
    %345 = arith.mulf %325, %335 : vector<16x128xf32>
    %346 = arith.addf %344, %345 : vector<16x128xf32>
    %347 = math.tanh %346 : vector<16x128xf32>
    %348 = arith.mulf %343, %347 : vector<16x128xf32>
    %349 = arith.truncf %348 : vector<16x128xf32> to vector<16x128xbf16>
    %350 = arith.index_cast %c7_i32 : i32 to index
    %c0_130 = arith.constant 0 : index
    %c0_131 = arith.constant 0 : index
    %351 = vector.load %arg13[%350, %c0_130, %c0_131] : memref<8x16x128xbf16, #tpu.memory_space<vmem>>, vector<1x16x128xbf16>
    %352 = vector.shape_cast %351 : vector<1x16x128xbf16> to vector<16x128xbf16>
    %353 = vector.shape_cast %349 : vector<16x128xbf16> to vector<1x16x128xbf16>
    tpu.vector_store %arg13[%350, %c0_130, %c0_131], %353 {strides = array<i32>} : memref<8x16x128xbf16, #tpu.memory_space<vmem>>, vector<1x16x128xbf16>,
    %c8_i32 = arith.constant 8 : i32
    %c0_132 = arith.constant 0 : index
    %c0_133 = arith.constant 0 : index
    %c0_134 = arith.constant 0 : index
    %354 = vector.load %arg11[%c0_132, %c0_133, %c0_134] : memref<2x16x128xf32, #tpu.memory_space<vmem>>, vector<1x16x128xf32>
    %355 = vector.shape_cast %354 : vector<1x16x128xf32> to vector<16x128xf32>
    %356 = vector.shape_cast %348 : vector<16x128xf32> to vector<1x16x128xf32>
    tpu.vector_store %arg11[%c0_132, %c0_133, %c0_134], %356 {strides = array<i32>} : memref<2x16x128xf32, #tpu.memory_space<vmem>>, vector<1x16x128xf32>,
    %c0_135 = arith.constant 0 : index
    %c0_136 = arith.constant 0 : index
    %c0_137 = arith.constant 0 : index
    %357 = vector.load %arg12[%c0_135, %c0_136, %c0_137] : memref<2x16x128xf32, #tpu.memory_space<vmem>>, vector<1x16x128xf32>
    %358 = vector.shape_cast %357 : vector<1x16x128xf32> to vector<16x128xf32>
    %359 = vector.shape_cast %346 : vector<16x128xf32> to vector<1x16x128xf32>
    tpu.vector_store %arg12[%c0_135, %c0_136, %c0_137], %359 {strides = array<i32>} : memref<2x16x128xf32, #tpu.memory_space<vmem>>, vector<1x16x128xf32>,
    %c0_138 = arith.constant 0 : index
    %c0_139 = arith.constant 0 : index
    %c0_140 = arith.constant 0 : index
    %360 = vector.load %arg13[%c0_138, %c0_139, %c0_140] : memref<8x16x128xbf16, #tpu.memory_space<vmem>>, vector<8x16x128xbf16>
    %361 = vector.shape_cast %360 : vector<8x16x128xbf16> to vector<128x128xbf16>
    %c0_141 = arith.constant 0 : index
    %c0_142 = arith.constant 0 : index
    %362 = vector.load %arg4[%c0_141, %c0_142] : memref<128x512xbf16, #tpu.memory_space<vmem>>, vector<128x512xbf16>
    %cst_143 = arith.constant dense<0.000000e+00> : vector<128x512xf32>
    %363 = tpu.matmul %361, %362, %cst_143 {dimension_numbers = #tpu.dot_dimension_numbers<[1], [0], [0], [1], [0, 0, 1, 1], [], []>} : vector<128x128xbf16>, vector<128x512xbf16>, vector<128x512xf32> -> vector<128x512xf32>
    %c1 = arith.constant 1 : index
    %c0_144 = arith.constant 0 : index
    %c0_145 = arith.constant 0 : index
    %364 = vector.load %arg7[%c1, %c0_144, %c0_145] : memref<2x1x512xf32, #tpu.memory_space<vmem>>, vector<1x1x512xf32>
    %365 = vector.shape_cast %364 : vector<1x1x512xf32> to vector<1x512xf32>
    %366 = vector.broadcast %365 : vector<1x512xf32> to vector<128x512xf32>
    %367 = arith.addf %363, %366 : vector<128x512xf32>
    %368 = vector.shape_cast %367 : vector<128x512xf32> to vector<8x16x512xf32>
    %c0_146 = arith.constant 0 : index
    %c0_147 = arith.constant 0 : index
    %c0_148 = arith.constant 0 : index
    %369 = vector.load %arg14[%c0_146, %c0_147, %c0_148] : memref<8x16x512xf32, #tpu.memory_space<vmem>>, vector<8x16x512xf32>
    tpu.vector_store %arg14[%c0_146, %c0_147, %c0_148], %368 {strides = array<i32>} : memref<8x16x512xf32, #tpu.memory_space<vmem>>, vector<8x16x512xf32>,
    %c0_149 = arith.constant 0 : index
    %c0_150 = arith.constant 0 : index
    %370 = vector.load %arg6[%c0_149, %c0_150] : memref<128x512xbf16, #tpu.memory_space<vmem>>, vector<128x512xbf16>
    %c1_151 = arith.constant 1 : index
    %c0_152 = arith.constant 0 : index
    %c0_153 = arith.constant 0 : index
    %371 = vector.load %arg11[%c1_151, %c0_152, %c0_153] : memref<2x16x128xf32, #tpu.memory_space<vmem>>, vector<1x16x128xf32>
    %372 = vector.shape_cast %371 : vector<1x16x128xf32> to vector<16x128xf32>
    %c1_154 = arith.constant 1 : index
    %c0_155 = arith.constant 0 : index
    %c0_156 = arith.constant 0 : index
    %373 = vector.load %arg12[%c1_154, %c0_155, %c0_156] : memref<2x16x128xf32, #tpu.memory_space<vmem>>, vector<1x16x128xf32>
    %374 = vector.shape_cast %373 : vector<1x16x128xf32> to vector<16x128xf32>
    %c0_i32_157 = arith.constant 0 : i32
    %375 = arith.index_cast %c0_i32_157 : i32 to index
    %c0_158 = arith.constant 0 : index
    %c0_159 = arith.constant 0 : index
    %376 = vector.load %arg14[%375, %c0_158, %c0_159] : memref<8x16x512xf32, #tpu.memory_space<vmem>>, vector<1x16x512xf32>
    %377 = vector.shape_cast %376 : vector<1x16x512xf32> to vector<16x512xf32>
    %378 = arith.truncf %372 : vector<16x128xf32> to vector<16x128xbf16>
    %cst_160 = arith.constant dense<0.000000e+00> : vector<16x512xf32>
    %379 = tpu.matmul %378, %370, %cst_160 {dimension_numbers = #tpu.dot_dimension_numbers<[1], [0], [0], [1], [0, 0, 1, 1], [], []>} : vector<16x128xbf16>, vector<128x512xbf16>, vector<16x512xf32> -> vector<16x512xf32>
    %380 = arith.addf %377, %379 : vector<16x512xf32>
    %381 = vector.extract_strided_slice %380 {offsets = [0, 0], sizes = [16, 128], strides = [1, 1]} : vector<16x512xf32> to vector<16x128xf32>
    %cst_161 = arith.constant 5.000000e-01 : f32
    %382 = vector.broadcast %cst_161 : f32 to vector<16x128xf32>
    %383 = arith.mulf %382, %381 : vector<16x128xf32>
    %384 = math.tanh %383 : vector<16x128xf32>
    %cst_162 = arith.constant 5.000000e-01 : f32
    %385 = vector.broadcast %cst_162 : f32 to vector<16x128xf32>
    %386 = arith.mulf %385, %384 : vector<16x128xf32>
    %cst_163 = arith.constant 5.000000e-01 : f32
    %387 = vector.broadcast %cst_163 : f32 to vector<16x128xf32>
    %388 = arith.addf %386, %387 : vector<16x128xf32>
    %389 = vector.extract_strided_slice %380 {offsets = [0, 128], sizes = [16, 128], strides = [1, 1]} : vector<16x512xf32> to vector<16x128xf32>
    %cst_164 = arith.constant 5.000000e-01 : f32
    %390 = vector.broadcast %cst_164 : f32 to vector<16x128xf32>
    %391 = arith.mulf %390, %389 : vector<16x128xf32>
    %392 = math.tanh %391 : vector<16x128xf32>
    %cst_165 = arith.constant 5.000000e-01 : f32
    %393 = vector.broadcast %cst_165 : f32 to vector<16x128xf32>
    %394 = arith.mulf %393, %392 : vector<16x128xf32>
    %cst_166 = arith.constant 5.000000e-01 : f32
    %395 = vector.broadcast %cst_166 : f32 to vector<16x128xf32>
    %396 = arith.addf %394, %395 : vector<16x128xf32>
    %397 = vector.extract_strided_slice %380 {offsets = [0, 256], sizes = [16, 128], strides = [1, 1]} : vector<16x512xf32> to vector<16x128xf32>
    %398 = math.tanh %397 : vector<16x128xf32>
    %399 = vector.extract_strided_slice %380 {offsets = [0, 384], sizes = [16, 128], strides = [1, 1]} : vector<16x512xf32> to vector<16x128xf32>
    %cst_167 = arith.constant 5.000000e-01 : f32
    %400 = vector.broadcast %cst_167 : f32 to vector<16x128xf32>
    %401 = arith.mulf %400, %399 : vector<16x128xf32>
    %402 = math.tanh %401 : vector<16x128xf32>
    %cst_168 = arith.constant 5.000000e-01 : f32
    %403 = vector.broadcast %cst_168 : f32 to vector<16x128xf32>
    %404 = arith.mulf %403, %402 : vector<16x128xf32>
    %cst_169 = arith.constant 5.000000e-01 : f32
    %405 = vector.broadcast %cst_169 : f32 to vector<16x128xf32>
    %406 = arith.addf %404, %405 : vector<16x128xf32>
    %407 = arith.mulf %396, %374 : vector<16x128xf32>
    %408 = arith.mulf %388, %398 : vector<16x128xf32>
    %409 = arith.addf %407, %408 : vector<16x128xf32>
    %410 = math.tanh %409 : vector<16x128xf32>
    %411 = arith.mulf %406, %410 : vector<16x128xf32>
    %c1_i32_170 = arith.constant 1 : i32
    %412 = arith.index_cast %c1_i32_170 : i32 to index
    %c0_171 = arith.constant 0 : index
    %c0_172 = arith.constant 0 : index
    %413 = vector.load %arg14[%412, %c0_171, %c0_172] : memref<8x16x512xf32, #tpu.memory_space<vmem>>, vector<1x16x512xf32>
    %414 = vector.shape_cast %413 : vector<1x16x512xf32> to vector<16x512xf32>
    %415 = arith.truncf %411 : vector<16x128xf32> to vector<16x128xbf16>
    %cst_173 = arith.constant dense<0.000000e+00> : vector<16x512xf32>
    %416 = tpu.matmul %415, %370, %cst_173 {dimension_numbers = #tpu.dot_dimension_numbers<[1], [0], [0], [1], [0, 0, 1, 1], [], []>} : vector<16x128xbf16>, vector<128x512xbf16>, vector<16x512xf32> -> vector<16x512xf32>
    %417 = arith.addf %414, %416 : vector<16x512xf32>
    %418 = vector.extract_strided_slice %417 {offsets = [0, 0], sizes = [16, 128], strides = [1, 1]} : vector<16x512xf32> to vector<16x128xf32>
    %cst_174 = arith.constant 5.000000e-01 : f32
    %419 = vector.broadcast %cst_174 : f32 to vector<16x128xf32>
    %420 = arith.mulf %419, %418 : vector<16x128xf32>
    %421 = math.tanh %420 : vector<16x128xf32>
    %cst_175 = arith.constant 5.000000e-01 : f32
    %422 = vector.broadcast %cst_175 : f32 to vector<16x128xf32>
    %423 = arith.mulf %422, %421 : vector<16x128xf32>
    %cst_176 = arith.constant 5.000000e-01 : f32
    %424 = vector.broadcast %cst_176 : f32 to vector<16x128xf32>
    %425 = arith.addf %423, %424 : vector<16x128xf32>
    %426 = vector.extract_strided_slice %417 {offsets = [0, 128], sizes = [16, 128], strides = [1, 1]} : vector<16x512xf32> to vector<16x128xf32>
    %cst_177 = arith.constant 5.000000e-01 : f32
    %427 = vector.broadcast %cst_177 : f32 to vector<16x128xf32>
    %428 = arith.mulf %427, %426 : vector<16x128xf32>
    %429 = math.tanh %428 : vector<16x128xf32>
    %cst_178 = arith.constant 5.000000e-01 : f32
    %430 = vector.broadcast %cst_178 : f32 to vector<16x128xf32>
    %431 = arith.mulf %430, %429 : vector<16x128xf32>
    %cst_179 = arith.constant 5.000000e-01 : f32
    %432 = vector.broadcast %cst_179 : f32 to vector<16x128xf32>
    %433 = arith.addf %431, %432 : vector<16x128xf32>
    %434 = vector.extract_strided_slice %417 {offsets = [0, 256], sizes = [16, 128], strides = [1, 1]} : vector<16x512xf32> to vector<16x128xf32>
    %435 = math.tanh %434 : vector<16x128xf32>
    %436 = vector.extract_strided_slice %417 {offsets = [0, 384], sizes = [16, 128], strides = [1, 1]} : vector<16x512xf32> to vector<16x128xf32>
    %cst_180 = arith.constant 5.000000e-01 : f32
    %437 = vector.broadcast %cst_180 : f32 to vector<16x128xf32>
    %438 = arith.mulf %437, %436 : vector<16x128xf32>
    %439 = math.tanh %438 : vector<16x128xf32>
    %cst_181 = arith.constant 5.000000e-01 : f32
    %440 = vector.broadcast %cst_181 : f32 to vector<16x128xf32>
    %441 = arith.mulf %440, %439 : vector<16x128xf32>
    %cst_182 = arith.constant 5.000000e-01 : f32
    %442 = vector.broadcast %cst_182 : f32 to vector<16x128xf32>
    %443 = arith.addf %441, %442 : vector<16x128xf32>
    %444 = arith.mulf %433, %409 : vector<16x128xf32>
    %445 = arith.mulf %425, %435 : vector<16x128xf32>
    %446 = arith.addf %444, %445 : vector<16x128xf32>
    %447 = math.tanh %446 : vector<16x128xf32>
    %448 = arith.mulf %443, %447 : vector<16x128xf32>
    %c2_i32_183 = arith.constant 2 : i32
    %449 = arith.index_cast %c2_i32_183 : i32 to index
    %c0_184 = arith.constant 0 : index
    %c0_185 = arith.constant 0 : index
    %450 = vector.load %arg14[%449, %c0_184, %c0_185] : memref<8x16x512xf32, #tpu.memory_space<vmem>>, vector<1x16x512xf32>
    %451 = vector.shape_cast %450 : vector<1x16x512xf32> to vector<16x512xf32>
    %452 = arith.truncf %448 : vector<16x128xf32> to vector<16x128xbf16>
    %cst_186 = arith.constant dense<0.000000e+00> : vector<16x512xf32>
    %453 = tpu.matmul %452, %370, %cst_186 {dimension_numbers = #tpu.dot_dimension_numbers<[1], [0], [0], [1], [0, 0, 1, 1], [], []>} : vector<16x128xbf16>, vector<128x512xbf16>, vector<16x512xf32> -> vector<16x512xf32>
    %454 = arith.addf %451, %453 : vector<16x512xf32>
    %455 = vector.extract_strided_slice %454 {offsets = [0, 0], sizes = [16, 128], strides = [1, 1]} : vector<16x512xf32> to vector<16x128xf32>
    %cst_187 = arith.constant 5.000000e-01 : f32
    %456 = vector.broadcast %cst_187 : f32 to vector<16x128xf32>
    %457 = arith.mulf %456, %455 : vector<16x128xf32>
    %458 = math.tanh %457 : vector<16x128xf32>
    %cst_188 = arith.constant 5.000000e-01 : f32
    %459 = vector.broadcast %cst_188 : f32 to vector<16x128xf32>
    %460 = arith.mulf %459, %458 : vector<16x128xf32>
    %cst_189 = arith.constant 5.000000e-01 : f32
    %461 = vector.broadcast %cst_189 : f32 to vector<16x128xf32>
    %462 = arith.addf %460, %461 : vector<16x128xf32>
    %463 = vector.extract_strided_slice %454 {offsets = [0, 128], sizes = [16, 128], strides = [1, 1]} : vector<16x512xf32> to vector<16x128xf32>
    %cst_190 = arith.constant 5.000000e-01 : f32
    %464 = vector.broadcast %cst_190 : f32 to vector<16x128xf32>
    %465 = arith.mulf %464, %463 : vector<16x128xf32>
    %466 = math.tanh %465 : vector<16x128xf32>
    %cst_191 = arith.constant 5.000000e-01 : f32
    %467 = vector.broadcast %cst_191 : f32 to vector<16x128xf32>
    %468 = arith.mulf %467, %466 : vector<16x128xf32>
    %cst_192 = arith.constant 5.000000e-01 : f32
    %469 = vector.broadcast %cst_192 : f32 to vector<16x128xf32>
    %470 = arith.addf %468, %469 : vector<16x128xf32>
    %471 = vector.extract_strided_slice %454 {offsets = [0, 256], sizes = [16, 128], strides = [1, 1]} : vector<16x512xf32> to vector<16x128xf32>
    %472 = math.tanh %471 : vector<16x128xf32>
    %473 = vector.extract_strided_slice %454 {offsets = [0, 384], sizes = [16, 128], strides = [1, 1]} : vector<16x512xf32> to vector<16x128xf32>
    %cst_193 = arith.constant 5.000000e-01 : f32
    %474 = vector.broadcast %cst_193 : f32 to vector<16x128xf32>
    %475 = arith.mulf %474, %473 : vector<16x128xf32>
    %476 = math.tanh %475 : vector<16x128xf32>
    %cst_194 = arith.constant 5.000000e-01 : f32
    %477 = vector.broadcast %cst_194 : f32 to vector<16x128xf32>
    %478 = arith.mulf %477, %476 : vector<16x128xf32>
    %cst_195 = arith.constant 5.000000e-01 : f32
    %479 = vector.broadcast %cst_195 : f32 to vector<16x128xf32>
    %480 = arith.addf %478, %479 : vector<16x128xf32>
    %481 = arith.mulf %470, %446 : vector<16x128xf32>
    %482 = arith.mulf %462, %472 : vector<16x128xf32>
    %483 = arith.addf %481, %482 : vector<16x128xf32>
    %484 = math.tanh %483 : vector<16x128xf32>
    %485 = arith.mulf %480, %484 : vector<16x128xf32>
    %c3_i32_196 = arith.constant 3 : i32
    %486 = arith.index_cast %c3_i32_196 : i32 to index
    %c0_197 = arith.constant 0 : index
    %c0_198 = arith.constant 0 : index
    %487 = vector.load %arg14[%486, %c0_197, %c0_198] : memref<8x16x512xf32, #tpu.memory_space<vmem>>, vector<1x16x512xf32>
    %488 = vector.shape_cast %487 : vector<1x16x512xf32> to vector<16x512xf32>
    %489 = arith.truncf %485 : vector<16x128xf32> to vector<16x128xbf16>
    %cst_199 = arith.constant dense<0.000000e+00> : vector<16x512xf32>
    %490 = tpu.matmul %489, %370, %cst_199 {dimension_numbers = #tpu.dot_dimension_numbers<[1], [0], [0], [1], [0, 0, 1, 1], [], []>} : vector<16x128xbf16>, vector<128x512xbf16>, vector<16x512xf32> -> vector<16x512xf32>
    %491 = arith.addf %488, %490 : vector<16x512xf32>
    %492 = vector.extract_strided_slice %491 {offsets = [0, 0], sizes = [16, 128], strides = [1, 1]} : vector<16x512xf32> to vector<16x128xf32>
    %cst_200 = arith.constant 5.000000e-01 : f32
    %493 = vector.broadcast %cst_200 : f32 to vector<16x128xf32>
    %494 = arith.mulf %493, %492 : vector<16x128xf32>
    %495 = math.tanh %494 : vector<16x128xf32>
    %cst_201 = arith.constant 5.000000e-01 : f32
    %496 = vector.broadcast %cst_201 : f32 to vector<16x128xf32>
    %497 = arith.mulf %496, %495 : vector<16x128xf32>
    %cst_202 = arith.constant 5.000000e-01 : f32
    %498 = vector.broadcast %cst_202 : f32 to vector<16x128xf32>
    %499 = arith.addf %497, %498 : vector<16x128xf32>
    %500 = vector.extract_strided_slice %491 {offsets = [0, 128], sizes = [16, 128], strides = [1, 1]} : vector<16x512xf32> to vector<16x128xf32>
    %cst_203 = arith.constant 5.000000e-01 : f32
    %501 = vector.broadcast %cst_203 : f32 to vector<16x128xf32>
    %502 = arith.mulf %501, %500 : vector<16x128xf32>
    %503 = math.tanh %502 : vector<16x128xf32>
    %cst_204 = arith.constant 5.000000e-01 : f32
    %504 = vector.broadcast %cst_204 : f32 to vector<16x128xf32>
    %505 = arith.mulf %504, %503 : vector<16x128xf32>
    %cst_205 = arith.constant 5.000000e-01 : f32
    %506 = vector.broadcast %cst_205 : f32 to vector<16x128xf32>
    %507 = arith.addf %505, %506 : vector<16x128xf32>
    %508 = vector.extract_strided_slice %491 {offsets = [0, 256], sizes = [16, 128], strides = [1, 1]} : vector<16x512xf32> to vector<16x128xf32>
    %509 = math.tanh %508 : vector<16x128xf32>
    %510 = vector.extract_strided_slice %491 {offsets = [0, 384], sizes = [16, 128], strides = [1, 1]} : vector<16x512xf32> to vector<16x128xf32>
    %cst_206 = arith.constant 5.000000e-01 : f32
    %511 = vector.broadcast %cst_206 : f32 to vector<16x128xf32>
    %512 = arith.mulf %511, %510 : vector<16x128xf32>
    %513 = math.tanh %512 : vector<16x128xf32>
    %cst_207 = arith.constant 5.000000e-01 : f32
    %514 = vector.broadcast %cst_207 : f32 to vector<16x128xf32>
    %515 = arith.mulf %514, %513 : vector<16x128xf32>
    %cst_208 = arith.constant 5.000000e-01 : f32
    %516 = vector.broadcast %cst_208 : f32 to vector<16x128xf32>
    %517 = arith.addf %515, %516 : vector<16x128xf32>
    %518 = arith.mulf %507, %483 : vector<16x128xf32>
    %519 = arith.mulf %499, %509 : vector<16x128xf32>
    %520 = arith.addf %518, %519 : vector<16x128xf32>
    %521 = math.tanh %520 : vector<16x128xf32>
    %522 = arith.mulf %517, %521 : vector<16x128xf32>
    %c4_i32_209 = arith.constant 4 : i32
    %523 = arith.index_cast %c4_i32_209 : i32 to index
    %c0_210 = arith.constant 0 : index
    %c0_211 = arith.constant 0 : index
    %524 = vector.load %arg14[%523, %c0_210, %c0_211] : memref<8x16x512xf32, #tpu.memory_space<vmem>>, vector<1x16x512xf32>
    %525 = vector.shape_cast %524 : vector<1x16x512xf32> to vector<16x512xf32>
    %526 = arith.truncf %522 : vector<16x128xf32> to vector<16x128xbf16>
    %cst_212 = arith.constant dense<0.000000e+00> : vector<16x512xf32>
    %527 = tpu.matmul %526, %370, %cst_212 {dimension_numbers = #tpu.dot_dimension_numbers<[1], [0], [0], [1], [0, 0, 1, 1], [], []>} : vector<16x128xbf16>, vector<128x512xbf16>, vector<16x512xf32> -> vector<16x512xf32>
    %528 = arith.addf %525, %527 : vector<16x512xf32>
    %529 = vector.extract_strided_slice %528 {offsets = [0, 0], sizes = [16, 128], strides = [1, 1]} : vector<16x512xf32> to vector<16x128xf32>
    %cst_213 = arith.constant 5.000000e-01 : f32
    %530 = vector.broadcast %cst_213 : f32 to vector<16x128xf32>
    %531 = arith.mulf %530, %529 : vector<16x128xf32>
    %532 = math.tanh %531 : vector<16x128xf32>
    %cst_214 = arith.constant 5.000000e-01 : f32
    %533 = vector.broadcast %cst_214 : f32 to vector<16x128xf32>
    %534 = arith.mulf %533, %532 : vector<16x128xf32>
    %cst_215 = arith.constant 5.000000e-01 : f32
    %535 = vector.broadcast %cst_215 : f32 to vector<16x128xf32>
    %536 = arith.addf %534, %535 : vector<16x128xf32>
    %537 = vector.extract_strided_slice %528 {offsets = [0, 128], sizes = [16, 128], strides = [1, 1]} : vector<16x512xf32> to vector<16x128xf32>
    %cst_216 = arith.constant 5.000000e-01 : f32
    %538 = vector.broadcast %cst_216 : f32 to vector<16x128xf32>
    %539 = arith.mulf %538, %537 : vector<16x128xf32>
    %540 = math.tanh %539 : vector<16x128xf32>
    %cst_217 = arith.constant 5.000000e-01 : f32
    %541 = vector.broadcast %cst_217 : f32 to vector<16x128xf32>
    %542 = arith.mulf %541, %540 : vector<16x128xf32>
    %cst_218 = arith.constant 5.000000e-01 : f32
    %543 = vector.broadcast %cst_218 : f32 to vector<16x128xf32>
    %544 = arith.addf %542, %543 : vector<16x128xf32>
    %545 = vector.extract_strided_slice %528 {offsets = [0, 256], sizes = [16, 128], strides = [1, 1]} : vector<16x512xf32> to vector<16x128xf32>
    %546 = math.tanh %545 : vector<16x128xf32>
    %547 = vector.extract_strided_slice %528 {offsets = [0, 384], sizes = [16, 128], strides = [1, 1]} : vector<16x512xf32> to vector<16x128xf32>
    %cst_219 = arith.constant 5.000000e-01 : f32
    %548 = vector.broadcast %cst_219 : f32 to vector<16x128xf32>
    %549 = arith.mulf %548, %547 : vector<16x128xf32>
    %550 = math.tanh %549 : vector<16x128xf32>
    %cst_220 = arith.constant 5.000000e-01 : f32
    %551 = vector.broadcast %cst_220 : f32 to vector<16x128xf32>
    %552 = arith.mulf %551, %550 : vector<16x128xf32>
    %cst_221 = arith.constant 5.000000e-01 : f32
    %553 = vector.broadcast %cst_221 : f32 to vector<16x128xf32>
    %554 = arith.addf %552, %553 : vector<16x128xf32>
    %555 = arith.mulf %544, %520 : vector<16x128xf32>
    %556 = arith.mulf %536, %546 : vector<16x128xf32>
    %557 = arith.addf %555, %556 : vector<16x128xf32>
    %558 = math.tanh %557 : vector<16x128xf32>
    %559 = arith.mulf %554, %558 : vector<16x128xf32>
    %c5_i32_222 = arith.constant 5 : i32
    %560 = arith.index_cast %c5_i32_222 : i32 to index
    %c0_223 = arith.constant 0 : index
    %c0_224 = arith.constant 0 : index
    %561 = vector.load %arg14[%560, %c0_223, %c0_224] : memref<8x16x512xf32, #tpu.memory_space<vmem>>, vector<1x16x512xf32>
    %562 = vector.shape_cast %561 : vector<1x16x512xf32> to vector<16x512xf32>
    %563 = arith.truncf %559 : vector<16x128xf32> to vector<16x128xbf16>
    %cst_225 = arith.constant dense<0.000000e+00> : vector<16x512xf32>
    %564 = tpu.matmul %563, %370, %cst_225 {dimension_numbers = #tpu.dot_dimension_numbers<[1], [0], [0], [1], [0, 0, 1, 1], [], []>} : vector<16x128xbf16>, vector<128x512xbf16>, vector<16x512xf32> -> vector<16x512xf32>
    %565 = arith.addf %562, %564 : vector<16x512xf32>
    %566 = vector.extract_strided_slice %565 {offsets = [0, 0], sizes = [16, 128], strides = [1, 1]} : vector<16x512xf32> to vector<16x128xf32>
    %cst_226 = arith.constant 5.000000e-01 : f32
    %567 = vector.broadcast %cst_226 : f32 to vector<16x128xf32>
    %568 = arith.mulf %567, %566 : vector<16x128xf32>
    %569 = math.tanh %568 : vector<16x128xf32>
    %cst_227 = arith.constant 5.000000e-01 : f32
    %570 = vector.broadcast %cst_227 : f32 to vector<16x128xf32>
    %571 = arith.mulf %570, %569 : vector<16x128xf32>
    %cst_228 = arith.constant 5.000000e-01 : f32
    %572 = vector.broadcast %cst_228 : f32 to vector<16x128xf32>
    %573 = arith.addf %571, %572 : vector<16x128xf32>
    %574 = vector.extract_strided_slice %565 {offsets = [0, 128], sizes = [16, 128], strides = [1, 1]} : vector<16x512xf32> to vector<16x128xf32>
    %cst_229 = arith.constant 5.000000e-01 : f32
    %575 = vector.broadcast %cst_229 : f32 to vector<16x128xf32>
    %576 = arith.mulf %575, %574 : vector<16x128xf32>
    %577 = math.tanh %576 : vector<16x128xf32>
    %cst_230 = arith.constant 5.000000e-01 : f32
    %578 = vector.broadcast %cst_230 : f32 to vector<16x128xf32>
    %579 = arith.mulf %578, %577 : vector<16x128xf32>
    %cst_231 = arith.constant 5.000000e-01 : f32
    %580 = vector.broadcast %cst_231 : f32 to vector<16x128xf32>
    %581 = arith.addf %579, %580 : vector<16x128xf32>
    %582 = vector.extract_strided_slice %565 {offsets = [0, 256], sizes = [16, 128], strides = [1, 1]} : vector<16x512xf32> to vector<16x128xf32>
    %583 = math.tanh %582 : vector<16x128xf32>
    %584 = vector.extract_strided_slice %565 {offsets = [0, 384], sizes = [16, 128], strides = [1, 1]} : vector<16x512xf32> to vector<16x128xf32>
    %cst_232 = arith.constant 5.000000e-01 : f32
    %585 = vector.broadcast %cst_232 : f32 to vector<16x128xf32>
    %586 = arith.mulf %585, %584 : vector<16x128xf32>
    %587 = math.tanh %586 : vector<16x128xf32>
    %cst_233 = arith.constant 5.000000e-01 : f32
    %588 = vector.broadcast %cst_233 : f32 to vector<16x128xf32>
    %589 = arith.mulf %588, %587 : vector<16x128xf32>
    %cst_234 = arith.constant 5.000000e-01 : f32
    %590 = vector.broadcast %cst_234 : f32 to vector<16x128xf32>
    %591 = arith.addf %589, %590 : vector<16x128xf32>
    %592 = arith.mulf %581, %557 : vector<16x128xf32>
    %593 = arith.mulf %573, %583 : vector<16x128xf32>
    %594 = arith.addf %592, %593 : vector<16x128xf32>
    %595 = math.tanh %594 : vector<16x128xf32>
    %596 = arith.mulf %591, %595 : vector<16x128xf32>
    %c6_i32_235 = arith.constant 6 : i32
    %597 = arith.index_cast %c6_i32_235 : i32 to index
    %c0_236 = arith.constant 0 : index
    %c0_237 = arith.constant 0 : index
    %598 = vector.load %arg14[%597, %c0_236, %c0_237] : memref<8x16x512xf32, #tpu.memory_space<vmem>>, vector<1x16x512xf32>
    %599 = vector.shape_cast %598 : vector<1x16x512xf32> to vector<16x512xf32>
    %600 = arith.truncf %596 : vector<16x128xf32> to vector<16x128xbf16>
    %cst_238 = arith.constant dense<0.000000e+00> : vector<16x512xf32>
    %601 = tpu.matmul %600, %370, %cst_238 {dimension_numbers = #tpu.dot_dimension_numbers<[1], [0], [0], [1], [0, 0, 1, 1], [], []>} : vector<16x128xbf16>, vector<128x512xbf16>, vector<16x512xf32> -> vector<16x512xf32>
    %602 = arith.addf %599, %601 : vector<16x512xf32>
    %603 = vector.extract_strided_slice %602 {offsets = [0, 0], sizes = [16, 128], strides = [1, 1]} : vector<16x512xf32> to vector<16x128xf32>
    %cst_239 = arith.constant 5.000000e-01 : f32
    %604 = vector.broadcast %cst_239 : f32 to vector<16x128xf32>
    %605 = arith.mulf %604, %603 : vector<16x128xf32>
    %606 = math.tanh %605 : vector<16x128xf32>
    %cst_240 = arith.constant 5.000000e-01 : f32
    %607 = vector.broadcast %cst_240 : f32 to vector<16x128xf32>
    %608 = arith.mulf %607, %606 : vector<16x128xf32>
    %cst_241 = arith.constant 5.000000e-01 : f32
    %609 = vector.broadcast %cst_241 : f32 to vector<16x128xf32>
    %610 = arith.addf %608, %609 : vector<16x128xf32>
    %611 = vector.extract_strided_slice %602 {offsets = [0, 128], sizes = [16, 128], strides = [1, 1]} : vector<16x512xf32> to vector<16x128xf32>
    %cst_242 = arith.constant 5.000000e-01 : f32
    %612 = vector.broadcast %cst_242 : f32 to vector<16x128xf32>
    %613 = arith.mulf %612, %611 : vector<16x128xf32>
    %614 = math.tanh %613 : vector<16x128xf32>
    %cst_243 = arith.constant 5.000000e-01 : f32
    %615 = vector.broadcast %cst_243 : f32 to vector<16x128xf32>
    %616 = arith.mulf %615, %614 : vector<16x128xf32>
    %cst_244 = arith.constant 5.000000e-01 : f32
    %617 = vector.broadcast %cst_244 : f32 to vector<16x128xf32>
    %618 = arith.addf %616, %617 : vector<16x128xf32>
    %619 = vector.extract_strided_slice %602 {offsets = [0, 256], sizes = [16, 128], strides = [1, 1]} : vector<16x512xf32> to vector<16x128xf32>
    %620 = math.tanh %619 : vector<16x128xf32>
    %621 = vector.extract_strided_slice %602 {offsets = [0, 384], sizes = [16, 128], strides = [1, 1]} : vector<16x512xf32> to vector<16x128xf32>
    %cst_245 = arith.constant 5.000000e-01 : f32
    %622 = vector.broadcast %cst_245 : f32 to vector<16x128xf32>
    %623 = arith.mulf %622, %621 : vector<16x128xf32>
    %624 = math.tanh %623 : vector<16x128xf32>
    %cst_246 = arith.constant 5.000000e-01 : f32
    %625 = vector.broadcast %cst_246 : f32 to vector<16x128xf32>
    %626 = arith.mulf %625, %624 : vector<16x128xf32>
    %cst_247 = arith.constant 5.000000e-01 : f32
    %627 = vector.broadcast %cst_247 : f32 to vector<16x128xf32>
    %628 = arith.addf %626, %627 : vector<16x128xf32>
    %629 = arith.mulf %618, %594 : vector<16x128xf32>
    %630 = arith.mulf %610, %620 : vector<16x128xf32>
    %631 = arith.addf %629, %630 : vector<16x128xf32>
    %632 = math.tanh %631 : vector<16x128xf32>
    %633 = arith.mulf %628, %632 : vector<16x128xf32>
    %c7_i32_248 = arith.constant 7 : i32
    %634 = arith.index_cast %c7_i32_248 : i32 to index
    %c0_249 = arith.constant 0 : index
    %c0_250 = arith.constant 0 : index
    %635 = vector.load %arg14[%634, %c0_249, %c0_250] : memref<8x16x512xf32, #tpu.memory_space<vmem>>, vector<1x16x512xf32>
    %636 = vector.shape_cast %635 : vector<1x16x512xf32> to vector<16x512xf32>
    %637 = arith.truncf %633 : vector<16x128xf32> to vector<16x128xbf16>
    %cst_251 = arith.constant dense<0.000000e+00> : vector<16x512xf32>
    %638 = tpu.matmul %637, %370, %cst_251 {dimension_numbers = #tpu.dot_dimension_numbers<[1], [0], [0], [1], [0, 0, 1, 1], [], []>} : vector<16x128xbf16>, vector<128x512xbf16>, vector<16x512xf32> -> vector<16x512xf32>
    %639 = arith.addf %636, %638 : vector<16x512xf32>
    %640 = vector.extract_strided_slice %639 {offsets = [0, 0], sizes = [16, 128], strides = [1, 1]} : vector<16x512xf32> to vector<16x128xf32>
    %cst_252 = arith.constant 5.000000e-01 : f32
    %641 = vector.broadcast %cst_252 : f32 to vector<16x128xf32>
    %642 = arith.mulf %641, %640 : vector<16x128xf32>
    %643 = math.tanh %642 : vector<16x128xf32>
    %cst_253 = arith.constant 5.000000e-01 : f32
    %644 = vector.broadcast %cst_253 : f32 to vector<16x128xf32>
    %645 = arith.mulf %644, %643 : vector<16x128xf32>
    %cst_254 = arith.constant 5.000000e-01 : f32
    %646 = vector.broadcast %cst_254 : f32 to vector<16x128xf32>
    %647 = arith.addf %645, %646 : vector<16x128xf32>
    %648 = vector.extract_strided_slice %639 {offsets = [0, 128], sizes = [16, 128], strides = [1, 1]} : vector<16x512xf32> to vector<16x128xf32>
    %cst_255 = arith.constant 5.000000e-01 : f32
    %649 = vector.broadcast %cst_255 : f32 to vector<16x128xf32>
    %650 = arith.mulf %649, %648 : vector<16x128xf32>
    %651 = math.tanh %650 : vector<16x128xf32>
    %cst_256 = arith.constant 5.000000e-01 : f32
    %652 = vector.broadcast %cst_256 : f32 to vector<16x128xf32>
    %653 = arith.mulf %652, %651 : vector<16x128xf32>
    %cst_257 = arith.constant 5.000000e-01 : f32
    %654 = vector.broadcast %cst_257 : f32 to vector<16x128xf32>
    %655 = arith.addf %653, %654 : vector<16x128xf32>
    %656 = vector.extract_strided_slice %639 {offsets = [0, 256], sizes = [16, 128], strides = [1, 1]} : vector<16x512xf32> to vector<16x128xf32>
    %657 = math.tanh %656 : vector<16x128xf32>
    %658 = vector.extract_strided_slice %639 {offsets = [0, 384], sizes = [16, 128], strides = [1, 1]} : vector<16x512xf32> to vector<16x128xf32>
    %cst_258 = arith.constant 5.000000e-01 : f32
    %659 = vector.broadcast %cst_258 : f32 to vector<16x128xf32>
    %660 = arith.mulf %659, %658 : vector<16x128xf32>
    %661 = math.tanh %660 : vector<16x128xf32>
    %cst_259 = arith.constant 5.000000e-01 : f32
    %662 = vector.broadcast %cst_259 : f32 to vector<16x128xf32>
    %663 = arith.mulf %662, %661 : vector<16x128xf32>
    %cst_260 = arith.constant 5.000000e-01 : f32
    %664 = vector.broadcast %cst_260 : f32 to vector<16x128xf32>
    %665 = arith.addf %663, %664 : vector<16x128xf32>
    %666 = arith.mulf %655, %631 : vector<16x128xf32>
    %667 = arith.mulf %647, %657 : vector<16x128xf32>
    %668 = arith.addf %666, %667 : vector<16x128xf32>
    %669 = math.tanh %668 : vector<16x128xf32>
    %670 = arith.mulf %665, %669 : vector<16x128xf32>
    %c8_i32_261 = arith.constant 8 : i32
    %c1_262 = arith.constant 1 : index
    %c0_263 = arith.constant 0 : index
    %c0_264 = arith.constant 0 : index
    %671 = vector.load %arg11[%c1_262, %c0_263, %c0_264] : memref<2x16x128xf32, #tpu.memory_space<vmem>>, vector<1x16x128xf32>
    %672 = vector.shape_cast %671 : vector<1x16x128xf32> to vector<16x128xf32>
    %673 = vector.shape_cast %670 : vector<16x128xf32> to vector<1x16x128xf32>
    tpu.vector_store %arg11[%c1_262, %c0_263, %c0_264], %673 {strides = array<i32>} : memref<2x16x128xf32, #tpu.memory_space<vmem>>, vector<1x16x128xf32>,
    %c1_265 = arith.constant 1 : index
    %c0_266 = arith.constant 0 : index
    %c0_267 = arith.constant 0 : index
    %674 = vector.load %arg12[%c1_265, %c0_266, %c0_267] : memref<2x16x128xf32, #tpu.memory_space<vmem>>, vector<1x16x128xf32>
    %675 = vector.shape_cast %674 : vector<1x16x128xf32> to vector<16x128xf32>
    %676 = vector.shape_cast %668 : vector<16x128xf32> to vector<1x16x128xf32>
    tpu.vector_store %arg12[%c1_265, %c0_266, %c0_267], %676 {strides = array<i32>} : memref<2x16x128xf32, #tpu.memory_space<vmem>>, vector<1x16x128xf32>,
    %c0_i32_268 = arith.constant 0 : i32
    %677 = arith.cmpi eq, %arg1, %c0_i32_268 : i32
    %678 = arith.extui %677 : i1 to i32
    %c0_i32_269 = arith.constant 0 : i32
    %679 = arith.cmpi ne, %678, %c0_i32_269 : i32
    scf.if %679 {
      %c1_270 = arith.constant 1 : index
      %c0_271 = arith.constant 0 : index
      %c0_272 = arith.constant 0 : index
      %680 = vector.load %arg11[%c1_270, %c0_271, %c0_272] : memref<2x16x128xf32, #tpu.memory_space<vmem>>, vector<1x16x128xf32>
      %681 = vector.shape_cast %680 : vector<1x16x128xf32> to vector<16x128xf32>
      %c0_273 = arith.constant 0 : index
      %c0_274 = arith.constant 0 : index
      %682 = vector.load %arg8[%c0_273, %c0_274] : memref<128x128xf32, #tpu.memory_space<vmem>>, vector<128x128xf32>
      %cst_275 = arith.constant dense<0.000000e+00> : vector<16x128xf32>
      %683 = tpu.matmul %681, %682, %cst_275 {dimension_numbers = #tpu.dot_dimension_numbers<[1], [0], [0], [1], [0, 0, 1, 1], [], []>} : vector<16x128xf32>, vector<128x128xf32>, vector<16x128xf32> -> vector<16x128xf32>
      %c0_276 = arith.constant 0 : index
      %c0_277 = arith.constant 0 : index
      %684 = vector.load %arg9[%c0_276, %c0_277] : memref<1x128xf32, #tpu.memory_space<vmem>>, vector<1x128xf32>
      %685 = vector.broadcast %684 : vector<1x128xf32> to vector<16x128xf32>
      %686 = arith.addf %683, %685 : vector<16x128xf32>
      %c0_278 = arith.constant 0 : index
      %c0_279 = arith.constant 0 : index
      %687 = vector.load %arg10[%c0_278, %c0_279] : memref<16x128xf32, #tpu.memory_space<vmem>>, vector<16x128xf32>
      tpu.vector_store %arg10[%c0_278, %c0_279], %686 {strides = array<i32>} : memref<16x128xf32, #tpu.memory_space<vmem>>, vector<16x128xf32>,
    } else {
    }
    return
  }
  func.func @transform_0(%arg0: i32, %arg1: i32) -> (i32, i32, i32) {
    %c0_i32 = arith.constant 0 : i32
    %c0_i32_0 = arith.constant 0 : i32
    return %arg1, %arg0, %c0_i32 : i32, i32, i32
  }
  func.func @transform_1(%arg0: i32, %arg1: i32) -> (i32, i32) {
    %c0_i32 = arith.constant 0 : i32
    %c0_i32_0 = arith.constant 0 : i32
    %c0_i32_1 = arith.constant 0 : i32
    return %c0_i32, %c0_i32_0 : i32, i32
  }
  func.func @transform_2(%arg0: i32, %arg1: i32) -> (i32, i32) {
    %c0_i32 = arith.constant 0 : i32
    %c0_i32_0 = arith.constant 0 : i32
    %c0_i32_1 = arith.constant 0 : i32
    return %c0_i32, %c0_i32_0 : i32, i32
  }
  func.func @transform_3(%arg0: i32, %arg1: i32) -> (i32, i32) {
    %c0_i32 = arith.constant 0 : i32
    %c0_i32_0 = arith.constant 0 : i32
    %c0_i32_1 = arith.constant 0 : i32
    return %c0_i32, %c0_i32_0 : i32, i32
  }
  func.func @transform_4(%arg0: i32, %arg1: i32) -> (i32, i32) {
    %c0_i32 = arith.constant 0 : i32
    %c0_i32_0 = arith.constant 0 : i32
    %c0_i32_1 = arith.constant 0 : i32
    return %c0_i32, %c0_i32_0 : i32, i32
  }
  func.func @transform_5(%arg0: i32, %arg1: i32) -> (i32, i32, i32) {
    %c0_i32 = arith.constant 0 : i32
    %c0_i32_0 = arith.constant 0 : i32
    %c0_i32_1 = arith.constant 0 : i32
    %c0_i32_2 = arith.constant 0 : i32
    return %c0_i32, %c0_i32_0, %c0_i32_1 : i32, i32, i32
  }
  func.func @transform_6(%arg0: i32, %arg1: i32) -> (i32, i32) {
    %c0_i32 = arith.constant 0 : i32
    %c0_i32_0 = arith.constant 0 : i32
    %c0_i32_1 = arith.constant 0 : i32
    return %c0_i32, %c0_i32_0 : i32, i32
  }
  func.func @transform_7(%arg0: i32, %arg1: i32) -> (i32, i32) {
    %c0_i32 = arith.constant 0 : i32
    %c0_i32_0 = arith.constant 0 : i32
    %c0_i32_1 = arith.constant 0 : i32
    return %c0_i32, %c0_i32_0 : i32, i32
  }
  func.func @transform_8(%arg0: i32, %arg1: i32) -> (i32, i32) {
    %c0_i32 = arith.constant 0 : i32
    %c0_i32_0 = arith.constant 0 : i32
    return %arg0, %c0_i32 : i32, i32
  }
}

module attributes {stable_mosaic.version = 11 : i64} {
  func.func @kernel(%arg0: i32, %arg1: i32, %arg2: memref<8x16x128xbf16, #tpu.memory_space<vmem>>, %arg3: memref<128x512xbf16, #tpu.memory_space<vmem>>, %arg4: memref<128x512xbf16, #tpu.memory_space<vmem>>, %arg5: memref<128x512xbf16, #tpu.memory_space<vmem>>, %arg6: memref<128x512xbf16, #tpu.memory_space<vmem>>, %arg7: memref<2x1x512xf32, #tpu.memory_space<vmem>>, %arg8: memref<128x128xf32, #tpu.memory_space<vmem>>, %arg9: memref<1x128xf32, #tpu.memory_space<vmem>>, %arg10: memref<16x128xf32, #tpu.memory_space<vmem>>, %arg11: memref<2x16x128xf32, #tpu.memory_space<vmem>>, %arg12: memref<2x16x128xf32, #tpu.memory_space<vmem>>, %arg13: memref<8x16x128xbf16, #tpu.memory_space<vmem>>, %arg14: memref<8x16x512xf32, #tpu.memory_space<vmem>>) attributes {dimension_semantics = [#tpu.dimension_semantics<parallel>, #tpu.dimension_semantics<arbitrary>], iteration_bounds = array<i64: 1, 1>, scalar_prefetch = 0 : i64, scratch_operands = 4 : i64, tpu.core_type = #tpu.core_type<tc>, window_params = [{transform_indices = @transform_0, window_bounds = array<i64: 8, 16, 128>}, {pipeline_mode = #tpu.pipeline_mode<synchronous>, transform_indices = @transform_1, window_bounds = array<i64: 128, 512>}, {pipeline_mode = #tpu.pipeline_mode<synchronous>, transform_indices = @transform_2, window_bounds = array<i64: 128, 512>}, {pipeline_mode = #tpu.pipeline_mode<synchronous>, transform_indices = @transform_3, window_bounds = array<i64: 128, 512>}, {pipeline_mode = #tpu.pipeline_mode<synchronous>, transform_indices = @transform_4, window_bounds = array<i64: 128, 512>}, {pipeline_mode = #tpu.pipeline_mode<synchronous>, transform_indices = @transform_5, window_bounds = array<i64: 2, 1, 512>}, {pipeline_mode = #tpu.pipeline_mode<synchronous>, transform_indices = @transform_6, window_bounds = array<i64: 128, 128>}, {pipeline_mode = #tpu.pipeline_mode<synchronous>, transform_indices = @transform_7, window_bounds = array<i64: 1, 128>}, {transform_indices = @transform_8, window_bounds = array<i64: 16, 128>}]} {
    %c0_i32 = arith.constant 0 : i32
    %0 = arith.cmpi eq, %arg1, %c0_i32 : i32
    %1 = arith.extui %0 : i1 to i32
    %c0_i32_0 = arith.constant 0 : i32
    %2 = arith.cmpi ne, %1, %c0_i32_0 : i32
    scf.if %2 {
      %cst_270 = arith.constant 0.000000e+00 : f32
      %680 = vector.broadcast %cst_270 : f32 to vector<2x16x128xf32>
      %c0_271 = arith.constant 0 : index
      %c0_272 = arith.constant 0 : index
      %c0_273 = arith.constant 0 : index
      %681 = vector.load %arg11[%c0_271, %c0_272, %c0_273] : memref<2x16x128xf32, #tpu.memory_space<vmem>>, vector<2x16x128xf32>
      tpu.vector_store %arg11[%c0_271, %c0_272, %c0_273], %680 {strides = array<i32>} : memref<2x16x128xf32, #tpu.memory_space<vmem>>, vector<2x16x128xf32>,
      %cst_274 = arith.constant 0.000000e+00 : f32
      %682 = vector.broadcast %cst_274 : f32 to vector<2x16x128xf32>
      %c0_275 = arith.constant 0 : index
      %c0_276 = arith.constant 0 : index
      %c0_277 = arith.constant 0 : index
      %683 = vector.load %arg12[%c0_275, %c0_276, %c0_277] : memref<2x16x128xf32, #tpu.memory_space<vmem>>, vector<2x16x128xf32>
      tpu.vector_store %arg12[%c0_275, %c0_276, %c0_277], %682 {strides = array<i32>} : memref<2x16x128xf32, #tpu.memory_space<vmem>>, vector<2x16x128xf32>,
    } else {
    }
    %c0 = arith.constant 0 : index
    %c0_1 = arith.constant 0 : index
    %c0_2 = arith.constant 0 : index
    %3 = vector.load %arg2[%c0, %c0_1, %c0_2] : memref<8x16x128xbf16, #tpu.memory_space<vmem>>, vector<8x16x128xbf16>
    %4 = vector.shape_cast %3 : vector<8x16x128xbf16> to vector<128x128xbf16>
    %c0_3 = arith.constant 0 : index
    %c0_4 = arith.constant 0 : index
    %5 = vector.load %arg3[%c0_3, %c0_4] : memref<128x512xbf16, #tpu.memory_space<vmem>>, vector<128x512xbf16>
    %cst = arith.constant dense<0.000000e+00> : vector<128x512xf32>
    %6 = tpu.matmul %4, %5, %cst {dimension_numbers = #tpu.dot_dimension_numbers<[1], [0], [0], [1], [0, 0, 1, 1], [], []>} : vector<128x128xbf16>, vector<128x512xbf16>, vector<128x512xf32> -> vector<128x512xf32>
    %c0_5 = arith.constant 0 : index
    %c0_6 = arith.constant 0 : index
    %c0_7 = arith.constant 0 : index
    %7 = vector.load %arg7[%c0_5, %c0_6, %c0_7] : memref<2x1x512xf32, #tpu.memory_space<vmem>>, vector<1x1x512xf32>
    %8 = vector.shape_cast %7 : vector<1x1x512xf32> to vector<1x512xf32>
    %9 = vector.broadcast %8 : vector<1x512xf32> to vector<128x512xf32>
    %10 = arith.addf %6, %9 : vector<128x512xf32>
    %11 = vector.shape_cast %10 : vector<128x512xf32> to vector<8x16x512xf32>
    %c0_8 = arith.constant 0 : index
    %c0_9 = arith.constant 0 : index
    %c0_10 = arith.constant 0 : index
    %12 = vector.load %arg14[%c0_8, %c0_9, %c0_10] : memref<8x16x512xf32, #tpu.memory_space<vmem>>, vector<8x16x512xf32>
    tpu.vector_store %arg14[%c0_8, %c0_9, %c0_10], %11 {strides = array<i32>} : memref<8x16x512xf32, #tpu.memory_space<vmem>>, vector<8x16x512xf32>,
    %c0_11 = arith.constant 0 : index
    %c0_12 = arith.constant 0 : index
    %13 = vector.load %arg5[%c0_11, %c0_12] : memref<128x512xbf16, #tpu.memory_space<vmem>>, vector<128x512xbf16>
    %c0_13 = arith.constant 0 : index
    %c0_14 = arith.constant 0 : index
    %c0_15 = arith.constant 0 : index
    %14 = vector.load %arg11[%c0_13, %c0_14, %c0_15] : memref<2x16x128xf32, #tpu.memory_space<vmem>>, vector<1x16x128xf32>
    %15 = vector.shape_cast %14 : vector<1x16x128xf32> to vector<16x128xf32>
    %c0_16 = arith.constant 0 : index
    %c0_17 = arith.constant 0 : index
    %c0_18 = arith.constant 0 : index
    %16 = vector.load %arg12[%c0_16, %c0_17, %c0_18] : memref<2x16x128xf32, #tpu.memory_space<vmem>>, vector<1x16x128xf32>
    %17 = vector.shape_cast %16 : vector<1x16x128xf32> to vector<16x128xf32>
    %c0_i32_19 = arith.constant 0 : i32
    %18 = arith.index_cast %c0_i32_19 : i32 to index
    %c0_20 = arith.constant 0 : index
    %c0_21 = arith.constant 0 : index
    %19 = vector.load %arg14[%18, %c0_20, %c0_21] : memref<8x16x512xf32, #tpu.memory_space<vmem>>, vector<1x16x512xf32>
    %20 = vector.shape_cast %19 : vector<1x16x512xf32> to vector<16x512xf32>
    %21 = arith.truncf %15 : vector<16x128xf32> to vector<16x128xbf16>
    %cst_22 = arith.constant dense<0.000000e+00> : vector<16x512xf32>
    %22 = tpu.matmul %21, %13, %cst_22 {dimension_numbers = #tpu.dot_dimension_numbers<[1], [0], [0], [1], [0, 0, 1, 1], [], []>} : vector<16x128xbf16>, vector<128x512xbf16>, vector<16x512xf32> -> vector<16x512xf32>
    %23 = arith.addf %20, %22 : vector<16x512xf32>
    %24 = vector.extract_strided_slice %23 {offsets = [0, 0], sizes = [16, 128], strides = [1, 1]} : vector<16x512xf32> to vector<16x128xf32>
    %cst_23 = arith.constant 5.000000e-01 : f32
    %25 = vector.broadcast %cst_23 : f32 to vector<16x128xf32>
    %26 = arith.mulf %25, %24 : vector<16x128xf32>
    %27 = math.tanh %26 : vector<16x128xf32>
    %cst_24 = arith.constant 5.000000e-01 : f32
    %28 = vector.broadcast %cst_24 : f32 to vector<16x128xf32>
    %29 = arith.mulf %28, %27 : vector<16x128xf32>
    %cst_25 = arith.constant 5.000000e-01 : f32
    %30 = vector.broadcast %cst_25 : f32 to vector<16x128xf32>
    %31 = arith.addf %29, %30 : vector<16x128xf32>
    %32 = vector.extract_strided_slice %23 {offsets = [0, 128], sizes = [16, 128], strides = [1, 1]} : vector<16x512xf32> to vector<16x128xf32>
    %cst_26 = arith.constant 5.000000e-01 : f32
    %33 = vector.broadcast %cst_26 : f32 to vector<16x128xf32>
    %34 = arith.mulf %33, %32 : vector<16x128xf32>
    %35 = math.tanh %34 : vector<16x128xf32>
    %cst_27 = arith.constant 5.000000e-01 : f32
    %36 = vector.broadcast %cst_27 : f32 to vector<16x128xf32>
    %37 = arith.mulf %36, %35 : vector<16x128xf32>
    %cst_28 = arith.constant 5.000000e-01 : f32
    %38 = vector.broadcast %cst_28 : f32 to vector<16x128xf32>
    %39 = arith.addf %37, %38 : vector<16x128xf32>
    %40 = vector.extract_strided_slice %23 {offsets = [0, 256], sizes = [16, 128], strides = [1, 1]} : vector<16x512xf32> to vector<16x128xf32>
    %41 = math.tanh %40 : vector<16x128xf32>
    %42 = vector.extract_strided_slice %23 {offsets = [0, 384], sizes = [16, 128], strides = [1, 1]} : vector<16x512xf32> to vector<16x128xf32>
    %cst_29 = arith.constant 5.000000e-01 : f32
    %43 = vector.broadcast %cst_29 : f32 to vector<16x128xf32>
    %44 = arith.mulf %43, %42 : vector<16x128xf32>
    %45 = math.tanh %44 : vector<16x128xf32>
    %cst_30 = arith.constant 5.000000e-01 : f32
    %46 = vector.broadcast %cst_30 : f32 to vector<16x128xf32>
    %47 = arith.mulf %46, %45 : vector<16x128xf32>
    %cst_31 = arith.constant 5.000000e-01 : f32
    %48 = vector.broadcast %cst_31 : f32 to vector<16x128xf32>
    %49 = arith.addf %47, %48 : vector<16x128xf32>
    %50 = arith.mulf %39, %17 : vector<16x128xf32>
    %51 = arith.mulf %31, %41 : vector<16x128xf32>
    %52 = arith.addf %50, %51 : vector<16x128xf32>
    %53 = math.tanh %52 : vector<16x128xf32>
    %54 = arith.mulf %49, %53 : vector<16x128xf32>
    %55 = arith.truncf %54 : vector<16x128xf32> to vector<16x128xbf16>
    %56 = arith.index_cast %c0_i32_19 : i32 to index
    %c0_32 = arith.constant 0 : index
    %c0_33 = arith.constant 0 : index
    %57 = vector.load %arg13[%56, %c0_32, %c0_33] : memref<8x16x128xbf16, #tpu.memory_space<vmem>>, vector<1x16x128xbf16>
    %58 = vector.shape_cast %57 : vector<1x16x128xbf16> to vector<16x128xbf16>
    %59 = vector.shape_cast %55 : vector<16x128xbf16> to vector<1x16x128xbf16>
    tpu.vector_store %arg13[%56, %c0_32, %c0_33], %59 {strides = array<i32>} : memref<8x16x128xbf16, #tpu.memory_space<vmem>>, vector<1x16x128xbf16>,
    %c1_i32 = arith.constant 1 : i32
    %60 = arith.index_cast %c1_i32 : i32 to index
    %c0_34 = arith.constant 0 : index
    %c0_35 = arith.constant 0 : index
    %61 = vector.load %arg14[%60, %c0_34, %c0_35] : memref<8x16x512xf32, #tpu.memory_space<vmem>>, vector<1x16x512xf32>
    %62 = vector.shape_cast %61 : vector<1x16x512xf32> to vector<16x512xf32>
    %63 = arith.truncf %54 : vector<16x128xf32> to vector<16x128xbf16>
    %cst_36 = arith.constant dense<0.000000e+00> : vector<16x512xf32>
    %64 = tpu.matmul %63, %13, %cst_36 {dimension_numbers = #tpu.dot_dimension_numbers<[1], [0], [0], [1], [0, 0, 1, 1], [], []>} : vector<16x128xbf16>, vector<128x512xbf16>, vector<16x512xf32> -> vector<16x512xf32>
    %65 = arith.addf %62, %64 : vector<16x512xf32>
    %66 = vector.extract_strided_slice %65 {offsets = [0, 0], sizes = [16, 128], strides = [1, 1]} : vector<16x512xf32> to vector<16x128xf32>
    %cst_37 = arith.constant 5.000000e-01 : f32
    %67 = vector.broadcast %cst_37 : f32 to vector<16x128xf32>
    %68 = arith.mulf %67, %66 : vector<16x128xf32>
    %69 = math.tanh %68 : vector<16x128xf32>
    %cst_38 = arith.constant 5.000000e-01 : f32
    %70 = vector.broadcast %cst_38 : f32 to vector<16x128xf32>
    %71 = arith.mulf %70, %69 : vector<16x128xf32>
    %cst_39 = arith.constant 5.000000e-01 : f32
    %72 = vector.broadcast %cst_39 : f32 to vector<16x128xf32>
    %73 = arith.addf %71, %72 : vector<16x128xf32>
    %74 = vector.extract_strided_slice %65 {offsets = [0, 128], sizes = [16, 128], strides = [1, 1]} : vector<16x512xf32> to vector<16x128xf32>
    %cst_40 = arith.constant 5.000000e-01 : f32
    %75 = vector.broadcast %cst_40 : f32 to vector<16x128xf32>
    %76 = arith.mulf %75, %74 : vector<16x128xf32>
    %77 = math.tanh %76 : vector<16x128xf32>
    %cst_41 = arith.constant 5.000000e-01 : f32
    %78 = vector.broadcast %cst_41 : f32 to vector<16x128xf32>
    %79 = arith.mulf %78, %77 : vector<16x128xf32>
    %cst_42 = arith.constant 5.000000e-01 : f32
    %80 = vector.broadcast %cst_42 : f32 to vector<16x128xf32>
    %81 = arith.addf %79, %80 : vector<16x128xf32>
    %82 = vector.extract_strided_slice %65 {offsets = [0, 256], sizes = [16, 128], strides = [1, 1]} : vector<16x512xf32> to vector<16x128xf32>
    %83 = math.tanh %82 : vector<16x128xf32>
    %84 = vector.extract_strided_slice %65 {offsets = [0, 384], sizes = [16, 128], strides = [1, 1]} : vector<16x512xf32> to vector<16x128xf32>
    %cst_43 = arith.constant 5.000000e-01 : f32
    %85 = vector.broadcast %cst_43 : f32 to vector<16x128xf32>
    %86 = arith.mulf %85, %84 : vector<16x128xf32>
    %87 = math.tanh %86 : vector<16x128xf32>
    %cst_44 = arith.constant 5.000000e-01 : f32
    %88 = vector.broadcast %cst_44 : f32 to vector<16x128xf32>
    %89 = arith.mulf %88, %87 : vector<16x128xf32>
    %cst_45 = arith.constant 5.000000e-01 : f32
    %90 = vector.broadcast %cst_45 : f32 to vector<16x128xf32>
    %91 = arith.addf %89, %90 : vector<16x128xf32>
    %92 = arith.mulf %81, %52 : vector<16x128xf32>
    %93 = arith.mulf %73, %83 : vector<16x128xf32>
    %94 = arith.addf %92, %93 : vector<16x128xf32>
    %95 = math.tanh %94 : vector<16x128xf32>
    %96 = arith.mulf %91, %95 : vector<16x128xf32>
    %97 = arith.truncf %96 : vector<16x128xf32> to vector<16x128xbf16>
    %98 = arith.index_cast %c1_i32 : i32 to index
    %c0_46 = arith.constant 0 : index
    %c0_47 = arith.constant 0 : index
    %99 = vector.load %arg13[%98, %c0_46, %c0_47] : memref<8x16x128xbf16, #tpu.memory_space<vmem>>, vector<1x16x128xbf16>
    %100 = vector.shape_cast %99 : vector<1x16x128xbf16> to vector<16x128xbf16>
    %101 = vector.shape_cast %97 : vector<16x128xbf16> to vector<1x16x128xbf16>
    tpu.vector_store %arg13[%98, %c0_46, %c0_47], %101 {strides = array<i32>} : memref<8x16x128xbf16, #tpu.memory_space<vmem>>, vector<1x16x128xbf16>,
    %c2_i32 = arith.constant 2 : i32
    %102 = arith.index_cast %c2_i32 : i32 to index
    %c0_48 = arith.constant 0 : index
    %c0_49 = arith.constant 0 : index
    %103 = vector.load %arg14[%102, %c0_48, %c0_49] : memref<8x16x512xf32, #tpu.memory_space<vmem>>, vector<1x16x512xf32>
    %104 = vector.shape_cast %103 : vector<1x16x512xf32> to vector<16x512xf32>
    %105 = arith.truncf %96 : vector<16x128xf32> to vector<16x128xbf16>
    %cst_50 = arith.constant dense<0.000000e+00> : vector<16x512xf32>
    %106 = tpu.matmul %105, %13, %cst_50 {dimension_numbers = #tpu.dot_dimension_numbers<[1], [0], [0], [1], [0, 0, 1, 1], [], []>} : vector<16x128xbf16>, vector<128x512xbf16>, vector<16x512xf32> -> vector<16x512xf32>
    %107 = arith.addf %104, %106 : vector<16x512xf32>
    %108 = vector.extract_strided_slice %107 {offsets = [0, 0], sizes = [16, 128], strides = [1, 1]} : vector<16x512xf32> to vector<16x128xf32>
    %cst_51 = arith.constant 5.000000e-01 : f32
    %109 = vector.broadcast %cst_51 : f32 to vector<16x128xf32>
    %110 = arith.mulf %109, %108 : vector<16x128xf32>
    %111 = math.tanh %110 : vector<16x128xf32>
    %cst_52 = arith.constant 5.000000e-01 : f32
    %112 = vector.broadcast %cst_52 : f32 to vector<16x128xf32>
    %113 = arith.mulf %112, %111 : vector<16x128xf32>
    %cst_53 = arith.constant 5.000000e-01 : f32
    %114 = vector.broadcast %cst_53 : f32 to vector<16x128xf32>
    %115 = arith.addf %113, %114 : vector<16x128xf32>
    %116 = vector.extract_strided_slice %107 {offsets = [0, 128], sizes = [16, 128], strides = [1, 1]} : vector<16x512xf32> to vector<16x128xf32>
    %cst_54 = arith.constant 5.000000e-01 : f32
    %117 = vector.broadcast %cst_54 : f32 to vector<16x128xf32>
    %118 = arith.mulf %117, %116 : vector<16x128xf32>
    %119 = math.tanh %118 : vector<16x128xf32>
    %cst_55 = arith.constant 5.000000e-01 : f32
    %120 = vector.broadcast %cst_55 : f32 to vector<16x128xf32>
    %121 = arith.mulf %120, %119 : vector<16x128xf32>
    %cst_56 = arith.constant 5.000000e-01 : f32
    %122 = vector.broadcast %cst_56 : f32 to vector<16x128xf32>
    %123 = arith.addf %121, %122 : vector<16x128xf32>
    %124 = vector.extract_strided_slice %107 {offsets = [0, 256], sizes = [16, 128], strides = [1, 1]} : vector<16x512xf32> to vector<16x128xf32>
    %125 = math.tanh %124 : vector<16x128xf32>
    %126 = vector.extract_strided_slice %107 {offsets = [0, 384], sizes = [16, 128], strides = [1, 1]} : vector<16x512xf32> to vector<16x128xf32>
    %cst_57 = arith.constant 5.000000e-01 : f32
    %127 = vector.broadcast %cst_57 : f32 to vector<16x128xf32>
    %128 = arith.mulf %127, %126 : vector<16x128xf32>
    %129 = math.tanh %128 : vector<16x128xf32>
    %cst_58 = arith.constant 5.000000e-01 : f32
    %130 = vector.broadcast %cst_58 : f32 to vector<16x128xf32>
    %131 = arith.mulf %130, %129 : vector<16x128xf32>
    %cst_59 = arith.constant 5.000000e-01 : f32
    %132 = vector.broadcast %cst_59 : f32 to vector<16x128xf32>
    %133 = arith.addf %131, %132 : vector<16x128xf32>
    %134 = arith.mulf %123, %94 : vector<16x128xf32>
    %135 = arith.mulf %115, %125 : vector<16x128xf32>
    %136 = arith.addf %134, %135 : vector<16x128xf32>
    %137 = math.tanh %136 : vector<16x128xf32>
    %138 = arith.mulf %133, %137 : vector<16x128xf32>
    %139 = arith.truncf %138 : vector<16x128xf32> to vector<16x128xbf16>
    %140 = arith.index_cast %c2_i32 : i32 to index
    %c0_60 = arith.constant 0 : index
    %c0_61 = arith.constant 0 : index
    %141 = vector.load %arg13[%140, %c0_60, %c0_61] : memref<8x16x128xbf16, #tpu.memory_space<vmem>>, vector<1x16x128xbf16>
    %142 = vector.shape_cast %141 : vector<1x16x128xbf16> to vector<16x128xbf16>
    %143 = vector.shape_cast %139 : vector<16x128xbf16> to vector<1x16x128xbf16>
    tpu.vector_store %arg13[%140, %c0_60, %c0_61], %143 {strides = array<i32>} : memref<8x16x128xbf16, #tpu.memory_space<vmem>>, vector<1x16x128xbf16>,
    %c3_i32 = arith.constant 3 : i32
    %144 = arith.index_cast %c3_i32 : i32 to index
    %c0_62 = arith.constant 0 : index
    %c0_63 = arith.constant 0 : index
    %145 = vector.load %arg14[%144, %c0_62, %c0_63] : memref<8x16x512xf32, #tpu.memory_space<vmem>>, vector<1x16x512xf32>
    %146 = vector.shape_cast %145 : vector<1x16x512xf32> to vector<16x512xf32>
    %147 = arith.truncf %138 : vector<16x128xf32> to vector<16x128xbf16>
    %cst_64 = arith.constant dense<0.000000e+00> : vector<16x512xf32>
    %148 = tpu.matmul %147, %13, %cst_64 {dimension_numbers = #tpu.dot_dimension_numbers<[1], [0], [0], [1], [0, 0, 1, 1], [], []>} : vector<16x128xbf16>, vector<128x512xbf16>, vector<16x512xf32> -> vector<16x512xf32>
    %149 = arith.addf %146, %148 : vector<16x512xf32>
    %150 = vector.extract_strided_slice %149 {offsets = [0, 0], sizes = [16, 128], strides = [1, 1]} : vector<16x512xf32> to vector<16x128xf32>
    %cst_65 = arith.constant 5.000000e-01 : f32
    %151 = vector.broadcast %cst_65 : f32 to vector<16x128xf32>
    %152 = arith.mulf %151, %150 : vector<16x128xf32>
    %153 = math.tanh %152 : vector<16x128xf32>
    %cst_66 = arith.constant 5.000000e-01 : f32
    %154 = vector.broadcast %cst_66 : f32 to vector<16x128xf32>
    %155 = arith.mulf %154, %153 : vector<16x128xf32>
    %cst_67 = arith.constant 5.000000e-01 : f32
    %156 = vector.broadcast %cst_67 : f32 to vector<16x128xf32>
    %157 = arith.addf %155, %156 : vector<16x128xf32>
    %158 = vector.extract_strided_slice %149 {offsets = [0, 128], sizes = [16, 128], strides = [1, 1]} : vector<16x512xf32> to vector<16x128xf32>
    %cst_68 = arith.constant 5.000000e-01 : f32
    %159 = vector.broadcast %cst_68 : f32 to vector<16x128xf32>
    %160 = arith.mulf %159, %158 : vector<16x128xf32>
    %161 = math.tanh %160 : vector<16x128xf32>
    %cst_69 = arith.constant 5.000000e-01 : f32
    %162 = vector.broadcast %cst_69 : f32 to vector<16x128xf32>
    %163 = arith.mulf %162, %161 : vector<16x128xf32>
    %cst_70 = arith.constant 5.000000e-01 : f32
    %164 = vector.broadcast %cst_70 : f32 to vector<16x128xf32>
    %165 = arith.addf %163, %164 : vector<16x128xf32>
    %166 = vector.extract_strided_slice %149 {offsets = [0, 256], sizes = [16, 128], strides = [1, 1]} : vector<16x512xf32> to vector<16x128xf32>
    %167 = math.tanh %166 : vector<16x128xf32>
    %168 = vector.extract_strided_slice %149 {offsets = [0, 384], sizes = [16, 128], strides = [1, 1]} : vector<16x512xf32> to vector<16x128xf32>
    %cst_71 = arith.constant 5.000000e-01 : f32
    %169 = vector.broadcast %cst_71 : f32 to vector<16x128xf32>
    %170 = arith.mulf %169, %168 : vector<16x128xf32>
    %171 = math.tanh %170 : vector<16x128xf32>
    %cst_72 = arith.constant 5.000000e-01 : f32
    %172 = vector.broadcast %cst_72 : f32 to vector<16x128xf32>
    %173 = arith.mulf %172, %171 : vector<16x128xf32>
    %cst_73 = arith.constant 5.000000e-01 : f32
    %174 = vector.broadcast %cst_73 : f32 to vector<16x128xf32>
    %175 = arith.addf %173, %174 : vector<16x128xf32>
    %176 = arith.mulf %165, %136 : vector<16x128xf32>
    %177 = arith.mulf %157, %167 : vector<16x128xf32>
    %178 = arith.addf %176, %177 : vector<16x128xf32>
    %179 = math.tanh %178 : vector<16x128xf32>
    %180 = arith.mulf %175, %179 : vector<16x128xf32>
    %181 = arith.truncf %180 : vector<16x128xf32> to vector<16x128xbf16>
    %182 = arith.index_cast %c3_i32 : i32 to index
    %c0_74 = arith.constant 0 : index
    %c0_75 = arith.constant 0 : index
    %183 = vector.load %arg13[%182, %c0_74, %c0_75] : memref<8x16x128xbf16, #tpu.memory_space<vmem>>, vector<1x16x128xbf16>
    %184 = vector.shape_cast %183 : vector<1x16x128xbf16> to vector<16x128xbf16>
    %185 = vector.shape_cast %181 : vector<16x128xbf16> to vector<1x16x128xbf16>
    tpu.vector_store %arg13[%182, %c0_74, %c0_75], %185 {strides = array<i32>} : memref<8x16x128xbf16, #tpu.memory_space<vmem>>, vector<1x16x128xbf16>,
    %c4_i32 = arith.constant 4 : i32
    %186 = arith.index_cast %c4_i32 : i32 to index
    %c0_76 = arith.constant 0 : index
    %c0_77 = arith.constant 0 : index
    %187 = vector.load %arg14[%186, %c0_76, %c0_77] : memref<8x16x512xf32, #tpu.memory_space<vmem>>, vector<1x16x512xf32>
    %188 = vector.shape_cast %187 : vector<1x16x512xf32> to vector<16x512xf32>
    %189 = arith.truncf %180 : vector<16x128xf32> to vector<16x128xbf16>
    %cst_78 = arith.constant dense<0.000000e+00> : vector<16x512xf32>
    %190 = tpu.matmul %189, %13, %cst_78 {dimension_numbers = #tpu.dot_dimension_numbers<[1], [0], [0], [1], [0, 0, 1, 1], [], []>} : vector<16x128xbf16>, vector<128x512xbf16>, vector<16x512xf32> -> vector<16x512xf32>
    %191 = arith.addf %188, %190 : vector<16x512xf32>
    %192 = vector.extract_strided_slice %191 {offsets = [0, 0], sizes = [16, 128], strides = [1, 1]} : vector<16x512xf32> to vector<16x128xf32>
    %cst_79 = arith.constant 5.000000e-01 : f32
    %193 = vector.broadcast %cst_79 : f32 to vector<16x128xf32>
    %194 = arith.mulf %193, %192 : vector<16x128xf32>
    %195 = math.tanh %194 : vector<16x128xf32>
    %cst_80 = arith.constant 5.000000e-01 : f32
    %196 = vector.broadcast %cst_80 : f32 to vector<16x128xf32>
    %197 = arith.mulf %196, %195 : vector<16x128xf32>
    %cst_81 = arith.constant 5.000000e-01 : f32
    %198 = vector.broadcast %cst_81 : f32 to vector<16x128xf32>
    %199 = arith.addf %197, %198 : vector<16x128xf32>
    %200 = vector.extract_strided_slice %191 {offsets = [0, 128], sizes = [16, 128], strides = [1, 1]} : vector<16x512xf32> to vector<16x128xf32>
    %cst_82 = arith.constant 5.000000e-01 : f32
    %201 = vector.broadcast %cst_82 : f32 to vector<16x128xf32>
    %202 = arith.mulf %201, %200 : vector<16x128xf32>
    %203 = math.tanh %202 : vector<16x128xf32>
    %cst_83 = arith.constant 5.000000e-01 : f32
    %204 = vector.broadcast %cst_83 : f32 to vector<16x128xf32>
    %205 = arith.mulf %204, %203 : vector<16x128xf32>
    %cst_84 = arith.constant 5.000000e-01 : f32
    %206 = vector.broadcast %cst_84 : f32 to vector<16x128xf32>
    %207 = arith.addf %205, %206 : vector<16x128xf32>
    %208 = vector.extract_strided_slice %191 {offsets = [0, 256], sizes = [16, 128], strides = [1, 1]} : vector<16x512xf32> to vector<16x128xf32>
    %209 = math.tanh %208 : vector<16x128xf32>
    %210 = vector.extract_strided_slice %191 {offsets = [0, 384], sizes = [16, 128], strides = [1, 1]} : vector<16x512xf32> to vector<16x128xf32>
    %cst_85 = arith.constant 5.000000e-01 : f32
    %211 = vector.broadcast %cst_85 : f32 to vector<16x128xf32>
    %212 = arith.mulf %211, %210 : vector<16x128xf32>
    %213 = math.tanh %212 : vector<16x128xf32>
    %cst_86 = arith.constant 5.000000e-01 : f32
    %214 = vector.broadcast %cst_86 : f32 to vector<16x128xf32>
    %215 = arith.mulf %214, %213 : vector<16x128xf32>
    %cst_87 = arith.constant 5.000000e-01 : f32
    %216 = vector.broadcast %cst_87 : f32 to vector<16x128xf32>
    %217 = arith.addf %215, %216 : vector<16x128xf32>
    %218 = arith.mulf %207, %178 : vector<16x128xf32>
    %219 = arith.mulf %199, %209 : vector<16x128xf32>
    %220 = arith.addf %218, %219 : vector<16x128xf32>
    %221 = math.tanh %220 : vector<16x128xf32>
    %222 = arith.mulf %217, %221 : vector<16x128xf32>
    %223 = arith.truncf %222 : vector<16x128xf32> to vector<16x128xbf16>
    %224 = arith.index_cast %c4_i32 : i32 to index
    %c0_88 = arith.constant 0 : index
    %c0_89 = arith.constant 0 : index
    %225 = vector.load %arg13[%224, %c0_88, %c0_89] : memref<8x16x128xbf16, #tpu.memory_space<vmem>>, vector<1x16x128xbf16>
    %226 = vector.shape_cast %225 : vector<1x16x128xbf16> to vector<16x128xbf16>
    %227 = vector.shape_cast %223 : vector<16x128xbf16> to vector<1x16x128xbf16>
    tpu.vector_store %arg13[%224, %c0_88, %c0_89], %227 {strides = array<i32>} : memref<8x16x128xbf16, #tpu.memory_space<vmem>>, vector<1x16x128xbf16>,
    %c5_i32 = arith.constant 5 : i32
    %228 = arith.index_cast %c5_i32 : i32 to index
    %c0_90 = arith.constant 0 : index
    %c0_91 = arith.constant 0 : index
    %229 = vector.load %arg14[%228, %c0_90, %c0_91] : memref<8x16x512xf32, #tpu.memory_space<vmem>>, vector<1x16x512xf32>
    %230 = vector.shape_cast %229 : vector<1x16x512xf32> to vector<16x512xf32>
    %231 = arith.truncf %222 : vector<16x128xf32> to vector<16x128xbf16>
    %cst_92 = arith.constant dense<0.000000e+00> : vector<16x512xf32>
    %232 = tpu.matmul %231, %13, %cst_92 {dimension_numbers = #tpu.dot_dimension_numbers<[1], [0], [0], [1], [0, 0, 1, 1], [], []>} : vector<16x128xbf16>, vector<128x512xbf16>, vector<16x512xf32> -> vector<16x512xf32>
    %233 = arith.addf %230, %232 : vector<16x512xf32>
    %234 = vector.extract_strided_slice %233 {offsets = [0, 0], sizes = [16, 128], strides = [1, 1]} : vector<16x512xf32> to vector<16x128xf32>
    %cst_93 = arith.constant 5.000000e-01 : f32
    %235 = vector.broadcast %cst_93 : f32 to vector<16x128xf32>
    %236 = arith.mulf %235, %234 : vector<16x128xf32>
    %237 = math.tanh %236 : vector<16x128xf32>
    %cst_94 = arith.constant 5.000000e-01 : f32
    %238 = vector.broadcast %cst_94 : f32 to vector<16x128xf32>
    %239 = arith.mulf %238, %237 : vector<16x128xf32>
    %cst_95 = arith.constant 5.000000e-01 : f32
    %240 = vector.broadcast %cst_95 : f32 to vector<16x128xf32>
    %241 = arith.addf %239, %240 : vector<16x128xf32>
    %242 = vector.extract_strided_slice %233 {offsets = [0, 128], sizes = [16, 128], strides = [1, 1]} : vector<16x512xf32> to vector<16x128xf32>
    %cst_96 = arith.constant 5.000000e-01 : f32
    %243 = vector.broadcast %cst_96 : f32 to vector<16x128xf32>
    %244 = arith.mulf %243, %242 : vector<16x128xf32>
    %245 = math.tanh %244 : vector<16x128xf32>
    %cst_97 = arith.constant 5.000000e-01 : f32
    %246 = vector.broadcast %cst_97 : f32 to vector<16x128xf32>
    %247 = arith.mulf %246, %245 : vector<16x128xf32>
    %cst_98 = arith.constant 5.000000e-01 : f32
    %248 = vector.broadcast %cst_98 : f32 to vector<16x128xf32>
    %249 = arith.addf %247, %248 : vector<16x128xf32>
    %250 = vector.extract_strided_slice %233 {offsets = [0, 256], sizes = [16, 128], strides = [1, 1]} : vector<16x512xf32> to vector<16x128xf32>
    %251 = math.tanh %250 : vector<16x128xf32>
    %252 = vector.extract_strided_slice %233 {offsets = [0, 384], sizes = [16, 128], strides = [1, 1]} : vector<16x512xf32> to vector<16x128xf32>
    %cst_99 = arith.constant 5.000000e-01 : f32
    %253 = vector.broadcast %cst_99 : f32 to vector<16x128xf32>
    %254 = arith.mulf %253, %252 : vector<16x128xf32>
    %255 = math.tanh %254 : vector<16x128xf32>
    %cst_100 = arith.constant 5.000000e-01 : f32
    %256 = vector.broadcast %cst_100 : f32 to vector<16x128xf32>
    %257 = arith.mulf %256, %255 : vector<16x128xf32>
    %cst_101 = arith.constant 5.000000e-01 : f32
    %258 = vector.broadcast %cst_101 : f32 to vector<16x128xf32>
    %259 = arith.addf %257, %258 : vector<16x128xf32>
    %260 = arith.mulf %249, %220 : vector<16x128xf32>
    %261 = arith.mulf %241, %251 : vector<16x128xf32>
    %262 = arith.addf %260, %261 : vector<16x128xf32>
    %263 = math.tanh %262 : vector<16x128xf32>
    %264 = arith.mulf %259, %263 : vector<16x128xf32>
    %265 = arith.truncf %264 : vector<16x128xf32> to vector<16x128xbf16>
    %266 = arith.index_cast %c5_i32 : i32 to index
    %c0_102 = arith.constant 0 : index
    %c0_103 = arith.constant 0 : index
    %267 = vector.load %arg13[%266, %c0_102, %c0_103] : memref<8x16x128xbf16, #tpu.memory_space<vmem>>, vector<1x16x128xbf16>
    %268 = vector.shape_cast %267 : vector<1x16x128xbf16> to vector<16x128xbf16>
    %269 = vector.shape_cast %265 : vector<16x128xbf16> to vector<1x16x128xbf16>
    tpu.vector_store %arg13[%266, %c0_102, %c0_103], %269 {strides = array<i32>} : memref<8x16x128xbf16, #tpu.memory_space<vmem>>, vector<1x16x128xbf16>,
    %c6_i32 = arith.constant 6 : i32
    %270 = arith.index_cast %c6_i32 : i32 to index
    %c0_104 = arith.constant 0 : index
    %c0_105 = arith.constant 0 : index
    %271 = vector.load %arg14[%270, %c0_104, %c0_105] : memref<8x16x512xf32, #tpu.memory_space<vmem>>, vector<1x16x512xf32>
    %272 = vector.shape_cast %271 : vector<1x16x512xf32> to vector<16x512xf32>
    %273 = arith.truncf %264 : vector<16x128xf32> to vector<16x128xbf16>
    %cst_106 = arith.constant dense<0.000000e+00> : vector<16x512xf32>
    %274 = tpu.matmul %273, %13, %cst_106 {dimension_numbers = #tpu.dot_dimension_numbers<[1], [0], [0], [1], [0, 0, 1, 1], [], []>} : vector<16x128xbf16>, vector<128x512xbf16>, vector<16x512xf32> -> vector<16x512xf32>
    %275 = arith.addf %272, %274 : vector<16x512xf32>
    %276 = vector.extract_strided_slice %275 {offsets = [0, 0], sizes = [16, 128], strides = [1, 1]} : vector<16x512xf32> to vector<16x128xf32>
    %cst_107 = arith.constant 5.000000e-01 : f32
    %277 = vector.broadcast %cst_107 : f32 to vector<16x128xf32>
    %278 = arith.mulf %277, %276 : vector<16x128xf32>
    %279 = math.tanh %278 : vector<16x128xf32>
    %cst_108 = arith.constant 5.000000e-01 : f32
    %280 = vector.broadcast %cst_108 : f32 to vector<16x128xf32>
    %281 = arith.mulf %280, %279 : vector<16x128xf32>
    %cst_109 = arith.constant 5.000000e-01 : f32
    %282 = vector.broadcast %cst_109 : f32 to vector<16x128xf32>
    %283 = arith.addf %281, %282 : vector<16x128xf32>
    %284 = vector.extract_strided_slice %275 {offsets = [0, 128], sizes = [16, 128], strides = [1, 1]} : vector<16x512xf32> to vector<16x128xf32>
    %cst_110 = arith.constant 5.000000e-01 : f32
    %285 = vector.broadcast %cst_110 : f32 to vector<16x128xf32>
    %286 = arith.mulf %285, %284 : vector<16x128xf32>
    %287 = math.tanh %286 : vector<16x128xf32>
    %cst_111 = arith.constant 5.000000e-01 : f32
    %288 = vector.broadcast %cst_111 : f32 to vector<16x128xf32>
    %289 = arith.mulf %288, %287 : vector<16x128xf32>
    %cst_112 = arith.constant 5.000000e-01 : f32
    %290 = vector.broadcast %cst_112 : f32 to vector<16x128xf32>
    %291 = arith.addf %289, %290 : vector<16x128xf32>
    %292 = vector.extract_strided_slice %275 {offsets = [0, 256], sizes = [16, 128], strides = [1, 1]} : vector<16x512xf32> to vector<16x128xf32>
    %293 = math.tanh %292 : vector<16x128xf32>
    %294 = vector.extract_strided_slice %275 {offsets = [0, 384], sizes = [16, 128], strides = [1, 1]} : vector<16x512xf32> to vector<16x128xf32>
    %cst_113 = arith.constant 5.000000e-01 : f32
    %295 = vector.broadcast %cst_113 : f32 to vector<16x128xf32>
    %296 = arith.mulf %295, %294 : vector<16x128xf32>
    %297 = math.tanh %296 : vector<16x128xf32>
    %cst_114 = arith.constant 5.000000e-01 : f32
    %298 = vector.broadcast %cst_114 : f32 to vector<16x128xf32>
    %299 = arith.mulf %298, %297 : vector<16x128xf32>
    %cst_115 = arith.constant 5.000000e-01 : f32
    %300 = vector.broadcast %cst_115 : f32 to vector<16x128xf32>
    %301 = arith.addf %299, %300 : vector<16x128xf32>
    %302 = arith.mulf %291, %262 : vector<16x128xf32>
    %303 = arith.mulf %283, %293 : vector<16x128xf32>
    %304 = arith.addf %302, %303 : vector<16x128xf32>
    %305 = math.tanh %304 : vector<16x128xf32>
    %306 = arith.mulf %301, %305 : vector<16x128xf32>
    %307 = arith.truncf %306 : vector<16x128xf32> to vector<16x128xbf16>
    %308 = arith.index_cast %c6_i32 : i32 to index
    %c0_116 = arith.constant 0 : index
    %c0_117 = arith.constant 0 : index
    %309 = vector.load %arg13[%308, %c0_116, %c0_117] : memref<8x16x128xbf16, #tpu.memory_space<vmem>>, vector<1x16x128xbf16>
    %310 = vector.shape_cast %309 : vector<1x16x128xbf16> to vector<16x128xbf16>
    %311 = vector.shape_cast %307 : vector<16x128xbf16> to vector<1x16x128xbf16>
    tpu.vector_store %arg13[%308, %c0_116, %c0_117], %311 {strides = array<i32>} : memref<8x16x128xbf16, #tpu.memory_space<vmem>>, vector<1x16x128xbf16>,
    %c7_i32 = arith.constant 7 : i32
    %312 = arith.index_cast %c7_i32 : i32 to index
    %c0_118 = arith.constant 0 : index
    %c0_119 = arith.constant 0 : index
    %313 = vector.load %arg14[%312, %c0_118, %c0_119] : memref<8x16x512xf32, #tpu.memory_space<vmem>>, vector<1x16x512xf32>
    %314 = vector.shape_cast %313 : vector<1x16x512xf32> to vector<16x512xf32>
    %315 = arith.truncf %306 : vector<16x128xf32> to vector<16x128xbf16>
    %cst_120 = arith.constant dense<0.000000e+00> : vector<16x512xf32>
    %316 = tpu.matmul %315, %13, %cst_120 {dimension_numbers = #tpu.dot_dimension_numbers<[1], [0], [0], [1], [0, 0, 1, 1], [], []>} : vector<16x128xbf16>, vector<128x512xbf16>, vector<16x512xf32> -> vector<16x512xf32>
    %317 = arith.addf %314, %316 : vector<16x512xf32>
    %318 = vector.extract_strided_slice %317 {offsets = [0, 0], sizes = [16, 128], strides = [1, 1]} : vector<16x512xf32> to vector<16x128xf32>
    %cst_121 = arith.constant 5.000000e-01 : f32
    %319 = vector.broadcast %cst_121 : f32 to vector<16x128xf32>
    %320 = arith.mulf %319, %318 : vector<16x128xf32>
    %321 = math.tanh %320 : vector<16x128xf32>
    %cst_122 = arith.constant 5.000000e-01 : f32
    %322 = vector.broadcast %cst_122 : f32 to vector<16x128xf32>
    %323 = arith.mulf %322, %321 : vector<16x128xf32>
    %cst_123 = arith.constant 5.000000e-01 : f32
    %324 = vector.broadcast %cst_123 : f32 to vector<16x128xf32>
    %325 = arith.addf %323, %324 : vector<16x128xf32>
    %326 = vector.extract_strided_slice %317 {offsets = [0, 128], sizes = [16, 128], strides = [1, 1]} : vector<16x512xf32> to vector<16x128xf32>
    %cst_124 = arith.constant 5.000000e-01 : f32
    %327 = vector.broadcast %cst_124 : f32 to vector<16x128xf32>
    %328 = arith.mulf %327, %326 : vector<16x128xf32>
    %329 = math.tanh %328 : vector<16x128xf32>
    %cst_125 = arith.constant 5.000000e-01 : f32
    %330 = vector.broadcast %cst_125 : f32 to vector<16x128xf32>
    %331 = arith.mulf %330, %329 : vector<16x128xf32>
    %cst_126 = arith.constant 5.000000e-01 : f32
    %332 = vector.broadcast %cst_126 : f32 to vector<16x128xf32>
    %333 = arith.addf %331, %332 : vector<16x128xf32>
    %334 = vector.extract_strided_slice %317 {offsets = [0, 256], sizes = [16, 128], strides = [1, 1]} : vector<16x512xf32> to vector<16x128xf32>
    %335 = math.tanh %334 : vector<16x128xf32>
    %336 = vector.extract_strided_slice %317 {offsets = [0, 384], sizes = [16, 128], strides = [1, 1]} : vector<16x512xf32> to vector<16x128xf32>
    %cst_127 = arith.constant 5.000000e-01 : f32
    %337 = vector.broadcast %cst_127 : f32 to vector<16x128xf32>
    %338 = arith.mulf %337, %336 : vector<16x128xf32>
    %339 = math.tanh %338 : vector<16x128xf32>
    %cst_128 = arith.constant 5.000000e-01 : f32
    %340 = vector.broadcast %cst_128 : f32 to vector<16x128xf32>
    %341 = arith.mulf %340, %339 : vector<16x128xf32>
    %cst_129 = arith.constant 5.000000e-01 : f32
    %342 = vector.broadcast %cst_129 : f32 to vector<16x128xf32>
    %343 = arith.addf %341, %342 : vector<16x128xf32>
    %344 = arith.mulf %333, %304 : vector<16x128xf32>
    %345 = arith.mulf %325, %335 : vector<16x128xf32>
    %346 = arith.addf %344, %345 : vector<16x128xf32>
    %347 = math.tanh %346 : vector<16x128xf32>
    %348 = arith.mulf %343, %347 : vector<16x128xf32>
    %349 = arith.truncf %348 : vector<16x128xf32> to vector<16x128xbf16>
    %350 = arith.index_cast %c7_i32 : i32 to index
    %c0_130 = arith.constant 0 : index
    %c0_131 = arith.constant 0 : index
    %351 = vector.load %arg13[%350, %c0_130, %c0_131] : memref<8x16x128xbf16, #tpu.memory_space<vmem>>, vector<1x16x128xbf16>
    %352 = vector.shape_cast %351 : vector<1x16x128xbf16> to vector<16x128xbf16>
    %353 = vector.shape_cast %349 : vector<16x128xbf16> to vector<1x16x128xbf16>
    tpu.vector_store %arg13[%350, %c0_130, %c0_131], %353 {strides = array<i32>} : memref<8x16x128xbf16, #tpu.memory_space<vmem>>, vector<1x16x128xbf16>,
    %c8_i32 = arith.constant 8 : i32
    %c0_132 = arith.constant 0 : index
    %c0_133 = arith.constant 0 : index
    %c0_134 = arith.constant 0 : index
    %354 = vector.load %arg11[%c0_132, %c0_133, %c0_134] : memref<2x16x128xf32, #tpu.memory_space<vmem>>, vector<1x16x128xf32>
    %355 = vector.shape_cast %354 : vector<1x16x128xf32> to vector<16x128xf32>
    %356 = vector.shape_cast %348 : vector<16x128xf32> to vector<1x16x128xf32>
    tpu.vector_store %arg11[%c0_132, %c0_133, %c0_134], %356 {strides = array<i32>} : memref<2x16x128xf32, #tpu.memory_space<vmem>>, vector<1x16x128xf32>,
    %c0_135 = arith.constant 0 : index
    %c0_136 = arith.constant 0 : index
    %c0_137 = arith.constant 0 : index
    %357 = vector.load %arg12[%c0_135, %c0_136, %c0_137] : memref<2x16x128xf32, #tpu.memory_space<vmem>>, vector<1x16x128xf32>
    %358 = vector.shape_cast %357 : vector<1x16x128xf32> to vector<16x128xf32>
    %359 = vector.shape_cast %346 : vector<16x128xf32> to vector<1x16x128xf32>
    tpu.vector_store %arg12[%c0_135, %c0_136, %c0_137], %359 {strides = array<i32>} : memref<2x16x128xf32, #tpu.memory_space<vmem>>, vector<1x16x128xf32>,
    %c0_138 = arith.constant 0 : index
    %c0_139 = arith.constant 0 : index
    %c0_140 = arith.constant 0 : index
    %360 = vector.load %arg13[%c0_138, %c0_139, %c0_140] : memref<8x16x128xbf16, #tpu.memory_space<vmem>>, vector<8x16x128xbf16>
    %361 = vector.shape_cast %360 : vector<8x16x128xbf16> to vector<128x128xbf16>
    %c0_141 = arith.constant 0 : index
    %c0_142 = arith.constant 0 : index
    %362 = vector.load %arg4[%c0_141, %c0_142] : memref<128x512xbf16, #tpu.memory_space<vmem>>, vector<128x512xbf16>
    %cst_143 = arith.constant dense<0.000000e+00> : vector<128x512xf32>
    %363 = tpu.matmul %361, %362, %cst_143 {dimension_numbers = #tpu.dot_dimension_numbers<[1], [0], [0], [1], [0, 0, 1, 1], [], []>} : vector<128x128xbf16>, vector<128x512xbf16>, vector<128x512xf32> -> vector<128x512xf32>
    %c1 = arith.constant 1 : index
    %c0_144 = arith.constant 0 : index
    %c0_145 = arith.constant 0 : index
    %364 = vector.load %arg7[%c1, %c0_144, %c0_145] : memref<2x1x512xf32, #tpu.memory_space<vmem>>, vector<1x1x512xf32>
    %365 = vector.shape_cast %364 : vector<1x1x512xf32> to vector<1x512xf32>
    %366 = vector.broadcast %365 : vector<1x512xf32> to vector<128x512xf32>
    %367 = arith.addf %363, %366 : vector<128x512xf32>
    %368 = vector.shape_cast %367 : vector<128x512xf32> to vector<8x16x512xf32>
    %c0_146 = arith.constant 0 : index
    %c0_147 = arith.constant 0 : index
    %c0_148 = arith.constant 0 : index
    %369 = vector.load %arg14[%c0_146, %c0_147, %c0_148] : memref<8x16x512xf32, #tpu.memory_space<vmem>>, vector<8x16x512xf32>
    tpu.vector_store %arg14[%c0_146, %c0_147, %c0_148], %368 {strides = array<i32>} : memref<8x16x512xf32, #tpu.memory_space<vmem>>, vector<8x16x512xf32>,
    %c0_149 = arith.constant 0 : index
    %c0_150 = arith.constant 0 : index
    %370 = vector.load %arg6[%c0_149, %c0_150] : memref<128x512xbf16, #tpu.memory_space<vmem>>, vector<128x512xbf16>
    %c1_151 = arith.constant 1 : index
    %c0_152 = arith.constant 0 : index
    %c0_153 = arith.constant 0 : index
    %371 = vector.load %arg11[%c1_151, %c0_152, %c0_153] : memref<2x16x128xf32, #tpu.memory_space<vmem>>, vector<1x16x128xf32>
    %372 = vector.shape_cast %371 : vector<1x16x128xf32> to vector<16x128xf32>
    %c1_154 = arith.constant 1 : index
    %c0_155 = arith.constant 0 : index
    %c0_156 = arith.constant 0 : index
    %373 = vector.load %arg12[%c1_154, %c0_155, %c0_156] : memref<2x16x128xf32, #tpu.memory_space<vmem>>, vector<1x16x128xf32>
    %374 = vector.shape_cast %373 : vector<1x16x128xf32> to vector<16x128xf32>
    %c0_i32_157 = arith.constant 0 : i32
    %375 = arith.index_cast %c0_i32_157 : i32 to index
    %c0_158 = arith.constant 0 : index
    %c0_159 = arith.constant 0 : index
    %376 = vector.load %arg14[%375, %c0_158, %c0_159] : memref<8x16x512xf32, #tpu.memory_space<vmem>>, vector<1x16x512xf32>
    %377 = vector.shape_cast %376 : vector<1x16x512xf32> to vector<16x512xf32>
    %378 = arith.truncf %372 : vector<16x128xf32> to vector<16x128xbf16>
    %cst_160 = arith.constant dense<0.000000e+00> : vector<16x512xf32>
    %379 = tpu.matmul %378, %370, %cst_160 {dimension_numbers = #tpu.dot_dimension_numbers<[1], [0], [0], [1], [0, 0, 1, 1], [], []>} : vector<16x128xbf16>, vector<128x512xbf16>, vector<16x512xf32> -> vector<16x512xf32>
    %380 = arith.addf %377, %379 : vector<16x512xf32>
    %381 = vector.extract_strided_slice %380 {offsets = [0, 0], sizes = [16, 128], strides = [1, 1]} : vector<16x512xf32> to vector<16x128xf32>
    %cst_161 = arith.constant 5.000000e-01 : f32
    %382 = vector.broadcast %cst_161 : f32 to vector<16x128xf32>
    %383 = arith.mulf %382, %381 : vector<16x128xf32>
    %384 = math.tanh %383 : vector<16x128xf32>
    %cst_162 = arith.constant 5.000000e-01 : f32
    %385 = vector.broadcast %cst_162 : f32 to vector<16x128xf32>
    %386 = arith.mulf %385, %384 : vector<16x128xf32>
    %cst_163 = arith.constant 5.000000e-01 : f32
    %387 = vector.broadcast %cst_163 : f32 to vector<16x128xf32>
    %388 = arith.addf %386, %387 : vector<16x128xf32>
    %389 = vector.extract_strided_slice %380 {offsets = [0, 128], sizes = [16, 128], strides = [1, 1]} : vector<16x512xf32> to vector<16x128xf32>
    %cst_164 = arith.constant 5.000000e-01 : f32
    %390 = vector.broadcast %cst_164 : f32 to vector<16x128xf32>
    %391 = arith.mulf %390, %389 : vector<16x128xf32>
    %392 = math.tanh %391 : vector<16x128xf32>
    %cst_165 = arith.constant 5.000000e-01 : f32
    %393 = vector.broadcast %cst_165 : f32 to vector<16x128xf32>
    %394 = arith.mulf %393, %392 : vector<16x128xf32>
    %cst_166 = arith.constant 5.000000e-01 : f32
    %395 = vector.broadcast %cst_166 : f32 to vector<16x128xf32>
    %396 = arith.addf %394, %395 : vector<16x128xf32>
    %397 = vector.extract_strided_slice %380 {offsets = [0, 256], sizes = [16, 128], strides = [1, 1]} : vector<16x512xf32> to vector<16x128xf32>
    %398 = math.tanh %397 : vector<16x128xf32>
    %399 = vector.extract_strided_slice %380 {offsets = [0, 384], sizes = [16, 128], strides = [1, 1]} : vector<16x512xf32> to vector<16x128xf32>
    %cst_167 = arith.constant 5.000000e-01 : f32
    %400 = vector.broadcast %cst_167 : f32 to vector<16x128xf32>
    %401 = arith.mulf %400, %399 : vector<16x128xf32>
    %402 = math.tanh %401 : vector<16x128xf32>
    %cst_168 = arith.constant 5.000000e-01 : f32
    %403 = vector.broadcast %cst_168 : f32 to vector<16x128xf32>
    %404 = arith.mulf %403, %402 : vector<16x128xf32>
    %cst_169 = arith.constant 5.000000e-01 : f32
    %405 = vector.broadcast %cst_169 : f32 to vector<16x128xf32>
    %406 = arith.addf %404, %405 : vector<16x128xf32>
    %407 = arith.mulf %396, %374 : vector<16x128xf32>
    %408 = arith.mulf %388, %398 : vector<16x128xf32>
    %409 = arith.addf %407, %408 : vector<16x128xf32>
    %410 = math.tanh %409 : vector<16x128xf32>
    %411 = arith.mulf %406, %410 : vector<16x128xf32>
    %c1_i32_170 = arith.constant 1 : i32
    %412 = arith.index_cast %c1_i32_170 : i32 to index
    %c0_171 = arith.constant 0 : index
    %c0_172 = arith.constant 0 : index
    %413 = vector.load %arg14[%412, %c0_171, %c0_172] : memref<8x16x512xf32, #tpu.memory_space<vmem>>, vector<1x16x512xf32>
    %414 = vector.shape_cast %413 : vector<1x16x512xf32> to vector<16x512xf32>
    %415 = arith.truncf %411 : vector<16x128xf32> to vector<16x128xbf16>
    %cst_173 = arith.constant dense<0.000000e+00> : vector<16x512xf32>
    %416 = tpu.matmul %415, %370, %cst_173 {dimension_numbers = #tpu.dot_dimension_numbers<[1], [0], [0], [1], [0, 0, 1, 1], [], []>} : vector<16x128xbf16>, vector<128x512xbf16>, vector<16x512xf32> -> vector<16x512xf32>
    %417 = arith.addf %414, %416 : vector<16x512xf32>
    %418 = vector.extract_strided_slice %417 {offsets = [0, 0], sizes = [16, 128], strides = [1, 1]} : vector<16x512xf32> to vector<16x128xf32>
    %cst_174 = arith.constant 5.000000e-01 : f32
    %419 = vector.broadcast %cst_174 : f32 to vector<16x128xf32>
    %420 = arith.mulf %419, %418 : vector<16x128xf32>
    %421 = math.tanh %420 : vector<16x128xf32>
    %cst_175 = arith.constant 5.000000e-01 : f32
    %422 = vector.broadcast %cst_175 : f32 to vector<16x128xf32>
    %423 = arith.mulf %422, %421 : vector<16x128xf32>
    %cst_176 = arith.constant 5.000000e-01 : f32
    %424 = vector.broadcast %cst_176 : f32 to vector<16x128xf32>
    %425 = arith.addf %423, %424 : vector<16x128xf32>
    %426 = vector.extract_strided_slice %417 {offsets = [0, 128], sizes = [16, 128], strides = [1, 1]} : vector<16x512xf32> to vector<16x128xf32>
    %cst_177 = arith.constant 5.000000e-01 : f32
    %427 = vector.broadcast %cst_177 : f32 to vector<16x128xf32>
    %428 = arith.mulf %427, %426 : vector<16x128xf32>
    %429 = math.tanh %428 : vector<16x128xf32>
    %cst_178 = arith.constant 5.000000e-01 : f32
    %430 = vector.broadcast %cst_178 : f32 to vector<16x128xf32>
    %431 = arith.mulf %430, %429 : vector<16x128xf32>
    %cst_179 = arith.constant 5.000000e-01 : f32
    %432 = vector.broadcast %cst_179 : f32 to vector<16x128xf32>
    %433 = arith.addf %431, %432 : vector<16x128xf32>
    %434 = vector.extract_strided_slice %417 {offsets = [0, 256], sizes = [16, 128], strides = [1, 1]} : vector<16x512xf32> to vector<16x128xf32>
    %435 = math.tanh %434 : vector<16x128xf32>
    %436 = vector.extract_strided_slice %417 {offsets = [0, 384], sizes = [16, 128], strides = [1, 1]} : vector<16x512xf32> to vector<16x128xf32>
    %cst_180 = arith.constant 5.000000e-01 : f32
    %437 = vector.broadcast %cst_180 : f32 to vector<16x128xf32>
    %438 = arith.mulf %437, %436 : vector<16x128xf32>
    %439 = math.tanh %438 : vector<16x128xf32>
    %cst_181 = arith.constant 5.000000e-01 : f32
    %440 = vector.broadcast %cst_181 : f32 to vector<16x128xf32>
    %441 = arith.mulf %440, %439 : vector<16x128xf32>
    %cst_182 = arith.constant 5.000000e-01 : f32
    %442 = vector.broadcast %cst_182 : f32 to vector<16x128xf32>
    %443 = arith.addf %441, %442 : vector<16x128xf32>
    %444 = arith.mulf %433, %409 : vector<16x128xf32>
    %445 = arith.mulf %425, %435 : vector<16x128xf32>
    %446 = arith.addf %444, %445 : vector<16x128xf32>
    %447 = math.tanh %446 : vector<16x128xf32>
    %448 = arith.mulf %443, %447 : vector<16x128xf32>
    %c2_i32_183 = arith.constant 2 : i32
    %449 = arith.index_cast %c2_i32_183 : i32 to index
    %c0_184 = arith.constant 0 : index
    %c0_185 = arith.constant 0 : index
    %450 = vector.load %arg14[%449, %c0_184, %c0_185] : memref<8x16x512xf32, #tpu.memory_space<vmem>>, vector<1x16x512xf32>
    %451 = vector.shape_cast %450 : vector<1x16x512xf32> to vector<16x512xf32>
    %452 = arith.truncf %448 : vector<16x128xf32> to vector<16x128xbf16>
    %cst_186 = arith.constant dense<0.000000e+00> : vector<16x512xf32>
    %453 = tpu.matmul %452, %370, %cst_186 {dimension_numbers = #tpu.dot_dimension_numbers<[1], [0], [0], [1], [0, 0, 1, 1], [], []>} : vector<16x128xbf16>, vector<128x512xbf16>, vector<16x512xf32> -> vector<16x512xf32>
    %454 = arith.addf %451, %453 : vector<16x512xf32>
    %455 = vector.extract_strided_slice %454 {offsets = [0, 0], sizes = [16, 128], strides = [1, 1]} : vector<16x512xf32> to vector<16x128xf32>
    %cst_187 = arith.constant 5.000000e-01 : f32
    %456 = vector.broadcast %cst_187 : f32 to vector<16x128xf32>
    %457 = arith.mulf %456, %455 : vector<16x128xf32>
    %458 = math.tanh %457 : vector<16x128xf32>
    %cst_188 = arith.constant 5.000000e-01 : f32
    %459 = vector.broadcast %cst_188 : f32 to vector<16x128xf32>
    %460 = arith.mulf %459, %458 : vector<16x128xf32>
    %cst_189 = arith.constant 5.000000e-01 : f32
    %461 = vector.broadcast %cst_189 : f32 to vector<16x128xf32>
    %462 = arith.addf %460, %461 : vector<16x128xf32>
    %463 = vector.extract_strided_slice %454 {offsets = [0, 128], sizes = [16, 128], strides = [1, 1]} : vector<16x512xf32> to vector<16x128xf32>
    %cst_190 = arith.constant 5.000000e-01 : f32
    %464 = vector.broadcast %cst_190 : f32 to vector<16x128xf32>
    %465 = arith.mulf %464, %463 : vector<16x128xf32>
    %466 = math.tanh %465 : vector<16x128xf32>
    %cst_191 = arith.constant 5.000000e-01 : f32
    %467 = vector.broadcast %cst_191 : f32 to vector<16x128xf32>
    %468 = arith.mulf %467, %466 : vector<16x128xf32>
    %cst_192 = arith.constant 5.000000e-01 : f32
    %469 = vector.broadcast %cst_192 : f32 to vector<16x128xf32>
    %470 = arith.addf %468, %469 : vector<16x128xf32>
    %471 = vector.extract_strided_slice %454 {offsets = [0, 256], sizes = [16, 128], strides = [1, 1]} : vector<16x512xf32> to vector<16x128xf32>
    %472 = math.tanh %471 : vector<16x128xf32>
    %473 = vector.extract_strided_slice %454 {offsets = [0, 384], sizes = [16, 128], strides = [1, 1]} : vector<16x512xf32> to vector<16x128xf32>
    %cst_193 = arith.constant 5.000000e-01 : f32
    %474 = vector.broadcast %cst_193 : f32 to vector<16x128xf32>
    %475 = arith.mulf %474, %473 : vector<16x128xf32>
    %476 = math.tanh %475 : vector<16x128xf32>
    %cst_194 = arith.constant 5.000000e-01 : f32
    %477 = vector.broadcast %cst_194 : f32 to vector<16x128xf32>
    %478 = arith.mulf %477, %476 : vector<16x128xf32>
    %cst_195 = arith.constant 5.000000e-01 : f32
    %479 = vector.broadcast %cst_195 : f32 to vector<16x128xf32>
    %480 = arith.addf %478, %479 : vector<16x128xf32>
    %481 = arith.mulf %470, %446 : vector<16x128xf32>
    %482 = arith.mulf %462, %472 : vector<16x128xf32>
    %483 = arith.addf %481, %482 : vector<16x128xf32>
    %484 = math.tanh %483 : vector<16x128xf32>
    %485 = arith.mulf %480, %484 : vector<16x128xf32>
    %c3_i32_196 = arith.constant 3 : i32
    %486 = arith.index_cast %c3_i32_196 : i32 to index
    %c0_197 = arith.constant 0 : index
    %c0_198 = arith.constant 0 : index
    %487 = vector.load %arg14[%486, %c0_197, %c0_198] : memref<8x16x512xf32, #tpu.memory_space<vmem>>, vector<1x16x512xf32>
    %488 = vector.shape_cast %487 : vector<1x16x512xf32> to vector<16x512xf32>
    %489 = arith.truncf %485 : vector<16x128xf32> to vector<16x128xbf16>
    %cst_199 = arith.constant dense<0.000000e+00> : vector<16x512xf32>
    %490 = tpu.matmul %489, %370, %cst_199 {dimension_numbers = #tpu.dot_dimension_numbers<[1], [0], [0], [1], [0, 0, 1, 1], [], []>} : vector<16x128xbf16>, vector<128x512xbf16>, vector<16x512xf32> -> vector<16x512xf32>
    %491 = arith.addf %488, %490 : vector<16x512xf32>
    %492 = vector.extract_strided_slice %491 {offsets = [0, 0], sizes = [16, 128], strides = [1, 1]} : vector<16x512xf32> to vector<16x128xf32>
    %cst_200 = arith.constant 5.000000e-01 : f32
    %493 = vector.broadcast %cst_200 : f32 to vector<16x128xf32>
    %494 = arith.mulf %493, %492 : vector<16x128xf32>
    %495 = math.tanh %494 : vector<16x128xf32>
    %cst_201 = arith.constant 5.000000e-01 : f32
    %496 = vector.broadcast %cst_201 : f32 to vector<16x128xf32>
    %497 = arith.mulf %496, %495 : vector<16x128xf32>
    %cst_202 = arith.constant 5.000000e-01 : f32
    %498 = vector.broadcast %cst_202 : f32 to vector<16x128xf32>
    %499 = arith.addf %497, %498 : vector<16x128xf32>
    %500 = vector.extract_strided_slice %491 {offsets = [0, 128], sizes = [16, 128], strides = [1, 1]} : vector<16x512xf32> to vector<16x128xf32>
    %cst_203 = arith.constant 5.000000e-01 : f32
    %501 = vector.broadcast %cst_203 : f32 to vector<16x128xf32>
    %502 = arith.mulf %501, %500 : vector<16x128xf32>
    %503 = math.tanh %502 : vector<16x128xf32>
    %cst_204 = arith.constant 5.000000e-01 : f32
    %504 = vector.broadcast %cst_204 : f32 to vector<16x128xf32>
    %505 = arith.mulf %504, %503 : vector<16x128xf32>
    %cst_205 = arith.constant 5.000000e-01 : f32
    %506 = vector.broadcast %cst_205 : f32 to vector<16x128xf32>
    %507 = arith.addf %505, %506 : vector<16x128xf32>
    %508 = vector.extract_strided_slice %491 {offsets = [0, 256], sizes = [16, 128], strides = [1, 1]} : vector<16x512xf32> to vector<16x128xf32>
    %509 = math.tanh %508 : vector<16x128xf32>
    %510 = vector.extract_strided_slice %491 {offsets = [0, 384], sizes = [16, 128], strides = [1, 1]} : vector<16x512xf32> to vector<16x128xf32>
    %cst_206 = arith.constant 5.000000e-01 : f32
    %511 = vector.broadcast %cst_206 : f32 to vector<16x128xf32>
    %512 = arith.mulf %511, %510 : vector<16x128xf32>
    %513 = math.tanh %512 : vector<16x128xf32>
    %cst_207 = arith.constant 5.000000e-01 : f32
    %514 = vector.broadcast %cst_207 : f32 to vector<16x128xf32>
    %515 = arith.mulf %514, %513 : vector<16x128xf32>
    %cst_208 = arith.constant 5.000000e-01 : f32
    %516 = vector.broadcast %cst_208 : f32 to vector<16x128xf32>
    %517 = arith.addf %515, %516 : vector<16x128xf32>
    %518 = arith.mulf %507, %483 : vector<16x128xf32>
    %519 = arith.mulf %499, %509 : vector<16x128xf32>
    %520 = arith.addf %518, %519 : vector<16x128xf32>
    %521 = math.tanh %520 : vector<16x128xf32>
    %522 = arith.mulf %517, %521 : vector<16x128xf32>
    %c4_i32_209 = arith.constant 4 : i32
    %523 = arith.index_cast %c4_i32_209 : i32 to index
    %c0_210 = arith.constant 0 : index
    %c0_211 = arith.constant 0 : index
    %524 = vector.load %arg14[%523, %c0_210, %c0_211] : memref<8x16x512xf32, #tpu.memory_space<vmem>>, vector<1x16x512xf32>
    %525 = vector.shape_cast %524 : vector<1x16x512xf32> to vector<16x512xf32>
    %526 = arith.truncf %522 : vector<16x128xf32> to vector<16x128xbf16>
    %cst_212 = arith.constant dense<0.000000e+00> : vector<16x512xf32>
    %527 = tpu.matmul %526, %370, %cst_212 {dimension_numbers = #tpu.dot_dimension_numbers<[1], [0], [0], [1], [0, 0, 1, 1], [], []>} : vector<16x128xbf16>, vector<128x512xbf16>, vector<16x512xf32> -> vector<16x512xf32>
    %528 = arith.addf %525, %527 : vector<16x512xf32>
    %529 = vector.extract_strided_slice %528 {offsets = [0, 0], sizes = [16, 128], strides = [1, 1]} : vector<16x512xf32> to vector<16x128xf32>
    %cst_213 = arith.constant 5.000000e-01 : f32
    %530 = vector.broadcast %cst_213 : f32 to vector<16x128xf32>
    %531 = arith.mulf %530, %529 : vector<16x128xf32>
    %532 = math.tanh %531 : vector<16x128xf32>
    %cst_214 = arith.constant 5.000000e-01 : f32
    %533 = vector.broadcast %cst_214 : f32 to vector<16x128xf32>
    %534 = arith.mulf %533, %532 : vector<16x128xf32>
    %cst_215 = arith.constant 5.000000e-01 : f32
    %535 = vector.broadcast %cst_215 : f32 to vector<16x128xf32>
    %536 = arith.addf %534, %535 : vector<16x128xf32>
    %537 = vector.extract_strided_slice %528 {offsets = [0, 128], sizes = [16, 128], strides = [1, 1]} : vector<16x512xf32> to vector<16x128xf32>
    %cst_216 = arith.constant 5.000000e-01 : f32
    %538 = vector.broadcast %cst_216 : f32 to vector<16x128xf32>
    %539 = arith.mulf %538, %537 : vector<16x128xf32>
    %540 = math.tanh %539 : vector<16x128xf32>
    %cst_217 = arith.constant 5.000000e-01 : f32
    %541 = vector.broadcast %cst_217 : f32 to vector<16x128xf32>
    %542 = arith.mulf %541, %540 : vector<16x128xf32>
    %cst_218 = arith.constant 5.000000e-01 : f32
    %543 = vector.broadcast %cst_218 : f32 to vector<16x128xf32>
    %544 = arith.addf %542, %543 : vector<16x128xf32>
    %545 = vector.extract_strided_slice %528 {offsets = [0, 256], sizes = [16, 128], strides = [1, 1]} : vector<16x512xf32> to vector<16x128xf32>
    %546 = math.tanh %545 : vector<16x128xf32>
    %547 = vector.extract_strided_slice %528 {offsets = [0, 384], sizes = [16, 128], strides = [1, 1]} : vector<16x512xf32> to vector<16x128xf32>
    %cst_219 = arith.constant 5.000000e-01 : f32
    %548 = vector.broadcast %cst_219 : f32 to vector<16x128xf32>
    %549 = arith.mulf %548, %547 : vector<16x128xf32>
    %550 = math.tanh %549 : vector<16x128xf32>
    %cst_220 = arith.constant 5.000000e-01 : f32
    %551 = vector.broadcast %cst_220 : f32 to vector<16x128xf32>
    %552 = arith.mulf %551, %550 : vector<16x128xf32>
    %cst_221 = arith.constant 5.000000e-01 : f32
    %553 = vector.broadcast %cst_221 : f32 to vector<16x128xf32>
    %554 = arith.addf %552, %553 : vector<16x128xf32>
    %555 = arith.mulf %544, %520 : vector<16x128xf32>
    %556 = arith.mulf %536, %546 : vector<16x128xf32>
    %557 = arith.addf %555, %556 : vector<16x128xf32>
    %558 = math.tanh %557 : vector<16x128xf32>
    %559 = arith.mulf %554, %558 : vector<16x128xf32>
    %c5_i32_222 = arith.constant 5 : i32
    %560 = arith.index_cast %c5_i32_222 : i32 to index
    %c0_223 = arith.constant 0 : index
    %c0_224 = arith.constant 0 : index
    %561 = vector.load %arg14[%560, %c0_223, %c0_224] : memref<8x16x512xf32, #tpu.memory_space<vmem>>, vector<1x16x512xf32>
    %562 = vector.shape_cast %561 : vector<1x16x512xf32> to vector<16x512xf32>
    %563 = arith.truncf %559 : vector<16x128xf32> to vector<16x128xbf16>
    %cst_225 = arith.constant dense<0.000000e+00> : vector<16x512xf32>
    %564 = tpu.matmul %563, %370, %cst_225 {dimension_numbers = #tpu.dot_dimension_numbers<[1], [0], [0], [1], [0, 0, 1, 1], [], []>} : vector<16x128xbf16>, vector<128x512xbf16>, vector<16x512xf32> -> vector<16x512xf32>
    %565 = arith.addf %562, %564 : vector<16x512xf32>
    %566 = vector.extract_strided_slice %565 {offsets = [0, 0], sizes = [16, 128], strides = [1, 1]} : vector<16x512xf32> to vector<16x128xf32>
    %cst_226 = arith.constant 5.000000e-01 : f32
    %567 = vector.broadcast %cst_226 : f32 to vector<16x128xf32>
    %568 = arith.mulf %567, %566 : vector<16x128xf32>
    %569 = math.tanh %568 : vector<16x128xf32>
    %cst_227 = arith.constant 5.000000e-01 : f32
    %570 = vector.broadcast %cst_227 : f32 to vector<16x128xf32>
    %571 = arith.mulf %570, %569 : vector<16x128xf32>
    %cst_228 = arith.constant 5.000000e-01 : f32
    %572 = vector.broadcast %cst_228 : f32 to vector<16x128xf32>
    %573 = arith.addf %571, %572 : vector<16x128xf32>
    %574 = vector.extract_strided_slice %565 {offsets = [0, 128], sizes = [16, 128], strides = [1, 1]} : vector<16x512xf32> to vector<16x128xf32>
    %cst_229 = arith.constant 5.000000e-01 : f32
    %575 = vector.broadcast %cst_229 : f32 to vector<16x128xf32>
    %576 = arith.mulf %575, %574 : vector<16x128xf32>
    %577 = math.tanh %576 : vector<16x128xf32>
    %cst_230 = arith.constant 5.000000e-01 : f32
    %578 = vector.broadcast %cst_230 : f32 to vector<16x128xf32>
    %579 = arith.mulf %578, %577 : vector<16x128xf32>
    %cst_231 = arith.constant 5.000000e-01 : f32
    %580 = vector.broadcast %cst_231 : f32 to vector<16x128xf32>
    %581 = arith.addf %579, %580 : vector<16x128xf32>
    %582 = vector.extract_strided_slice %565 {offsets = [0, 256], sizes = [16, 128], strides = [1, 1]} : vector<16x512xf32> to vector<16x128xf32>
    %583 = math.tanh %582 : vector<16x128xf32>
    %584 = vector.extract_strided_slice %565 {offsets = [0, 384], sizes = [16, 128], strides = [1, 1]} : vector<16x512xf32> to vector<16x128xf32>
    %cst_232 = arith.constant 5.000000e-01 : f32
    %585 = vector.broadcast %cst_232 : f32 to vector<16x128xf32>
    %586 = arith.mulf %585, %584 : vector<16x128xf32>
    %587 = math.tanh %586 : vector<16x128xf32>
    %cst_233 = arith.constant 5.000000e-01 : f32
    %588 = vector.broadcast %cst_233 : f32 to vector<16x128xf32>
    %589 = arith.mulf %588, %587 : vector<16x128xf32>
    %cst_234 = arith.constant 5.000000e-01 : f32
    %590 = vector.broadcast %cst_234 : f32 to vector<16x128xf32>
    %591 = arith.addf %589, %590 : vector<16x128xf32>
    %592 = arith.mulf %581, %557 : vector<16x128xf32>
    %593 = arith.mulf %573, %583 : vector<16x128xf32>
    %594 = arith.addf %592, %593 : vector<16x128xf32>
    %595 = math.tanh %594 : vector<16x128xf32>
    %596 = arith.mulf %591, %595 : vector<16x128xf32>
    %c6_i32_235 = arith.constant 6 : i32
    %597 = arith.index_cast %c6_i32_235 : i32 to index
    %c0_236 = arith.constant 0 : index
    %c0_237 = arith.constant 0 : index
    %598 = vector.load %arg14[%597, %c0_236, %c0_237] : memref<8x16x512xf32, #tpu.memory_space<vmem>>, vector<1x16x512xf32>
    %599 = vector.shape_cast %598 : vector<1x16x512xf32> to vector<16x512xf32>
    %600 = arith.truncf %596 : vector<16x128xf32> to vector<16x128xbf16>
    %cst_238 = arith.constant dense<0.000000e+00> : vector<16x512xf32>
    %601 = tpu.matmul %600, %370, %cst_238 {dimension_numbers = #tpu.dot_dimension_numbers<[1], [0], [0], [1], [0, 0, 1, 1], [], []>} : vector<16x128xbf16>, vector<128x512xbf16>, vector<16x512xf32> -> vector<16x512xf32>
    %602 = arith.addf %599, %601 : vector<16x512xf32>
    %603 = vector.extract_strided_slice %602 {offsets = [0, 0], sizes = [16, 128], strides = [1, 1]} : vector<16x512xf32> to vector<16x128xf32>
    %cst_239 = arith.constant 5.000000e-01 : f32
    %604 = vector.broadcast %cst_239 : f32 to vector<16x128xf32>
    %605 = arith.mulf %604, %603 : vector<16x128xf32>
    %606 = math.tanh %605 : vector<16x128xf32>
    %cst_240 = arith.constant 5.000000e-01 : f32
    %607 = vector.broadcast %cst_240 : f32 to vector<16x128xf32>
    %608 = arith.mulf %607, %606 : vector<16x128xf32>
    %cst_241 = arith.constant 5.000000e-01 : f32
    %609 = vector.broadcast %cst_241 : f32 to vector<16x128xf32>
    %610 = arith.addf %608, %609 : vector<16x128xf32>
    %611 = vector.extract_strided_slice %602 {offsets = [0, 128], sizes = [16, 128], strides = [1, 1]} : vector<16x512xf32> to vector<16x128xf32>
    %cst_242 = arith.constant 5.000000e-01 : f32
    %612 = vector.broadcast %cst_242 : f32 to vector<16x128xf32>
    %613 = arith.mulf %612, %611 : vector<16x128xf32>
    %614 = math.tanh %613 : vector<16x128xf32>
    %cst_243 = arith.constant 5.000000e-01 : f32
    %615 = vector.broadcast %cst_243 : f32 to vector<16x128xf32>
    %616 = arith.mulf %615, %614 : vector<16x128xf32>
    %cst_244 = arith.constant 5.000000e-01 : f32
    %617 = vector.broadcast %cst_244 : f32 to vector<16x128xf32>
    %618 = arith.addf %616, %617 : vector<16x128xf32>
    %619 = vector.extract_strided_slice %602 {offsets = [0, 256], sizes = [16, 128], strides = [1, 1]} : vector<16x512xf32> to vector<16x128xf32>
    %620 = math.tanh %619 : vector<16x128xf32>
    %621 = vector.extract_strided_slice %602 {offsets = [0, 384], sizes = [16, 128], strides = [1, 1]} : vector<16x512xf32> to vector<16x128xf32>
    %cst_245 = arith.constant 5.000000e-01 : f32
    %622 = vector.broadcast %cst_245 : f32 to vector<16x128xf32>
    %623 = arith.mulf %622, %621 : vector<16x128xf32>
    %624 = math.tanh %623 : vector<16x128xf32>
    %cst_246 = arith.constant 5.000000e-01 : f32
    %625 = vector.broadcast %cst_246 : f32 to vector<16x128xf32>
    %626 = arith.mulf %625, %624 : vector<16x128xf32>
    %cst_247 = arith.constant 5.000000e-01 : f32
    %627 = vector.broadcast %cst_247 : f32 to vector<16x128xf32>
    %628 = arith.addf %626, %627 : vector<16x128xf32>
    %629 = arith.mulf %618, %594 : vector<16x128xf32>
    %630 = arith.mulf %610, %620 : vector<16x128xf32>
    %631 = arith.addf %629, %630 : vector<16x128xf32>
    %632 = math.tanh %631 : vector<16x128xf32>
    %633 = arith.mulf %628, %632 : vector<16x128xf32>
    %c7_i32_248 = arith.constant 7 : i32
    %634 = arith.index_cast %c7_i32_248 : i32 to index
    %c0_249 = arith.constant 0 : index
    %c0_250 = arith.constant 0 : index
    %635 = vector.load %arg14[%634, %c0_249, %c0_250] : memref<8x16x512xf32, #tpu.memory_space<vmem>>, vector<1x16x512xf32>
    %636 = vector.shape_cast %635 : vector<1x16x512xf32> to vector<16x512xf32>
    %637 = arith.truncf %633 : vector<16x128xf32> to vector<16x128xbf16>
    %cst_251 = arith.constant dense<0.000000e+00> : vector<16x512xf32>
    %638 = tpu.matmul %637, %370, %cst_251 {dimension_numbers = #tpu.dot_dimension_numbers<[1], [0], [0], [1], [0, 0, 1, 1], [], []>} : vector<16x128xbf16>, vector<128x512xbf16>, vector<16x512xf32> -> vector<16x512xf32>
    %639 = arith.addf %636, %638 : vector<16x512xf32>
    %640 = vector.extract_strided_slice %639 {offsets = [0, 0], sizes = [16, 128], strides = [1, 1]} : vector<16x512xf32> to vector<16x128xf32>
    %cst_252 = arith.constant 5.000000e-01 : f32
    %641 = vector.broadcast %cst_252 : f32 to vector<16x128xf32>
    %642 = arith.mulf %641, %640 : vector<16x128xf32>
    %643 = math.tanh %642 : vector<16x128xf32>
    %cst_253 = arith.constant 5.000000e-01 : f32
    %644 = vector.broadcast %cst_253 : f32 to vector<16x128xf32>
    %645 = arith.mulf %644, %643 : vector<16x128xf32>
    %cst_254 = arith.constant 5.000000e-01 : f32
    %646 = vector.broadcast %cst_254 : f32 to vector<16x128xf32>
    %647 = arith.addf %645, %646 : vector<16x128xf32>
    %648 = vector.extract_strided_slice %639 {offsets = [0, 128], sizes = [16, 128], strides = [1, 1]} : vector<16x512xf32> to vector<16x128xf32>
    %cst_255 = arith.constant 5.000000e-01 : f32
    %649 = vector.broadcast %cst_255 : f32 to vector<16x128xf32>
    %650 = arith.mulf %649, %648 : vector<16x128xf32>
    %651 = math.tanh %650 : vector<16x128xf32>
    %cst_256 = arith.constant 5.000000e-01 : f32
    %652 = vector.broadcast %cst_256 : f32 to vector<16x128xf32>
    %653 = arith.mulf %652, %651 : vector<16x128xf32>
    %cst_257 = arith.constant 5.000000e-01 : f32
    %654 = vector.broadcast %cst_257 : f32 to vector<16x128xf32>
    %655 = arith.addf %653, %654 : vector<16x128xf32>
    %656 = vector.extract_strided_slice %639 {offsets = [0, 256], sizes = [16, 128], strides = [1, 1]} : vector<16x512xf32> to vector<16x128xf32>
    %657 = math.tanh %656 : vector<16x128xf32>
    %658 = vector.extract_strided_slice %639 {offsets = [0, 384], sizes = [16, 128], strides = [1, 1]} : vector<16x512xf32> to vector<16x128xf32>
    %cst_258 = arith.constant 5.000000e-01 : f32
    %659 = vector.broadcast %cst_258 : f32 to vector<16x128xf32>
    %660 = arith.mulf %659, %658 : vector<16x128xf32>
    %661 = math.tanh %660 : vector<16x128xf32>
    %cst_259 = arith.constant 5.000000e-01 : f32
    %662 = vector.broadcast %cst_259 : f32 to vector<16x128xf32>
    %663 = arith.mulf %662, %661 : vector<16x128xf32>
    %cst_260 = arith.constant 5.000000e-01 : f32
    %664 = vector.broadcast %cst_260 : f32 to vector<16x128xf32>
    %665 = arith.addf %663, %664 : vector<16x128xf32>
    %666 = arith.mulf %655, %631 : vector<16x128xf32>
    %667 = arith.mulf %647, %657 : vector<16x128xf32>
    %668 = arith.addf %666, %667 : vector<16x128xf32>
    %669 = math.tanh %668 : vector<16x128xf32>
    %670 = arith.mulf %665, %669 : vector<16x128xf32>
    %c8_i32_261 = arith.constant 8 : i32
    %c1_262 = arith.constant 1 : index
    %c0_263 = arith.constant 0 : index
    %c0_264 = arith.constant 0 : index
    %671 = vector.load %arg11[%c1_262, %c0_263, %c0_264] : memref<2x16x128xf32, #tpu.memory_space<vmem>>, vector<1x16x128xf32>
    %672 = vector.shape_cast %671 : vector<1x16x128xf32> to vector<16x128xf32>
    %673 = vector.shape_cast %670 : vector<16x128xf32> to vector<1x16x128xf32>
    tpu.vector_store %arg11[%c1_262, %c0_263, %c0_264], %673 {strides = array<i32>} : memref<2x16x128xf32, #tpu.memory_space<vmem>>, vector<1x16x128xf32>,
    %c1_265 = arith.constant 1 : index
    %c0_266 = arith.constant 0 : index
    %c0_267 = arith.constant 0 : index
    %674 = vector.load %arg12[%c1_265, %c0_266, %c0_267] : memref<2x16x128xf32, #tpu.memory_space<vmem>>, vector<1x16x128xf32>
    %675 = vector.shape_cast %674 : vector<1x16x128xf32> to vector<16x128xf32>
    %676 = vector.shape_cast %668 : vector<16x128xf32> to vector<1x16x128xf32>
    tpu.vector_store %arg12[%c1_265, %c0_266, %c0_267], %676 {strides = array<i32>} : memref<2x16x128xf32, #tpu.memory_space<vmem>>, vector<1x16x128xf32>,
    %c0_i32_268 = arith.constant 0 : i32
    %677 = arith.cmpi eq, %arg1, %c0_i32_268 : i32
    %678 = arith.extui %677 : i1 to i32
    %c0_i32_269 = arith.constant 0 : i32
    %679 = arith.cmpi ne, %678, %c0_i32_269 : i32
    scf.if %679 {
      %c1_270 = arith.constant 1 : index
      %c0_271 = arith.constant 0 : index
      %c0_272 = arith.constant 0 : index
      %680 = vector.load %arg11[%c1_270, %c0_271, %c0_272] : memref<2x16x128xf32, #tpu.memory_space<vmem>>, vector<1x16x128xf32>
      %681 = vector.shape_cast %680 : vector<1x16x128xf32> to vector<16x128xf32>
      %c0_273 = arith.constant 0 : index
      %c0_274 = arith.constant 0 : index
      %682 = vector.load %arg8[%c0_273, %c0_274] : memref<128x128xf32, #tpu.memory_space<vmem>>, vector<128x128xf32>
      %cst_275 = arith.constant dense<0.000000e+00> : vector<16x128xf32>
      %683 = tpu.matmul %681, %682, %cst_275 {dimension_numbers = #tpu.dot_dimension_numbers<[1], [0], [0], [1], [0, 0, 1, 1], [], []>} : vector<16x128xf32>, vector<128x128xf32>, vector<16x128xf32> -> vector<16x128xf32>
      %c0_276 = arith.constant 0 : index
      %c0_277 = arith.constant 0 : index
      %684 = vector.load %arg9[%c0_276, %c0_277] : memref<1x128xf32, #tpu.memory_space<vmem>>, vector<1x128xf32>
      %685 = vector.broadcast %684 : vector<1x128xf32> to vector<16x128xf32>
      %686 = arith.addf %683, %685 : vector<16x128xf32>
      %c0_278 = arith.constant 0 : index
      %c0_279 = arith.constant 0 : index
      %687 = vector.load %arg10[%c0_278, %c0_279] : memref<16x128xf32, #tpu.memory_space<vmem>>, vector<16x128xf32>
      tpu.vector_store %arg10[%c0_278, %c0_279], %686 {strides = array<i32>} : memref<16x128xf32, #tpu.memory_space<vmem>>, vector<16x128xf32>,
    } else {
    }
    return
  }
  func.func @transform_0(%arg0: i32, %arg1: i32) -> (i32, i32, i32) {
    %c0_i32 = arith.constant 0 : i32
    %c0_i32_0 = arith.constant 0 : i32
    return %arg1, %arg0, %c0_i32 : i32, i32, i32
  }
  func.func @transform_1(%arg0: i32, %arg1: i32) -> (i32, i32) {
    %c0_i32 = arith.constant 0 : i32
    %c0_i32_0 = arith.constant 0 : i32
    %c0_i32_1 = arith.constant 0 : i32
    return %c0_i32, %c0_i32_0 : i32, i32
  }
  func.func @transform_2(%arg0: i32, %arg1: i32) -> (i32, i32) {
    %c0_i32 = arith.constant 0 : i32
    %c0_i32_0 = arith.constant 0 : i32
    %c0_i32_1 = arith.constant 0 : i32
    return %c0_i32, %c0_i32_0 : i32, i32
  }
  func.func @transform_3(%arg0: i32, %arg1: i32) -> (i32, i32) {
    %c0_i32 = arith.constant 0 : i32
    %c0_i32_0 = arith.constant 0 : i32
    %c0_i32_1 = arith.constant 0 : i32
    return %c0_i32, %c0_i32_0 : i32, i32
  }
  func.func @transform_4(%arg0: i32, %arg1: i32) -> (i32, i32) {
    %c0_i32 = arith.constant 0 : i32
    %c0_i32_0 = arith.constant 0 : i32
    %c0_i32_1 = arith.constant 0 : i32
    return %c0_i32, %c0_i32_0 : i32, i32
  }
  func.func @transform_5(%arg0: i32, %arg1: i32) -> (i32, i32, i32) {
    %c0_i32 = arith.constant 0 : i32
    %c0_i32_0 = arith.constant 0 : i32
    %c0_i32_1 = arith.constant 0 : i32
    %c0_i32_2 = arith.constant 0 : i32
    return %c0_i32, %c0_i32_0, %c0_i32_1 : i32, i32, i32
  }
  func.func @transform_6(%arg0: i32, %arg1: i32) -> (i32, i32) {
    %c0_i32 = arith.constant 0 : i32
    %c0_i32_0 = arith.constant 0 : i32
    %c0_i32_1 = arith.constant 0 : i32
    return %c0_i32, %c0_i32_0 : i32, i32
  }
  func.func @transform_7(%arg0: i32, %arg1: i32) -> (i32, i32) {
    %c0_i32 = arith.constant 0 : i32
    %c0_i32_0 = arith.constant 0 : i32
    %c0_i32_1 = arith.constant 0 : i32
    return %c0_i32, %c0_i32_0 : i32, i32
  }
  func.func @transform_8(%arg0: i32, %arg1: i32) -> (i32, i32) {
    %c0_i32 = arith.constant 0 : i32
    %c0_i32_0 = arith.constant 0 : i32
    return %arg0, %c0_i32 : i32, i32
  }
}

</mosaic_0001>

<llo_original>
// kernel: tpu_custom_call.1
$region0: #{tpu_custom_call.1}
  #allocation0 [shape = 'u32[]', space=smem, size = 0x4, offset = 0x4, fixed_abs, tag = 'smem constant byte address 0x4 - core index']
  #allocation1 [shape = 'u32[72,128]{1,0:T(1,128)}', space=vmem, size = 0x9000, scoped, tag = 'internal scratch']
  #allocation2 [shape = 'f32[2,16,128]{2,1,0:T(8,128)}', space=vmem, size = 0x4000, scoped, tag = 'scratch operand']
  #allocation3 [shape = 'f32[2,16,128]{2,1,0:T(8,128)}', space=vmem, size = 0x4000, scoped, tag = 'scratch operand']
  #allocation4 [shape = 'bf16[8,16,128]{2,1,0:T(8,128)(2,1)}', space=vmem, size = 0x8000, scoped, tag = 'scratch operand']
  #allocation5 [shape = 'f32[8,16,512]{2,1,0:T(8,128)}', space=vmem, size = 0x40000, scoped, tag = 'scratch operand']
  %s0 = inlined_call_operand.hbm [shape: bf16[8,16,128], index: 0, kind: input, shape index: {}]
  %s1 = inlined_call_operand.hbm [shape: bf16[128,512], index: 1, kind: input, shape index: {}]
  %s2 = inlined_call_operand.hbm [shape: bf16[128,512], index: 2, kind: input, shape index: {}]
  %s3 = inlined_call_operand.hbm [shape: bf16[128,512], index: 3, kind: input, shape index: {}]
  %s4 = inlined_call_operand.hbm [shape: bf16[128,512], index: 4, kind: input, shape index: {}]
  %s5 = inlined_call_operand.hbm [shape: f32[2,1,512], index: 5, kind: input, shape index: {}]
  %s6 = inlined_call_operand.hbm [shape: f32[128,128], index: 6, kind: input, shape index: {}]
  %s7 = inlined_call_operand.vmem [shape: f32[1,128], index: 7, kind: input, shape index: {}]
  %s8 = inlined_call_operand.hbm [shape: f32[16,128], index: 8, kind: output, shape index: {}]
  %s9 = sld [smem:[#allocation0]]
  $region78: #{tpu_custom_call.1} parent=0
    _
  %s11 = ssub.s32 1, %s9
  %s12 = scalar_select 0, %s11, %s9
  $region1: #{tpu_custom_call.1} parent=0
    #allocation6 [shape = 'u8[32768]{0}', space=vmem, size = 0x8000, scoped, tag = 'input window, operand 0, single buffered']
    #allocation7 [shape = 's32[1]{0}', space=sflag, size = 0x4, scoped, tag = 'scoped memory for tpu_custom_call.1']
    #allocation8 [shape = 's32[1]{0}', space=sflag, size = 0x4, scoped, tag = 'scoped memory for tpu_custom_call.1']
    #allocation9 [shape = 'u8[131072]{0}', space=vmem, size = 0x20000, scoped, tag = 'input window, operand 1, single buffered']
    #allocation10 [shape = 's32[1]{0}', space=sflag, size = 0x4, scoped, tag = 'scoped memory for tpu_custom_call.1']
    #allocation11 [shape = 'u8[131072]{0}', space=vmem, size = 0x20000, scoped, tag = 'input window, operand 2, single buffered']
    #allocation12 [shape = 'u8[131072]{0}', space=vmem, size = 0x20000, scoped, tag = 'input window, operand 3, single buffered']
    #allocation13 [shape = 's32[1]{0}', space=sflag, size = 0x4, scoped, tag = 'scoped memory for tpu_custom_call.1']
    #allocation14 [shape = 'u8[131072]{0}', space=vmem, size = 0x20000, scoped, tag = 'input window, operand 4, single buffered']
    #allocation15 [shape = 'u8[4096]{0}', space=vmem, size = 0x1000, scoped, tag = 'input window, operand 5, single buffered']
    #allocation16 [shape = 's32[1]{0}', space=sflag, size = 0x4, scoped, tag = 'scoped memory for tpu_custom_call.1']
    #allocation17 [shape = 'u8[65536]{0}', space=vmem, size = 0x10000, scoped, tag = 'input window, operand 6, single buffered']
    #allocation18 [shape = 'u8[8192]{0}', space=vmem, size = 0x2000, scoped, tag = 'output window, operand 0, single buffered']
    %13 = vsyncpa [#allocation7], 0
    %14 = vsyncpa [#allocation10], 0
    %15 = vsyncpa [#allocation13], 0
    %16 = vsyncpa [#allocation16], 0
    %17 = vsyncpa [#allocation8], 0
    // Predicated region
    $region2: #{tpu_custom_call.1} parent=1 // pred_check
      _
    $region3: #{tpu_custom_call.1} parent=1 // pred_check_branch
      %19 = sbr.rel (0) target = $region5
    $region4: #{tpu_custom_call.1} parent=1 // pred_region
      %21 = vsyncadd [#allocation7], 0
      %s22 = sshll.u32 %s0, 4
      %s23 = int_to_ptr.hbm [resolvable:$true] %s22
      %s24 = sshll.u32 [#allocation6], 4
      %s25 = int_to_ptr.vmem [resolvable:$true] %s24
      %30 = dma.hbm_to_vmem [thread:$0]  %s23, 1024, %s25, [#allocation7], 64, 64, 4
    $region5: #{tpu_custom_call.1} parent=1 // pred_fallthru
      _
    // Predicated region
    $region6: #{tpu_custom_call.1} parent=1 // pred_check
      _
    $region7: #{tpu_custom_call.1} parent=1 // pred_check_branch
      %32 = sbr.rel (0) target = $region9
    $region8: #{tpu_custom_call.1} parent=1 // pred_region
      %34 = vsyncadd [#allocation10], 0
      %s35 = sshll.u32 %s1, 4
      %s36 = int_to_ptr.hbm [resolvable:$true] %s35
      %s37 = sshll.u32 [#allocation9], 4
      %s38 = int_to_ptr.vmem [resolvable:$true] %s37
      %43 = dma.hbm_to_vmem [thread:$0]  %s36, 4096, %s38, [#allocation10], 256, 256, 16
    $region9: #{tpu_custom_call.1} parent=1 // pred_fallthru
      _
    // Predicated region
    $region10: #{tpu_custom_call.1} parent=1 // pred_check
      _
    $region11: #{tpu_custom_call.1} parent=1 // pred_check_branch
      %45 = sbr.rel (0) target = $region13
    $region12: #{tpu_custom_call.1} parent=1 // pred_region
      %47 = vsyncadd [#allocation10], 0
      %s48 = sshll.u32 %s2, 4
      %s49 = int_to_ptr.hbm [resolvable:$true] %s48
      %s50 = sshll.u32 [#allocation11], 4
      %s51 = int_to_ptr.vmem [resolvable:$true] %s50
      %56 = dma.hbm_to_vmem [thread:$0]  %s49, 4096, %s51, [#allocation10], 256, 256, 16
    $region13: #{tpu_custom_call.1} parent=1 // pred_fallthru
      _
    // Predicated region
    $region14: #{tpu_custom_call.1} parent=1 // pred_check
      _
    $region15: #{tpu_custom_call.1} parent=1 // pred_check_branch
      %58 = sbr.rel (0) target = $region17
    $region16: #{tpu_custom_call.1} parent=1 // pred_region
      %60 = vsyncadd [#allocation13], 0
      %s61 = sshll.u32 %s3, 4
      %s62 = int_to_ptr.hbm [resolvable:$true] %s61
      %s63 = sshll.u32 [#allocation12], 4
      %s64 = int_to_ptr.vmem [resolvable:$true] %s63
      %69 = dma.hbm_to_vmem [thread:$0]  %s62, 4096, %s64, [#allocation13], 256, 256, 16
    $region17: #{tpu_custom_call.1} parent=1 // pred_fallthru
      _
    // Predicated region
    $region18: #{tpu_custom_call.1} parent=1 // pred_check
      _
    $region19: #{tpu_custom_call.1} parent=1 // pred_check_branch
      %71 = sbr.rel (0) target = $region21
    $region20: #{tpu_custom_call.1} parent=1 // pred_region
      %73 = vsyncadd [#allocation13], 0
      %s74 = sshll.u32 %s4, 4
      %s75 = int_to_ptr.hbm [resolvable:$true] %s74
      %s76 = sshll.u32 [#allocation14], 4
      %s77 = int_to_ptr.vmem [resolvable:$true] %s76
      %82 = dma.hbm_to_vmem [thread:$0]  %s75, 4096, %s77, [#allocation13], 256, 256, 16
    $region21: #{tpu_custom_call.1} parent=1 // pred_fallthru
      _
    // Predicated region
    $region22: #{tpu_custom_call.1} parent=1 // pred_check
      _
    $region23: #{tpu_custom_call.1} parent=1 // pred_check_branch
      %84 = sbr.rel (0) target = $region25
    $region24: #{tpu_custom_call.1} parent=1 // pred_region
      %86 = vsyncadd [#allocation16], 0
      %s87 = sshll.u32 %s5, 4
      %s88 = int_to_ptr.hbm [resolvable:$true] %s87
      %s89 = sshll.u32 [#allocation15], 4
      %s90 = int_to_ptr.vmem [resolvable:$true] %s89
      %95 = dma.hbm_to_vmem [thread:$0]  %s88, 128, %s90, [#allocation16], 64, 64, 4
    $region25: #{tpu_custom_call.1} parent=1 // pred_fallthru
      _
    // Predicated region
    $region26: #{tpu_custom_call.1} parent=1 // pred_check
      _
    $region27: #{tpu_custom_call.1} parent=1 // pred_check_branch
      %97 = sbr.rel (0) target = $region29
    $region28: #{tpu_custom_call.1} parent=1 // pred_region
      %99 = vsyncadd [#allocation16], 0
      %s100 = sshll.u32 %s6, 4
      %s101 = int_to_ptr.hbm [resolvable:$true] %s100
      %s102 = sshll.u32 [#allocation17], 4
      %s103 = int_to_ptr.vmem [resolvable:$true] %s102
      %108 = dma.hbm_to_vmem [thread:$0]  %s101, 2048, %s103, [#allocation16], 128, 128, 8
    $region29: #{tpu_custom_call.1} parent=1 // pred_fallthru
      _
    // Predicated region
    $region30: #{tpu_custom_call.1} parent=1 // pred_check
      _
    $region31: #{tpu_custom_call.1} parent=1 // pred_check_branch
      %110 = sbr.rel (0) target = $region33
    $region32: #{tpu_custom_call.1} parent=1 // pred_region
      _
    $region33: #{tpu_custom_call.1} parent=1 // pred_fallthru
      _
    // Predicated region
    $region34: #{tpu_custom_call.1} parent=1 // pred_check
      _
    $region35: #{tpu_custom_call.1} parent=1 // pred_check_branch
      %112 = sbr.rel (0) target = $region37
    $region36: #{tpu_custom_call.1} parent=1 // pred_region
      %114 = dma.done [#allocation7], 1024
    $region37: #{tpu_custom_call.1} parent=1 // pred_fallthru
      _
    // Predicated region
    $region38: #{tpu_custom_call.1} parent=1 // pred_check
      _
    $region39: #{tpu_custom_call.1} parent=1 // pred_check_branch
      %116 = sbr.rel (0) target = $region41
    $region40: #{tpu_custom_call.1} parent=1 // pred_region
      %118 = dma.done [#allocation10], 4096
    $region41: #{tpu_custom_call.1} parent=1 // pred_fallthru
      _
    // Predicated region
    $region42: #{tpu_custom_call.1} parent=1 // pred_check
      _
    $region43: #{tpu_custom_call.1} parent=1 // pred_check_branch
      %120 = sbr.rel (0) target = $region45
    $region44: #{tpu_custom_call.1} parent=1 // pred_region
      %122 = dma.done [#allocation10], 4096
    $region45: #{tpu_custom_call.1} parent=1 // pred_fallthru
      _
    // Predicated region
    $region46: #{tpu_custom_call.1} parent=1 // pred_check
      _
    $region47: #{tpu_custom_call.1} parent=1 // pred_check_branch
      %124 = sbr.rel (0) target = $region49
    $region48: #{tpu_custom_call.1} parent=1 // pred_region
      %126 = dma.done [#allocation13], 4096
    $region49: #{tpu_custom_call.1} parent=1 // pred_fallthru
      _
    // Predicated region
    $region50: #{tpu_custom_call.1} parent=1 // pred_check
      _
    $region51: #{tpu_custom_call.1} parent=1 // pred_check_branch
      %128 = sbr.rel (0) target = $region53
    $region52: #{tpu_custom_call.1} parent=1 // pred_region
      %130 = dma.done [#allocation13], 4096
    $region53: #{tpu_custom_call.1} parent=1 // pred_fallthru
      _
    // Predicated region
    $region54: #{tpu_custom_call.1} parent=1 // pred_check
      _
    $region55: #{tpu_custom_call.1} parent=1 // pred_check_branch
      %132 = sbr.rel (0) target = $region57
    $region56: #{tpu_custom_call.1} parent=1 // pred_region
      %134 = dma.done [#allocation16], 128
    $region57: #{tpu_custom_call.1} parent=1 // pred_fallthru
      _
    // Predicated region
    $region58: #{tpu_custom_call.1} parent=1 // pred_check
      _
    $region59: #{tpu_custom_call.1} parent=1 // pred_check_branch
      %136 = sbr.rel (0) target = $region61
    $region60: #{tpu_custom_call.1} parent=1 // pred_region
      %138 = dma.done [#allocation16], 2048
    $region61: #{tpu_custom_call.1} parent=1 // pred_fallthru
      _
    %p139 = scmp.eq.s32.totalorder 0, 0
    // Predicated region
    $region62: #{tpu_custom_call.1} parent=1 // pred_check
      %p140 = pneg %p139
    $region63: #{tpu_custom_call.1} parent=1 // pred_check_branch
      %142 = sbr.rel (%p140) target = $region65
    $region64: #{tpu_custom_call.1} parent=1 // pred_region
      %143 = vst [vmem:[#allocation2] sm:$0xff] 0.0
      %144 = vst [vmem:[#allocation2 + $0x8] sm:$0xff] 0.0
      %145 = vst [vmem:[#allocation2 + $0x10] sm:$0xff] 0.0
      %146 = vst [vmem:[#allocation2 + $0x18] sm:$0xff] 0.0
      %147 = vst [vmem:[#allocation3] sm:$0xff] 0.0
      %148 = vst [vmem:[#allocation3 + $0x8] sm:$0xff] 0.0
      %149 = vst [vmem:[#allocation3 + $0x10] sm:$0xff] 0.0
      %150 = vst [vmem:[#allocation3 + $0x18] sm:$0xff] 0.0
    $region65: #{tpu_custom_call.1} parent=1 // pred_fallthru
      _
    %v151 = vld [vmem:[#allocation6] sm:$0xf]
    %v152 = vld [vmem:[#allocation6 + $0x4] sm:$0xf]
    %v153 = vld [vmem:[#allocation6 + $0x8] sm:$0xf]
    %v154 = vld [vmem:[#allocation6 + $0xc] sm:$0xf]
    %v155 = vld [vmem:[#allocation6 + $0x10] sm:$0xf]
    %v156 = vld [vmem:[#allocation6 + $0x14] sm:$0xf]
    %v157 = vld [vmem:[#allocation6 + $0x18] sm:$0xf]
    %v158 = vld [vmem:[#allocation6 + $0x1c] sm:$0xf]
    %v159 = vld [vmem:[#allocation6 + $0x20] sm:$0xf]
    %v160 = vld [vmem:[#allocation6 + $0x24] sm:$0xf]
    %v161 = vld [vmem:[#allocation6 + $0x28] sm:$0xf]
    %v162 = vld [vmem:[#allocation6 + $0x2c] sm:$0xf]
    %v163 = vld [vmem:[#allocation6 + $0x30] sm:$0xf]
    %v164 = vld [vmem:[#allocation6 + $0x34] sm:$0xf]
    %v165 = vld [vmem:[#allocation6 + $0x38] sm:$0xf]
    %v166 = vld [vmem:[#allocation6 + $0x3c] sm:$0xf]
    %v167 = vld [vmem:[#allocation9] sm:$0xff]
    %v168 = vld [vmem:[#allocation9 + $0x8] sm:$0xff]
    %v169 = vld [vmem:[#allocation9 + $0x10] sm:$0xff]
    %v170 = vld [vmem:[#allocation9 + $0x18] sm:$0xff]
    %v171 = vld [vmem:[#allocation9 + $0x20] sm:$0xff]
    %v172 = vld [vmem:[#allocation9 + $0x28] sm:$0xff]
    %v173 = vld [vmem:[#allocation9 + $0x30] sm:$0xff]
    %v174 = vld [vmem:[#allocation9 + $0x38] sm:$0xff]
    %v175 = vld [vmem:[#allocation9 + $0x40] sm:$0xff]
    %v176 = vld [vmem:[#allocation9 + $0x48] sm:$0xff]
    %v177 = vld [vmem:[#allocation9 + $0x50] sm:$0xff]
    %v178 = vld [vmem:[#allocation9 + $0x58] sm:$0xff]
    %v179 = vld [vmem:[#allocation9 + $0x60] sm:$0xff]
    %v180 = vld [vmem:[#allocation9 + $0x68] sm:$0xff]
    %v181 = vld [vmem:[#allocation9 + $0x70] sm:$0xff]
    %v182 = vld [vmem:[#allocation9 + $0x78] sm:$0xff]
    %v183 = vld [vmem:[#allocation9 + $0x80] sm:$0xff]
    %v184 = vld [vmem:[#allocation9 + $0x88] sm:$0xff]
    %v185 = vld [vmem:[#allocation9 + $0x90] sm:$0xff]
    %v186 = vld [vmem:[#allocation9 + $0x98] sm:$0xff]
    %v187 = vld [vmem:[#allocation9 + $0xa0] sm:$0xff]
    %v188 = vld [vmem:[#allocation9 + $0xa8] sm:$0xff]
    %v189 = vld [vmem:[#allocation9 + $0xb0] sm:$0xff]
    %v190 = vld [vmem:[#allocation9 + $0xb8] sm:$0xff]
    %v191 = vld [vmem:[#allocation9 + $0xc0] sm:$0xff]
    %v192 = vld [vmem:[#allocation9 + $0xc8] sm:$0xff]
    %v193 = vld [vmem:[#allocation9 + $0xd0] sm:$0xff]
    %v194 = vld [vmem:[#allocation9 + $0xd8] sm:$0xff]
    %v195 = vld [vmem:[#allocation9 + $0xe0] sm:$0xff]
    %v196 = vld [vmem:[#allocation9 + $0xe8] sm:$0xff]
    %v197 = vld [vmem:[#allocation9 + $0xf0] sm:$0xff]
    %v198 = vld [vmem:[#allocation9 + $0xf8] sm:$0xff]
    %v199 = vld [vmem:[#allocation15] sm:$0xf]
    %v201 = vperm.slane %v199, 0
    %v202 = vperm.slane %v199, 1
    %v203 = vperm.slane %v199, 2
    %v204 = vperm.slane %v199, 3
    %v225 = vunpack.c.l.b16 %v151
    %v226 = vunpack.c.l.b16 %v152
    %v227 = vunpack.c.l.b16 %v153
    %v228 = vunpack.c.l.b16 %v154
    %v229 = vunpack.c.l.b16 %v155
    %v230 = vunpack.c.l.b16 %v156
    %v231 = vunpack.c.l.b16 %v157
    %v232 = vunpack.c.l.b16 %v158
    %v233 = vunpack.c.l.b16 %v159
    %v234 = vunpack.c.l.b16 %v160
    %v235 = vunpack.c.l.b16 %v161
    %v236 = vunpack.c.l.b16 %v162
    %v237 = vunpack.c.l.b16 %v163
    %v238 = vunpack.c.l.b16 %v164
    %v239 = vunpack.c.l.b16 %v165
    %v240 = vunpack.c.l.b16 %v166
    %v241 = vpack.c.b16 %v226, %v225
    %v242 = vpack.c.b16 %v228, %v227
    %v243 = vpack.c.b16 %v230, %v229
    %v244 = vpack.c.b16 %v232, %v231
    %v245 = vpack.c.b16 %v234, %v233
    %v246 = vpack.c.b16 %v236, %v235
    %v247 = vpack.c.b16 %v238, %v237
    %v248 = vpack.c.b16 %v240, %v239
    %v289 = vunpack.c.l.b16 %v167
    %v290 = vunpack.c.h.b16 %v167
    %v291 = vunpack.c.l.b16 %v168
    %v292 = vunpack.c.h.b16 %v168
    %v293 = vunpack.c.l.b16 %v169
    %v294 = vunpack.c.h.b16 %v169
    %v295 = vunpack.c.l.b16 %v170
    %v296 = vunpack.c.h.b16 %v170
    %v297 = vunpack.c.l.b16 %v171
    %v298 = vunpack.c.h.b16 %v171
    %v299 = vunpack.c.l.b16 %v172
    %v300 = vunpack.c.h.b16 %v172
    %v301 = vunpack.c.l.b16 %v173
    %v302 = vunpack.c.h.b16 %v173
    %v303 = vunpack.c.l.b16 %v174
    %v304 = vunpack.c.h.b16 %v174
    %v305 = vunpack.c.l.b16 %v175
    %v306 = vunpack.c.h.b16 %v175
    %v307 = vunpack.c.l.b16 %v176
    %v308 = vunpack.c.h.b16 %v176
    %v309 = vunpack.c.l.b16 %v177
    %v310 = vunpack.c.h.b16 %v177
    %v311 = vunpack.c.l.b16 %v178
    %v312 = vunpack.c.h.b16 %v178
    %v313 = vunpack.c.l.b16 %v179
    %v314 = vunpack.c.h.b16 %v179
    %v315 = vunpack.c.l.b16 %v180
    %v316 = vunpack.c.h.b16 %v180
    %v317 = vunpack.c.l.b16 %v181
    %v318 = vunpack.c.h.b16 %v181
    %v319 = vunpack.c.l.b16 %v182
    %v320 = vunpack.c.h.b16 %v182
    %v321 = vunpack.c.l.b16 %v183
    %v322 = vunpack.c.h.b16 %v183
    %v323 = vunpack.c.l.b16 %v184
    %v324 = vunpack.c.h.b16 %v184
    %v325 = vunpack.c.l.b16 %v185
    %v326 = vunpack.c.h.b16 %v185
    %v327 = vunpack.c.l.b16 %v186
    %v328 = vunpack.c.h.b16 %v186
    %v329 = vunpack.c.l.b16 %v187
    %v330 = vunpack.c.h.b16 %v187
    %v331 = vunpack.c.l.b16 %v188
    %v332 = vunpack.c.h.b16 %v188
    %v333 = vunpack.c.l.b16 %v189
    %v334 = vunpack.c.h.b16 %v189
    %v335 = vunpack.c.l.b16 %v190
    %v336 = vunpack.c.h.b16 %v190
    %v337 = vunpack.c.l.b16 %v191
    %v338 = vunpack.c.h.b16 %v191
    %v339 = vunpack.c.l.b16 %v192
    %v340 = vunpack.c.h.b16 %v192
    %v341 = vunpack.c.l.b16 %v193
    %v342 = vunpack.c.h.b16 %v193
    %v343 = vunpack.c.l.b16 %v194
    %v344 = vunpack.c.h.b16 %v194
    %v345 = vunpack.c.l.b16 %v195
    %v346 = vunpack.c.h.b16 %v195
    %v347 = vunpack.c.l.b16 %v196
    %v348 = vunpack.c.h.b16 %v196
    %v349 = vunpack.c.l.b16 %v197
    %v350 = vunpack.c.h.b16 %v197
    %v351 = vunpack.c.l.b16 %v198
    %v352 = vunpack.c.h.b16 %v198
    %v353 = vpack.c.b16 %v293, %v289
    %v354 = vpack.c.b16 %v294, %v290
    %v355 = vpack.c.b16 %v295, %v291
    %v356 = vpack.c.b16 %v296, %v292
    %v357 = vpack.c.b16 %v301, %v297
    %v358 = vpack.c.b16 %v302, %v298
    %v359 = vpack.c.b16 %v303, %v299
    %v360 = vpack.c.b16 %v304, %v300
    %v361 = vpack.c.b16 %v309, %v305
    %v362 = vpack.c.b16 %v310, %v306
    %v363 = vpack.c.b16 %v311, %v307
    %v364 = vpack.c.b16 %v312, %v308
    %v365 = vpack.c.b16 %v317, %v313
    %v366 = vpack.c.b16 %v318, %v314
    %v367 = vpack.c.b16 %v319, %v315
    %v368 = vpack.c.b16 %v320, %v316
    %v369 = vpack.c.b16 %v325, %v321
    %v370 = vpack.c.b16 %v326, %v322
    %v371 = vpack.c.b16 %v327, %v323
    %v372 = vpack.c.b16 %v328, %v324
    %v373 = vpack.c.b16 %v333, %v329
    %v374 = vpack.c.b16 %v334, %v330
    %v375 = vpack.c.b16 %v335, %v331
    %v376 = vpack.c.b16 %v336, %v332
    %v377 = vpack.c.b16 %v341, %v337
    %v378 = vpack.c.b16 %v342, %v338
    %v379 = vpack.c.b16 %v343, %v339
    %v380 = vpack.c.b16 %v344, %v340
    %v381 = vpack.c.b16 %v349, %v345
    %v382 = vpack.c.b16 %v350, %v346
    %v383 = vpack.c.b16 %v351, %v347
    %v384 = vpack.c.b16 %v352, %v348
    %417 = vmatpush.bf16.msra.mxu0 %v381
    %418 = vmatpush.bf16.msra.mxu0 %v377
    %419 = vmatpush.bf16.msra.mxu0 %v373
    %420 = vmatpush.bf16.msra.mxu0 %v369
    %421 = vmatpush.bf16.msra.mxu0 %v365
    %422 = vmatpush.bf16.msra.mxu0 %v361
    %423 = vmatpush.bf16.msra.mxu0 %v357
    %424 = vmatpush.bf16.msra.mxu0 %v353
    %425 = vmatmul.bf16.gmra.mxu0 %v241
    %v426 = vpop.f32.mrf.mxu0
    %v427 = vadd.f32 %v201, %v426
    %v428 = vpop.f32.mrf.mxu0
    %v429 = vadd.f32 %v201, %v428
    %430 = vmatmul.bf16.gmra.mxu0 %v242
    %v431 = vpop.f32.mrf.mxu0
    %v432 = vadd.f32 %v201, %v431
    %v433 = vpop.f32.mrf.mxu0
    %v434 = vadd.f32 %v201, %v433
    %435 = vmatmul.bf16.gmra.mxu0 %v243
    %v436 = vpop.f32.mrf.mxu0
    %v437 = vadd.f32 %v201, %v436
    %v438 = vpop.f32.mrf.mxu0
    %v439 = vadd.f32 %v201, %v438
    %440 = vmatmul.bf16.gmra.mxu0 %v244
    %v441 = vpop.f32.mrf.mxu0
    %v442 = vadd.f32 %v201, %v441
    %v443 = vpop.f32.mrf.mxu0
    %v444 = vadd.f32 %v201, %v443
    %445 = vmatmul.bf16.gmra.mxu0 %v245
    %v446 = vpop.f32.mrf.mxu0
    %v447 = vadd.f32 %v201, %v446
    %v448 = vpop.f32.mrf.mxu0
    %v449 = vadd.f32 %v201, %v448
    %450 = vmatmul.bf16.gmra.mxu0 %v246
    %v451 = vpop.f32.mrf.mxu0
    %v452 = vadd.f32 %v201, %v451
    %v453 = vpop.f32.mrf.mxu0
    %v454 = vadd.f32 %v201, %v453
    %455 = vmatmul.bf16.gmra.mxu0 %v247
    %v456 = vpop.f32.mrf.mxu0
    %v457 = vadd.f32 %v201, %v456
    %v458 = vpop.f32.mrf.mxu0
    %v459 = vadd.f32 %v201, %v458
    %460 = vmatmul.bf16.gmra.mxu0 %v248
    %v461 = vpop.f32.mrf.mxu0
    %v462 = vadd.f32 %v201, %v461
    %v463 = vpop.f32.mrf.mxu0
    %v464 = vadd.f32 %v201, %v463
    %465 = vdwg.mxu0
    %466 = vmatpush.bf16.msra.mxu0 %v382
    %467 = vmatpush.bf16.msra.mxu0 %v378
    %468 = vmatpush.bf16.msra.mxu0 %v374
    %469 = vmatpush.bf16.msra.mxu0 %v370
    %470 = vmatpush.bf16.msra.mxu0 %v366
    %471 = vmatpush.bf16.msra.mxu0 %v362
    %472 = vmatpush.bf16.msra.mxu0 %v358
    %473 = vmatpush.bf16.msra.mxu0 %v354
    %474 = vmatmul.bf16.gmra.mxu0 %v241
    %v475 = vpop.f32.mrf.mxu0
    %v476 = vadd.f32 %v202, %v475
    %v477 = vpop.f32.mrf.mxu0
    %v478 = vadd.f32 %v202, %v477
    %479 = vmatmul.bf16.gmra.mxu0 %v242
    %v480 = vpop.f32.mrf.mxu0
    %v481 = vadd.f32 %v202, %v480
    %v482 = vpop.f32.mrf.mxu0
    %v483 = vadd.f32 %v202, %v482
    %484 = vmatmul.bf16.gmra.mxu0 %v243
    %v485 = vpop.f32.mrf.mxu0
    %v486 = vadd.f32 %v202, %v485
    %v487 = vpop.f32.mrf.mxu0
    %v488 = vadd.f32 %v202, %v487
    %489 = vmatmul.bf16.gmra.mxu0 %v244
    %v490 = vpop.f32.mrf.mxu0
    %v491 = vadd.f32 %v202, %v490
    %v492 = vpop.f32.mrf.mxu0
    %v493 = vadd.f32 %v202, %v492
    %494 = vmatmul.bf16.gmra.mxu0 %v245
    %v495 = vpop.f32.mrf.mxu0
    %v496 = vadd.f32 %v202, %v495
    %v497 = vpop.f32.mrf.mxu0
    %v498 = vadd.f32 %v202, %v497
    %499 = vmatmul.bf16.gmra.mxu0 %v246
    %v500 = vpop.f32.mrf.mxu0
    %v501 = vadd.f32 %v202, %v500
    %v502 = vpop.f32.mrf.mxu0
    %v503 = vadd.f32 %v202, %v502
    %504 = vmatmul.bf16.gmra.mxu0 %v247
    %v505 = vpop.f32.mrf.mxu0
    %v506 = vadd.f32 %v202, %v505
    %v507 = vpop.f32.mrf.mxu0
    %v508 = vadd.f32 %v202, %v507
    %509 = vmatmul.bf16.gmra.mxu0 %v248
    %v510 = vpop.f32.mrf.mxu0
    %v511 = vadd.f32 %v202, %v510
    %v512 = vpop.f32.mrf.mxu0
    %v513 = vadd.f32 %v202, %v512
    %514 = vdwg.mxu0
    %515 = vmatpush.bf16.msra.mxu0 %v383
    %516 = vmatpush.bf16.msra.mxu0 %v379
    %517 = vmatpush.bf16.msra.mxu0 %v375
    %518 = vmatpush.bf16.msra.mxu0 %v371
    %519 = vmatpush.bf16.msra.mxu0 %v367
    %520 = vmatpush.bf16.msra.mxu0 %v363
    %521 = vmatpush.bf16.msra.mxu0 %v359
    %522 = vmatpush.bf16.msra.mxu0 %v355
    %523 = vmatmul.bf16.gmra.mxu0 %v241
    %v524 = vpop.f32.mrf.mxu0
    %v525 = vadd.f32 %v203, %v524
    %v526 = vpop.f32.mrf.mxu0
    %v527 = vadd.f32 %v203, %v526
    %528 = vmatmul.bf16.gmra.mxu0 %v242
    %v529 = vpop.f32.mrf.mxu0
    %v530 = vadd.f32 %v203, %v529
    %v531 = vpop.f32.mrf.mxu0
    %v532 = vadd.f32 %v203, %v531
    %533 = vmatmul.bf16.gmra.mxu0 %v243
    %v534 = vpop.f32.mrf.mxu0
    %v535 = vadd.f32 %v203, %v534
    %v536 = vpop.f32.mrf.mxu0
    %v537 = vadd.f32 %v203, %v536
    %538 = vmatmul.bf16.gmra.mxu0 %v244
    %v539 = vpop.f32.mrf.mxu0
    %v540 = vadd.f32 %v203, %v539
    %v541 = vpop.f32.mrf.mxu0
    %v542 = vadd.f32 %v203, %v541
    %543 = vmatmul.bf16.gmra.mxu0 %v245
    %v544 = vpop.f32.mrf.mxu0
    %v545 = vadd.f32 %v203, %v544
    %v546 = vpop.f32.mrf.mxu0
    %v547 = vadd.f32 %v203, %v546
    %548 = vmatmul.bf16.gmra.mxu0 %v246
    %v549 = vpop.f32.mrf.mxu0
    %v550 = vadd.f32 %v203, %v549
    %v551 = vpop.f32.mrf.mxu0
    %v552 = vadd.f32 %v203, %v551
    %553 = vmatmul.bf16.gmra.mxu0 %v247
    %v554 = vpop.f32.mrf.mxu0
    %v555 = vadd.f32 %v203, %v554
    %v556 = vpop.f32.mrf.mxu0
    %v557 = vadd.f32 %v203, %v556
    %558 = vmatmul.bf16.gmra.mxu0 %v248
    %v559 = vpop.f32.mrf.mxu0
    %v560 = vadd.f32 %v203, %v559
    %v561 = vpop.f32.mrf.mxu0
    %v562 = vadd.f32 %v203, %v561
    %563 = vdwg.mxu0
    %564 = vmatpush.bf16.msra.mxu0 %v384
    %565 = vmatpush.bf16.msra.mxu0 %v380
    %566 = vmatpush.bf16.msra.mxu0 %v376
    %567 = vmatpush.bf16.msra.mxu0 %v372
    %568 = vmatpush.bf16.msra.mxu0 %v368
    %569 = vmatpush.bf16.msra.mxu0 %v364
    %570 = vmatpush.bf16.msra.mxu0 %v360
    %571 = vmatpush.bf16.msra.mxu0 %v356
    %572 = vmatmul.bf16.gmra.mxu0 %v241
    %v573 = vpop.f32.mrf.mxu0
    %v574 = vadd.f32 %v204, %v573
    %v575 = vpop.f32.mrf.mxu0
    %v576 = vadd.f32 %v204, %v575
    %577 = vmatmul.bf16.gmra.mxu0 %v242
    %v578 = vpop.f32.mrf.mxu0
    %v579 = vadd.f32 %v204, %v578
    %v580 = vpop.f32.mrf.mxu0
    %v581 = vadd.f32 %v204, %v580
    %582 = vmatmul.bf16.gmra.mxu0 %v243
    %v583 = vpop.f32.mrf.mxu0
    %v584 = vadd.f32 %v204, %v583
    %v585 = vpop.f32.mrf.mxu0
    %v586 = vadd.f32 %v204, %v585
    %587 = vmatmul.bf16.gmra.mxu0 %v244
    %v588 = vpop.f32.mrf.mxu0
    %v589 = vadd.f32 %v204, %v588
    %v590 = vpop.f32.mrf.mxu0
    %v591 = vadd.f32 %v204, %v590
    %592 = vmatmul.bf16.gmra.mxu0 %v245
    %v593 = vpop.f32.mrf.mxu0
    %v594 = vadd.f32 %v204, %v593
    %v595 = vpop.f32.mrf.mxu0
    %v596 = vadd.f32 %v204, %v595
    %597 = vmatmul.bf16.gmra.mxu0 %v246
    %v598 = vpop.f32.mrf.mxu0
    %v599 = vadd.f32 %v204, %v598
    %v600 = vpop.f32.mrf.mxu0
    %v601 = vadd.f32 %v204, %v600
    %602 = vmatmul.bf16.gmra.mxu0 %v247
    %v603 = vpop.f32.mrf.mxu0
    %v604 = vadd.f32 %v204, %v603
    %v605 = vpop.f32.mrf.mxu0
    %v606 = vadd.f32 %v204, %v605
    %607 = vmatmul.bf16.gmra.mxu0 %v248
    %v608 = vpop.f32.mrf.mxu0
    %v609 = vadd.f32 %v204, %v608
    %v610 = vpop.f32.mrf.mxu0
    %v611 = vadd.f32 %v204, %v610
    %612 = vdwg.mxu0
    %613 = vst [vmem:[#allocation5] sm:$0xff] %v427
    %614 = vst [vmem:[#allocation5 + $0x8] sm:$0xff] %v476
    %615 = vst [vmem:[#allocation5 + $0x10] sm:$0xff] %v525
    %616 = vst [vmem:[#allocation5 + $0x18] sm:$0xff] %v574
    %617 = vst [vmem:[#allocation5 + $0x20] sm:$0xff] %v429
    %618 = vst [vmem:[#allocation5 + $0x28] sm:$0xff] %v478
    %619 = vst [vmem:[#allocation5 + $0x30] sm:$0xff] %v527
    %620 = vst [vmem:[#allocation5 + $0x38] sm:$0xff] %v576
    %621 = vst [vmem:[#allocation5 + $0x40] sm:$0xff] %v432
    %622 = vst [vmem:[#allocation5 + $0x48] sm:$0xff] %v481
    %623 = vst [vmem:[#allocation5 + $0x50] sm:$0xff] %v530
    %624 = vst [vmem:[#allocation5 + $0x58] sm:$0xff] %v579
    %625 = vst [vmem:[#allocation5 + $0x60] sm:$0xff] %v434
    %626 = vst [vmem:[#allocation5 + $0x68] sm:$0xff] %v483
    %627 = vst [vmem:[#allocation5 + $0x70] sm:$0xff] %v532
    %628 = vst [vmem:[#allocation5 + $0x78] sm:$0xff] %v581
    %629 = vst [vmem:[#allocation5 + $0x80] sm:$0xff] %v437
    %630 = vst [vmem:[#allocation5 + $0x88] sm:$0xff] %v486
    %631 = vst [vmem:[#allocation5 + $0x90] sm:$0xff] %v535
    %632 = vst [vmem:[#allocation5 + $0x98] sm:$0xff] %v584
    %633 = vst [vmem:[#allocation5 + $0xa0] sm:$0xff] %v439
    %634 = vst [vmem:[#allocation5 + $0xa8] sm:$0xff] %v488
    %635 = vst [vmem:[#allocation5 + $0xb0] sm:$0xff] %v537
    %636 = vst [vmem:[#allocation5 + $0xb8] sm:$0xff] %v586
    %637 = vst [vmem:[#allocation5 + $0xc0] sm:$0xff] %v442
    %638 = vst [vmem:[#allocation5 + $0xc8] sm:$0xff] %v491
    %639 = vst [vmem:[#allocation5 + $0xd0] sm:$0xff] %v540
    %640 = vst [vmem:[#allocation5 + $0xd8] sm:$0xff] %v589
    %641 = vst [vmem:[#allocation5 + $0xe0] sm:$0xff] %v444
    %642 = vst [vmem:[#allocation5 + $0xe8] sm:$0xff] %v493
    %643 = vst [vmem:[#allocation5 + $0xf0] sm:$0xff] %v542
    %644 = vst [vmem:[#allocation5 + $0xf8] sm:$0xff] %v591
    %645 = vst [vmem:[#allocation5 + $0x100] sm:$0xff] %v447
    %646 = vst [vmem:[#allocation5 + $0x108] sm:$0xff] %v496
    %647 = vst [vmem:[#allocation5 + $0x110] sm:$0xff] %v545
    %648 = vst [vmem:[#allocation5 + $0x118] sm:$0xff] %v594
    %649 = vst [vmem:[#allocation5 + $0x120] sm:$0xff] %v449
    %650 = vst [vmem:[#allocation5 + $0x128] sm:$0xff] %v498
    %651 = vst [vmem:[#allocation5 + $0x130] sm:$0xff] %v547
    %652 = vst [vmem:[#allocation5 + $0x138] sm:$0xff] %v596
    %653 = vst [vmem:[#allocation5 + $0x140] sm:$0xff] %v452
    %654 = vst [vmem:[#allocation5 + $0x148] sm:$0xff] %v501
    %655 = vst [vmem:[#allocation5 + $0x150] sm:$0xff] %v550
    %656 = vst [vmem:[#allocation5 + $0x158] sm:$0xff] %v599
    %657 = vst [vmem:[#allocation5 + $0x160] sm:$0xff] %v454
    %658 = vst [vmem:[#allocation5 + $0x168] sm:$0xff] %v503
    %659 = vst [vmem:[#allocation5 + $0x170] sm:$0xff] %v552
    %660 = vst [vmem:[#allocation5 + $0x178] sm:$0xff] %v601
    %661 = vst [vmem:[#allocation5 + $0x180] sm:$0xff] %v457
    %662 = vst [vmem:[#allocation5 + $0x188] sm:$0xff] %v506
    %663 = vst [vmem:[#allocation5 + $0x190] sm:$0xff] %v555
    %664 = vst [vmem:[#allocation5 + $0x198] sm:$0xff] %v604
    %665 = vst [vmem:[#allocation5 + $0x1a0] sm:$0xff] %v459
    %666 = vst [vmem:[#allocation5 + $0x1a8] sm:$0xff] %v508
    %667 = vst [vmem:[#allocation5 + $0x1b0] sm:$0xff] %v557
    %668 = vst [vmem:[#allocation5 + $0x1b8] sm:$0xff] %v606
    %669 = vst [vmem:[#allocation5 + $0x1c0] sm:$0xff] %v462
    %670 = vst [vmem:[#allocation5 + $0x1c8] sm:$0xff] %v511
    %671 = vst [vmem:[#allocation5 + $0x1d0] sm:$0xff] %v560
    %672 = vst [vmem:[#allocation5 + $0x1d8] sm:$0xff] %v609
    %673 = vst [vmem:[#allocation5 + $0x1e0] sm:$0xff] %v464
    %674 = vst [vmem:[#allocation5 + $0x1e8] sm:$0xff] %v513
    %675 = vst [vmem:[#allocation5 + $0x1f0] sm:$0xff] %v562
    %676 = vst [vmem:[#allocation5 + $0x1f8] sm:$0xff] %v611
    %v677 = vld [vmem:[#allocation12] sm:$0xff]
    %v678 = vld [vmem:[#allocation12 + $0x8] sm:$0xff]
    %v679 = vld [vmem:[#allocation12 + $0x10] sm:$0xff]
    %v680 = vld [vmem:[#allocation12 + $0x18] sm:$0xff]
    %v681 = vld [vmem:[#allocation12 + $0x20] sm:$0xff]
    %v682 = vld [vmem:[#allocation12 + $0x28] sm:$0xff]
    %v683 = vld [vmem:[#allocation12 + $0x30] sm:$0xff]
    %v684 = vld [vmem:[#allocation12 + $0x38] sm:$0xff]
    %v685 = vld [vmem:[#allocation12 + $0x40] sm:$0xff]
    %v686 = vld [vmem:[#allocation12 + $0x48] sm:$0xff]
    %v687 = vld [vmem:[#allocation12 + $0x50] sm:$0xff]
    %v688 = vld [vmem:[#allocation12 + $0x58] sm:$0xff]
    %v689 = vld [vmem:[#allocation12 + $0x60] sm:$0xff]
    %v690 = vld [vmem:[#allocation12 + $0x68] sm:$0xff]
    %v691 = vld [vmem:[#allocation12 + $0x70] sm:$0xff]
    %v692 = vld [vmem:[#allocation12 + $0x78] sm:$0xff]
    %v693 = vld [vmem:[#allocation12 + $0x80] sm:$0xff]
    %v694 = vld [vmem:[#allocation12 + $0x88] sm:$0xff]
    %v695 = vld [vmem:[#allocation12 + $0x90] sm:$0xff]
    %v696 = vld [vmem:[#allocation12 + $0x98] sm:$0xff]
    %v697 = vld [vmem:[#allocation12 + $0xa0] sm:$0xff]
    %v698 = vld [vmem:[#allocation12 + $0xa8] sm:$0xff]
    %v699 = vld [vmem:[#allocation12 + $0xb0] sm:$0xff]
    %v700 = vld [vmem:[#allocation12 + $0xb8] sm:$0xff]
    %v701 = vld [vmem:[#allocation12 + $0xc0] sm:$0xff]
    %v702 = vld [vmem:[#allocation12 + $0xc8] sm:$0xff]
    %v703 = vld [vmem:[#allocation12 + $0xd0] sm:$0xff]
    %v704 = vld [vmem:[#allocation12 + $0xd8] sm:$0xff]
    %v705 = vld [vmem:[#allocation12 + $0xe0] sm:$0xff]
    %v706 = vld [vmem:[#allocation12 + $0xe8] sm:$0xff]
    %v707 = vld [vmem:[#allocation12 + $0xf0] sm:$0xff]
    %v708 = vld [vmem:[#allocation12 + $0xf8] sm:$0xff]
    %v709 = vld [vmem:[#allocation2] sm:$0xff]
    %v710 = vld [vmem:[#allocation2 + $0x8] sm:$0xff]
    %v711 = vld [vmem:[#allocation3] sm:$0xff]
    %v712 = vld [vmem:[#allocation3 + $0x8] sm:$0xff]
    %v713 = vld [vmem:[#allocation5] sm:$0xff]
    %v714 = vld [vmem:[#allocation5 + $0x8] sm:$0xff]
    %v715 = vld [vmem:[#allocation5 + $0x10] sm:$0xff]
    %v716 = vld [vmem:[#allocation5 + $0x18] sm:$0xff]
    %v717 = vld [vmem:[#allocation5 + $0x20] sm:$0xff]
    %v718 = vld [vmem:[#allocation5 + $0x28] sm:$0xff]
    %v719 = vld [vmem:[#allocation5 + $0x30] sm:$0xff]
    %v720 = vld [vmem:[#allocation5 + $0x38] sm:$0xff]
    %v721 = vpack.c.bf16 %v710, %v709
    %v754 = vunpack.c.l.b16 %v677
    %v755 = vunpack.c.h.b16 %v677
    %v756 = vunpack.c.l.b16 %v678
    %v757 = vunpack.c.h.b16 %v678
    %v758 = vunpack.c.l.b16 %v679
    %v759 = vunpack.c.h.b16 %v679
    %v760 = vunpack.c.l.b16 %v680
    %v761 = vunpack.c.h.b16 %v680
    %v762 = vunpack.c.l.b16 %v681
    %v763 = vunpack.c.h.b16 %v681
    %v764 = vunpack.c.l.b16 %v682
    %v765 = vunpack.c.h.b16 %v682
    %v766 = vunpack.c.l.b16 %v683
    %v767 = vunpack.c.h.b16 %v683
    %v768 = vunpack.c.l.b16 %v684
    %v769 = vunpack.c.h.b16 %v684
    %v770 = vunpack.c.l.b16 %v685
    %v771 = vunpack.c.h.b16 %v685
    %v772 = vunpack.c.l.b16 %v686
    %v773 = vunpack.c.h.b16 %v686
    %v774 = vunpack.c.l.b16 %v687
    %v775 = vunpack.c.h.b16 %v687
    %v776 = vunpack.c.l.b16 %v688
    %v777 = vunpack.c.h.b16 %v688
    %v778 = vunpack.c.l.b16 %v689
    %v779 = vunpack.c.h.b16 %v689
    %v780 = vunpack.c.l.b16 %v690
    %v781 = vunpack.c.h.b16 %v690
    %v782 = vunpack.c.l.b16 %v691
    %v783 = vunpack.c.h.b16 %v691
    %v784 = vunpack.c.l.b16 %v692
    %v785 = vunpack.c.h.b16 %v692
    %v786 = vunpack.c.l.b16 %v693
    %v787 = vunpack.c.h.b16 %v693
    %v788 = vunpack.c.l.b16 %v694
    %v789 = vunpack.c.h.b16 %v694
    %v790 = vunpack.c.l.b16 %v695
    %v791 = vunpack.c.h.b16 %v695
    %v792 = vunpack.c.l.b16 %v696
    %v793 = vunpack.c.h.b16 %v696
    %v794 = vunpack.c.l.b16 %v697
    %v795 = vunpack.c.h.b16 %v697
    %v796 = vunpack.c.l.b16 %v698
    %v797 = vunpack.c.h.b16 %v698
    %v798 = vunpack.c.l.b16 %v699
    %v799 = vunpack.c.h.b16 %v699
    %v800 = vunpack.c.l.b16 %v700
    %v801 = vunpack.c.h.b16 %v700
    %v802 = vunpack.c.l.b16 %v701
    %v803 = vunpack.c.h.b16 %v701
    %v804 = vunpack.c.l.b16 %v702
    %v805 = vunpack.c.h.b16 %v702
    %v806 = vunpack.c.l.b16 %v703
    %v807 = vunpack.c.h.b16 %v703
    %v808 = vunpack.c.l.b16 %v704
    %v809 = vunpack.c.h.b16 %v704
    %v810 = vunpack.c.l.b16 %v705
    %v811 = vunpack.c.h.b16 %v705
    %v812 = vunpack.c.l.b16 %v706
    %v813 = vunpack.c.h.b16 %v706
    %v814 = vunpack.c.l.b16 %v707
    %v815 = vunpack.c.h.b16 %v707
    %v816 = vunpack.c.l.b16 %v708
    %v817 = vunpack.c.h.b16 %v708
    %v818 = vpack.c.b16 %v758, %v754
    %v819 = vpack.c.b16 %v759, %v755
    %v820 = vpack.c.b16 %v760, %v756
    %v821 = vpack.c.b16 %v761, %v757
    %v822 = vpack.c.b16 %v766, %v762
    %v823 = vpack.c.b16 %v767, %v763
    %v824 = vpack.c.b16 %v768, %v764
    %v825 = vpack.c.b16 %v769, %v765
    %v826 = vpack.c.b16 %v774, %v770
    %v827 = vpack.c.b16 %v775, %v771
    %v828 = vpack.c.b16 %v776, %v772
    %v829 = vpack.c.b16 %v777, %v773
    %v830 = vpack.c.b16 %v782, %v778
    %v831 = vpack.c.b16 %v783, %v779
    %v832 = vpack.c.b16 %v784, %v780
    %v833 = vpack.c.b16 %v785, %v781
    %v834 = vpack.c.b16 %v790, %v786
    %v835 = vpack.c.b16 %v791, %v787
    %v836 = vpack.c.b16 %v792, %v788
    %v837 = vpack.c.b16 %v793, %v789
    %v838 = vpack.c.b16 %v798, %v794
    %v839 = vpack.c.b16 %v799, %v795
    %v840 = vpack.c.b16 %v800, %v796
    %v841 = vpack.c.b16 %v801, %v797
    %v842 = vpack.c.b16 %v806, %v802
    %v843 = vpack.c.b16 %v807, %v803
    %v844 = vpack.c.b16 %v808, %v804
    %v845 = vpack.c.b16 %v809, %v805
    %v846 = vpack.c.b16 %v814, %v810
    %v847 = vpack.c.b16 %v815, %v811
    %v848 = vpack.c.b16 %v816, %v812
    %v849 = vpack.c.b16 %v817, %v813
    %882 = vmatpush.bf16.msra.mxu0 %v846
    %883 = vmatpush.bf16.msra.mxu0 %v842
    %884 = vmatpush.bf16.msra.mxu0 %v838
    %885 = vmatpush.bf16.msra.mxu0 %v834
    %886 = vmatpush.bf16.msra.mxu0 %v830
    %887 = vmatpush.bf16.msra.mxu0 %v826
    %888 = vmatpush.bf16.msra.mxu0 %v822
    %889 = vmatpush.bf16.msra.mxu0 %v818
    %890 = vmatmul.bf16.gmra.mxu0 %v721
    %v891 = vpop.f32.mrf.mxu0
    %v892 = vadd.f32 0.0, %v891
    %v893 = vpop.f32.mrf.mxu0
    %v894 = vadd.f32 0.0, %v893
    %895 = vdwg.mxu0
    %896 = vmatpush.bf16.msra.mxu0 %v847
    %897 = vmatpush.bf16.msra.mxu0 %v843
    %898 = vmatpush.bf16.msra.mxu0 %v839
    %899 = vmatpush.bf16.msra.mxu0 %v835
    %900 = vmatpush.bf16.msra.mxu0 %v831
    %901 = vmatpush.bf16.msra.mxu0 %v827
    %902 = vmatpush.bf16.msra.mxu0 %v823
    %903 = vmatpush.bf16.msra.mxu0 %v819
    %904 = vmatmul.bf16.gmra.mxu0 %v721
    %v905 = vpop.f32.mrf.mxu0
    %v906 = vadd.f32 0.0, %v905
    %v907 = vpop.f32.mrf.mxu0
    %v908 = vadd.f32 0.0, %v907
    %909 = vdwg.mxu0
    %910 = vmatpush.bf16.msra.mxu0 %v848
    %911 = vmatpush.bf16.msra.mxu0 %v844
    %912 = vmatpush.bf16.msra.mxu0 %v840
    %913 = vmatpush.bf16.msra.mxu0 %v836
    %914 = vmatpush.bf16.msra.mxu0 %v832
    %915 = vmatpush.bf16.msra.mxu0 %v828
    %916 = vmatpush.bf16.msra.mxu0 %v824
    %917 = vmatpush.bf16.msra.mxu0 %v820
    %918 = vmatmul.bf16.gmra.mxu0 %v721
    %v919 = vpop.f32.mrf.mxu0
    %v920 = vadd.f32 0.0, %v919
    %v921 = vpop.f32.mrf.mxu0
    %v922 = vadd.f32 0.0, %v921
    %923 = vdwg.mxu0
    %924 = vmatpush.bf16.msra.mxu0 %v849
    %925 = vmatpush.bf16.msra.mxu0 %v845
    %926 = vmatpush.bf16.msra.mxu0 %v841
    %927 = vmatpush.bf16.msra.mxu0 %v837
    %928 = vmatpush.bf16.msra.mxu0 %v833
    %929 = vmatpush.bf16.msra.mxu0 %v829
    %930 = vmatpush.bf16.msra.mxu0 %v825
    %931 = vmatpush.bf16.msra.mxu0 %v821
    %932 = vmatmul.bf16.gmra.mxu0 %v721
    %v933 = vpop.f32.mrf.mxu0
    %v934 = vadd.f32 0.0, %v933
    %v935 = vpop.f32.mrf.mxu0
    %v936 = vadd.f32 0.0, %v935
    %937 = vdwg.mxu0
    %v938 = vadd.f32 %v713, %v892
    %v939 = vadd.f32 %v714, %v906
    %v940 = vadd.f32 %v715, %v920
    %v941 = vadd.f32 %v716, %v934
    %v942 = vadd.f32 %v717, %v894
    %v943 = vadd.f32 %v718, %v908
    %v944 = vadd.f32 %v719, %v922
    %v945 = vadd.f32 %v720, %v936
    %v946 = vmul.f32 %v938, 0.5
    %v947 = vmul.f32 %v942, 0.5
    %v948 = vtanh.pop %v946
    %v949 = vtanh.pop %v947
    %v950 = vmul.f32 %v948, 0.5
    %v951 = vmul.f32 %v949, 0.5
    %v952 = vadd.f32 %v950, 0.5
    %v953 = vadd.f32 %v951, 0.5
    %v954 = vmul.f32 %v939, 0.5
    %v955 = vmul.f32 %v943, 0.5
    %v956 = vtanh.pop %v954
    %v957 = vtanh.pop %v955
    %v958 = vmul.f32 %v956, 0.5
    %v959 = vmul.f32 %v957, 0.5
    %v960 = vadd.f32 %v958, 0.5
    %v961 = vadd.f32 %v959, 0.5
    %v962 = vtanh.pop %v940
    %v963 = vtanh.pop %v944
    %v964 = vmul.f32 %v941, 0.5
    %v965 = vmul.f32 %v945, 0.5
    %v966 = vtanh.pop %v964
    %v967 = vtanh.pop %v965
    %v968 = vmul.f32 %v966, 0.5
    %v969 = vmul.f32 %v967, 0.5
    %v970 = vadd.f32 %v968, 0.5
    %v971 = vadd.f32 %v969, 0.5
    %v972 = vmul.f32 %v960, %v711
    %v973 = vmul.f32 %v961, %v712
    %v974 = vmul.f32 %v952, %v962
    %v975 = vmul.f32 %v953, %v963
    %v976 = vadd.f32 %v972, %v974
    %v977 = vadd.f32 %v973, %v975
    %v978 = vtanh.pop %v976
    %v979 = vtanh.pop %v977
    %v980 = vmul.f32 %v970, %v978
    %v981 = vmul.f32 %v971, %v979
    %v982 = vpack.c.bf16 %v980, %v980
    %v983 = vpack.c.bf16 %v981, %v981
    %984 = vst [vmem:[#allocation4] sm:$0xf] %v982
    %985 = vst [vmem:[#allocation4 + $0x4] sm:$0xf] %v983
    %s986 = scalar_lea.vmem [#allocation5], 64
    %v987 = vld [vmem:[%s986] sm:$0xff]
    %v988 = vld [vmem:[%s986 + $0x8] sm:$0xff]
    %v989 = vld [vmem:[%s986 + $0x10] sm:$0xff]
    %v990 = vld [vmem:[%s986 + $0x18] sm:$0xff]
    %v991 = vld [vmem:[%s986 + $0x20] sm:$0xff]
    %v992 = vld [vmem:[%s986 + $0x28] sm:$0xff]
    %v993 = vld [vmem:[%s986 + $0x30] sm:$0xff]
    %v994 = vld [vmem:[%s986 + $0x38] sm:$0xff]
    %v997 = vunpack.c.l.b16 %v982
    %v998 = vunpack.c.l.b16 %v983
    %v999 = vpack.c.b16 %v998, %v997
    %1001 = vmatpush.bf16.msra.mxu0 %v846
    %1002 = vmatpush.bf16.msra.mxu0 %v842
    %1003 = vmatpush.bf16.msra.mxu0 %v838
    %1004 = vmatpush.bf16.msra.mxu0 %v834
    %1005 = vmatpush.bf16.msra.mxu0 %v830
    %1006 = vmatpush.bf16.msra.mxu0 %v826
    %1007 = vmatpush.bf16.msra.mxu0 %v822
    %1008 = vmatpush.bf16.msra.mxu0 %v818
    %1009 = vmatmul.bf16.gmra.mxu0 %v999
    %v1010 = vpop.f32.mrf.mxu0
    %v1011 = vadd.f32 0.0, %v1010
    %v1012 = vpop.f32.mrf.mxu0
    %v1013 = vadd.f32 0.0, %v1012
    %1014 = vdwg.mxu0
    %1015 = vmatpush.bf16.msra.mxu0 %v847
    %1016 = vmatpush.bf16.msra.mxu0 %v843
    %1017 = vmatpush.bf16.msra.mxu0 %v839
    %1018 = vmatpush.bf16.msra.mxu0 %v835
    %1019 = vmatpush.bf16.msra.mxu0 %v831
    %1020 = vmatpush.bf16.msra.mxu0 %v827
    %1021 = vmatpush.bf16.msra.mxu0 %v823
    %1022 = vmatpush.bf16.msra.mxu0 %v819
    %1023 = vmatmul.bf16.gmra.mxu0 %v999
    %v1024 = vpop.f32.mrf.mxu0
    %v1025 = vadd.f32 0.0, %v1024
    %v1026 = vpop.f32.mrf.mxu0
    %v1027 = vadd.f32 0.0, %v1026
    %1028 = vdwg.mxu0
    %1029 = vmatpush.bf16.msra.mxu0 %v848
    %1030 = vmatpush.bf16.msra.mxu0 %v844
    %1031 = vmatpush.bf16.msra.mxu0 %v840
    %1032 = vmatpush.bf16.msra.mxu0 %v836
    %1033 = vmatpush.bf16.msra.mxu0 %v832
    %1034 = vmatpush.bf16.msra.mxu0 %v828
    %1035 = vmatpush.bf16.msra.mxu0 %v824
    %1036 = vmatpush.bf16.msra.mxu0 %v820
    %1037 = vmatmul.bf16.gmra.mxu0 %v999
    %v1038 = vpop.f32.mrf.mxu0
    %v1039 = vadd.f32 0.0, %v1038
    %v1040 = vpop.f32.mrf.mxu0
    %v1041 = vadd.f32 0.0, %v1040
    %1042 = vdwg.mxu0
    %1043 = vmatpush.bf16.msra.mxu0 %v849
    %1044 = vmatpush.bf16.msra.mxu0 %v845
    %1045 = vmatpush.bf16.msra.mxu0 %v841
    %1046 = vmatpush.bf16.msra.mxu0 %v837
    %1047 = vmatpush.bf16.msra.mxu0 %v833
    %1048 = vmatpush.bf16.msra.mxu0 %v829
    %1049 = vmatpush.bf16.msra.mxu0 %v825
    %1050 = vmatpush.bf16.msra.mxu0 %v821
    %1051 = vmatmul.bf16.gmra.mxu0 %v999
    %v1052 = vpop.f32.mrf.mxu0
    %v1053 = vadd.f32 0.0, %v1052
    %v1054 = vpop.f32.mrf.mxu0
    %v1055 = vadd.f32 0.0, %v1054
    %1056 = vdwg.mxu0
    %v1057 = vadd.f32 %v987, %v1011
    %v1058 = vadd.f32 %v988, %v1025
    %v1059 = vadd.f32 %v989, %v1039
    %v1060 = vadd.f32 %v990, %v1053
    %v1061 = vadd.f32 %v991, %v1013
    %v1062 = vadd.f32 %v992, %v1027
    %v1063 = vadd.f32 %v993, %v1041
    %v1064 = vadd.f32 %v994, %v1055
    %v1065 = vmul.f32 %v1057, 0.5
    %v1066 = vmul.f32 %v1061, 0.5
    %v1067 = vtanh.pop %v1065
    %v1068 = vtanh.pop %v1066
    %v1069 = vmul.f32 %v1067, 0.5
    %v1070 = vmul.f32 %v1068, 0.5
    %v1071 = vadd.f32 %v1069, 0.5
    %v1072 = vadd.f32 %v1070, 0.5
    %v1073 = vmul.f32 %v1058, 0.5
    %v1074 = vmul.f32 %v1062, 0.5
    %v1075 = vtanh.pop %v1073
    %v1076 = vtanh.pop %v1074
    %v1077 = vmul.f32 %v1075, 0.5
    %v1078 = vmul.f32 %v1076, 0.5
    %v1079 = vadd.f32 %v1077, 0.5
    %v1080 = vadd.f32 %v1078, 0.5
    %v1081 = vtanh.pop %v1059
    %v1082 = vtanh.pop %v1063
    %v1083 = vmul.f32 %v1060, 0.5
    %v1084 = vmul.f32 %v1064, 0.5
    %v1085 = vtanh.pop %v1083
    %v1086 = vtanh.pop %v1084
    %v1087 = vmul.f32 %v1085, 0.5
    %v1088 = vmul.f32 %v1086, 0.5
    %v1089 = vadd.f32 %v1087, 0.5
    %v1090 = vadd.f32 %v1088, 0.5
    %v1091 = vmul.f32 %v1079, %v976
    %v1092 = vmul.f32 %v1080, %v977
    %v1093 = vmul.f32 %v1071, %v1081
    %v1094 = vmul.f32 %v1072, %v1082
    %v1095 = vadd.f32 %v1091, %v1093
    %v1096 = vadd.f32 %v1092, %v1094
    %v1097 = vtanh.pop %v1095
    %v1098 = vtanh.pop %v1096
    %v1099 = vmul.f32 %v1089, %v1097
    %v1100 = vmul.f32 %v1090, %v1098
    %v1101 = vpack.c.bf16 %v1099, %v1099
    %v1102 = vpack.c.bf16 %v1100, %v1100
    %s1103 = scalar_lea.vmem [#allocation4], 8
    %1104 = vst [vmem:[%s1103] sm:$0xf] %v1101
    %1105 = vst [vmem:[%s1103 + $0x4] sm:$0xf] %v1102
    %s1106 = scalar_lea.vmem [#allocation5], 128
    %v1107 = vld [vmem:[%s1106] sm:$0xff]
    %v1108 = vld [vmem:[%s1106 + $0x8] sm:$0xff]
    %v1109 = vld [vmem:[%s1106 + $0x10] sm:$0xff]
    %v1110 = vld [vmem:[%s1106 + $0x18] sm:$0xff]
    %v1111 = vld [vmem:[%s1106 + $0x20] sm:$0xff]
    %v1112 = vld [vmem:[%s1106 + $0x28] sm:$0xff]
    %v1113 = vld [vmem:[%s1106 + $0x30] sm:$0xff]
    %v1114 = vld [vmem:[%s1106 + $0x38] sm:$0xff]
    %v1117 = vunpack.c.l.b16 %v1101
    %v1118 = vunpack.c.l.b16 %v1102
    %v1119 = vpack.c.b16 %v1118, %v1117
    %1121 = vmatpush.bf16.msra.mxu0 %v846
    %1122 = vmatpush.bf16.msra.mxu0 %v842
    %1123 = vmatpush.bf16.msra.mxu0 %v838
    %1124 = vmatpush.bf16.msra.mxu0 %v834
    %1125 = vmatpush.bf16.msra.mxu0 %v830
    %1126 = vmatpush.bf16.msra.mxu0 %v826
    %1127 = vmatpush.bf16.msra.mxu0 %v822
    %1128 = vmatpush.bf16.msra.mxu0 %v818
    %1129 = vmatmul.bf16.gmra.mxu0 %v1119
    %v1130 = vpop.f32.mrf.mxu0
    %v1131 = vadd.f32 0.0, %v1130
    %v1132 = vpop.f32.mrf.mxu0
    %v1133 = vadd.f32 0.0, %v1132
    %1134 = vdwg.mxu0
    %1135 = vmatpush.bf16.msra.mxu0 %v847
    %1136 = vmatpush.bf16.msra.mxu0 %v843
    %1137 = vmatpush.bf16.msra.mxu0 %v839
    %1138 = vmatpush.bf16.msra.mxu0 %v835
    %1139 = vmatpush.bf16.msra.mxu0 %v831
    %1140 = vmatpush.bf16.msra.mxu0 %v827
    %1141 = vmatpush.bf16.msra.mxu0 %v823
    %1142 = vmatpush.bf16.msra.mxu0 %v819
    %1143 = vmatmul.bf16.gmra.mxu0 %v1119
    %v1144 = vpop.f32.mrf.mxu0
    %v1145 = vadd.f32 0.0, %v1144
    %v1146 = vpop.f32.mrf.mxu0
    %v1147 = vadd.f32 0.0, %v1146
    %1148 = vdwg.mxu0
    %1149 = vmatpush.bf16.msra.mxu0 %v848
    %1150 = vmatpush.bf16.msra.mxu0 %v844
    %1151 = vmatpush.bf16.msra.mxu0 %v840
    %1152 = vmatpush.bf16.msra.mxu0 %v836
    %1153 = vmatpush.bf16.msra.mxu0 %v832
    %1154 = vmatpush.bf16.msra.mxu0 %v828
    %1155 = vmatpush.bf16.msra.mxu0 %v824
    %1156 = vmatpush.bf16.msra.mxu0 %v820
    %1157 = vmatmul.bf16.gmra.mxu0 %v1119
    %v1158 = vpop.f32.mrf.mxu0
    %v1159 = vadd.f32 0.0, %v1158
    %v1160 = vpop.f32.mrf.mxu0
    %v1161 = vadd.f32 0.0, %v1160
    %1162 = vdwg.mxu0
    %1163 = vmatpush.bf16.msra.mxu0 %v849
    %1164 = vmatpush.bf16.msra.mxu0 %v845
    %1165 = vmatpush.bf16.msra.mxu0 %v841
    %1166 = vmatpush.bf16.msra.mxu0 %v837
    %1167 = vmatpush.bf16.msra.mxu0 %v833
    %1168 = vmatpush.bf16.msra.mxu0 %v829
    %1169 = vmatpush.bf16.msra.mxu0 %v825
    %1170 = vmatpush.bf16.msra.mxu0 %v821
    %1171 = vmatmul.bf16.gmra.mxu0 %v1119
    %v1172 = vpop.f32.mrf.mxu0
    %v1173 = vadd.f32 0.0, %v1172
    %v1174 = vpop.f32.mrf.mxu0
    %v1175 = vadd.f32 0.0, %v1174
    %1176 = vdwg.mxu0
    %v1177 = vadd.f32 %v1107, %v1131
    %v1178 = vadd.f32 %v1108, %v1145
    %v1179 = vadd.f32 %v1109, %v1159
    %v1180 = vadd.f32 %v1110, %v1173
    %v1181 = vadd.f32 %v1111, %v1133
    %v1182 = vadd.f32 %v1112, %v1147
    %v1183 = vadd.f32 %v1113, %v1161
    %v1184 = vadd.f32 %v1114, %v1175
    %v1185 = vmul.f32 %v1177, 0.5
    %v1186 = vmul.f32 %v1181, 0.5
    %v1187 = vtanh.pop %v1185
    %v1188 = vtanh.pop %v1186
    %v1189 = vmul.f32 %v1187, 0.5
    %v1190 = vmul.f32 %v1188, 0.5
    %v1191 = vadd.f32 %v1189, 0.5
    %v1192 = vadd.f32 %v1190, 0.5
    %v1193 = vmul.f32 %v1178, 0.5
    %v1194 = vmul.f32 %v1182, 0.5
    %v1195 = vtanh.pop %v1193
    %v1196 = vtanh.pop %v1194
    %v1197 = vmul.f32 %v1195, 0.5
    %v1198 = vmul.f32 %v1196, 0.5
    %v1199 = vadd.f32 %v1197, 0.5
    %v1200 = vadd.f32 %v1198, 0.5
    %v1201 = vtanh.pop %v1179
    %v1202 = vtanh.pop %v1183
    %v1203 = vmul.f32 %v1180, 0.5
    %v1204 = vmul.f32 %v1184, 0.5
    %v1205 = vtanh.pop %v1203
    %v1206 = vtanh.pop %v1204
    %v1207 = vmul.f32 %v1205, 0.5
    %v1208 = vmul.f32 %v1206, 0.5
    %v1209 = vadd.f32 %v1207, 0.5
    %v1210 = vadd.f32 %v1208, 0.5
    %v1211 = vmul.f32 %v1199, %v1095
    %v1212 = vmul.f32 %v1200, %v1096
    %v1213 = vmul.f32 %v1191, %v1201
    %v1214 = vmul.f32 %v1192, %v1202
    %v1215 = vadd.f32 %v1211, %v1213
    %v1216 = vadd.f32 %v1212, %v1214
    %v1217 = vtanh.pop %v1215
    %v1218 = vtanh.pop %v1216
    %v1219 = vmul.f32 %v1209, %v1217
    %v1220 = vmul.f32 %v1210, %v1218
    %v1221 = vpack.c.bf16 %v1219, %v1219
    %v1222 = vpack.c.bf16 %v1220, %v1220
    %s1223 = scalar_lea.vmem [#allocation4], 16
    %1224 = vst [vmem:[%s1223] sm:$0xf] %v1221
    %1225 = vst [vmem:[%s1223 + $0x4] sm:$0xf] %v1222
    %s1226 = scalar_lea.vmem [#allocation5], 192
    %v1227 = vld [vmem:[%s1226] sm:$0xff]
    %v1228 = vld [vmem:[%s1226 + $0x8] sm:$0xff]
    %v1229 = vld [vmem:[%s1226 + $0x10] sm:$0xff]
    %v1230 = vld [vmem:[%s1226 + $0x18] sm:$0xff]
    %v1231 = vld [vmem:[%s1226 + $0x20] sm:$0xff]
    %v1232 = vld [vmem:[%s1226 + $0x28] sm:$0xff]
    %v1233 = vld [vmem:[%s1226 + $0x30] sm:$0xff]
    %v1234 = vld [vmem:[%s1226 + $0x38] sm:$0xff]
    %v1237 = vunpack.c.l.b16 %v1221
    %v1238 = vunpack.c.l.b16 %v1222
    %v1239 = vpack.c.b16 %v1238, %v1237
    %1241 = vmatpush.bf16.msra.mxu0 %v846
    %1242 = vmatpush.bf16.msra.mxu0 %v842
    %1243 = vmatpush.bf16.msra.mxu0 %v838
    %1244 = vmatpush.bf16.msra.mxu0 %v834
    %1245 = vmatpush.bf16.msra.mxu0 %v830
    %1246 = vmatpush.bf16.msra.mxu0 %v826
    %1247 = vmatpush.bf16.msra.mxu0 %v822
    %1248 = vmatpush.bf16.msra.mxu0 %v818
    %1249 = vmatmul.bf16.gmra.mxu0 %v1239
    %v1250 = vpop.f32.mrf.mxu0
    %v1251 = vadd.f32 0.0, %v1250
    %v1252 = vpop.f32.mrf.mxu0
    %v1253 = vadd.f32 0.0, %v1252
    %1254 = vdwg.mxu0
    %1255 = vmatpush.bf16.msra.mxu0 %v847
    %1256 = vmatpush.bf16.msra.mxu0 %v843
    %1257 = vmatpush.bf16.msra.mxu0 %v839
    %1258 = vmatpush.bf16.msra.mxu0 %v835
    %1259 = vmatpush.bf16.msra.mxu0 %v831
    %1260 = vmatpush.bf16.msra.mxu0 %v827
    %1261 = vmatpush.bf16.msra.mxu0 %v823
    %1262 = vmatpush.bf16.msra.mxu0 %v819
    %1263 = vmatmul.bf16.gmra.mxu0 %v1239
    %v1264 = vpop.f32.mrf.mxu0
    %v1265 = vadd.f32 0.0, %v1264
    %v1266 = vpop.f32.mrf.mxu0
    %v1267 = vadd.f32 0.0, %v1266
    %1268 = vdwg.mxu0
    %1269 = vmatpush.bf16.msra.mxu0 %v848
    %1270 = vmatpush.bf16.msra.mxu0 %v844
    %1271 = vmatpush.bf16.msra.mxu0 %v840
    %1272 = vmatpush.bf16.msra.mxu0 %v836
    %1273 = vmatpush.bf16.msra.mxu0 %v832
    %1274 = vmatpush.bf16.msra.mxu0 %v828
    %1275 = vmatpush.bf16.msra.mxu0 %v824
    %1276 = vmatpush.bf16.msra.mxu0 %v820
    %1277 = vmatmul.bf16.gmra.mxu0 %v1239
    %v1278 = vpop.f32.mrf.mxu0
    %v1279 = vadd.f32 0.0, %v1278
    %v1280 = vpop.f32.mrf.mxu0
    %v1281 = vadd.f32 0.0, %v1280
    %1282 = vdwg.mxu0
    %1283 = vmatpush.bf16.msra.mxu0 %v849
    %1284 = vmatpush.bf16.msra.mxu0 %v845
    %1285 = vmatpush.bf16.msra.mxu0 %v841
    %1286 = vmatpush.bf16.msra.mxu0 %v837
    %1287 = vmatpush.bf16.msra.mxu0 %v833
    %1288 = vmatpush.bf16.msra.mxu0 %v829
    %1289 = vmatpush.bf16.msra.mxu0 %v825
    %1290 = vmatpush.bf16.msra.mxu0 %v821
    %1291 = vmatmul.bf16.gmra.mxu0 %v1239
    %v1292 = vpop.f32.mrf.mxu0
    %v1293 = vadd.f32 0.0, %v1292
    %v1294 = vpop.f32.mrf.mxu0
    %v1295 = vadd.f32 0.0, %v1294
    %1296 = vdwg.mxu0
    %v1297 = vadd.f32 %v1227, %v1251
    %v1298 = vadd.f32 %v1228, %v1265
    %v1299 = vadd.f32 %v1229, %v1279
    %v1300 = vadd.f32 %v1230, %v1293
    %v1301 = vadd.f32 %v1231, %v1253
    %v1302 = vadd.f32 %v1232, %v1267
    %v1303 = vadd.f32 %v1233, %v1281
    %v1304 = vadd.f32 %v1234, %v1295
    %v1305 = vmul.f32 %v1297, 0.5
    %v1306 = vmul.f32 %v1301, 0.5
    %v1307 = vtanh.pop %v1305
    %v1308 = vtanh.pop %v1306
    %v1309 = vmul.f32 %v1307, 0.5
    %v1310 = vmul.f32 %v1308, 0.5
    %v1311 = vadd.f32 %v1309, 0.5
    %v1312 = vadd.f32 %v1310, 0.5
    %v1313 = vmul.f32 %v1298, 0.5
    %v1314 = vmul.f32 %v1302, 0.5
    %v1315 = vtanh.pop %v1313
    %v1316 = vtanh.pop %v1314
    %v1317 = vmul.f32 %v1315, 0.5
    %v1318 = vmul.f32 %v1316, 0.5
    %v1319 = vadd.f32 %v1317, 0.5
    %v1320 = vadd.f32 %v1318, 0.5
    %v1321 = vtanh.pop %v1299
    %v1322 = vtanh.pop %v1303
    %v1323 = vmul.f32 %v1300, 0.5
    %v1324 = vmul.f32 %v1304, 0.5
    %v1325 = vtanh.pop %v1323
    %v1326 = vtanh.pop %v1324
    %v1327 = vmul.f32 %v1325, 0.5
    %v1328 = vmul.f32 %v1326, 0.5
    %v1329 = vadd.f32 %v1327, 0.5
    %v1330 = vadd.f32 %v1328, 0.5
    %v1331 = vmul.f32 %v1319, %v1215
    %v1332 = vmul.f32 %v1320, %v1216
    %v1333 = vmul.f32 %v1311, %v1321
    %v1334 = vmul.f32 %v1312, %v1322
    %v1335 = vadd.f32 %v1331, %v1333
    %v1336 = vadd.f32 %v1332, %v1334
    %v1337 = vtanh.pop %v1335
    %v1338 = vtanh.pop %v1336
    %v1339 = vmul.f32 %v1329, %v1337
    %v1340 = vmul.f32 %v1330, %v1338
    %v1341 = vpack.c.bf16 %v1339, %v1339
    %v1342 = vpack.c.bf16 %v1340, %v1340
    %s1343 = scalar_lea.vmem [#allocation4], 24
    %1344 = vst [vmem:[%s1343] sm:$0xf] %v1341
    %1345 = vst [vmem:[%s1343 + $0x4] sm:$0xf] %v1342
    %s1346 = scalar_lea.vmem [#allocation5], 256
    %v1347 = vld [vmem:[%s1346] sm:$0xff]
    %v1348 = vld [vmem:[%s1346 + $0x8] sm:$0xff]
    %v1349 = vld [vmem:[%s1346 + $0x10] sm:$0xff]
    %v1350 = vld [vmem:[%s1346 + $0x18] sm:$0xff]
    %v1351 = vld [vmem:[%s1346 + $0x20] sm:$0xff]
    %v1352 = vld [vmem:[%s1346 + $0x28] sm:$0xff]
    %v1353 = vld [vmem:[%s1346 + $0x30] sm:$0xff]
    %v1354 = vld [vmem:[%s1346 + $0x38] sm:$0xff]
    %v1357 = vunpack.c.l.b16 %v1341
    %v1358 = vunpack.c.l.b16 %v1342
    %v1359 = vpack.c.b16 %v1358, %v1357
    %1361 = vmatpush.bf16.msra.mxu0 %v846
    %1362 = vmatpush.bf16.msra.mxu0 %v842
    %1363 = vmatpush.bf16.msra.mxu0 %v838
    %1364 = vmatpush.bf16.msra.mxu0 %v834
    %1365 = vmatpush.bf16.msra.mxu0 %v830
    %1366 = vmatpush.bf16.msra.mxu0 %v826
    %1367 = vmatpush.bf16.msra.mxu0 %v822
    %1368 = vmatpush.bf16.msra.mxu0 %v818
    %1369 = vmatmul.bf16.gmra.mxu0 %v1359
    %v1370 = vpop.f32.mrf.mxu0
    %v1371 = vadd.f32 0.0, %v1370
    %v1372 = vpop.f32.mrf.mxu0
    %v1373 = vadd.f32 0.0, %v1372
    %1374 = vdwg.mxu0
    %1375 = vmatpush.bf16.msra.mxu0 %v847
    %1376 = vmatpush.bf16.msra.mxu0 %v843
    %1377 = vmatpush.bf16.msra.mxu0 %v839
    %1378 = vmatpush.bf16.msra.mxu0 %v835
    %1379 = vmatpush.bf16.msra.mxu0 %v831
    %1380 = vmatpush.bf16.msra.mxu0 %v827
    %1381 = vmatpush.bf16.msra.mxu0 %v823
    %1382 = vmatpush.bf16.msra.mxu0 %v819
    %1383 = vmatmul.bf16.gmra.mxu0 %v1359
    %v1384 = vpop.f32.mrf.mxu0
    %v1385 = vadd.f32 0.0, %v1384
    %v1386 = vpop.f32.mrf.mxu0
    %v1387 = vadd.f32 0.0, %v1386
    %1388 = vdwg.mxu0
    %1389 = vmatpush.bf16.msra.mxu0 %v848
    %1390 = vmatpush.bf16.msra.mxu0 %v844
    %1391 = vmatpush.bf16.msra.mxu0 %v840
    %1392 = vmatpush.bf16.msra.mxu0 %v836
    %1393 = vmatpush.bf16.msra.mxu0 %v832
    %1394 = vmatpush.bf16.msra.mxu0 %v828
    %1395 = vmatpush.bf16.msra.mxu0 %v824
    %1396 = vmatpush.bf16.msra.mxu0 %v820
    %1397 = vmatmul.bf16.gmra.mxu0 %v1359
    %v1398 = vpop.f32.mrf.mxu0
    %v1399 = vadd.f32 0.0, %v1398
    %v1400 = vpop.f32.mrf.mxu0
    %v1401 = vadd.f32 0.0, %v1400
    %1402 = vdwg.mxu0
    %1403 = vmatpush.bf16.msra.mxu0 %v849
    %1404 = vmatpush.bf16.msra.mxu0 %v845
    %1405 = vmatpush.bf16.msra.mxu0 %v841
    %1406 = vmatpush.bf16.msra.mxu0 %v837
    %1407 = vmatpush.bf16.msra.mxu0 %v833
    %1408 = vmatpush.bf16.msra.mxu0 %v829
    %1409 = vmatpush.bf16.msra.mxu0 %v825
    %1410 = vmatpush.bf16.msra.mxu0 %v821
    %1411 = vmatmul.bf16.gmra.mxu0 %v1359
    %v1412 = vpop.f32.mrf.mxu0
    %v1413 = vadd.f32 0.0, %v1412
    %v1414 = vpop.f32.mrf.mxu0
    %v1415 = vadd.f32 0.0, %v1414
    %1416 = vdwg.mxu0
    %v1417 = vadd.f32 %v1347, %v1371
    %v1418 = vadd.f32 %v1348, %v1385
    %v1419 = vadd.f32 %v1349, %v1399
    %v1420 = vadd.f32 %v1350, %v1413
    %v1421 = vadd.f32 %v1351, %v1373
    %v1422 = vadd.f32 %v1352, %v1387
    %v1423 = vadd.f32 %v1353, %v1401
    %v1424 = vadd.f32 %v1354, %v1415
    %v1425 = vmul.f32 %v1417, 0.5
    %v1426 = vmul.f32 %v1421, 0.5
    %v1427 = vtanh.pop %v1425
    %v1428 = vtanh.pop %v1426
    %v1429 = vmul.f32 %v1427, 0.5
    %v1430 = vmul.f32 %v1428, 0.5
    %v1431 = vadd.f32 %v1429, 0.5
    %v1432 = vadd.f32 %v1430, 0.5
    %v1433 = vmul.f32 %v1418, 0.5
    %v1434 = vmul.f32 %v1422, 0.5
    %v1435 = vtanh.pop %v1433
    %v1436 = vtanh.pop %v1434
    %v1437 = vmul.f32 %v1435, 0.5
    %v1438 = vmul.f32 %v1436, 0.5
    %v1439 = vadd.f32 %v1437, 0.5
    %v1440 = vadd.f32 %v1438, 0.5
    %v1441 = vtanh.pop %v1419
    %v1442 = vtanh.pop %v1423
    %v1443 = vmul.f32 %v1420, 0.5
    %v1444 = vmul.f32 %v1424, 0.5
    %v1445 = vtanh.pop %v1443
    %v1446 = vtanh.pop %v1444
    %v1447 = vmul.f32 %v1445, 0.5
    %v1448 = vmul.f32 %v1446, 0.5
    %v1449 = vadd.f32 %v1447, 0.5
    %v1450 = vadd.f32 %v1448, 0.5
    %v1451 = vmul.f32 %v1439, %v1335
    %v1452 = vmul.f32 %v1440, %v1336
    %v1453 = vmul.f32 %v1431, %v1441
    %v1454 = vmul.f32 %v1432, %v1442
    %v1455 = vadd.f32 %v1451, %v1453
    %v1456 = vadd.f32 %v1452, %v1454
    %v1457 = vtanh.pop %v1455
    %v1458 = vtanh.pop %v1456
    %v1459 = vmul.f32 %v1449, %v1457
    %v1460 = vmul.f32 %v1450, %v1458
    %v1461 = vpack.c.bf16 %v1459, %v1459
    %v1462 = vpack.c.bf16 %v1460, %v1460
    %s1463 = scalar_lea.vmem [#allocation4], 32
    %1464 = vst [vmem:[%s1463] sm:$0xf] %v1461
    %1465 = vst [vmem:[%s1463 + $0x4] sm:$0xf] %v1462
    %s1466 = scalar_lea.vmem [#allocation5], 320
    %v1467 = vld [vmem:[%s1466] sm:$0xff]
    %v1468 = vld [vmem:[%s1466 + $0x8] sm:$0xff]
    %v1469 = vld [vmem:[%s1466 + $0x10] sm:$0xff]
    %v1470 = vld [vmem:[%s1466 + $0x18] sm:$0xff]
    %v1471 = vld [vmem:[%s1466 + $0x20] sm:$0xff]
    %v1472 = vld [vmem:[%s1466 + $0x28] sm:$0xff]
    %v1473 = vld [vmem:[%s1466 + $0x30] sm:$0xff]
    %v1474 = vld [vmem:[%s1466 + $0x38] sm:$0xff]
    %v1477 = vunpack.c.l.b16 %v1461
    %v1478 = vunpack.c.l.b16 %v1462
    %v1479 = vpack.c.b16 %v1478, %v1477
    %1481 = vmatpush.bf16.msra.mxu0 %v846
    %1482 = vmatpush.bf16.msra.mxu0 %v842
    %1483 = vmatpush.bf16.msra.mxu0 %v838
    %1484 = vmatpush.bf16.msra.mxu0 %v834
    %1485 = vmatpush.bf16.msra.mxu0 %v830
    %1486 = vmatpush.bf16.msra.mxu0 %v826
    %1487 = vmatpush.bf16.msra.mxu0 %v822
    %1488 = vmatpush.bf16.msra.mxu0 %v818
    %1489 = vmatmul.bf16.gmra.mxu0 %v1479
    %v1490 = vpop.f32.mrf.mxu0
    %v1491 = vadd.f32 0.0, %v1490
    %v1492 = vpop.f32.mrf.mxu0
    %v1493 = vadd.f32 0.0, %v1492
    %1494 = vdwg.mxu0
    %1495 = vmatpush.bf16.msra.mxu0 %v847
    %1496 = vmatpush.bf16.msra.mxu0 %v843
    %1497 = vmatpush.bf16.msra.mxu0 %v839
    %1498 = vmatpush.bf16.msra.mxu0 %v835
    %1499 = vmatpush.bf16.msra.mxu0 %v831
    %1500 = vmatpush.bf16.msra.mxu0 %v827
    %1501 = vmatpush.bf16.msra.mxu0 %v823
    %1502 = vmatpush.bf16.msra.mxu0 %v819
    %1503 = vmatmul.bf16.gmra.mxu0 %v1479
    %v1504 = vpop.f32.mrf.mxu0
    %v1505 = vadd.f32 0.0, %v1504
    %v1506 = vpop.f32.mrf.mxu0
    %v1507 = vadd.f32 0.0, %v1506
    %1508 = vdwg.mxu0
    %1509 = vmatpush.bf16.msra.mxu0 %v848
    %1510 = vmatpush.bf16.msra.mxu0 %v844
    %1511 = vmatpush.bf16.msra.mxu0 %v840
    %1512 = vmatpush.bf16.msra.mxu0 %v836
    %1513 = vmatpush.bf16.msra.mxu0 %v832
    %1514 = vmatpush.bf16.msra.mxu0 %v828
    %1515 = vmatpush.bf16.msra.mxu0 %v824
    %1516 = vmatpush.bf16.msra.mxu0 %v820
    %1517 = vmatmul.bf16.gmra.mxu0 %v1479
    %v1518 = vpop.f32.mrf.mxu0
    %v1519 = vadd.f32 0.0, %v1518
    %v1520 = vpop.f32.mrf.mxu0
    %v1521 = vadd.f32 0.0, %v1520
    %1522 = vdwg.mxu0
    %1523 = vmatpush.bf16.msra.mxu0 %v849
    %1524 = vmatpush.bf16.msra.mxu0 %v845
    %1525 = vmatpush.bf16.msra.mxu0 %v841
    %1526 = vmatpush.bf16.msra.mxu0 %v837
    %1527 = vmatpush.bf16.msra.mxu0 %v833
    %1528 = vmatpush.bf16.msra.mxu0 %v829
    %1529 = vmatpush.bf16.msra.mxu0 %v825
    %1530 = vmatpush.bf16.msra.mxu0 %v821
    %1531 = vmatmul.bf16.gmra.mxu0 %v1479
    %v1532 = vpop.f32.mrf.mxu0
    %v1533 = vadd.f32 0.0, %v1532
    %v1534 = vpop.f32.mrf.mxu0
    %v1535 = vadd.f32 0.0, %v1534
    %1536 = vdwg.mxu0
    %v1537 = vadd.f32 %v1467, %v1491
    %v1538 = vadd.f32 %v1468, %v1505
    %v1539 = vadd.f32 %v1469, %v1519
    %v1540 = vadd.f32 %v1470, %v1533
    %v1541 = vadd.f32 %v1471, %v1493
    %v1542 = vadd.f32 %v1472, %v1507
    %v1543 = vadd.f32 %v1473, %v1521
    %v1544 = vadd.f32 %v1474, %v1535
    %v1545 = vmul.f32 %v1537, 0.5
    %v1546 = vmul.f32 %v1541, 0.5
    %v1547 = vtanh.pop %v1545
    %v1548 = vtanh.pop %v1546
    %v1549 = vmul.f32 %v1547, 0.5
    %v1550 = vmul.f32 %v1548, 0.5
    %v1551 = vadd.f32 %v1549, 0.5
    %v1552 = vadd.f32 %v1550, 0.5
    %v1553 = vmul.f32 %v1538, 0.5
    %v1554 = vmul.f32 %v1542, 0.5
    %v1555 = vtanh.pop %v1553
    %v1556 = vtanh.pop %v1554
    %v1557 = vmul.f32 %v1555, 0.5
    %v1558 = vmul.f32 %v1556, 0.5
    %v1559 = vadd.f32 %v1557, 0.5
    %v1560 = vadd.f32 %v1558, 0.5
    %v1561 = vtanh.pop %v1539
    %v1562 = vtanh.pop %v1543
    %v1563 = vmul.f32 %v1540, 0.5
    %v1564 = vmul.f32 %v1544, 0.5
    %v1565 = vtanh.pop %v1563
    %v1566 = vtanh.pop %v1564
    %v1567 = vmul.f32 %v1565, 0.5
    %v1568 = vmul.f32 %v1566, 0.5
    %v1569 = vadd.f32 %v1567, 0.5
    %v1570 = vadd.f32 %v1568, 0.5
    %v1571 = vmul.f32 %v1559, %v1455
    %v1572 = vmul.f32 %v1560, %v1456
    %v1573 = vmul.f32 %v1551, %v1561
    %v1574 = vmul.f32 %v1552, %v1562
    %v1575 = vadd.f32 %v1571, %v1573
    %v1576 = vadd.f32 %v1572, %v1574
    %v1577 = vtanh.pop %v1575
    %v1578 = vtanh.pop %v1576
    %v1579 = vmul.f32 %v1569, %v1577
    %v1580 = vmul.f32 %v1570, %v1578
    %v1581 = vpack.c.bf16 %v1579, %v1579
    %v1582 = vpack.c.bf16 %v1580, %v1580
    %s1583 = scalar_lea.vmem [#allocation4], 40
    %1584 = vst [vmem:[%s1583] sm:$0xf] %v1581
    %1585 = vst [vmem:[%s1583 + $0x4] sm:$0xf] %v1582
    %s1586 = scalar_lea.vmem [#allocation5], 384
    %v1587 = vld [vmem:[%s1586] sm:$0xff]
    %v1588 = vld [vmem:[%s1586 + $0x8] sm:$0xff]
    %v1589 = vld [vmem:[%s1586 + $0x10] sm:$0xff]
    %v1590 = vld [vmem:[%s1586 + $0x18] sm:$0xff]
    %v1591 = vld [vmem:[%s1586 + $0x20] sm:$0xff]
    %v1592 = vld [vmem:[%s1586 + $0x28] sm:$0xff]
    %v1593 = vld [vmem:[%s1586 + $0x30] sm:$0xff]
    %v1594 = vld [vmem:[%s1586 + $0x38] sm:$0xff]
    %v1597 = vunpack.c.l.b16 %v1581
    %v1598 = vunpack.c.l.b16 %v1582
    %v1599 = vpack.c.b16 %v1598, %v1597
    %1601 = vmatpush.bf16.msra.mxu0 %v846
    %1602 = vmatpush.bf16.msra.mxu0 %v842
    %1603 = vmatpush.bf16.msra.mxu0 %v838
    %1604 = vmatpush.bf16.msra.mxu0 %v834
    %1605 = vmatpush.bf16.msra.mxu0 %v830
    %1606 = vmatpush.bf16.msra.mxu0 %v826
    %1607 = vmatpush.bf16.msra.mxu0 %v822
    %1608 = vmatpush.bf16.msra.mxu0 %v818
    %1609 = vmatmul.bf16.gmra.mxu0 %v1599
    %v1610 = vpop.f32.mrf.mxu0
    %v1611 = vadd.f32 0.0, %v1610
    %v1612 = vpop.f32.mrf.mxu0
    %v1613 = vadd.f32 0.0, %v1612
    %1614 = vdwg.mxu0
    %1615 = vmatpush.bf16.msra.mxu0 %v847
    %1616 = vmatpush.bf16.msra.mxu0 %v843
    %1617 = vmatpush.bf16.msra.mxu0 %v839
    %1618 = vmatpush.bf16.msra.mxu0 %v835
    %1619 = vmatpush.bf16.msra.mxu0 %v831
    %1620 = vmatpush.bf16.msra.mxu0 %v827
    %1621 = vmatpush.bf16.msra.mxu0 %v823
    %1622 = vmatpush.bf16.msra.mxu0 %v819
    %1623 = vmatmul.bf16.gmra.mxu0 %v1599
    %v1624 = vpop.f32.mrf.mxu0
    %v1625 = vadd.f32 0.0, %v1624
    %v1626 = vpop.f32.mrf.mxu0
    %v1627 = vadd.f32 0.0, %v1626
    %1628 = vdwg.mxu0
    %1629 = vmatpush.bf16.msra.mxu0 %v848
    %1630 = vmatpush.bf16.msra.mxu0 %v844
    %1631 = vmatpush.bf16.msra.mxu0 %v840
    %1632 = vmatpush.bf16.msra.mxu0 %v836
    %1633 = vmatpush.bf16.msra.mxu0 %v832
    %1634 = vmatpush.bf16.msra.mxu0 %v828
    %1635 = vmatpush.bf16.msra.mxu0 %v824
    %1636 = vmatpush.bf16.msra.mxu0 %v820
    %1637 = vmatmul.bf16.gmra.mxu0 %v1599
    %v1638 = vpop.f32.mrf.mxu0
    %v1639 = vadd.f32 0.0, %v1638
    %v1640 = vpop.f32.mrf.mxu0
    %v1641 = vadd.f32 0.0, %v1640
    %1642 = vdwg.mxu0
    %1643 = vmatpush.bf16.msra.mxu0 %v849
    %1644 = vmatpush.bf16.msra.mxu0 %v845
    %1645 = vmatpush.bf16.msra.mxu0 %v841
    %1646 = vmatpush.bf16.msra.mxu0 %v837
    %1647 = vmatpush.bf16.msra.mxu0 %v833
    %1648 = vmatpush.bf16.msra.mxu0 %v829
    %1649 = vmatpush.bf16.msra.mxu0 %v825
    %1650 = vmatpush.bf16.msra.mxu0 %v821
    %1651 = vmatmul.bf16.gmra.mxu0 %v1599
    %v1652 = vpop.f32.mrf.mxu0
    %v1653 = vadd.f32 0.0, %v1652
    %v1654 = vpop.f32.mrf.mxu0
    %v1655 = vadd.f32 0.0, %v1654
    %1656 = vdwg.mxu0
    %v1657 = vadd.f32 %v1587, %v1611
    %v1658 = vadd.f32 %v1588, %v1625
    %v1659 = vadd.f32 %v1589, %v1639
    %v1660 = vadd.f32 %v1590, %v1653
    %v1661 = vadd.f32 %v1591, %v1613
    %v1662 = vadd.f32 %v1592, %v1627
    %v1663 = vadd.f32 %v1593, %v1641
    %v1664 = vadd.f32 %v1594, %v1655
    %v1665 = vmul.f32 %v1657, 0.5
    %v1666 = vmul.f32 %v1661, 0.5
    %v1667 = vtanh.pop %v1665
    %v1668 = vtanh.pop %v1666
    %v1669 = vmul.f32 %v1667, 0.5
    %v1670 = vmul.f32 %v1668, 0.5
    %v1671 = vadd.f32 %v1669, 0.5
    %v1672 = vadd.f32 %v1670, 0.5
    %v1673 = vmul.f32 %v1658, 0.5
    %v1674 = vmul.f32 %v1662, 0.5
    %v1675 = vtanh.pop %v1673
    %v1676 = vtanh.pop %v1674
    %v1677 = vmul.f32 %v1675, 0.5
    %v1678 = vmul.f32 %v1676, 0.5
    %v1679 = vadd.f32 %v1677, 0.5
    %v1680 = vadd.f32 %v1678, 0.5
    %v1681 = vtanh.pop %v1659
    %v1682 = vtanh.pop %v1663
    %v1683 = vmul.f32 %v1660, 0.5
    %v1684 = vmul.f32 %v1664, 0.5
    %v1685 = vtanh.pop %v1683
    %v1686 = vtanh.pop %v1684
    %v1687 = vmul.f32 %v1685, 0.5
    %v1688 = vmul.f32 %v1686, 0.5
    %v1689 = vadd.f32 %v1687, 0.5
    %v1690 = vadd.f32 %v1688, 0.5
    %v1691 = vmul.f32 %v1679, %v1575
    %v1692 = vmul.f32 %v1680, %v1576
    %v1693 = vmul.f32 %v1671, %v1681
    %v1694 = vmul.f32 %v1672, %v1682
    %v1695 = vadd.f32 %v1691, %v1693
    %v1696 = vadd.f32 %v1692, %v1694
    %v1697 = vtanh.pop %v1695
    %v1698 = vtanh.pop %v1696
    %v1699 = vmul.f32 %v1689, %v1697
    %v1700 = vmul.f32 %v1690, %v1698
    %v1701 = vpack.c.bf16 %v1699, %v1699
    %v1702 = vpack.c.bf16 %v1700, %v1700
    %s1703 = scalar_lea.vmem [#allocation4], 48
    %1704 = vst [vmem:[%s1703] sm:$0xf] %v1701
    %1705 = vst [vmem:[%s1703 + $0x4] sm:$0xf] %v1702
    %s1706 = scalar_lea.vmem [#allocation5], 448
    %v1707 = vld [vmem:[%s1706] sm:$0xff]
    %v1708 = vld [vmem:[%s1706 + $0x8] sm:$0xff]
    %v1709 = vld [vmem:[%s1706 + $0x10] sm:$0xff]
    %v1710 = vld [vmem:[%s1706 + $0x18] sm:$0xff]
    %v1711 = vld [vmem:[%s1706 + $0x20] sm:$0xff]
    %v1712 = vld [vmem:[%s1706 + $0x28] sm:$0xff]
    %v1713 = vld [vmem:[%s1706 + $0x30] sm:$0xff]
    %v1714 = vld [vmem:[%s1706 + $0x38] sm:$0xff]
    %v1717 = vunpack.c.l.b16 %v1701
    %v1718 = vunpack.c.l.b16 %v1702
    %v1719 = vpack.c.b16 %v1718, %v1717
    %1721 = vmatpush.bf16.msra.mxu0 %v846
    %1722 = vmatpush.bf16.msra.mxu0 %v842
    %1723 = vmatpush.bf16.msra.mxu0 %v838
    %1724 = vmatpush.bf16.msra.mxu0 %v834
    %1725 = vmatpush.bf16.msra.mxu0 %v830
    %1726 = vmatpush.bf16.msra.mxu0 %v826
    %1727 = vmatpush.bf16.msra.mxu0 %v822
    %1728 = vmatpush.bf16.msra.mxu0 %v818
    %1729 = vmatmul.bf16.gmra.mxu0 %v1719
    %v1730 = vpop.f32.mrf.mxu0
    %v1731 = vadd.f32 0.0, %v1730
    %v1732 = vpop.f32.mrf.mxu0
    %v1733 = vadd.f32 0.0, %v1732
    %1734 = vdwg.mxu0
    %1735 = vmatpush.bf16.msra.mxu0 %v847
    %1736 = vmatpush.bf16.msra.mxu0 %v843
    %1737 = vmatpush.bf16.msra.mxu0 %v839
    %1738 = vmatpush.bf16.msra.mxu0 %v835
    %1739 = vmatpush.bf16.msra.mxu0 %v831
    %1740 = vmatpush.bf16.msra.mxu0 %v827
    %1741 = vmatpush.bf16.msra.mxu0 %v823
    %1742 = vmatpush.bf16.msra.mxu0 %v819
    %1743 = vmatmul.bf16.gmra.mxu0 %v1719
    %v1744 = vpop.f32.mrf.mxu0
    %v1745 = vadd.f32 0.0, %v1744
    %v1746 = vpop.f32.mrf.mxu0
    %v1747 = vadd.f32 0.0, %v1746
    %1748 = vdwg.mxu0
    %1749 = vmatpush.bf16.msra.mxu0 %v848
    %1750 = vmatpush.bf16.msra.mxu0 %v844
    %1751 = vmatpush.bf16.msra.mxu0 %v840
    %1752 = vmatpush.bf16.msra.mxu0 %v836
    %1753 = vmatpush.bf16.msra.mxu0 %v832
    %1754 = vmatpush.bf16.msra.mxu0 %v828
    %1755 = vmatpush.bf16.msra.mxu0 %v824
    %1756 = vmatpush.bf16.msra.mxu0 %v820
    %1757 = vmatmul.bf16.gmra.mxu0 %v1719
    %v1758 = vpop.f32.mrf.mxu0
    %v1759 = vadd.f32 0.0, %v1758
    %v1760 = vpop.f32.mrf.mxu0
    %v1761 = vadd.f32 0.0, %v1760
    %1762 = vdwg.mxu0
    %1763 = vmatpush.bf16.msra.mxu0 %v849
    %1764 = vmatpush.bf16.msra.mxu0 %v845
    %1765 = vmatpush.bf16.msra.mxu0 %v841
    %1766 = vmatpush.bf16.msra.mxu0 %v837
    %1767 = vmatpush.bf16.msra.mxu0 %v833
    %1768 = vmatpush.bf16.msra.mxu0 %v829
    %1769 = vmatpush.bf16.msra.mxu0 %v825
    %1770 = vmatpush.bf16.msra.mxu0 %v821
    %1771 = vmatmul.bf16.gmra.mxu0 %v1719
    %v1772 = vpop.f32.mrf.mxu0
    %v1773 = vadd.f32 0.0, %v1772
    %v1774 = vpop.f32.mrf.mxu0
    %v1775 = vadd.f32 0.0, %v1774
    %1776 = vdwg.mxu0
    %v1777 = vadd.f32 %v1707, %v1731
    %v1778 = vadd.f32 %v1708, %v1745
    %v1779 = vadd.f32 %v1709, %v1759
    %v1780 = vadd.f32 %v1710, %v1773
    %v1781 = vadd.f32 %v1711, %v1733
    %v1782 = vadd.f32 %v1712, %v1747
    %v1783 = vadd.f32 %v1713, %v1761
    %v1784 = vadd.f32 %v1714, %v1775
    %v1785 = vmul.f32 %v1777, 0.5
    %v1786 = vmul.f32 %v1781, 0.5
    %v1787 = vtanh.pop %v1785
    %v1788 = vtanh.pop %v1786
    %v1789 = vmul.f32 %v1787, 0.5
    %v1790 = vmul.f32 %v1788, 0.5
    %v1791 = vadd.f32 %v1789, 0.5
    %v1792 = vadd.f32 %v1790, 0.5
    %v1793 = vmul.f32 %v1778, 0.5
    %v1794 = vmul.f32 %v1782, 0.5
    %v1795 = vtanh.pop %v1793
    %v1796 = vtanh.pop %v1794
    %v1797 = vmul.f32 %v1795, 0.5
    %v1798 = vmul.f32 %v1796, 0.5
    %v1799 = vadd.f32 %v1797, 0.5
    %v1800 = vadd.f32 %v1798, 0.5
    %v1801 = vtanh.pop %v1779
    %v1802 = vtanh.pop %v1783
    %v1803 = vmul.f32 %v1780, 0.5
    %v1804 = vmul.f32 %v1784, 0.5
    %v1805 = vtanh.pop %v1803
    %v1806 = vtanh.pop %v1804
    %v1807 = vmul.f32 %v1805, 0.5
    %v1808 = vmul.f32 %v1806, 0.5
    %v1809 = vadd.f32 %v1807, 0.5
    %v1810 = vadd.f32 %v1808, 0.5
    %v1811 = vmul.f32 %v1799, %v1695
    %v1812 = vmul.f32 %v1800, %v1696
    %v1813 = vmul.f32 %v1791, %v1801
    %v1814 = vmul.f32 %v1792, %v1802
    %v1815 = vadd.f32 %v1811, %v1813
    %v1816 = vadd.f32 %v1812, %v1814
    %v1817 = vtanh.pop %v1815
    %v1818 = vtanh.pop %v1816
    %v1819 = vmul.f32 %v1809, %v1817
    %v1820 = vmul.f32 %v1810, %v1818
    %v1821 = vpack.c.bf16 %v1819, %v1819
    %v1822 = vpack.c.bf16 %v1820, %v1820
    %s1823 = scalar_lea.vmem [#allocation4], 56
    %1824 = vst [vmem:[%s1823] sm:$0xf] %v1821
    %1825 = vst [vmem:[%s1823 + $0x4] sm:$0xf] %v1822
    %1826 = vst [vmem:[#allocation2] sm:$0xff] %v1819
    %1827 = vst [vmem:[#allocation2 + $0x8] sm:$0xff] %v1820
    %1828 = vst [vmem:[#allocation3] sm:$0xff] %v1815
    %1829 = vst [vmem:[#allocation3 + $0x8] sm:$0xff] %v1816
    %v1830 = vld [vmem:[#allocation4] sm:$0xf]
    %v1831 = vld [vmem:[#allocation4 + $0x4] sm:$0xf]
    %v1832 = vld [vmem:[#allocation4 + $0x8] sm:$0xf]
    %v1833 = vld [vmem:[#allocation4 + $0xc] sm:$0xf]
    %v1834 = vld [vmem:[#allocation4 + $0x10] sm:$0xf]
    %v1835 = vld [vmem:[#allocation4 + $0x14] sm:$0xf]
    %v1836 = vld [vmem:[#allocation4 + $0x18] sm:$0xf]
    %v1837 = vld [vmem:[#allocation4 + $0x1c] sm:$0xf]
    %v1838 = vld [vmem:[#allocation4 + $0x20] sm:$0xf]
    %v1839 = vld [vmem:[#allocation4 + $0x24] sm:$0xf]
    %v1840 = vld [vmem:[#allocation4 + $0x28] sm:$0xf]
    %v1841 = vld [vmem:[#allocation4 + $0x2c] sm:$0xf]
    %v1842 = vld [vmem:[#allocation4 + $0x30] sm:$0xf]
    %v1843 = vld [vmem:[#allocation4 + $0x34] sm:$0xf]
    %v1844 = vld [vmem:[#allocation4 + $0x38] sm:$0xf]
    %v1845 = vld [vmem:[#allocation4 + $0x3c] sm:$0xf]
    %v1846 = vld [vmem:[#allocation11] sm:$0xff]
    %v1847 = vld [vmem:[#allocation11 + $0x8] sm:$0xff]
    %v1848 = vld [vmem:[#allocation11 + $0x10] sm:$0xff]
    %v1849 = vld [vmem:[#allocation11 + $0x18] sm:$0xff]
    %v1850 = vld [vmem:[#allocation11 + $0x20] sm:$0xff]
    %v1851 = vld [vmem:[#allocation11 + $0x28] sm:$0xff]
    %v1852 = vld [vmem:[#allocation11 + $0x30] sm:$0xff]
    %v1853 = vld [vmem:[#allocation11 + $0x38] sm:$0xff]
    %v1854 = vld [vmem:[#allocation11 + $0x40] sm:$0xff]
    %v1855 = vld [vmem:[#allocation11 + $0x48] sm:$0xff]
    %v1856 = vld [vmem:[#allocation11 + $0x50] sm:$0xff]
    %v1857 = vld [vmem:[#allocation11 + $0x58] sm:$0xff]
    %v1858 = vld [vmem:[#allocation11 + $0x60] sm:$0xff]
    %v1859 = vld [vmem:[#allocation11 + $0x68] sm:$0xff]
    %v1860 = vld [vmem:[#allocation11 + $0x70] sm:$0xff]
    %v1861 = vld [vmem:[#allocation11 + $0x78] sm:$0xff]
    %v1862 = vld [vmem:[#allocation11 + $0x80] sm:$0xff]
    %v1863 = vld [vmem:[#allocation11 + $0x88] sm:$0xff]
    %v1864 = vld [vmem:[#allocation11 + $0x90] sm:$0xff]
    %v1865 = vld [vmem:[#allocation11 + $0x98] sm:$0xff]
    %v1866 = vld [vmem:[#allocation11 + $0xa0] sm:$0xff]
    %v1867 = vld [vmem:[#allocation11 + $0xa8] sm:$0xff]
    %v1868 = vld [vmem:[#allocation11 + $0xb0] sm:$0xff]
    %v1869 = vld [vmem:[#allocation11 + $0xb8] sm:$0xff]
    %v1870 = vld [vmem:[#allocation11 + $0xc0] sm:$0xff]
    %v1871 = vld [vmem:[#allocation11 + $0xc8] sm:$0xff]
    %v1872 = vld [vmem:[#allocation11 + $0xd0] sm:$0xff]
    %v1873 = vld [vmem:[#allocation11 + $0xd8] sm:$0xff]
    %v1874 = vld [vmem:[#allocation11 + $0xe0] sm:$0xff]
    %v1875 = vld [vmem:[#allocation11 + $0xe8] sm:$0xff]
    %v1876 = vld [vmem:[#allocation11 + $0xf0] sm:$0xff]
    %v1877 = vld [vmem:[#allocation11 + $0xf8] sm:$0xff]
    %s1878 = scalar_lea.vmem [#allocation15], 4
    %v1879 = vld [vmem:[%s1878] sm:$0xf]
    %v1881 = vperm.slane %v1879, 0
    %v1882 = vperm.slane %v1879, 1
    %v1883 = vperm.slane %v1879, 2
    %v1884 = vperm.slane %v1879, 3
    %v1905 = vunpack.c.l.b16 %v1830
    %v1906 = vunpack.c.l.b16 %v1831
    %v1907 = vunpack.c.l.b16 %v1832
    %v1908 = vunpack.c.l.b16 %v1833
    %v1909 = vunpack.c.l.b16 %v1834
    %v1910 = vunpack.c.l.b16 %v1835
    %v1911 = vunpack.c.l.b16 %v1836
    %v1912 = vunpack.c.l.b16 %v1837
    %v1913 = vunpack.c.l.b16 %v1838
    %v1914 = vunpack.c.l.b16 %v1839
    %v1915 = vunpack.c.l.b16 %v1840
    %v1916 = vunpack.c.l.b16 %v1841
    %v1917 = vunpack.c.l.b16 %v1842
    %v1918 = vunpack.c.l.b16 %v1843
    %v1919 = vunpack.c.l.b16 %v1844
    %v1920 = vunpack.c.l.b16 %v1845
    %v1921 = vpack.c.b16 %v1906, %v1905
    %v1922 = vpack.c.b16 %v1908, %v1907
    %v1923 = vpack.c.b16 %v1910, %v1909
    %v1924 = vpack.c.b16 %v1912, %v1911
    %v1925 = vpack.c.b16 %v1914, %v1913
    %v1926 = vpack.c.b16 %v1916, %v1915
    %v1927 = vpack.c.b16 %v1918, %v1917
    %v1928 = vpack.c.b16 %v1920, %v1919
    %v1969 = vunpack.c.l.b16 %v1846
    %v1970 = vunpack.c.h.b16 %v1846
    %v1971 = vunpack.c.l.b16 %v1847
    %v1972 = vunpack.c.h.b16 %v1847
    %v1973 = vunpack.c.l.b16 %v1848
    %v1974 = vunpack.c.h.b16 %v1848
    %v1975 = vunpack.c.l.b16 %v1849
    %v1976 = vunpack.c.h.b16 %v1849
    %v1977 = vunpack.c.l.b16 %v1850
    %v1978 = vunpack.c.h.b16 %v1850
    %v1979 = vunpack.c.l.b16 %v1851
    %v1980 = vunpack.c.h.b16 %v1851
    %v1981 = vunpack.c.l.b16 %v1852
    %v1982 = vunpack.c.h.b16 %v1852
    %v1983 = vunpack.c.l.b16 %v1853
    %v1984 = vunpack.c.h.b16 %v1853
    %v1985 = vunpack.c.l.b16 %v1854
    %v1986 = vunpack.c.h.b16 %v1854
    %v1987 = vunpack.c.l.b16 %v1855
    %v1988 = vunpack.c.h.b16 %v1855
    %v1989 = vunpack.c.l.b16 %v1856
    %v1990 = vunpack.c.h.b16 %v1856
    %v1991 = vunpack.c.l.b16 %v1857
    %v1992 = vunpack.c.h.b16 %v1857
    %v1993 = vunpack.c.l.b16 %v1858
    %v1994 = vunpack.c.h.b16 %v1858
    %v1995 = vunpack.c.l.b16 %v1859
    %v1996 = vunpack.c.h.b16 %v1859
    %v1997 = vunpack.c.l.b16 %v1860
    %v1998 = vunpack.c.h.b16 %v1860
    %v1999 = vunpack.c.l.b16 %v1861
    %v2000 = vunpack.c.h.b16 %v1861
    %v2001 = vunpack.c.l.b16 %v1862
    %v2002 = vunpack.c.h.b16 %v1862
    %v2003 = vunpack.c.l.b16 %v1863
    %v2004 = vunpack.c.h.b16 %v1863
    %v2005 = vunpack.c.l.b16 %v1864
    %v2006 = vunpack.c.h.b16 %v1864
    %v2007 = vunpack.c.l.b16 %v1865
    %v2008 = vunpack.c.h.b16 %v1865
    %v2009 = vunpack.c.l.b16 %v1866
    %v2010 = vunpack.c.h.b16 %v1866
    %v2011 = vunpack.c.l.b16 %v1867
    %v2012 = vunpack.c.h.b16 %v1867
    %v2013 = vunpack.c.l.b16 %v1868
    %v2014 = vunpack.c.h.b16 %v1868
    %v2015 = vunpack.c.l.b16 %v1869
    %v2016 = vunpack.c.h.b16 %v1869
    %v2017 = vunpack.c.l.b16 %v1870
    %v2018 = vunpack.c.h.b16 %v1870
    %v2019 = vunpack.c.l.b16 %v1871
    %v2020 = vunpack.c.h.b16 %v1871
    %v2021 = vunpack.c.l.b16 %v1872
    %v2022 = vunpack.c.h.b16 %v1872
    %v2023 = vunpack.c.l.b16 %v1873
    %v2024 = vunpack.c.h.b16 %v1873
    %v2025 = vunpack.c.l.b16 %v1874
    %v2026 = vunpack.c.h.b16 %v1874
    %v2027 = vunpack.c.l.b16 %v1875
    %v2028 = vunpack.c.h.b16 %v1875
    %v2029 = vunpack.c.l.b16 %v1876
    %v2030 = vunpack.c.h.b16 %v1876
    %v2031 = vunpack.c.l.b16 %v1877
    %v2032 = vunpack.c.h.b16 %v1877
    %v2033 = vpack.c.b16 %v1973, %v1969
    %v2034 = vpack.c.b16 %v1974, %v1970
    %v2035 = vpack.c.b16 %v1975, %v1971
    %v2036 = vpack.c.b16 %v1976, %v1972
    %v2037 = vpack.c.b16 %v1981, %v1977
    %v2038 = vpack.c.b16 %v1982, %v1978
    %v2039 = vpack.c.b16 %v1983, %v1979
    %v2040 = vpack.c.b16 %v1984, %v1980
    %v2041 = vpack.c.b16 %v1989, %v1985
    %v2042 = vpack.c.b16 %v1990, %v1986
    %v2043 = vpack.c.b16 %v1991, %v1987
    %v2044 = vpack.c.b16 %v1992, %v1988
    %v2045 = vpack.c.b16 %v1997, %v1993
    %v2046 = vpack.c.b16 %v1998, %v1994
    %v2047 = vpack.c.b16 %v1999, %v1995
    %v2048 = vpack.c.b16 %v2000, %v1996
    %v2049 = vpack.c.b16 %v2005, %v2001
    %v2050 = vpack.c.b16 %v2006, %v2002
    %v2051 = vpack.c.b16 %v2007, %v2003
    %v2052 = vpack.c.b16 %v2008, %v2004
    %v2053 = vpack.c.b16 %v2013, %v2009
    %v2054 = vpack.c.b16 %v2014, %v2010
    %v2055 = vpack.c.b16 %v2015, %v2011
    %v2056 = vpack.c.b16 %v2016, %v2012
    %v2057 = vpack.c.b16 %v2021, %v2017
    %v2058 = vpack.c.b16 %v2022, %v2018
    %v2059 = vpack.c.b16 %v2023, %v2019
    %v2060 = vpack.c.b16 %v2024, %v2020
    %v2061 = vpack.c.b16 %v2029, %v2025
    %v2062 = vpack.c.b16 %v2030, %v2026
    %v2063 = vpack.c.b16 %v2031, %v2027
    %v2064 = vpack.c.b16 %v2032, %v2028
    %2097 = vmatpush.bf16.msra.mxu0 %v2061
    %2098 = vmatpush.bf16.msra.mxu0 %v2057
    %2099 = vmatpush.bf16.msra.mxu0 %v2053
    %2100 = vmatpush.bf16.msra.mxu0 %v2049
    %2101 = vmatpush.bf16.msra.mxu0 %v2045
    %2102 = vmatpush.bf16.msra.mxu0 %v2041
    %2103 = vmatpush.bf16.msra.mxu0 %v2037
    %2104 = vmatpush.bf16.msra.mxu0 %v2033
    %2105 = vmatmul.bf16.gmra.mxu0 %v1921
    %v2106 = vpop.f32.mrf.mxu0
    %v2107 = vadd.f32 %v1881, %v2106
    %v2108 = vpop.f32.mrf.mxu0
    %v2109 = vadd.f32 %v1881, %v2108
    %2110 = vmatmul.bf16.gmra.mxu0 %v1922
    %v2111 = vpop.f32.mrf.mxu0
    %v2112 = vadd.f32 %v1881, %v2111
    %v2113 = vpop.f32.mrf.mxu0
    %v2114 = vadd.f32 %v1881, %v2113
    %2115 = vmatmul.bf16.gmra.mxu0 %v1923
    %v2116 = vpop.f32.mrf.mxu0
    %v2117 = vadd.f32 %v1881, %v2116
    %v2118 = vpop.f32.mrf.mxu0
    %v2119 = vadd.f32 %v1881, %v2118
    %2120 = vmatmul.bf16.gmra.mxu0 %v1924
    %v2121 = vpop.f32.mrf.mxu0
    %v2122 = vadd.f32 %v1881, %v2121
    %v2123 = vpop.f32.mrf.mxu0
    %v2124 = vadd.f32 %v1881, %v2123
    %2125 = vmatmul.bf16.gmra.mxu0 %v1925
    %v2126 = vpop.f32.mrf.mxu0
    %v2127 = vadd.f32 %v1881, %v2126
    %v2128 = vpop.f32.mrf.mxu0
    %v2129 = vadd.f32 %v1881, %v2128
    %2130 = vmatmul.bf16.gmra.mxu0 %v1926
    %v2131 = vpop.f32.mrf.mxu0
    %v2132 = vadd.f32 %v1881, %v2131
    %v2133 = vpop.f32.mrf.mxu0
    %v2134 = vadd.f32 %v1881, %v2133
    %2135 = vmatmul.bf16.gmra.mxu0 %v1927
    %v2136 = vpop.f32.mrf.mxu0
    %v2137 = vadd.f32 %v1881, %v2136
    %v2138 = vpop.f32.mrf.mxu0
    %v2139 = vadd.f32 %v1881, %v2138
    %2140 = vmatmul.bf16.gmra.mxu0 %v1928
    %v2141 = vpop.f32.mrf.mxu0
    %v2142 = vadd.f32 %v1881, %v2141
    %v2143 = vpop.f32.mrf.mxu0
    %v2144 = vadd.f32 %v1881, %v2143
    %2145 = vdwg.mxu0
    %2146 = vmatpush.bf16.msra.mxu0 %v2062
    %2147 = vmatpush.bf16.msra.mxu0 %v2058
    %2148 = vmatpush.bf16.msra.mxu0 %v2054
    %2149 = vmatpush.bf16.msra.mxu0 %v2050
    %2150 = vmatpush.bf16.msra.mxu0 %v2046
    %2151 = vmatpush.bf16.msra.mxu0 %v2042
    %2152 = vmatpush.bf16.msra.mxu0 %v2038
    %2153 = vmatpush.bf16.msra.mxu0 %v2034
    %2154 = vmatmul.bf16.gmra.mxu0 %v1921
    %v2155 = vpop.f32.mrf.mxu0
    %v2156 = vadd.f32 %v1882, %v2155
    %v2157 = vpop.f32.mrf.mxu0
    %v2158 = vadd.f32 %v1882, %v2157
    %2159 = vmatmul.bf16.gmra.mxu0 %v1922
    %v2160 = vpop.f32.mrf.mxu0
    %v2161 = vadd.f32 %v1882, %v2160
    %v2162 = vpop.f32.mrf.mxu0
    %v2163 = vadd.f32 %v1882, %v2162
    %2164 = vmatmul.bf16.gmra.mxu0 %v1923
    %v2165 = vpop.f32.mrf.mxu0
    %v2166 = vadd.f32 %v1882, %v2165
    %v2167 = vpop.f32.mrf.mxu0
    %v2168 = vadd.f32 %v1882, %v2167
    %2169 = vmatmul.bf16.gmra.mxu0 %v1924
    %v2170 = vpop.f32.mrf.mxu0
    %v2171 = vadd.f32 %v1882, %v2170
    %v2172 = vpop.f32.mrf.mxu0
    %v2173 = vadd.f32 %v1882, %v2172
    %2174 = vmatmul.bf16.gmra.mxu0 %v1925
    %v2175 = vpop.f32.mrf.mxu0
    %v2176 = vadd.f32 %v1882, %v2175
    %v2177 = vpop.f32.mrf.mxu0
    %v2178 = vadd.f32 %v1882, %v2177
    %2179 = vmatmul.bf16.gmra.mxu0 %v1926
    %v2180 = vpop.f32.mrf.mxu0
    %v2181 = vadd.f32 %v1882, %v2180
    %v2182 = vpop.f32.mrf.mxu0
    %v2183 = vadd.f32 %v1882, %v2182
    %2184 = vmatmul.bf16.gmra.mxu0 %v1927
    %v2185 = vpop.f32.mrf.mxu0
    %v2186 = vadd.f32 %v1882, %v2185
    %v2187 = vpop.f32.mrf.mxu0
    %v2188 = vadd.f32 %v1882, %v2187
    %2189 = vmatmul.bf16.gmra.mxu0 %v1928
    %v2190 = vpop.f32.mrf.mxu0
    %v2191 = vadd.f32 %v1882, %v2190
    %v2192 = vpop.f32.mrf.mxu0
    %v2193 = vadd.f32 %v1882, %v2192
    %2194 = vdwg.mxu0
    %2195 = vmatpush.bf16.msra.mxu0 %v2063
    %2196 = vmatpush.bf16.msra.mxu0 %v2059
    %2197 = vmatpush.bf16.msra.mxu0 %v2055
    %2198 = vmatpush.bf16.msra.mxu0 %v2051
    %2199 = vmatpush.bf16.msra.mxu0 %v2047
    %2200 = vmatpush.bf16.msra.mxu0 %v2043
    %2201 = vmatpush.bf16.msra.mxu0 %v2039
    %2202 = vmatpush.bf16.msra.mxu0 %v2035
    %2203 = vmatmul.bf16.gmra.mxu0 %v1921
    %v2204 = vpop.f32.mrf.mxu0
    %v2205 = vadd.f32 %v1883, %v2204
    %v2206 = vpop.f32.mrf.mxu0
    %v2207 = vadd.f32 %v1883, %v2206
    %2208 = vmatmul.bf16.gmra.mxu0 %v1922
    %v2209 = vpop.f32.mrf.mxu0
    %v2210 = vadd.f32 %v1883, %v2209
    %v2211 = vpop.f32.mrf.mxu0
    %v2212 = vadd.f32 %v1883, %v2211
    %2213 = vmatmul.bf16.gmra.mxu0 %v1923
    %v2214 = vpop.f32.mrf.mxu0
    %v2215 = vadd.f32 %v1883, %v2214
    %v2216 = vpop.f32.mrf.mxu0
    %v2217 = vadd.f32 %v1883, %v2216
    %2218 = vmatmul.bf16.gmra.mxu0 %v1924
    %v2219 = vpop.f32.mrf.mxu0
    %v2220 = vadd.f32 %v1883, %v2219
    %v2221 = vpop.f32.mrf.mxu0
    %v2222 = vadd.f32 %v1883, %v2221
    %2223 = vmatmul.bf16.gmra.mxu0 %v1925
    %v2224 = vpop.f32.mrf.mxu0
    %v2225 = vadd.f32 %v1883, %v2224
    %v2226 = vpop.f32.mrf.mxu0
    %v2227 = vadd.f32 %v1883, %v2226
    %2228 = vmatmul.bf16.gmra.mxu0 %v1926
    %v2229 = vpop.f32.mrf.mxu0
    %v2230 = vadd.f32 %v1883, %v2229
    %v2231 = vpop.f32.mrf.mxu0
    %v2232 = vadd.f32 %v1883, %v2231
    %2233 = vmatmul.bf16.gmra.mxu0 %v1927
    %v2234 = vpop.f32.mrf.mxu0
    %v2235 = vadd.f32 %v1883, %v2234
    %v2236 = vpop.f32.mrf.mxu0
    %v2237 = vadd.f32 %v1883, %v2236
    %2238 = vmatmul.bf16.gmra.mxu0 %v1928
    %v2239 = vpop.f32.mrf.mxu0
    %v2240 = vadd.f32 %v1883, %v2239
    %v2241 = vpop.f32.mrf.mxu0
    %v2242 = vadd.f32 %v1883, %v2241
    %2243 = vdwg.mxu0
    %2244 = vmatpush.bf16.msra.mxu0 %v2064
    %2245 = vmatpush.bf16.msra.mxu0 %v2060
    %2246 = vmatpush.bf16.msra.mxu0 %v2056
    %2247 = vmatpush.bf16.msra.mxu0 %v2052
    %2248 = vmatpush.bf16.msra.mxu0 %v2048
    %2249 = vmatpush.bf16.msra.mxu0 %v2044
    %2250 = vmatpush.bf16.msra.mxu0 %v2040
    %2251 = vmatpush.bf16.msra.mxu0 %v2036
    %2252 = vmatmul.bf16.gmra.mxu0 %v1921
    %v2253 = vpop.f32.mrf.mxu0
    %v2254 = vadd.f32 %v1884, %v2253
    %v2255 = vpop.f32.mrf.mxu0
    %v2256 = vadd.f32 %v1884, %v2255
    %2257 = vmatmul.bf16.gmra.mxu0 %v1922
    %v2258 = vpop.f32.mrf.mxu0
    %v2259 = vadd.f32 %v1884, %v2258
    %v2260 = vpop.f32.mrf.mxu0
    %v2261 = vadd.f32 %v1884, %v2260
    %2262 = vmatmul.bf16.gmra.mxu0 %v1923
    %v2263 = vpop.f32.mrf.mxu0
    %v2264 = vadd.f32 %v1884, %v2263
    %v2265 = vpop.f32.mrf.mxu0
    %v2266 = vadd.f32 %v1884, %v2265
    %2267 = vmatmul.bf16.gmra.mxu0 %v1924
    %v2268 = vpop.f32.mrf.mxu0
    %v2269 = vadd.f32 %v1884, %v2268
    %v2270 = vpop.f32.mrf.mxu0
    %v2271 = vadd.f32 %v1884, %v2270
    %2272 = vmatmul.bf16.gmra.mxu0 %v1925
    %v2273 = vpop.f32.mrf.mxu0
    %v2274 = vadd.f32 %v1884, %v2273
    %v2275 = vpop.f32.mrf.mxu0
    %v2276 = vadd.f32 %v1884, %v2275
    %2277 = vmatmul.bf16.gmra.mxu0 %v1926
    %v2278 = vpop.f32.mrf.mxu0
    %v2279 = vadd.f32 %v1884, %v2278
    %v2280 = vpop.f32.mrf.mxu0
    %v2281 = vadd.f32 %v1884, %v2280
    %2282 = vmatmul.bf16.gmra.mxu0 %v1927
    %v2283 = vpop.f32.mrf.mxu0
    %v2284 = vadd.f32 %v1884, %v2283
    %v2285 = vpop.f32.mrf.mxu0
    %v2286 = vadd.f32 %v1884, %v2285
    %2287 = vmatmul.bf16.gmra.mxu0 %v1928
    %v2288 = vpop.f32.mrf.mxu0
    %v2289 = vadd.f32 %v1884, %v2288
    %v2290 = vpop.f32.mrf.mxu0
    %v2291 = vadd.f32 %v1884, %v2290
    %2292 = vdwg.mxu0
    %2293 = vst [vmem:[#allocation5] sm:$0xff] %v2107
    %2294 = vst [vmem:[#allocation5 + $0x8] sm:$0xff] %v2156
    %2295 = vst [vmem:[#allocation5 + $0x10] sm:$0xff] %v2205
    %2296 = vst [vmem:[#allocation5 + $0x18] sm:$0xff] %v2254
    %2297 = vst [vmem:[#allocation5 + $0x20] sm:$0xff] %v2109
    %2298 = vst [vmem:[#allocation5 + $0x28] sm:$0xff] %v2158
    %2299 = vst [vmem:[#allocation5 + $0x30] sm:$0xff] %v2207
    %2300 = vst [vmem:[#allocation5 + $0x38] sm:$0xff] %v2256
    %2301 = vst [vmem:[#allocation5 + $0x40] sm:$0xff] %v2112
    %2302 = vst [vmem:[#allocation5 + $0x48] sm:$0xff] %v2161
    %2303 = vst [vmem:[#allocation5 + $0x50] sm:$0xff] %v2210
    %2304 = vst [vmem:[#allocation5 + $0x58] sm:$0xff] %v2259
    %2305 = vst [vmem:[#allocation5 + $0x60] sm:$0xff] %v2114
    %2306 = vst [vmem:[#allocation5 + $0x68] sm:$0xff] %v2163
    %2307 = vst [vmem:[#allocation5 + $0x70] sm:$0xff] %v2212
    %2308 = vst [vmem:[#allocation5 + $0x78] sm:$0xff] %v2261
    %2309 = vst [vmem:[#allocation5 + $0x80] sm:$0xff] %v2117
    %2310 = vst [vmem:[#allocation5 + $0x88] sm:$0xff] %v2166
    %2311 = vst [vmem:[#allocation5 + $0x90] sm:$0xff] %v2215
    %2312 = vst [vmem:[#allocation5 + $0x98] sm:$0xff] %v2264
    %2313 = vst [vmem:[#allocation5 + $0xa0] sm:$0xff] %v2119
    %2314 = vst [vmem:[#allocation5 + $0xa8] sm:$0xff] %v2168
    %2315 = vst [vmem:[#allocation5 + $0xb0] sm:$0xff] %v2217
    %2316 = vst [vmem:[#allocation5 + $0xb8] sm:$0xff] %v2266
    %2317 = vst [vmem:[#allocation5 + $0xc0] sm:$0xff] %v2122
    %2318 = vst [vmem:[#allocation5 + $0xc8] sm:$0xff] %v2171
    %2319 = vst [vmem:[#allocation5 + $0xd0] sm:$0xff] %v2220
    %2320 = vst [vmem:[#allocation5 + $0xd8] sm:$0xff] %v2269
    %2321 = vst [vmem:[#allocation5 + $0xe0] sm:$0xff] %v2124
    %2322 = vst [vmem:[#allocation5 + $0xe8] sm:$0xff] %v2173
    %2323 = vst [vmem:[#allocation5 + $0xf0] sm:$0xff] %v2222
    %2324 = vst [vmem:[#allocation5 + $0xf8] sm:$0xff] %v2271
    %2325 = vst [vmem:[#allocation5 + $0x100] sm:$0xff] %v2127
    %2326 = vst [vmem:[#allocation5 + $0x108] sm:$0xff] %v2176
    %2327 = vst [vmem:[#allocation5 + $0x110] sm:$0xff] %v2225
    %2328 = vst [vmem:[#allocation5 + $0x118] sm:$0xff] %v2274
    %2329 = vst [vmem:[#allocation5 + $0x120] sm:$0xff] %v2129
    %2330 = vst [vmem:[#allocation5 + $0x128] sm:$0xff] %v2178
    %2331 = vst [vmem:[#allocation5 + $0x130] sm:$0xff] %v2227
    %2332 = vst [vmem:[#allocation5 + $0x138] sm:$0xff] %v2276
    %2333 = vst [vmem:[#allocation5 + $0x140] sm:$0xff] %v2132
    %2334 = vst [vmem:[#allocation5 + $0x148] sm:$0xff] %v2181
    %2335 = vst [vmem:[#allocation5 + $0x150] sm:$0xff] %v2230
    %2336 = vst [vmem:[#allocation5 + $0x158] sm:$0xff] %v2279
    %2337 = vst [vmem:[#allocation5 + $0x160] sm:$0xff] %v2134
    %2338 = vst [vmem:[#allocation5 + $0x168] sm:$0xff] %v2183
    %2339 = vst [vmem:[#allocation5 + $0x170] sm:$0xff] %v2232
    %2340 = vst [vmem:[#allocation5 + $0x178] sm:$0xff] %v2281
    %2341 = vst [vmem:[#allocation5 + $0x180] sm:$0xff] %v2137
    %2342 = vst [vmem:[#allocation5 + $0x188] sm:$0xff] %v2186
    %2343 = vst [vmem:[#allocation5 + $0x190] sm:$0xff] %v2235
    %2344 = vst [vmem:[#allocation5 + $0x198] sm:$0xff] %v2284
    %2345 = vst [vmem:[#allocation5 + $0x1a0] sm:$0xff] %v2139
    %2346 = vst [vmem:[#allocation5 + $0x1a8] sm:$0xff] %v2188
    %2347 = vst [vmem:[#allocation5 + $0x1b0] sm:$0xff] %v2237
    %2348 = vst [vmem:[#allocation5 + $0x1b8] sm:$0xff] %v2286
    %2349 = vst [vmem:[#allocation5 + $0x1c0] sm:$0xff] %v2142
    %2350 = vst [vmem:[#allocation5 + $0x1c8] sm:$0xff] %v2191
    %2351 = vst [vmem:[#allocation5 + $0x1d0] sm:$0xff] %v2240
    %2352 = vst [vmem:[#allocation5 + $0x1d8] sm:$0xff] %v2289
    %2353 = vst [vmem:[#allocation5 + $0x1e0] sm:$0xff] %v2144
    %2354 = vst [vmem:[#allocation5 + $0x1e8] sm:$0xff] %v2193
    %2355 = vst [vmem:[#allocation5 + $0x1f0] sm:$0xff] %v2242
    %2356 = vst [vmem:[#allocation5 + $0x1f8] sm:$0xff] %v2291
    %v2357 = vld [vmem:[#allocation14] sm:$0xff]
    %v2358 = vld [vmem:[#allocation14 + $0x8] sm:$0xff]
    %v2359 = vld [vmem:[#allocation14 + $0x10] sm:$0xff]
    %v2360 = vld [vmem:[#allocation14 + $0x18] sm:$0xff]
    %v2361 = vld [vmem:[#allocation14 + $0x20] sm:$0xff]
    %v2362 = vld [vmem:[#allocation14 + $0x28] sm:$0xff]
    %v2363 = vld [vmem:[#allocation14 + $0x30] sm:$0xff]
    %v2364 = vld [vmem:[#allocation14 + $0x38] sm:$0xff]
    %v2365 = vld [vmem:[#allocation14 + $0x40] sm:$0xff]
    %v2366 = vld [vmem:[#allocation14 + $0x48] sm:$0xff]
    %v2367 = vld [vmem:[#allocation14 + $0x50] sm:$0xff]
    %v2368 = vld [vmem:[#allocation14 + $0x58] sm:$0xff]
    %v2369 = vld [vmem:[#allocation14 + $0x60] sm:$0xff]
    %v2370 = vld [vmem:[#allocation14 + $0x68] sm:$0xff]
    %v2371 = vld [vmem:[#allocation14 + $0x70] sm:$0xff]
    %v2372 = vld [vmem:[#allocation14 + $0x78] sm:$0xff]
    %v2373 = vld [vmem:[#allocation14 + $0x80] sm:$0xff]
    %v2374 = vld [vmem:[#allocation14 + $0x88] sm:$0xff]
    %v2375 = vld [vmem:[#allocation14 + $0x90] sm:$0xff]
    %v2376 = vld [vmem:[#allocation14 + $0x98] sm:$0xff]
    %v2377 = vld [vmem:[#allocation14 + $0xa0] sm:$0xff]
    %v2378 = vld [vmem:[#allocation14 + $0xa8] sm:$0xff]
    %v2379 = vld [vmem:[#allocation14 + $0xb0] sm:$0xff]
    %v2380 = vld [vmem:[#allocation14 + $0xb8] sm:$0xff]
    %v2381 = vld [vmem:[#allocation14 + $0xc0] sm:$0xff]
    %v2382 = vld [vmem:[#allocation14 + $0xc8] sm:$0xff]
    %v2383 = vld [vmem:[#allocation14 + $0xd0] sm:$0xff]
    %v2384 = vld [vmem:[#allocation14 + $0xd8] sm:$0xff]
    %v2385 = vld [vmem:[#allocation14 + $0xe0] sm:$0xff]
    %v2386 = vld [vmem:[#allocation14 + $0xe8] sm:$0xff]
    %v2387 = vld [vmem:[#allocation14 + $0xf0] sm:$0xff]
    %v2388 = vld [vmem:[#allocation14 + $0xf8] sm:$0xff]
    %s2389 = scalar_lea.vmem [#allocation2], 16
    %v2390 = vld [vmem:[%s2389] sm:$0xff]
    %v2391 = vld [vmem:[%s2389 + $0x8] sm:$0xff]
    %s2392 = scalar_lea.vmem [#allocation3], 16
    %v2393 = vld [vmem:[%s2392] sm:$0xff]
    %v2394 = vld [vmem:[%s2392 + $0x8] sm:$0xff]
    %v2395 = vld [vmem:[#allocation5] sm:$0xff]
    %v2396 = vld [vmem:[#allocation5 + $0x8] sm:$0xff]
    %v2397 = vld [vmem:[#allocation5 + $0x10] sm:$0xff]
    %v2398 = vld [vmem:[#allocation5 + $0x18] sm:$0xff]
    %v2399 = vld [vmem:[#allocation5 + $0x20] sm:$0xff]
    %v2400 = vld [vmem:[#allocation5 + $0x28] sm:$0xff]
    %v2401 = vld [vmem:[#allocation5 + $0x30] sm:$0xff]
    %v2402 = vld [vmem:[#allocation5 + $0x38] sm:$0xff]
    %v2403 = vpack.c.bf16 %v2391, %v2390
    %v2436 = vunpack.c.l.b16 %v2357
    %v2437 = vunpack.c.h.b16 %v2357
    %v2438 = vunpack.c.l.b16 %v2358
    %v2439 = vunpack.c.h.b16 %v2358
    %v2440 = vunpack.c.l.b16 %v2359
    %v2441 = vunpack.c.h.b16 %v2359
    %v2442 = vunpack.c.l.b16 %v2360
    %v2443 = vunpack.c.h.b16 %v2360
    %v2444 = vunpack.c.l.b16 %v2361
    %v2445 = vunpack.c.h.b16 %v2361
    %v2446 = vunpack.c.l.b16 %v2362
    %v2447 = vunpack.c.h.b16 %v2362
    %v2448 = vunpack.c.l.b16 %v2363
    %v2449 = vunpack.c.h.b16 %v2363
    %v2450 = vunpack.c.l.b16 %v2364
    %v2451 = vunpack.c.h.b16 %v2364
    %v2452 = vunpack.c.l.b16 %v2365
    %v2453 = vunpack.c.h.b16 %v2365
    %v2454 = vunpack.c.l.b16 %v2366
    %v2455 = vunpack.c.h.b16 %v2366
    %v2456 = vunpack.c.l.b16 %v2367
    %v2457 = vunpack.c.h.b16 %v2367
    %v2458 = vunpack.c.l.b16 %v2368
    %v2459 = vunpack.c.h.b16 %v2368
    %v2460 = vunpack.c.l.b16 %v2369
    %v2461 = vunpack.c.h.b16 %v2369
    %v2462 = vunpack.c.l.b16 %v2370
    %v2463 = vunpack.c.h.b16 %v2370
    %v2464 = vunpack.c.l.b16 %v2371
    %v2465 = vunpack.c.h.b16 %v2371
    %v2466 = vunpack.c.l.b16 %v2372
    %v2467 = vunpack.c.h.b16 %v2372
    %v2468 = vunpack.c.l.b16 %v2373
    %v2469 = vunpack.c.h.b16 %v2373
    %v2470 = vunpack.c.l.b16 %v2374
    %v2471 = vunpack.c.h.b16 %v2374
    %v2472 = vunpack.c.l.b16 %v2375
    %v2473 = vunpack.c.h.b16 %v2375
    %v2474 = vunpack.c.l.b16 %v2376
    %v2475 = vunpack.c.h.b16 %v2376
    %v2476 = vunpack.c.l.b16 %v2377
    %v2477 = vunpack.c.h.b16 %v2377
    %v2478 = vunpack.c.l.b16 %v2378
    %v2479 = vunpack.c.h.b16 %v2378
    %v2480 = vunpack.c.l.b16 %v2379
    %v2481 = vunpack.c.h.b16 %v2379
    %v2482 = vunpack.c.l.b16 %v2380
    %v2483 = vunpack.c.h.b16 %v2380
    %v2484 = vunpack.c.l.b16 %v2381
    %v2485 = vunpack.c.h.b16 %v2381
    %v2486 = vunpack.c.l.b16 %v2382
    %v2487 = vunpack.c.h.b16 %v2382
    %v2488 = vunpack.c.l.b16 %v2383
    %v2489 = vunpack.c.h.b16 %v2383
    %v2490 = vunpack.c.l.b16 %v2384
    %v2491 = vunpack.c.h.b16 %v2384
    %v2492 = vunpack.c.l.b16 %v2385
    %v2493 = vunpack.c.h.b16 %v2385
    %v2494 = vunpack.c.l.b16 %v2386
    %v2495 = vunpack.c.h.b16 %v2386
    %v2496 = vunpack.c.l.b16 %v2387
    %v2497 = vunpack.c.h.b16 %v2387
    %v2498 = vunpack.c.l.b16 %v2388
    %v2499 = vunpack.c.h.b16 %v2388
    %v2500 = vpack.c.b16 %v2440, %v2436
    %v2501 = vpack.c.b16 %v2441, %v2437
    %v2502 = vpack.c.b16 %v2442, %v2438
    %v2503 = vpack.c.b16 %v2443, %v2439
    %v2504 = vpack.c.b16 %v2448, %v2444
    %v2505 = vpack.c.b16 %v2449, %v2445
    %v2506 = vpack.c.b16 %v2450, %v2446
    %v2507 = vpack.c.b16 %v2451, %v2447
    %v2508 = vpack.c.b16 %v2456, %v2452
    %v2509 = vpack.c.b16 %v2457, %v2453
    %v2510 = vpack.c.b16 %v2458, %v2454
    %v2511 = vpack.c.b16 %v2459, %v2455
    %v2512 = vpack.c.b16 %v2464, %v2460
    %v2513 = vpack.c.b16 %v2465, %v2461
    %v2514 = vpack.c.b16 %v2466, %v2462
    %v2515 = vpack.c.b16 %v2467, %v2463
    %v2516 = vpack.c.b16 %v2472, %v2468
    %v2517 = vpack.c.b16 %v2473, %v2469
    %v2518 = vpack.c.b16 %v2474, %v2470
    %v2519 = vpack.c.b16 %v2475, %v2471
    %v2520 = vpack.c.b16 %v2480, %v2476
    %v2521 = vpack.c.b16 %v2481, %v2477
    %v2522 = vpack.c.b16 %v2482, %v2478
    %v2523 = vpack.c.b16 %v2483, %v2479
    %v2524 = vpack.c.b16 %v2488, %v2484
    %v2525 = vpack.c.b16 %v2489, %v2485
    %v2526 = vpack.c.b16 %v2490, %v2486
    %v2527 = vpack.c.b16 %v2491, %v2487
    %v2528 = vpack.c.b16 %v2496, %v2492
    %v2529 = vpack.c.b16 %v2497, %v2493
    %v2530 = vpack.c.b16 %v2498, %v2494
    %v2531 = vpack.c.b16 %v2499, %v2495
    %2564 = vmatpush.bf16.msra.mxu0 %v2528
    %2565 = vmatpush.bf16.msra.mxu0 %v2524
    %2566 = vmatpush.bf16.msra.mxu0 %v2520
    %2567 = vmatpush.bf16.msra.mxu0 %v2516
    %2568 = vmatpush.bf16.msra.mxu0 %v2512
    %2569 = vmatpush.bf16.msra.mxu0 %v2508
    %2570 = vmatpush.bf16.msra.mxu0 %v2504
    %2571 = vmatpush.bf16.msra.mxu0 %v2500
    %2572 = vmatmul.bf16.gmra.mxu0 %v2403
    %v2573 = vpop.f32.mrf.mxu0
    %v2574 = vadd.f32 0.0, %v2573
    %v2575 = vpop.f32.mrf.mxu0
    %v2576 = vadd.f32 0.0, %v2575
    %2577 = vdwg.mxu0
    %2578 = vmatpush.bf16.msra.mxu0 %v2529
    %2579 = vmatpush.bf16.msra.mxu0 %v2525
    %2580 = vmatpush.bf16.msra.mxu0 %v2521
    %2581 = vmatpush.bf16.msra.mxu0 %v2517
    %2582 = vmatpush.bf16.msra.mxu0 %v2513
    %2583 = vmatpush.bf16.msra.mxu0 %v2509
    %2584 = vmatpush.bf16.msra.mxu0 %v2505
    %2585 = vmatpush.bf16.msra.mxu0 %v2501
    %2586 = vmatmul.bf16.gmra.mxu0 %v2403
    %v2587 = vpop.f32.mrf.mxu0
    %v2588 = vadd.f32 0.0, %v2587
    %v2589 = vpop.f32.mrf.mxu0
    %v2590 = vadd.f32 0.0, %v2589
    %2591 = vdwg.mxu0
    %2592 = vmatpush.bf16.msra.mxu0 %v2530
    %2593 = vmatpush.bf16.msra.mxu0 %v2526
    %2594 = vmatpush.bf16.msra.mxu0 %v2522
    %2595 = vmatpush.bf16.msra.mxu0 %v2518
    %2596 = vmatpush.bf16.msra.mxu0 %v2514
    %2597 = vmatpush.bf16.msra.mxu0 %v2510
    %2598 = vmatpush.bf16.msra.mxu0 %v2506
    %2599 = vmatpush.bf16.msra.mxu0 %v2502
    %2600 = vmatmul.bf16.gmra.mxu0 %v2403
    %v2601 = vpop.f32.mrf.mxu0
    %v2602 = vadd.f32 0.0, %v2601
    %v2603 = vpop.f32.mrf.mxu0
    %v2604 = vadd.f32 0.0, %v2603
    %2605 = vdwg.mxu0
    %2606 = vmatpush.bf16.msra.mxu0 %v2531
    %2607 = vmatpush.bf16.msra.mxu0 %v2527
    %2608 = vmatpush.bf16.msra.mxu0 %v2523
    %2609 = vmatpush.bf16.msra.mxu0 %v2519
    %2610 = vmatpush.bf16.msra.mxu0 %v2515
    %2611 = vmatpush.bf16.msra.mxu0 %v2511
    %2612 = vmatpush.bf16.msra.mxu0 %v2507
    %2613 = vmatpush.bf16.msra.mxu0 %v2503
    %2614 = vmatmul.bf16.gmra.mxu0 %v2403
    %v2615 = vpop.f32.mrf.mxu0
    %v2616 = vadd.f32 0.0, %v2615
    %v2617 = vpop.f32.mrf.mxu0
    %v2618 = vadd.f32 0.0, %v2617
    %2619 = vdwg.mxu0
    %v2620 = vadd.f32 %v2395, %v2574
    %v2621 = vadd.f32 %v2396, %v2588
    %v2622 = vadd.f32 %v2397, %v2602
    %v2623 = vadd.f32 %v2398, %v2616
    %v2624 = vadd.f32 %v2399, %v2576
    %v2625 = vadd.f32 %v2400, %v2590
    %v2626 = vadd.f32 %v2401, %v2604
    %v2627 = vadd.f32 %v2402, %v2618
    %v2628 = vmul.f32 %v2620, 0.5
    %v2629 = vmul.f32 %v2624, 0.5
    %v2630 = vtanh.pop %v2628
    %v2631 = vtanh.pop %v2629
    %v2632 = vmul.f32 %v2630, 0.5
    %v2633 = vmul.f32 %v2631, 0.5
    %v2634 = vadd.f32 %v2632, 0.5
    %v2635 = vadd.f32 %v2633, 0.5
    %v2636 = vmul.f32 %v2621, 0.5
    %v2637 = vmul.f32 %v2625, 0.5
    %v2638 = vtanh.pop %v2636
    %v2639 = vtanh.pop %v2637
    %v2640 = vmul.f32 %v2638, 0.5
    %v2641 = vmul.f32 %v2639, 0.5
    %v2642 = vadd.f32 %v2640, 0.5
    %v2643 = vadd.f32 %v2641, 0.5
    %v2644 = vtanh.pop %v2622
    %v2645 = vtanh.pop %v2626
    %v2646 = vmul.f32 %v2623, 0.5
    %v2647 = vmul.f32 %v2627, 0.5
    %v2648 = vtanh.pop %v2646
    %v2649 = vtanh.pop %v2647
    %v2650 = vmul.f32 %v2648, 0.5
    %v2651 = vmul.f32 %v2649, 0.5
    %v2652 = vadd.f32 %v2650, 0.5
    %v2653 = vadd.f32 %v2651, 0.5
    %v2654 = vmul.f32 %v2642, %v2393
    %v2655 = vmul.f32 %v2643, %v2394
    %v2656 = vmul.f32 %v2634, %v2644
    %v2657 = vmul.f32 %v2635, %v2645
    %v2658 = vadd.f32 %v2654, %v2656
    %v2659 = vadd.f32 %v2655, %v2657
    %v2660 = vtanh.pop %v2658
    %v2661 = vtanh.pop %v2659
    %v2662 = vmul.f32 %v2652, %v2660
    %v2663 = vmul.f32 %v2653, %v2661
    %v2664 = vld [vmem:[%s986] sm:$0xff]
    %v2665 = vld [vmem:[%s986 + $0x8] sm:$0xff]
    %v2666 = vld [vmem:[%s986 + $0x10] sm:$0xff]
    %v2667 = vld [vmem:[%s986 + $0x18] sm:$0xff]
    %v2668 = vld [vmem:[%s986 + $0x20] sm:$0xff]
    %v2669 = vld [vmem:[%s986 + $0x28] sm:$0xff]
    %v2670 = vld [vmem:[%s986 + $0x30] sm:$0xff]
    %v2671 = vld [vmem:[%s986 + $0x38] sm:$0xff]
    %v2672 = vpack.c.bf16 %v2663, %v2662
    %2673 = vmatpush.bf16.msra.mxu0 %v2528
    %2674 = vmatpush.bf16.msra.mxu0 %v2524
    %2675 = vmatpush.bf16.msra.mxu0 %v2520
    %2676 = vmatpush.bf16.msra.mxu0 %v2516
    %2677 = vmatpush.bf16.msra.mxu0 %v2512
    %2678 = vmatpush.bf16.msra.mxu0 %v2508
    %2679 = vmatpush.bf16.msra.mxu0 %v2504
    %2680 = vmatpush.bf16.msra.mxu0 %v2500
    %2681 = vmatmul.bf16.gmra.mxu0 %v2672
    %v2682 = vpop.f32.mrf.mxu0
    %v2683 = vadd.f32 0.0, %v2682
    %v2684 = vpop.f32.mrf.mxu0
    %v2685 = vadd.f32 0.0, %v2684
    %2686 = vdwg.mxu0
    %2687 = vmatpush.bf16.msra.mxu0 %v2529
    %2688 = vmatpush.bf16.msra.mxu0 %v2525
    %2689 = vmatpush.bf16.msra.mxu0 %v2521
    %2690 = vmatpush.bf16.msra.mxu0 %v2517
    %2691 = vmatpush.bf16.msra.mxu0 %v2513
    %2692 = vmatpush.bf16.msra.mxu0 %v2509
    %2693 = vmatpush.bf16.msra.mxu0 %v2505
    %2694 = vmatpush.bf16.msra.mxu0 %v2501
    %2695 = vmatmul.bf16.gmra.mxu0 %v2672
    %v2696 = vpop.f32.mrf.mxu0
    %v2697 = vadd.f32 0.0, %v2696
    %v2698 = vpop.f32.mrf.mxu0
    %v2699 = vadd.f32 0.0, %v2698
    %2700 = vdwg.mxu0
    %2701 = vmatpush.bf16.msra.mxu0 %v2530
    %2702 = vmatpush.bf16.msra.mxu0 %v2526
    %2703 = vmatpush.bf16.msra.mxu0 %v2522
    %2704 = vmatpush.bf16.msra.mxu0 %v2518
    %2705 = vmatpush.bf16.msra.mxu0 %v2514
    %2706 = vmatpush.bf16.msra.mxu0 %v2510
    %2707 = vmatpush.bf16.msra.mxu0 %v2506
    %2708 = vmatpush.bf16.msra.mxu0 %v2502
    %2709 = vmatmul.bf16.gmra.mxu0 %v2672
    %v2710 = vpop.f32.mrf.mxu0
    %v2711 = vadd.f32 0.0, %v2710
    %v2712 = vpop.f32.mrf.mxu0
    %v2713 = vadd.f32 0.0, %v2712
    %2714 = vdwg.mxu0
    %2715 = vmatpush.bf16.msra.mxu0 %v2531
    %2716 = vmatpush.bf16.msra.mxu0 %v2527
    %2717 = vmatpush.bf16.msra.mxu0 %v2523
    %2718 = vmatpush.bf16.msra.mxu0 %v2519
    %2719 = vmatpush.bf16.msra.mxu0 %v2515
    %2720 = vmatpush.bf16.msra.mxu0 %v2511
    %2721 = vmatpush.bf16.msra.mxu0 %v2507
    %2722 = vmatpush.bf16.msra.mxu0 %v2503
    %2723 = vmatmul.bf16.gmra.mxu0 %v2672
    %v2724 = vpop.f32.mrf.mxu0
    %v2725 = vadd.f32 0.0, %v2724
    %v2726 = vpop.f32.mrf.mxu0
    %v2727 = vadd.f32 0.0, %v2726
    %2728 = vdwg.mxu0
    %v2729 = vadd.f32 %v2664, %v2683
    %v2730 = vadd.f32 %v2665, %v2697
    %v2731 = vadd.f32 %v2666, %v2711
    %v2732 = vadd.f32 %v2667, %v2725
    %v2733 = vadd.f32 %v2668, %v2685
    %v2734 = vadd.f32 %v2669, %v2699
    %v2735 = vadd.f32 %v2670, %v2713
    %v2736 = vadd.f32 %v2671, %v2727
    %v2737 = vmul.f32 %v2729, 0.5
    %v2738 = vmul.f32 %v2733, 0.5
    %v2739 = vtanh.pop %v2737
    %v2740 = vtanh.pop %v2738
    %v2741 = vmul.f32 %v2739, 0.5
    %v2742 = vmul.f32 %v2740, 0.5
    %v2743 = vadd.f32 %v2741, 0.5
    %v2744 = vadd.f32 %v2742, 0.5
    %v2745 = vmul.f32 %v2730, 0.5
    %v2746 = vmul.f32 %v2734, 0.5
    %v2747 = vtanh.pop %v2745
    %v2748 = vtanh.pop %v2746
    %v2749 = vmul.f32 %v2747, 0.5
    %v2750 = vmul.f32 %v2748, 0.5
    %v2751 = vadd.f32 %v2749, 0.5
    %v2752 = vadd.f32 %v2750, 0.5
    %v2753 = vtanh.pop %v2731
    %v2754 = vtanh.pop %v2735
    %v2755 = vmul.f32 %v2732, 0.5
    %v2756 = vmul.f32 %v2736, 0.5
    %v2757 = vtanh.pop %v2755
    %v2758 = vtanh.pop %v2756
    %v2759 = vmul.f32 %v2757, 0.5
    %v2760 = vmul.f32 %v2758, 0.5
    %v2761 = vadd.f32 %v2759, 0.5
    %v2762 = vadd.f32 %v2760, 0.5
    %v2763 = vmul.f32 %v2751, %v2658
    %v2764 = vmul.f32 %v2752, %v2659
    %v2765 = vmul.f32 %v2743, %v2753
    %v2766 = vmul.f32 %v2744, %v2754
    %v2767 = vadd.f32 %v2763, %v2765
    %v2768 = vadd.f32 %v2764, %v2766
    %v2769 = vtanh.pop %v2767
    %v2770 = vtanh.pop %v2768
    %v2771 = vmul.f32 %v2761, %v2769
    %v2772 = vmul.f32 %v2762, %v2770
    %v2773 = vld [vmem:[%s1106] sm:$0xff]
    %v2774 = vld [vmem:[%s1106 + $0x8] sm:$0xff]
    %v2775 = vld [vmem:[%s1106 + $0x10] sm:$0xff]
    %v2776 = vld [vmem:[%s1106 + $0x18] sm:$0xff]
    %v2777 = vld [vmem:[%s1106 + $0x20] sm:$0xff]
    %v2778 = vld [vmem:[%s1106 + $0x28] sm:$0xff]
    %v2779 = vld [vmem:[%s1106 + $0x30] sm:$0xff]
    %v2780 = vld [vmem:[%s1106 + $0x38] sm:$0xff]
    %v2781 = vpack.c.bf16 %v2772, %v2771
    %2782 = vmatpush.bf16.msra.mxu0 %v2528
    %2783 = vmatpush.bf16.msra.mxu0 %v2524
    %2784 = vmatpush.bf16.msra.mxu0 %v2520
    %2785 = vmatpush.bf16.msra.mxu0 %v2516
    %2786 = vmatpush.bf16.msra.mxu0 %v2512
    %2787 = vmatpush.bf16.msra.mxu0 %v2508
    %2788 = vmatpush.bf16.msra.mxu0 %v2504
    %2789 = vmatpush.bf16.msra.mxu0 %v2500
    %2790 = vmatmul.bf16.gmra.mxu0 %v2781
    %v2791 = vpop.f32.mrf.mxu0
    %v2792 = vadd.f32 0.0, %v2791
    %v2793 = vpop.f32.mrf.mxu0
    %v2794 = vadd.f32 0.0, %v2793
    %2795 = vdwg.mxu0
    %2796 = vmatpush.bf16.msra.mxu0 %v2529
    %2797 = vmatpush.bf16.msra.mxu0 %v2525
    %2798 = vmatpush.bf16.msra.mxu0 %v2521
    %2799 = vmatpush.bf16.msra.mxu0 %v2517
    %2800 = vmatpush.bf16.msra.mxu0 %v2513
    %2801 = vmatpush.bf16.msra.mxu0 %v2509
    %2802 = vmatpush.bf16.msra.mxu0 %v2505
    %2803 = vmatpush.bf16.msra.mxu0 %v2501
    %2804 = vmatmul.bf16.gmra.mxu0 %v2781
    %v2805 = vpop.f32.mrf.mxu0
    %v2806 = vadd.f32 0.0, %v2805
    %v2807 = vpop.f32.mrf.mxu0
    %v2808 = vadd.f32 0.0, %v2807
    %2809 = vdwg.mxu0
    %2810 = vmatpush.bf16.msra.mxu0 %v2530
    %2811 = vmatpush.bf16.msra.mxu0 %v2526
    %2812 = vmatpush.bf16.msra.mxu0 %v2522
    %2813 = vmatpush.bf16.msra.mxu0 %v2518
    %2814 = vmatpush.bf16.msra.mxu0 %v2514
    %2815 = vmatpush.bf16.msra.mxu0 %v2510
    %2816 = vmatpush.bf16.msra.mxu0 %v2506
    %2817 = vmatpush.bf16.msra.mxu0 %v2502
    %2818 = vmatmul.bf16.gmra.mxu0 %v2781
    %v2819 = vpop.f32.mrf.mxu0
    %v2820 = vadd.f32 0.0, %v2819
    %v2821 = vpop.f32.mrf.mxu0
    %v2822 = vadd.f32 0.0, %v2821
    %2823 = vdwg.mxu0
    %2824 = vmatpush.bf16.msra.mxu0 %v2531
    %2825 = vmatpush.bf16.msra.mxu0 %v2527
    %2826 = vmatpush.bf16.msra.mxu0 %v2523
    %2827 = vmatpush.bf16.msra.mxu0 %v2519
    %2828 = vmatpush.bf16.msra.mxu0 %v2515
    %2829 = vmatpush.bf16.msra.mxu0 %v2511
    %2830 = vmatpush.bf16.msra.mxu0 %v2507
    %2831 = vmatpush.bf16.msra.mxu0 %v2503
    %2832 = vmatmul.bf16.gmra.mxu0 %v2781
    %v2833 = vpop.f32.mrf.mxu0
    %v2834 = vadd.f32 0.0, %v2833
    %v2835 = vpop.f32.mrf.mxu0
    %v2836 = vadd.f32 0.0, %v2835
    %2837 = vdwg.mxu0
    %v2838 = vadd.f32 %v2773, %v2792
    %v2839 = vadd.f32 %v2774, %v2806
    %v2840 = vadd.f32 %v2775, %v2820
    %v2841 = vadd.f32 %v2776, %v2834
    %v2842 = vadd.f32 %v2777, %v2794
    %v2843 = vadd.f32 %v2778, %v2808
    %v2844 = vadd.f32 %v2779, %v2822
    %v2845 = vadd.f32 %v2780, %v2836
    %v2846 = vmul.f32 %v2838, 0.5
    %v2847 = vmul.f32 %v2842, 0.5
    %v2848 = vtanh.pop %v2846
    %v2849 = vtanh.pop %v2847
    %v2850 = vmul.f32 %v2848, 0.5
    %v2851 = vmul.f32 %v2849, 0.5
    %v2852 = vadd.f32 %v2850, 0.5
    %v2853 = vadd.f32 %v2851, 0.5
    %v2854 = vmul.f32 %v2839, 0.5
    %v2855 = vmul.f32 %v2843, 0.5
    %v2856 = vtanh.pop %v2854
    %v2857 = vtanh.pop %v2855
    %v2858 = vmul.f32 %v2856, 0.5
    %v2859 = vmul.f32 %v2857, 0.5
    %v2860 = vadd.f32 %v2858, 0.5
    %v2861 = vadd.f32 %v2859, 0.5
    %v2862 = vtanh.pop %v2840
    %v2863 = vtanh.pop %v2844
    %v2864 = vmul.f32 %v2841, 0.5
    %v2865 = vmul.f32 %v2845, 0.5
    %v2866 = vtanh.pop %v2864
    %v2867 = vtanh.pop %v2865
    %v2868 = vmul.f32 %v2866, 0.5
    %v2869 = vmul.f32 %v2867, 0.5
    %v2870 = vadd.f32 %v2868, 0.5
    %v2871 = vadd.f32 %v2869, 0.5
    %v2872 = vmul.f32 %v2860, %v2767
    %v2873 = vmul.f32 %v2861, %v2768
    %v2874 = vmul.f32 %v2852, %v2862
    %v2875 = vmul.f32 %v2853, %v2863
    %v2876 = vadd.f32 %v2872, %v2874
    %v2877 = vadd.f32 %v2873, %v2875
    %v2878 = vtanh.pop %v2876
    %v2879 = vtanh.pop %v2877
    %v2880 = vmul.f32 %v2870, %v2878
    %v2881 = vmul.f32 %v2871, %v2879
    %v2882 = vld [vmem:[%s1226] sm:$0xff]
    %v2883 = vld [vmem:[%s1226 + $0x8] sm:$0xff]
    %v2884 = vld [vmem:[%s1226 + $0x10] sm:$0xff]
    %v2885 = vld [vmem:[%s1226 + $0x18] sm:$0xff]
    %v2886 = vld [vmem:[%s1226 + $0x20] sm:$0xff]
    %v2887 = vld [vmem:[%s1226 + $0x28] sm:$0xff]
    %v2888 = vld [vmem:[%s1226 + $0x30] sm:$0xff]
    %v2889 = vld [vmem:[%s1226 + $0x38] sm:$0xff]
    %v2890 = vpack.c.bf16 %v2881, %v2880
    %2891 = vmatpush.bf16.msra.mxu0 %v2528
    %2892 = vmatpush.bf16.msra.mxu0 %v2524
    %2893 = vmatpush.bf16.msra.mxu0 %v2520
    %2894 = vmatpush.bf16.msra.mxu0 %v2516
    %2895 = vmatpush.bf16.msra.mxu0 %v2512
    %2896 = vmatpush.bf16.msra.mxu0 %v2508
    %2897 = vmatpush.bf16.msra.mxu0 %v2504
    %2898 = vmatpush.bf16.msra.mxu0 %v2500
    %2899 = vmatmul.bf16.gmra.mxu0 %v2890
    %v2900 = vpop.f32.mrf.mxu0
    %v2901 = vadd.f32 0.0, %v2900
    %v2902 = vpop.f32.mrf.mxu0
    %v2903 = vadd.f32 0.0, %v2902
    %2904 = vdwg.mxu0
    %2905 = vmatpush.bf16.msra.mxu0 %v2529
    %2906 = vmatpush.bf16.msra.mxu0 %v2525
    %2907 = vmatpush.bf16.msra.mxu0 %v2521
    %2908 = vmatpush.bf16.msra.mxu0 %v2517
    %2909 = vmatpush.bf16.msra.mxu0 %v2513
    %2910 = vmatpush.bf16.msra.mxu0 %v2509
    %2911 = vmatpush.bf16.msra.mxu0 %v2505
    %2912 = vmatpush.bf16.msra.mxu0 %v2501
    %2913 = vmatmul.bf16.gmra.mxu0 %v2890
    %v2914 = vpop.f32.mrf.mxu0
    %v2915 = vadd.f32 0.0, %v2914
    %v2916 = vpop.f32.mrf.mxu0
    %v2917 = vadd.f32 0.0, %v2916
    %2918 = vdwg.mxu0
    %2919 = vmatpush.bf16.msra.mxu0 %v2530
    %2920 = vmatpush.bf16.msra.mxu0 %v2526
    %2921 = vmatpush.bf16.msra.mxu0 %v2522
    %2922 = vmatpush.bf16.msra.mxu0 %v2518
    %2923 = vmatpush.bf16.msra.mxu0 %v2514
    %2924 = vmatpush.bf16.msra.mxu0 %v2510
    %2925 = vmatpush.bf16.msra.mxu0 %v2506
    %2926 = vmatpush.bf16.msra.mxu0 %v2502
    %2927 = vmatmul.bf16.gmra.mxu0 %v2890
    %v2928 = vpop.f32.mrf.mxu0
    %v2929 = vadd.f32 0.0, %v2928
    %v2930 = vpop.f32.mrf.mxu0
    %v2931 = vadd.f32 0.0, %v2930
    %2932 = vdwg.mxu0
    %2933 = vmatpush.bf16.msra.mxu0 %v2531
    %2934 = vmatpush.bf16.msra.mxu0 %v2527
    %2935 = vmatpush.bf16.msra.mxu0 %v2523
    %2936 = vmatpush.bf16.msra.mxu0 %v2519
    %2937 = vmatpush.bf16.msra.mxu0 %v2515
    %2938 = vmatpush.bf16.msra.mxu0 %v2511
    %2939 = vmatpush.bf16.msra.mxu0 %v2507
    %2940 = vmatpush.bf16.msra.mxu0 %v2503
    %2941 = vmatmul.bf16.gmra.mxu0 %v2890
    %v2942 = vpop.f32.mrf.mxu0
    %v2943 = vadd.f32 0.0, %v2942
    %v2944 = vpop.f32.mrf.mxu0
    %v2945 = vadd.f32 0.0, %v2944
    %2946 = vdwg.mxu0
    %v2947 = vadd.f32 %v2882, %v2901
    %v2948 = vadd.f32 %v2883, %v2915
    %v2949 = vadd.f32 %v2884, %v2929
    %v2950 = vadd.f32 %v2885, %v2943
    %v2951 = vadd.f32 %v2886, %v2903
    %v2952 = vadd.f32 %v2887, %v2917
    %v2953 = vadd.f32 %v2888, %v2931
    %v2954 = vadd.f32 %v2889, %v2945
    %v2955 = vmul.f32 %v2947, 0.5
    %v2956 = vmul.f32 %v2951, 0.5
    %v2957 = vtanh.pop %v2955
    %v2958 = vtanh.pop %v2956
    %v2959 = vmul.f32 %v2957, 0.5
    %v2960 = vmul.f32 %v2958, 0.5
    %v2961 = vadd.f32 %v2959, 0.5
    %v2962 = vadd.f32 %v2960, 0.5
    %v2963 = vmul.f32 %v2948, 0.5
    %v2964 = vmul.f32 %v2952, 0.5
    %v2965 = vtanh.pop %v2963
    %v2966 = vtanh.pop %v2964
    %v2967 = vmul.f32 %v2965, 0.5
    %v2968 = vmul.f32 %v2966, 0.5
    %v2969 = vadd.f32 %v2967, 0.5
    %v2970 = vadd.f32 %v2968, 0.5
    %v2971 = vtanh.pop %v2949
    %v2972 = vtanh.pop %v2953
    %v2973 = vmul.f32 %v2950, 0.5
    %v2974 = vmul.f32 %v2954, 0.5
    %v2975 = vtanh.pop %v2973
    %v2976 = vtanh.pop %v2974
    %v2977 = vmul.f32 %v2975, 0.5
    %v2978 = vmul.f32 %v2976, 0.5
    %v2979 = vadd.f32 %v2977, 0.5
    %v2980 = vadd.f32 %v2978, 0.5
    %v2981 = vmul.f32 %v2969, %v2876
    %v2982 = vmul.f32 %v2970, %v2877
    %v2983 = vmul.f32 %v2961, %v2971
    %v2984 = vmul.f32 %v2962, %v2972
    %v2985 = vadd.f32 %v2981, %v2983
    %v2986 = vadd.f32 %v2982, %v2984
    %v2987 = vtanh.pop %v2985
    %v2988 = vtanh.pop %v2986
    %v2989 = vmul.f32 %v2979, %v2987
    %v2990 = vmul.f32 %v2980, %v2988
    %v2991 = vld [vmem:[%s1346] sm:$0xff]
    %v2992 = vld [vmem:[%s1346 + $0x8] sm:$0xff]
    %v2993 = vld [vmem:[%s1346 + $0x10] sm:$0xff]
    %v2994 = vld [vmem:[%s1346 + $0x18] sm:$0xff]
    %v2995 = vld [vmem:[%s1346 + $0x20] sm:$0xff]
    %v2996 = vld [vmem:[%s1346 + $0x28] sm:$0xff]
    %v2997 = vld [vmem:[%s1346 + $0x30] sm:$0xff]
    %v2998 = vld [vmem:[%s1346 + $0x38] sm:$0xff]
    %v2999 = vpack.c.bf16 %v2990, %v2989
    %3000 = vmatpush.bf16.msra.mxu0 %v2528
    %3001 = vmatpush.bf16.msra.mxu0 %v2524
    %3002 = vmatpush.bf16.msra.mxu0 %v2520
    %3003 = vmatpush.bf16.msra.mxu0 %v2516
    %3004 = vmatpush.bf16.msra.mxu0 %v2512
    %3005 = vmatpush.bf16.msra.mxu0 %v2508
    %3006 = vmatpush.bf16.msra.mxu0 %v2504
    %3007 = vmatpush.bf16.msra.mxu0 %v2500
    %3008 = vmatmul.bf16.gmra.mxu0 %v2999
    %v3009 = vpop.f32.mrf.mxu0
    %v3010 = vadd.f32 0.0, %v3009
    %v3011 = vpop.f32.mrf.mxu0
    %v3012 = vadd.f32 0.0, %v3011
    %3013 = vdwg.mxu0
    %3014 = vmatpush.bf16.msra.mxu0 %v2529
    %3015 = vmatpush.bf16.msra.mxu0 %v2525
    %3016 = vmatpush.bf16.msra.mxu0 %v2521
    %3017 = vmatpush.bf16.msra.mxu0 %v2517
    %3018 = vmatpush.bf16.msra.mxu0 %v2513
    %3019 = vmatpush.bf16.msra.mxu0 %v2509
    %3020 = vmatpush.bf16.msra.mxu0 %v2505
    %3021 = vmatpush.bf16.msra.mxu0 %v2501
    %3022 = vmatmul.bf16.gmra.mxu0 %v2999
    %v3023 = vpop.f32.mrf.mxu0
    %v3024 = vadd.f32 0.0, %v3023
    %v3025 = vpop.f32.mrf.mxu0
    %v3026 = vadd.f32 0.0, %v3025
    %3027 = vdwg.mxu0
    %3028 = vmatpush.bf16.msra.mxu0 %v2530
    %3029 = vmatpush.bf16.msra.mxu0 %v2526
    %3030 = vmatpush.bf16.msra.mxu0 %v2522
    %3031 = vmatpush.bf16.msra.mxu0 %v2518
    %3032 = vmatpush.bf16.msra.mxu0 %v2514
    %3033 = vmatpush.bf16.msra.mxu0 %v2510
    %3034 = vmatpush.bf16.msra.mxu0 %v2506
    %3035 = vmatpush.bf16.msra.mxu0 %v2502
    %3036 = vmatmul.bf16.gmra.mxu0 %v2999
    %v3037 = vpop.f32.mrf.mxu0
    %v3038 = vadd.f32 0.0, %v3037
    %v3039 = vpop.f32.mrf.mxu0
    %v3040 = vadd.f32 0.0, %v3039
    %3041 = vdwg.mxu0
    %3042 = vmatpush.bf16.msra.mxu0 %v2531
    %3043 = vmatpush.bf16.msra.mxu0 %v2527
    %3044 = vmatpush.bf16.msra.mxu0 %v2523
    %3045 = vmatpush.bf16.msra.mxu0 %v2519
    %3046 = vmatpush.bf16.msra.mxu0 %v2515
    %3047 = vmatpush.bf16.msra.mxu0 %v2511
    %3048 = vmatpush.bf16.msra.mxu0 %v2507
    %3049 = vmatpush.bf16.msra.mxu0 %v2503
    %3050 = vmatmul.bf16.gmra.mxu0 %v2999
    %v3051 = vpop.f32.mrf.mxu0
    %v3052 = vadd.f32 0.0, %v3051
    %v3053 = vpop.f32.mrf.mxu0
    %v3054 = vadd.f32 0.0, %v3053
    %3055 = vdwg.mxu0
    %v3056 = vadd.f32 %v2991, %v3010
    %v3057 = vadd.f32 %v2992, %v3024
    %v3058 = vadd.f32 %v2993, %v3038
    %v3059 = vadd.f32 %v2994, %v3052
    %v3060 = vadd.f32 %v2995, %v3012
    %v3061 = vadd.f32 %v2996, %v3026
    %v3062 = vadd.f32 %v2997, %v3040
    %v3063 = vadd.f32 %v2998, %v3054
    %v3064 = vmul.f32 %v3056, 0.5
    %v3065 = vmul.f32 %v3060, 0.5
    %v3066 = vtanh.pop %v3064
    %v3067 = vtanh.pop %v3065
    %v3068 = vmul.f32 %v3066, 0.5
    %v3069 = vmul.f32 %v3067, 0.5
    %v3070 = vadd.f32 %v3068, 0.5
    %v3071 = vadd.f32 %v3069, 0.5
    %v3072 = vmul.f32 %v3057, 0.5
    %v3073 = vmul.f32 %v3061, 0.5
    %v3074 = vtanh.pop %v3072
    %v3075 = vtanh.pop %v3073
    %v3076 = vmul.f32 %v3074, 0.5
    %v3077 = vmul.f32 %v3075, 0.5
    %v3078 = vadd.f32 %v3076, 0.5
    %v3079 = vadd.f32 %v3077, 0.5
    %v3080 = vtanh.pop %v3058
    %v3081 = vtanh.pop %v3062
    %v3082 = vmul.f32 %v3059, 0.5
    %v3083 = vmul.f32 %v3063, 0.5
    %v3084 = vtanh.pop %v3082
    %v3085 = vtanh.pop %v3083
    %v3086 = vmul.f32 %v3084, 0.5
    %v3087 = vmul.f32 %v3085, 0.5
    %v3088 = vadd.f32 %v3086, 0.5
    %v3089 = vadd.f32 %v3087, 0.5
    %v3090 = vmul.f32 %v3078, %v2985
    %v3091 = vmul.f32 %v3079, %v2986
    %v3092 = vmul.f32 %v3070, %v3080
    %v3093 = vmul.f32 %v3071, %v3081
    %v3094 = vadd.f32 %v3090, %v3092
    %v3095 = vadd.f32 %v3091, %v3093
    %v3096 = vtanh.pop %v3094
    %v3097 = vtanh.pop %v3095
    %v3098 = vmul.f32 %v3088, %v3096
    %v3099 = vmul.f32 %v3089, %v3097
    %v3100 = vld [vmem:[%s1466] sm:$0xff]
    %v3101 = vld [vmem:[%s1466 + $0x8] sm:$0xff]
    %v3102 = vld [vmem:[%s1466 + $0x10] sm:$0xff]
    %v3103 = vld [vmem:[%s1466 + $0x18] sm:$0xff]
    %v3104 = vld [vmem:[%s1466 + $0x20] sm:$0xff]
    %v3105 = vld [vmem:[%s1466 + $0x28] sm:$0xff]
    %v3106 = vld [vmem:[%s1466 + $0x30] sm:$0xff]
    %v3107 = vld [vmem:[%s1466 + $0x38] sm:$0xff]
    %v3108 = vpack.c.bf16 %v3099, %v3098
    %3109 = vmatpush.bf16.msra.mxu0 %v2528
    %3110 = vmatpush.bf16.msra.mxu0 %v2524
    %3111 = vmatpush.bf16.msra.mxu0 %v2520
    %3112 = vmatpush.bf16.msra.mxu0 %v2516
    %3113 = vmatpush.bf16.msra.mxu0 %v2512
    %3114 = vmatpush.bf16.msra.mxu0 %v2508
    %3115 = vmatpush.bf16.msra.mxu0 %v2504
    %3116 = vmatpush.bf16.msra.mxu0 %v2500
    %3117 = vmatmul.bf16.gmra.mxu0 %v3108
    %v3118 = vpop.f32.mrf.mxu0
    %v3119 = vadd.f32 0.0, %v3118
    %v3120 = vpop.f32.mrf.mxu0
    %v3121 = vadd.f32 0.0, %v3120
    %3122 = vdwg.mxu0
    %3123 = vmatpush.bf16.msra.mxu0 %v2529
    %3124 = vmatpush.bf16.msra.mxu0 %v2525
    %3125 = vmatpush.bf16.msra.mxu0 %v2521
    %3126 = vmatpush.bf16.msra.mxu0 %v2517
    %3127 = vmatpush.bf16.msra.mxu0 %v2513
    %3128 = vmatpush.bf16.msra.mxu0 %v2509
    %3129 = vmatpush.bf16.msra.mxu0 %v2505
    %3130 = vmatpush.bf16.msra.mxu0 %v2501
    %3131 = vmatmul.bf16.gmra.mxu0 %v3108
    %v3132 = vpop.f32.mrf.mxu0
    %v3133 = vadd.f32 0.0, %v3132
    %v3134 = vpop.f32.mrf.mxu0
    %v3135 = vadd.f32 0.0, %v3134
    %3136 = vdwg.mxu0
    %3137 = vmatpush.bf16.msra.mxu0 %v2530
    %3138 = vmatpush.bf16.msra.mxu0 %v2526
    %3139 = vmatpush.bf16.msra.mxu0 %v2522
    %3140 = vmatpush.bf16.msra.mxu0 %v2518
    %3141 = vmatpush.bf16.msra.mxu0 %v2514
    %3142 = vmatpush.bf16.msra.mxu0 %v2510
    %3143 = vmatpush.bf16.msra.mxu0 %v2506
    %3144 = vmatpush.bf16.msra.mxu0 %v2502
    %3145 = vmatmul.bf16.gmra.mxu0 %v3108
    %v3146 = vpop.f32.mrf.mxu0
    %v3147 = vadd.f32 0.0, %v3146
    %v3148 = vpop.f32.mrf.mxu0
    %v3149 = vadd.f32 0.0, %v3148
    %3150 = vdwg.mxu0
    %3151 = vmatpush.bf16.msra.mxu0 %v2531
    %3152 = vmatpush.bf16.msra.mxu0 %v2527
    %3153 = vmatpush.bf16.msra.mxu0 %v2523
    %3154 = vmatpush.bf16.msra.mxu0 %v2519
    %3155 = vmatpush.bf16.msra.mxu0 %v2515
    %3156 = vmatpush.bf16.msra.mxu0 %v2511
    %3157 = vmatpush.bf16.msra.mxu0 %v2507
    %3158 = vmatpush.bf16.msra.mxu0 %v2503
    %3159 = vmatmul.bf16.gmra.mxu0 %v3108
    %v3160 = vpop.f32.mrf.mxu0
    %v3161 = vadd.f32 0.0, %v3160
    %v3162 = vpop.f32.mrf.mxu0
    %v3163 = vadd.f32 0.0, %v3162
    %3164 = vdwg.mxu0
    %v3165 = vadd.f32 %v3100, %v3119
    %v3166 = vadd.f32 %v3101, %v3133
    %v3167 = vadd.f32 %v3102, %v3147
    %v3168 = vadd.f32 %v3103, %v3161
    %v3169 = vadd.f32 %v3104, %v3121
    %v3170 = vadd.f32 %v3105, %v3135
    %v3171 = vadd.f32 %v3106, %v3149
    %v3172 = vadd.f32 %v3107, %v3163
    %v3173 = vmul.f32 %v3165, 0.5
    %v3174 = vmul.f32 %v3169, 0.5
    %v3175 = vtanh.pop %v3173
    %v3176 = vtanh.pop %v3174
    %v3177 = vmul.f32 %v3175, 0.5
    %v3178 = vmul.f32 %v3176, 0.5
    %v3179 = vadd.f32 %v3177, 0.5
    %v3180 = vadd.f32 %v3178, 0.5
    %v3181 = vmul.f32 %v3166, 0.5
    %v3182 = vmul.f32 %v3170, 0.5
    %v3183 = vtanh.pop %v3181
    %v3184 = vtanh.pop %v3182
    %v3185 = vmul.f32 %v3183, 0.5
    %v3186 = vmul.f32 %v3184, 0.5
    %v3187 = vadd.f32 %v3185, 0.5
    %v3188 = vadd.f32 %v3186, 0.5
    %v3189 = vtanh.pop %v3167
    %v3190 = vtanh.pop %v3171
    %v3191 = vmul.f32 %v3168, 0.5
    %v3192 = vmul.f32 %v3172, 0.5
    %v3193 = vtanh.pop %v3191
    %v3194 = vtanh.pop %v3192
    %v3195 = vmul.f32 %v3193, 0.5
    %v3196 = vmul.f32 %v3194, 0.5
    %v3197 = vadd.f32 %v3195, 0.5
    %v3198 = vadd.f32 %v3196, 0.5
    %v3199 = vmul.f32 %v3187, %v3094
    %v3200 = vmul.f32 %v3188, %v3095
    %v3201 = vmul.f32 %v3179, %v3189
    %v3202 = vmul.f32 %v3180, %v3190
    %v3203 = vadd.f32 %v3199, %v3201
    %v3204 = vadd.f32 %v3200, %v3202
    %v3205 = vtanh.pop %v3203
    %v3206 = vtanh.pop %v3204
    %v3207 = vmul.f32 %v3197, %v3205
    %v3208 = vmul.f32 %v3198, %v3206
    %v3209 = vld [vmem:[%s1586] sm:$0xff]
    %v3210 = vld [vmem:[%s1586 + $0x8] sm:$0xff]
    %v3211 = vld [vmem:[%s1586 + $0x10] sm:$0xff]
    %v3212 = vld [vmem:[%s1586 + $0x18] sm:$0xff]
    %v3213 = vld [vmem:[%s1586 + $0x20] sm:$0xff]
    %v3214 = vld [vmem:[%s1586 + $0x28] sm:$0xff]
    %v3215 = vld [vmem:[%s1586 + $0x30] sm:$0xff]
    %v3216 = vld [vmem:[%s1586 + $0x38] sm:$0xff]
    %v3217 = vpack.c.bf16 %v3208, %v3207
    %3218 = vmatpush.bf16.msra.mxu0 %v2528
    %3219 = vmatpush.bf16.msra.mxu0 %v2524
    %3220 = vmatpush.bf16.msra.mxu0 %v2520
    %3221 = vmatpush.bf16.msra.mxu0 %v2516
    %3222 = vmatpush.bf16.msra.mxu0 %v2512
    %3223 = vmatpush.bf16.msra.mxu0 %v2508
    %3224 = vmatpush.bf16.msra.mxu0 %v2504
    %3225 = vmatpush.bf16.msra.mxu0 %v2500
    %3226 = vmatmul.bf16.gmra.mxu0 %v3217
    %v3227 = vpop.f32.mrf.mxu0
    %v3228 = vadd.f32 0.0, %v3227
    %v3229 = vpop.f32.mrf.mxu0
    %v3230 = vadd.f32 0.0, %v3229
    %3231 = vdwg.mxu0
    %3232 = vmatpush.bf16.msra.mxu0 %v2529
    %3233 = vmatpush.bf16.msra.mxu0 %v2525
    %3234 = vmatpush.bf16.msra.mxu0 %v2521
    %3235 = vmatpush.bf16.msra.mxu0 %v2517
    %3236 = vmatpush.bf16.msra.mxu0 %v2513
    %3237 = vmatpush.bf16.msra.mxu0 %v2509
    %3238 = vmatpush.bf16.msra.mxu0 %v2505
    %3239 = vmatpush.bf16.msra.mxu0 %v2501
    %3240 = vmatmul.bf16.gmra.mxu0 %v3217
    %v3241 = vpop.f32.mrf.mxu0
    %v3242 = vadd.f32 0.0, %v3241
    %v3243 = vpop.f32.mrf.mxu0
    %v3244 = vadd.f32 0.0, %v3243
    %3245 = vdwg.mxu0
    %3246 = vmatpush.bf16.msra.mxu0 %v2530
    %3247 = vmatpush.bf16.msra.mxu0 %v2526
    %3248 = vmatpush.bf16.msra.mxu0 %v2522
    %3249 = vmatpush.bf16.msra.mxu0 %v2518
    %3250 = vmatpush.bf16.msra.mxu0 %v2514
    %3251 = vmatpush.bf16.msra.mxu0 %v2510
    %3252 = vmatpush.bf16.msra.mxu0 %v2506
    %3253 = vmatpush.bf16.msra.mxu0 %v2502
    %3254 = vmatmul.bf16.gmra.mxu0 %v3217
    %v3255 = vpop.f32.mrf.mxu0
    %v3256 = vadd.f32 0.0, %v3255
    %v3257 = vpop.f32.mrf.mxu0
    %v3258 = vadd.f32 0.0, %v3257
    %3259 = vdwg.mxu0
    %3260 = vmatpush.bf16.msra.mxu0 %v2531
    %3261 = vmatpush.bf16.msra.mxu0 %v2527
    %3262 = vmatpush.bf16.msra.mxu0 %v2523
    %3263 = vmatpush.bf16.msra.mxu0 %v2519
    %3264 = vmatpush.bf16.msra.mxu0 %v2515
    %3265 = vmatpush.bf16.msra.mxu0 %v2511
    %3266 = vmatpush.bf16.msra.mxu0 %v2507
    %3267 = vmatpush.bf16.msra.mxu0 %v2503
    %3268 = vmatmul.bf16.gmra.mxu0 %v3217
    %v3269 = vpop.f32.mrf.mxu0
    %v3270 = vadd.f32 0.0, %v3269
    %v3271 = vpop.f32.mrf.mxu0
    %v3272 = vadd.f32 0.0, %v3271
    %3273 = vdwg.mxu0
    %v3274 = vadd.f32 %v3209, %v3228
    %v3275 = vadd.f32 %v3210, %v3242
    %v3276 = vadd.f32 %v3211, %v3256
    %v3277 = vadd.f32 %v3212, %v3270
    %v3278 = vadd.f32 %v3213, %v3230
    %v3279 = vadd.f32 %v3214, %v3244
    %v3280 = vadd.f32 %v3215, %v3258
    %v3281 = vadd.f32 %v3216, %v3272
    %v3282 = vmul.f32 %v3274, 0.5
    %v3283 = vmul.f32 %v3278, 0.5
    %v3284 = vtanh.pop %v3282
    %v3285 = vtanh.pop %v3283
    %v3286 = vmul.f32 %v3284, 0.5
    %v3287 = vmul.f32 %v3285, 0.5
    %v3288 = vadd.f32 %v3286, 0.5
    %v3289 = vadd.f32 %v3287, 0.5
    %v3290 = vmul.f32 %v3275, 0.5
    %v3291 = vmul.f32 %v3279, 0.5
    %v3292 = vtanh.pop %v3290
    %v3293 = vtanh.pop %v3291
    %v3294 = vmul.f32 %v3292, 0.5
    %v3295 = vmul.f32 %v3293, 0.5
    %v3296 = vadd.f32 %v3294, 0.5
    %v3297 = vadd.f32 %v3295, 0.5
    %v3298 = vtanh.pop %v3276
    %v3299 = vtanh.pop %v3280
    %v3300 = vmul.f32 %v3277, 0.5
    %v3301 = vmul.f32 %v3281, 0.5
    %v3302 = vtanh.pop %v3300
    %v3303 = vtanh.pop %v3301
    %v3304 = vmul.f32 %v3302, 0.5
    %v3305 = vmul.f32 %v3303, 0.5
    %v3306 = vadd.f32 %v3304, 0.5
    %v3307 = vadd.f32 %v3305, 0.5
    %v3308 = vmul.f32 %v3296, %v3203
    %v3309 = vmul.f32 %v3297, %v3204
    %v3310 = vmul.f32 %v3288, %v3298
    %v3311 = vmul.f32 %v3289, %v3299
    %v3312 = vadd.f32 %v3308, %v3310
    %v3313 = vadd.f32 %v3309, %v3311
    %v3314 = vtanh.pop %v3312
    %v3315 = vtanh.pop %v3313
    %v3316 = vmul.f32 %v3306, %v3314
    %v3317 = vmul.f32 %v3307, %v3315
    %v3318 = vld [vmem:[%s1706] sm:$0xff]
    %v3319 = vld [vmem:[%s1706 + $0x8] sm:$0xff]
    %v3320 = vld [vmem:[%s1706 + $0x10] sm:$0xff]
    %v3321 = vld [vmem:[%s1706 + $0x18] sm:$0xff]
    %v3322 = vld [vmem:[%s1706 + $0x20] sm:$0xff]
    %v3323 = vld [vmem:[%s1706 + $0x28] sm:$0xff]
    %v3324 = vld [vmem:[%s1706 + $0x30] sm:$0xff]
    %v3325 = vld [vmem:[%s1706 + $0x38] sm:$0xff]
    %v3326 = vpack.c.bf16 %v3317, %v3316
    %3327 = vmatpush.bf16.msra.mxu0 %v2528
    %3328 = vmatpush.bf16.msra.mxu0 %v2524
    %3329 = vmatpush.bf16.msra.mxu0 %v2520
    %3330 = vmatpush.bf16.msra.mxu0 %v2516
    %3331 = vmatpush.bf16.msra.mxu0 %v2512
    %3332 = vmatpush.bf16.msra.mxu0 %v2508
    %3333 = vmatpush.bf16.msra.mxu0 %v2504
    %3334 = vmatpush.bf16.msra.mxu0 %v2500
    %3335 = vmatmul.bf16.gmra.mxu0 %v3326
    %v3336 = vpop.f32.mrf.mxu0
    %v3337 = vadd.f32 0.0, %v3336
    %v3338 = vpop.f32.mrf.mxu0
    %v3339 = vadd.f32 0.0, %v3338
    %3340 = vdwg.mxu0
    %3341 = vmatpush.bf16.msra.mxu0 %v2529
    %3342 = vmatpush.bf16.msra.mxu0 %v2525
    %3343 = vmatpush.bf16.msra.mxu0 %v2521
    %3344 = vmatpush.bf16.msra.mxu0 %v2517
    %3345 = vmatpush.bf16.msra.mxu0 %v2513
    %3346 = vmatpush.bf16.msra.mxu0 %v2509
    %3347 = vmatpush.bf16.msra.mxu0 %v2505
    %3348 = vmatpush.bf16.msra.mxu0 %v2501
    %3349 = vmatmul.bf16.gmra.mxu0 %v3326
    %v3350 = vpop.f32.mrf.mxu0
    %v3351 = vadd.f32 0.0, %v3350
    %v3352 = vpop.f32.mrf.mxu0
    %v3353 = vadd.f32 0.0, %v3352
    %3354 = vdwg.mxu0
    %3355 = vmatpush.bf16.msra.mxu0 %v2530
    %3356 = vmatpush.bf16.msra.mxu0 %v2526
    %3357 = vmatpush.bf16.msra.mxu0 %v2522
    %3358 = vmatpush.bf16.msra.mxu0 %v2518
    %3359 = vmatpush.bf16.msra.mxu0 %v2514
    %3360 = vmatpush.bf16.msra.mxu0 %v2510
    %3361 = vmatpush.bf16.msra.mxu0 %v2506
    %3362 = vmatpush.bf16.msra.mxu0 %v2502
    %3363 = vmatmul.bf16.gmra.mxu0 %v3326
    %v3364 = vpop.f32.mrf.mxu0
    %v3365 = vadd.f32 0.0, %v3364
    %v3366 = vpop.f32.mrf.mxu0
    %v3367 = vadd.f32 0.0, %v3366
    %3368 = vdwg.mxu0
    %3369 = vmatpush.bf16.msra.mxu0 %v2531
    %3370 = vmatpush.bf16.msra.mxu0 %v2527
    %3371 = vmatpush.bf16.msra.mxu0 %v2523
    %3372 = vmatpush.bf16.msra.mxu0 %v2519
    %3373 = vmatpush.bf16.msra.mxu0 %v2515
    %3374 = vmatpush.bf16.msra.mxu0 %v2511
    %3375 = vmatpush.bf16.msra.mxu0 %v2507
    %3376 = vmatpush.bf16.msra.mxu0 %v2503
    %3377 = vmatmul.bf16.gmra.mxu0 %v3326
    %v3378 = vpop.f32.mrf.mxu0
    %v3379 = vadd.f32 0.0, %v3378
    %v3380 = vpop.f32.mrf.mxu0
    %v3381 = vadd.f32 0.0, %v3380
    %3382 = vdwg.mxu0
    %v3383 = vadd.f32 %v3318, %v3337
    %v3384 = vadd.f32 %v3319, %v3351
    %v3385 = vadd.f32 %v3320, %v3365
    %v3386 = vadd.f32 %v3321, %v3379
    %v3387 = vadd.f32 %v3322, %v3339
    %v3388 = vadd.f32 %v3323, %v3353
    %v3389 = vadd.f32 %v3324, %v3367
    %v3390 = vadd.f32 %v3325, %v3381
    %v3391 = vmul.f32 %v3383, 0.5
    %v3392 = vmul.f32 %v3387, 0.5
    %v3393 = vtanh.pop %v3391
    %v3394 = vtanh.pop %v3392
    %v3395 = vmul.f32 %v3393, 0.5
    %v3396 = vmul.f32 %v3394, 0.5
    %v3397 = vadd.f32 %v3395, 0.5
    %v3398 = vadd.f32 %v3396, 0.5
    %v3399 = vmul.f32 %v3384, 0.5
    %v3400 = vmul.f32 %v3388, 0.5
    %v3401 = vtanh.pop %v3399
    %v3402 = vtanh.pop %v3400
    %v3403 = vmul.f32 %v3401, 0.5
    %v3404 = vmul.f32 %v3402, 0.5
    %v3405 = vadd.f32 %v3403, 0.5
    %v3406 = vadd.f32 %v3404, 0.5
    %v3407 = vtanh.pop %v3385
    %v3408 = vtanh.pop %v3389
    %v3409 = vmul.f32 %v3386, 0.5
    %v3410 = vmul.f32 %v3390, 0.5
    %v3411 = vtanh.pop %v3409
    %v3412 = vtanh.pop %v3410
    %v3413 = vmul.f32 %v3411, 0.5
    %v3414 = vmul.f32 %v3412, 0.5
    %v3415 = vadd.f32 %v3413, 0.5
    %v3416 = vadd.f32 %v3414, 0.5
    %v3417 = vmul.f32 %v3405, %v3312
    %v3418 = vmul.f32 %v3406, %v3313
    %v3419 = vmul.f32 %v3397, %v3407
    %v3420 = vmul.f32 %v3398, %v3408
    %v3421 = vadd.f32 %v3417, %v3419
    %v3422 = vadd.f32 %v3418, %v3420
    %v3423 = vtanh.pop %v3421
    %v3424 = vtanh.pop %v3422
    %v3425 = vmul.f32 %v3415, %v3423
    %v3426 = vmul.f32 %v3416, %v3424
    %3427 = vst [vmem:[%s2389] sm:$0xff] %v3425
    %3428 = vst [vmem:[%s2389 + $0x8] sm:$0xff] %v3426
    %3429 = vst [vmem:[%s2392] sm:$0xff] %v3421
    %3430 = vst [vmem:[%s2392 + $0x8] sm:$0xff] %v3422
    // Predicated region
    $region66: #{tpu_custom_call.1} parent=1 // pred_check
      %p3431 = pneg %p139
    $region67: #{tpu_custom_call.1} parent=1 // pred_check_branch
      %3433 = sbr.rel (%p3431) target = $region69
    $region68: #{tpu_custom_call.1} parent=1 // pred_region
      %v3434 = vld [vmem:[%s2389] sm:$0xff]
      %v3435 = vld [vmem:[%s2389 + $0x8] sm:$0xff]
      %v3436 = vld [vmem:[#allocation17] sm:$0xff]
      %v3437 = vld [vmem:[#allocation17 + $0x8] sm:$0xff]
      %v3438 = vld [vmem:[#allocation17 + $0x10] sm:$0xff]
      %v3439 = vld [vmem:[#allocation17 + $0x18] sm:$0xff]
      %v3440 = vld [vmem:[#allocation17 + $0x20] sm:$0xff]
      %v3441 = vld [vmem:[#allocation17 + $0x28] sm:$0xff]
      %v3442 = vld [vmem:[#allocation17 + $0x30] sm:$0xff]
      %v3443 = vld [vmem:[#allocation17 + $0x38] sm:$0xff]
      %v3444 = vld [vmem:[#allocation17 + $0x40] sm:$0xff]
      %v3445 = vld [vmem:[#allocation17 + $0x48] sm:$0xff]
      %v3446 = vld [vmem:[#allocation17 + $0x50] sm:$0xff]
      %v3447 = vld [vmem:[#allocation17 + $0x58] sm:$0xff]
      %v3448 = vld [vmem:[#allocation17 + $0x60] sm:$0xff]
      %v3449 = vld [vmem:[#allocation17 + $0x68] sm:$0xff]
      %v3450 = vld [vmem:[#allocation17 + $0x70] sm:$0xff]
      %v3451 = vld [vmem:[#allocation17 + $0x78] sm:$0xff]
      %v3452 = vld [vmem:[%s7] sm:$0x1]
      %v3454 = vperm.slane %v3452, 0
      %3456 = vmatpush.msra.mxu0 %v3451
      %3457 = vmatpush.msra.mxu0 %v3450
      %3458 = vmatpush.msra.mxu0 %v3449
      %3459 = vmatpush.msra.mxu0 %v3448
      %3460 = vmatpush.msra.mxu0 %v3447
      %3461 = vmatpush.msra.mxu0 %v3446
      %3462 = vmatpush.msra.mxu0 %v3445
      %3463 = vmatpush.msra.mxu0 %v3444
      %3464 = vmatpush.msra.mxu0 %v3443
      %3465 = vmatpush.msra.mxu0 %v3442
      %3466 = vmatpush.msra.mxu0 %v3441
      %3467 = vmatpush.msra.mxu0 %v3440
      %3468 = vmatpush.msra.mxu0 %v3439
      %3469 = vmatpush.msra.mxu0 %v3438
      %3470 = vmatpush.msra.mxu0 %v3437
      %3471 = vmatpush.msra.mxu0 %v3436
      %3472 = vmatmul.f32.gmra.mxu0 %v3434
      %v3473 = vpop.f32.mrf.mxu0
      %v3474 = vadd.f32 %v3454, %v3473
      %3475 = vmatmul.f32.gmra.mxu0 %v3435
      %v3476 = vpop.f32.mrf.mxu0
      %v3477 = vadd.f32 %v3454, %v3476
      %3478 = vdwg.mxu0
      %3479 = vst [vmem:[#allocation18] sm:$0xff] %v3474
      %3480 = vst [vmem:[#allocation18 + $0x8] sm:$0xff] %v3477
    $region69: #{tpu_custom_call.1} parent=1 // pred_fallthru
      _
    // Predicated region
    $region70: #{tpu_custom_call.1} parent=1 // pred_check
      _
    $region71: #{tpu_custom_call.1} parent=1 // pred_check_branch
      %3482 = sbr.rel (0) target = $region73
    $region72: #{tpu_custom_call.1} parent=1 // pred_region
      %3484 = vsyncadd [#allocation8], 0
      %s3485 = sshll.u32 [#allocation18], 4
      %s3486 = int_to_ptr.vmem [resolvable:$true] %s3485
      %s3487 = sshll.u32 %s8, 4
      %s3488 = int_to_ptr.hbm [resolvable:$true] %s3487
      %3493 = dma.vmem_to_hbm [thread:$0]  %s3486, 256, %s3488, [#allocation8], 128, 128, 8
    $region73: #{tpu_custom_call.1} parent=1 // pred_fallthru
      _
    // Predicated region
    $region74: #{tpu_custom_call.1} parent=1 // pred_check
      _
    $region75: #{tpu_custom_call.1} parent=1 // pred_check_branch
      %3495 = sbr.rel (0) target = $region77
    $region76: #{tpu_custom_call.1} parent=1 // pred_region
      %3497 = dma.done [#allocation8], 256
    $region77: #{tpu_custom_call.1} parent=1 // pred_fallthru
      _
    %3498 = vsyncpa [#allocation7], 1
    %3499 = vsyncpa [#allocation10], 1
    %3500 = vsyncpa [#allocation13], 1
    %3501 = vsyncpa [#allocation16], 1
    %3502 = vsyncpa [#allocation8], 1

// kernel: tpu_custom_call.1
$region0: #{tpu_custom_call.1}
  #allocation0 [shape = 'u32[]', space=smem, size = 0x4, offset = 0x4, fixed_abs, tag = 'smem constant byte address 0x4 - core index']
  #allocation1 [shape = 'u32[72,128]{1,0:T(1,128)}', space=vmem, size = 0x9000, scoped, tag = 'internal scratch']
  #allocation2 [shape = 'f32[2,16,128]{2,1,0:T(8,128)}', space=vmem, size = 0x4000, scoped, tag = 'scratch operand']
  #allocation3 [shape = 'f32[2,16,128]{2,1,0:T(8,128)}', space=vmem, size = 0x4000, scoped, tag = 'scratch operand']
  #allocation4 [shape = 'bf16[8,16,128]{2,1,0:T(8,128)(2,1)}', space=vmem, size = 0x8000, scoped, tag = 'scratch operand']
  #allocation5 [shape = 'f32[8,16,512]{2,1,0:T(8,128)}', space=vmem, size = 0x40000, scoped, tag = 'scratch operand']
  %s0 = inlined_call_operand.hbm [shape: bf16[8,16,128], index: 0, kind: input, shape index: {}]
  %s1 = inlined_call_operand.hbm [shape: bf16[128,512], index: 1, kind: input, shape index: {}]
  %s2 = inlined_call_operand.hbm [shape: bf16[128,512], index: 2, kind: input, shape index: {}]
  %s3 = inlined_call_operand.hbm [shape: bf16[128,512], index: 3, kind: input, shape index: {}]
  %s4 = inlined_call_operand.hbm [shape: bf16[128,512], index: 4, kind: input, shape index: {}]
  %s5 = inlined_call_operand.hbm [shape: f32[2,1,512], index: 5, kind: input, shape index: {}]
  %s6 = inlined_call_operand.hbm [shape: f32[128,128], index: 6, kind: input, shape index: {}]
  %s7 = inlined_call_operand.vmem [shape: f32[1,128], index: 7, kind: input, shape index: {}]
  %s8 = inlined_call_operand.hbm [shape: f32[16,128], index: 8, kind: output, shape index: {}]
  %s9 = sld [smem:[#allocation0]]
  $region78: #{tpu_custom_call.1} parent=0
    _
  %s11 = ssub.s32 1, %s9
  %s12 = scalar_select 0, %s11, %s9
  $region1: #{tpu_custom_call.1} parent=0
    #allocation6 [shape = 'u8[32768]{0}', space=vmem, size = 0x8000, scoped, tag = 'input window, operand 0, single buffered']
    #allocation7 [shape = 's32[1]{0}', space=sflag, size = 0x4, scoped, tag = 'scoped memory for tpu_custom_call.1']
    #allocation8 [shape = 's32[1]{0}', space=sflag, size = 0x4, scoped, tag = 'scoped memory for tpu_custom_call.1']
    #allocation9 [shape = 'u8[131072]{0}', space=vmem, size = 0x20000, scoped, tag = 'input window, operand 1, single buffered']
    #allocation10 [shape = 's32[1]{0}', space=sflag, size = 0x4, scoped, tag = 'scoped memory for tpu_custom_call.1']
    #allocation11 [shape = 'u8[131072]{0}', space=vmem, size = 0x20000, scoped, tag = 'input window, operand 2, single buffered']
    #allocation12 [shape = 'u8[131072]{0}', space=vmem, size = 0x20000, scoped, tag = 'input window, operand 3, single buffered']
    #allocation13 [shape = 's32[1]{0}', space=sflag, size = 0x4, scoped, tag = 'scoped memory for tpu_custom_call.1']
    #allocation14 [shape = 'u8[131072]{0}', space=vmem, size = 0x20000, scoped, tag = 'input window, operand 4, single buffered']
    #allocation15 [shape = 'u8[4096]{0}', space=vmem, size = 0x1000, scoped, tag = 'input window, operand 5, single buffered']
    #allocation16 [shape = 's32[1]{0}', space=sflag, size = 0x4, scoped, tag = 'scoped memory for tpu_custom_call.1']
    #allocation17 [shape = 'u8[65536]{0}', space=vmem, size = 0x10000, scoped, tag = 'input window, operand 6, single buffered']
    #allocation18 [shape = 'u8[8192]{0}', space=vmem, size = 0x2000, scoped, tag = 'output window, operand 0, single buffered']
    %13 = vsyncpa [#allocation7], 0
    %14 = vsyncpa [#allocation10], 0
    %15 = vsyncpa [#allocation13], 0
    %16 = vsyncpa [#allocation16], 0
    %17 = vsyncpa [#allocation8], 0
    // Predicated region
    $region2: #{tpu_custom_call.1} parent=1 // pred_check
      _
    $region3: #{tpu_custom_call.1} parent=1 // pred_check_branch
      %19 = sbr.rel (0) target = $region5
    $region4: #{tpu_custom_call.1} parent=1 // pred_region
      %21 = vsyncadd [#allocation7], 0
      %s22 = sshll.u32 %s0, 4
      %s23 = int_to_ptr.hbm [resolvable:$true] %s22
      %s24 = sshll.u32 [#allocation6], 4
      %s25 = int_to_ptr.vmem [resolvable:$true] %s24
      %30 = dma.hbm_to_vmem [thread:$0]  %s23, 1024, %s25, [#allocation7], 64, 64, 4
    $region5: #{tpu_custom_call.1} parent=1 // pred_fallthru
      _
    // Predicated region
    $region6: #{tpu_custom_call.1} parent=1 // pred_check
      _
    $region7: #{tpu_custom_call.1} parent=1 // pred_check_branch
      %32 = sbr.rel (0) target = $region9
    $region8: #{tpu_custom_call.1} parent=1 // pred_region
      %34 = vsyncadd [#allocation10], 0
      %s35 = sshll.u32 %s1, 4
      %s36 = int_to_ptr.hbm [resolvable:$true] %s35
      %s37 = sshll.u32 [#allocation9], 4
      %s38 = int_to_ptr.vmem [resolvable:$true] %s37
      %43 = dma.hbm_to_vmem [thread:$0]  %s36, 4096, %s38, [#allocation10], 256, 256, 16
    $region9: #{tpu_custom_call.1} parent=1 // pred_fallthru
      _
    // Predicated region
    $region10: #{tpu_custom_call.1} parent=1 // pred_check
      _
    $region11: #{tpu_custom_call.1} parent=1 // pred_check_branch
      %45 = sbr.rel (0) target = $region13
    $region12: #{tpu_custom_call.1} parent=1 // pred_region
      %47 = vsyncadd [#allocation10], 0
      %s48 = sshll.u32 %s2, 4
      %s49 = int_to_ptr.hbm [resolvable:$true] %s48
      %s50 = sshll.u32 [#allocation11], 4
      %s51 = int_to_ptr.vmem [resolvable:$true] %s50
      %56 = dma.hbm_to_vmem [thread:$0]  %s49, 4096, %s51, [#allocation10], 256, 256, 16
    $region13: #{tpu_custom_call.1} parent=1 // pred_fallthru
      _
    // Predicated region
    $region14: #{tpu_custom_call.1} parent=1 // pred_check
      _
    $region15: #{tpu_custom_call.1} parent=1 // pred_check_branch
      %58 = sbr.rel (0) target = $region17
    $region16: #{tpu_custom_call.1} parent=1 // pred_region
      %60 = vsyncadd [#allocation13], 0
      %s61 = sshll.u32 %s3, 4
      %s62 = int_to_ptr.hbm [resolvable:$true] %s61
      %s63 = sshll.u32 [#allocation12], 4
      %s64 = int_to_ptr.vmem [resolvable:$true] %s63
      %69 = dma.hbm_to_vmem [thread:$0]  %s62, 4096, %s64, [#allocation13], 256, 256, 16
    $region17: #{tpu_custom_call.1} parent=1 // pred_fallthru
      _
    // Predicated region
    $region18: #{tpu_custom_call.1} parent=1 // pred_check
      _
    $region19: #{tpu_custom_call.1} parent=1 // pred_check_branch
      %71 = sbr.rel (0) target = $region21
    $region20: #{tpu_custom_call.1} parent=1 // pred_region
      %73 = vsyncadd [#allocation13], 0
      %s74 = sshll.u32 %s4, 4
      %s75 = int_to_ptr.hbm [resolvable:$true] %s74
      %s76 = sshll.u32 [#allocation14], 4
      %s77 = int_to_ptr.vmem [resolvable:$true] %s76
      %82 = dma.hbm_to_vmem [thread:$0]  %s75, 4096, %s77, [#allocation13], 256, 256, 16
    $region21: #{tpu_custom_call.1} parent=1 // pred_fallthru
      _
    // Predicated region
    $region22: #{tpu_custom_call.1} parent=1 // pred_check
      _
    $region23: #{tpu_custom_call.1} parent=1 // pred_check_branch
      %84 = sbr.rel (0) target = $region25
    $region24: #{tpu_custom_call.1} parent=1 // pred_region
      %86 = vsyncadd [#allocation16], 0
      %s87 = sshll.u32 %s5, 4
      %s88 = int_to_ptr.hbm [resolvable:$true] %s87
      %s89 = sshll.u32 [#allocation15], 4
      %s90 = int_to_ptr.vmem [resolvable:$true] %s89
      %95 = dma.hbm_to_vmem [thread:$0]  %s88, 128, %s90, [#allocation16], 64, 64, 4
    $region25: #{tpu_custom_call.1} parent=1 // pred_fallthru
      _
    // Predicated region
    $region26: #{tpu_custom_call.1} parent=1 // pred_check
      _
    $region27: #{tpu_custom_call.1} parent=1 // pred_check_branch
      %97 = sbr.rel (0) target = $region29
    $region28: #{tpu_custom_call.1} parent=1 // pred_region
      %99 = vsyncadd [#allocation16], 0
      %s100 = sshll.u32 %s6, 4
      %s101 = int_to_ptr.hbm [resolvable:$true] %s100
      %s102 = sshll.u32 [#allocation17], 4
      %s103 = int_to_ptr.vmem [resolvable:$true] %s102
      %108 = dma.hbm_to_vmem [thread:$0]  %s101, 2048, %s103, [#allocation16], 128, 128, 8
    $region29: #{tpu_custom_call.1} parent=1 // pred_fallthru
      _
    // Predicated region
    $region30: #{tpu_custom_call.1} parent=1 // pred_check
      _
    $region31: #{tpu_custom_call.1} parent=1 // pred_check_branch
      %110 = sbr.rel (0) target = $region33
    $region32: #{tpu_custom_call.1} parent=1 // pred_region
      _
    $region33: #{tpu_custom_call.1} parent=1 // pred_fallthru
      _
    // Predicated region
    $region34: #{tpu_custom_call.1} parent=1 // pred_check
      _
    $region35: #{tpu_custom_call.1} parent=1 // pred_check_branch
      %112 = sbr.rel (0) target = $region37
    $region36: #{tpu_custom_call.1} parent=1 // pred_region
      %114 = dma.done [#allocation7], 1024
    $region37: #{tpu_custom_call.1} parent=1 // pred_fallthru
      _
    // Predicated region
    $region38: #{tpu_custom_call.1} parent=1 // pred_check
      _
    $region39: #{tpu_custom_call.1} parent=1 // pred_check_branch
      %116 = sbr.rel (0) target = $region41
    $region40: #{tpu_custom_call.1} parent=1 // pred_region
      %118 = dma.done [#allocation10], 4096
    $region41: #{tpu_custom_call.1} parent=1 // pred_fallthru
      _
    // Predicated region
    $region42: #{tpu_custom_call.1} parent=1 // pred_check
      _
    $region43: #{tpu_custom_call.1} parent=1 // pred_check_branch
      %120 = sbr.rel (0) target = $region45
    $region44: #{tpu_custom_call.1} parent=1 // pred_region
      %122 = dma.done [#allocation10], 4096
    $region45: #{tpu_custom_call.1} parent=1 // pred_fallthru
      _
    // Predicated region
    $region46: #{tpu_custom_call.1} parent=1 // pred_check
      _
    $region47: #{tpu_custom_call.1} parent=1 // pred_check_branch
      %124 = sbr.rel (0) target = $region49
    $region48: #{tpu_custom_call.1} parent=1 // pred_region
      %126 = dma.done [#allocation13], 4096
    $region49: #{tpu_custom_call.1} parent=1 // pred_fallthru
      _
    // Predicated region
    $region50: #{tpu_custom_call.1} parent=1 // pred_check
      _
    $region51: #{tpu_custom_call.1} parent=1 // pred_check_branch
      %128 = sbr.rel (0) target = $region53
    $region52: #{tpu_custom_call.1} parent=1 // pred_region
      %130 = dma.done [#allocation13], 4096
    $region53: #{tpu_custom_call.1} parent=1 // pred_fallthru
      _
    // Predicated region
    $region54: #{tpu_custom_call.1} parent=1 // pred_check
      _
    $region55: #{tpu_custom_call.1} parent=1 // pred_check_branch
      %132 = sbr.rel (0) target = $region57
    $region56: #{tpu_custom_call.1} parent=1 // pred_region
      %134 = dma.done [#allocation16], 128
    $region57: #{tpu_custom_call.1} parent=1 // pred_fallthru
      _
    // Predicated region
    $region58: #{tpu_custom_call.1} parent=1 // pred_check
      _
    $region59: #{tpu_custom_call.1} parent=1 // pred_check_branch
      %136 = sbr.rel (0) target = $region61
    $region60: #{tpu_custom_call.1} parent=1 // pred_region
      %138 = dma.done [#allocation16], 2048
    $region61: #{tpu_custom_call.1} parent=1 // pred_fallthru
      _
    %p139 = scmp.eq.s32.totalorder 0, 0
    // Predicated region
    $region62: #{tpu_custom_call.1} parent=1 // pred_check
      %p140 = pneg %p139
    $region63: #{tpu_custom_call.1} parent=1 // pred_check_branch
      %142 = sbr.rel (%p140) target = $region65
    $region64: #{tpu_custom_call.1} parent=1 // pred_region
      %143 = vst [vmem:[#allocation2] sm:$0xff] 0.0
      %144 = vst [vmem:[#allocation2 + $0x8] sm:$0xff] 0.0
      %145 = vst [vmem:[#allocation2 + $0x10] sm:$0xff] 0.0
      %146 = vst [vmem:[#allocation2 + $0x18] sm:$0xff] 0.0
      %147 = vst [vmem:[#allocation3] sm:$0xff] 0.0
      %148 = vst [vmem:[#allocation3 + $0x8] sm:$0xff] 0.0
      %149 = vst [vmem:[#allocation3 + $0x10] sm:$0xff] 0.0
      %150 = vst [vmem:[#allocation3 + $0x18] sm:$0xff] 0.0
    $region65: #{tpu_custom_call.1} parent=1 // pred_fallthru
      _
    %v151 = vld [vmem:[#allocation6] sm:$0xf]
    %v152 = vld [vmem:[#allocation6 + $0x4] sm:$0xf]
    %v153 = vld [vmem:[#allocation6 + $0x8] sm:$0xf]
    %v154 = vld [vmem:[#allocation6 + $0xc] sm:$0xf]
    %v155 = vld [vmem:[#allocation6 + $0x10] sm:$0xf]
    %v156 = vld [vmem:[#allocation6 + $0x14] sm:$0xf]
    %v157 = vld [vmem:[#allocation6 + $0x18] sm:$0xf]
    %v158 = vld [vmem:[#allocation6 + $0x1c] sm:$0xf]
    %v159 = vld [vmem:[#allocation6 + $0x20] sm:$0xf]
    %v160 = vld [vmem:[#allocation6 + $0x24] sm:$0xf]
    %v161 = vld [vmem:[#allocation6 + $0x28] sm:$0xf]
    %v162 = vld [vmem:[#allocation6 + $0x2c] sm:$0xf]
    %v163 = vld [vmem:[#allocation6 + $0x30] sm:$0xf]
    %v164 = vld [vmem:[#allocation6 + $0x34] sm:$0xf]
    %v165 = vld [vmem:[#allocation6 + $0x38] sm:$0xf]
    %v166 = vld [vmem:[#allocation6 + $0x3c] sm:$0xf]
    %v167 = vld [vmem:[#allocation9] sm:$0xff]
    %v168 = vld [vmem:[#allocation9 + $0x8] sm:$0xff]
    %v169 = vld [vmem:[#allocation9 + $0x10] sm:$0xff]
    %v170 = vld [vmem:[#allocation9 + $0x18] sm:$0xff]
    %v171 = vld [vmem:[#allocation9 + $0x20] sm:$0xff]
    %v172 = vld [vmem:[#allocation9 + $0x28] sm:$0xff]
    %v173 = vld [vmem:[#allocation9 + $0x30] sm:$0xff]
    %v174 = vld [vmem:[#allocation9 + $0x38] sm:$0xff]
    %v175 = vld [vmem:[#allocation9 + $0x40] sm:$0xff]
    %v176 = vld [vmem:[#allocation9 + $0x48] sm:$0xff]
    %v177 = vld [vmem:[#allocation9 + $0x50] sm:$0xff]
    %v178 = vld [vmem:[#allocation9 + $0x58] sm:$0xff]
    %v179 = vld [vmem:[#allocation9 + $0x60] sm:$0xff]
    %v180 = vld [vmem:[#allocation9 + $0x68] sm:$0xff]
    %v181 = vld [vmem:[#allocation9 + $0x70] sm:$0xff]
    %v182 = vld [vmem:[#allocation9 + $0x78] sm:$0xff]
    %v183 = vld [vmem:[#allocation9 + $0x80] sm:$0xff]
    %v184 = vld [vmem:[#allocation9 + $0x88] sm:$0xff]
    %v185 = vld [vmem:[#allocation9 + $0x90] sm:$0xff]
    %v186 = vld [vmem:[#allocation9 + $0x98] sm:$0xff]
    %v187 = vld [vmem:[#allocation9 + $0xa0] sm:$0xff]
    %v188 = vld [vmem:[#allocation9 + $0xa8] sm:$0xff]
    %v189 = vld [vmem:[#allocation9 + $0xb0] sm:$0xff]
    %v190 = vld [vmem:[#allocation9 + $0xb8] sm:$0xff]
    %v191 = vld [vmem:[#allocation9 + $0xc0] sm:$0xff]
    %v192 = vld [vmem:[#allocation9 + $0xc8] sm:$0xff]
    %v193 = vld [vmem:[#allocation9 + $0xd0] sm:$0xff]
    %v194 = vld [vmem:[#allocation9 + $0xd8] sm:$0xff]
    %v195 = vld [vmem:[#allocation9 + $0xe0] sm:$0xff]
    %v196 = vld [vmem:[#allocation9 + $0xe8] sm:$0xff]
    %v197 = vld [vmem:[#allocation9 + $0xf0] sm:$0xff]
    %v198 = vld [vmem:[#allocation9 + $0xf8] sm:$0xff]
    %v199 = vld [vmem:[#allocation15] sm:$0xf]
    %v201 = vperm.slane %v199, 0
    %v202 = vperm.slane %v199, 1
    %v203 = vperm.slane %v199, 2
    %v204 = vperm.slane %v199, 3
    %v225 = vunpack.c.l.b16 %v151
    %v226 = vunpack.c.l.b16 %v152
    %v227 = vunpack.c.l.b16 %v153
    %v228 = vunpack.c.l.b16 %v154
    %v229 = vunpack.c.l.b16 %v155
    %v230 = vunpack.c.l.b16 %v156
    %v231 = vunpack.c.l.b16 %v157
    %v232 = vunpack.c.l.b16 %v158
    %v233 = vunpack.c.l.b16 %v159
    %v234 = vunpack.c.l.b16 %v160
    %v235 = vunpack.c.l.b16 %v161
    %v236 = vunpack.c.l.b16 %v162
    %v237 = vunpack.c.l.b16 %v163
    %v238 = vunpack.c.l.b16 %v164
    %v239 = vunpack.c.l.b16 %v165
    %v240 = vunpack.c.l.b16 %v166
    %v241 = vpack.c.b16 %v226, %v225
    %v242 = vpack.c.b16 %v228, %v227
    %v243 = vpack.c.b16 %v230, %v229
    %v244 = vpack.c.b16 %v232, %v231
    %v245 = vpack.c.b16 %v234, %v233
    %v246 = vpack.c.b16 %v236, %v235
    %v247 = vpack.c.b16 %v238, %v237
    %v248 = vpack.c.b16 %v240, %v239
    %v289 = vunpack.c.l.b16 %v167
    %v290 = vunpack.c.h.b16 %v167
    %v291 = vunpack.c.l.b16 %v168
    %v292 = vunpack.c.h.b16 %v168
    %v293 = vunpack.c.l.b16 %v169
    %v294 = vunpack.c.h.b16 %v169
    %v295 = vunpack.c.l.b16 %v170
    %v296 = vunpack.c.h.b16 %v170
    %v297 = vunpack.c.l.b16 %v171
    %v298 = vunpack.c.h.b16 %v171
    %v299 = vunpack.c.l.b16 %v172
    %v300 = vunpack.c.h.b16 %v172
    %v301 = vunpack.c.l.b16 %v173
    %v302 = vunpack.c.h.b16 %v173
    %v303 = vunpack.c.l.b16 %v174
    %v304 = vunpack.c.h.b16 %v174
    %v305 = vunpack.c.l.b16 %v175
    %v306 = vunpack.c.h.b16 %v175
    %v307 = vunpack.c.l.b16 %v176
    %v308 = vunpack.c.h.b16 %v176
    %v309 = vunpack.c.l.b16 %v177
    %v310 = vunpack.c.h.b16 %v177
    %v311 = vunpack.c.l.b16 %v178
    %v312 = vunpack.c.h.b16 %v178
    %v313 = vunpack.c.l.b16 %v179
    %v314 = vunpack.c.h.b16 %v179
    %v315 = vunpack.c.l.b16 %v180
    %v316 = vunpack.c.h.b16 %v180
    %v317 = vunpack.c.l.b16 %v181
    %v318 = vunpack.c.h.b16 %v181
    %v319 = vunpack.c.l.b16 %v182
    %v320 = vunpack.c.h.b16 %v182
    %v321 = vunpack.c.l.b16 %v183
    %v322 = vunpack.c.h.b16 %v183
    %v323 = vunpack.c.l.b16 %v184
    %v324 = vunpack.c.h.b16 %v184
    %v325 = vunpack.c.l.b16 %v185
    %v326 = vunpack.c.h.b16 %v185
    %v327 = vunpack.c.l.b16 %v186
    %v328 = vunpack.c.h.b16 %v186
    %v329 = vunpack.c.l.b16 %v187
    %v330 = vunpack.c.h.b16 %v187
    %v331 = vunpack.c.l.b16 %v188
    %v332 = vunpack.c.h.b16 %v188
    %v333 = vunpack.c.l.b16 %v189
    %v334 = vunpack.c.h.b16 %v189
    %v335 = vunpack.c.l.b16 %v190
    %v336 = vunpack.c.h.b16 %v190
    %v337 = vunpack.c.l.b16 %v191
    %v338 = vunpack.c.h.b16 %v191
    %v339 = vunpack.c.l.b16 %v192
    %v340 = vunpack.c.h.b16 %v192
    %v341 = vunpack.c.l.b16 %v193
    %v342 = vunpack.c.h.b16 %v193
    %v343 = vunpack.c.l.b16 %v194
    %v344 = vunpack.c.h.b16 %v194
    %v345 = vunpack.c.l.b16 %v195
    %v346 = vunpack.c.h.b16 %v195
    %v347 = vunpack.c.l.b16 %v196
    %v348 = vunpack.c.h.b16 %v196
    %v349 = vunpack.c.l.b16 %v197
    %v350 = vunpack.c.h.b16 %v197
    %v351 = vunpack.c.l.b16 %v198
    %v352 = vunpack.c.h.b16 %v198
    %v353 = vpack.c.b16 %v293, %v289
    %v354 = vpack.c.b16 %v294, %v290
    %v355 = vpack.c.b16 %v295, %v291
    %v356 = vpack.c.b16 %v296, %v292
    %v357 = vpack.c.b16 %v301, %v297
    %v358 = vpack.c.b16 %v302, %v298
    %v359 = vpack.c.b16 %v303, %v299
    %v360 = vpack.c.b16 %v304, %v300
    %v361 = vpack.c.b16 %v309, %v305
    %v362 = vpack.c.b16 %v310, %v306
    %v363 = vpack.c.b16 %v311, %v307
    %v364 = vpack.c.b16 %v312, %v308
    %v365 = vpack.c.b16 %v317, %v313
    %v366 = vpack.c.b16 %v318, %v314
    %v367 = vpack.c.b16 %v319, %v315
    %v368 = vpack.c.b16 %v320, %v316
    %v369 = vpack.c.b16 %v325, %v321
    %v370 = vpack.c.b16 %v326, %v322
    %v371 = vpack.c.b16 %v327, %v323
    %v372 = vpack.c.b16 %v328, %v324
    %v373 = vpack.c.b16 %v333, %v329
    %v374 = vpack.c.b16 %v334, %v330
    %v375 = vpack.c.b16 %v335, %v331
    %v376 = vpack.c.b16 %v336, %v332
    %v377 = vpack.c.b16 %v341, %v337
    %v378 = vpack.c.b16 %v342, %v338
    %v379 = vpack.c.b16 %v343, %v339
    %v380 = vpack.c.b16 %v344, %v340
    %v381 = vpack.c.b16 %v349, %v345
    %v382 = vpack.c.b16 %v350, %v346
    %v383 = vpack.c.b16 %v351, %v347
    %v384 = vpack.c.b16 %v352, %v348
    %417 = vmatpush.bf16.msra.mxu0 %v381
    %418 = vmatpush.bf16.msra.mxu0 %v377
    %419 = vmatpush.bf16.msra.mxu0 %v373
    %420 = vmatpush.bf16.msra.mxu0 %v369
    %421 = vmatpush.bf16.msra.mxu0 %v365
    %422 = vmatpush.bf16.msra.mxu0 %v361
    %423 = vmatpush.bf16.msra.mxu0 %v357
    %424 = vmatpush.bf16.msra.mxu0 %v353
    %425 = vmatmul.bf16.gmra.mxu0 %v241
    %v426 = vpop.f32.mrf.mxu0
    %v427 = vadd.f32 %v201, %v426
    %v428 = vpop.f32.mrf.mxu0
    %v429 = vadd.f32 %v201, %v428
    %430 = vmatmul.bf16.gmra.mxu0 %v242
    %v431 = vpop.f32.mrf.mxu0
    %v432 = vadd.f32 %v201, %v431
    %v433 = vpop.f32.mrf.mxu0
    %v434 = vadd.f32 %v201, %v433
    %435 = vmatmul.bf16.gmra.mxu0 %v243
    %v436 = vpop.f32.mrf.mxu0
    %v437 = vadd.f32 %v201, %v436
    %v438 = vpop.f32.mrf.mxu0
    %v439 = vadd.f32 %v201, %v438
    %440 = vmatmul.bf16.gmra.mxu0 %v244
    %v441 = vpop.f32.mrf.mxu0
    %v442 = vadd.f32 %v201, %v441
    %v443 = vpop.f32.mrf.mxu0
    %v444 = vadd.f32 %v201, %v443
    %445 = vmatmul.bf16.gmra.mxu0 %v245
    %v446 = vpop.f32.mrf.mxu0
    %v447 = vadd.f32 %v201, %v446
    %v448 = vpop.f32.mrf.mxu0
    %v449 = vadd.f32 %v201, %v448
    %450 = vmatmul.bf16.gmra.mxu0 %v246
    %v451 = vpop.f32.mrf.mxu0
    %v452 = vadd.f32 %v201, %v451
    %v453 = vpop.f32.mrf.mxu0
    %v454 = vadd.f32 %v201, %v453
    %455 = vmatmul.bf16.gmra.mxu0 %v247
    %v456 = vpop.f32.mrf.mxu0
    %v457 = vadd.f32 %v201, %v456
    %v458 = vpop.f32.mrf.mxu0
    %v459 = vadd.f32 %v201, %v458
    %460 = vmatmul.bf16.gmra.mxu0 %v248
    %v461 = vpop.f32.mrf.mxu0
    %v462 = vadd.f32 %v201, %v461
    %v463 = vpop.f32.mrf.mxu0
    %v464 = vadd.f32 %v201, %v463
    %465 = vdwg.mxu0
    %466 = vmatpush.bf16.msra.mxu0 %v382
    %467 = vmatpush.bf16.msra.mxu0 %v378
    %468 = vmatpush.bf16.msra.mxu0 %v374
    %469 = vmatpush.bf16.msra.mxu0 %v370
    %470 = vmatpush.bf16.msra.mxu0 %v366
    %471 = vmatpush.bf16.msra.mxu0 %v362
    %472 = vmatpush.bf16.msra.mxu0 %v358
    %473 = vmatpush.bf16.msra.mxu0 %v354
    %474 = vmatmul.bf16.gmra.mxu0 %v241
    %v475 = vpop.f32.mrf.mxu0
    %v476 = vadd.f32 %v202, %v475
    %v477 = vpop.f32.mrf.mxu0
    %v478 = vadd.f32 %v202, %v477
    %479 = vmatmul.bf16.gmra.mxu0 %v242
    %v480 = vpop.f32.mrf.mxu0
    %v481 = vadd.f32 %v202, %v480
    %v482 = vpop.f32.mrf.mxu0
    %v483 = vadd.f32 %v202, %v482
    %484 = vmatmul.bf16.gmra.mxu0 %v243
    %v485 = vpop.f32.mrf.mxu0
    %v486 = vadd.f32 %v202, %v485
    %v487 = vpop.f32.mrf.mxu0
    %v488 = vadd.f32 %v202, %v487
    %489 = vmatmul.bf16.gmra.mxu0 %v244
    %v490 = vpop.f32.mrf.mxu0
    %v491 = vadd.f32 %v202, %v490
    %v492 = vpop.f32.mrf.mxu0
    %v493 = vadd.f32 %v202, %v492
    %494 = vmatmul.bf16.gmra.mxu0 %v245
    %v495 = vpop.f32.mrf.mxu0
    %v496 = vadd.f32 %v202, %v495
    %v497 = vpop.f32.mrf.mxu0
    %v498 = vadd.f32 %v202, %v497
    %499 = vmatmul.bf16.gmra.mxu0 %v246
    %v500 = vpop.f32.mrf.mxu0
    %v501 = vadd.f32 %v202, %v500
    %v502 = vpop.f32.mrf.mxu0
    %v503 = vadd.f32 %v202, %v502
    %504 = vmatmul.bf16.gmra.mxu0 %v247
    %v505 = vpop.f32.mrf.mxu0
    %v506 = vadd.f32 %v202, %v505
    %v507 = vpop.f32.mrf.mxu0
    %v508 = vadd.f32 %v202, %v507
    %509 = vmatmul.bf16.gmra.mxu0 %v248
    %v510 = vpop.f32.mrf.mxu0
    %v511 = vadd.f32 %v202, %v510
    %v512 = vpop.f32.mrf.mxu0
    %v513 = vadd.f32 %v202, %v512
    %514 = vdwg.mxu0
    %515 = vmatpush.bf16.msra.mxu0 %v383
    %516 = vmatpush.bf16.msra.mxu0 %v379
    %517 = vmatpush.bf16.msra.mxu0 %v375
    %518 = vmatpush.bf16.msra.mxu0 %v371
    %519 = vmatpush.bf16.msra.mxu0 %v367
    %520 = vmatpush.bf16.msra.mxu0 %v363
    %521 = vmatpush.bf16.msra.mxu0 %v359
    %522 = vmatpush.bf16.msra.mxu0 %v355
    %523 = vmatmul.bf16.gmra.mxu0 %v241
    %v524 = vpop.f32.mrf.mxu0
    %v525 = vadd.f32 %v203, %v524
    %v526 = vpop.f32.mrf.mxu0
    %v527 = vadd.f32 %v203, %v526
    %528 = vmatmul.bf16.gmra.mxu0 %v242
    %v529 = vpop.f32.mrf.mxu0
    %v530 = vadd.f32 %v203, %v529
    %v531 = vpop.f32.mrf.mxu0
    %v532 = vadd.f32 %v203, %v531
    %533 = vmatmul.bf16.gmra.mxu0 %v243
    %v534 = vpop.f32.mrf.mxu0
    %v535 = vadd.f32 %v203, %v534
    %v536 = vpop.f32.mrf.mxu0
    %v537 = vadd.f32 %v203, %v536
    %538 = vmatmul.bf16.gmra.mxu0 %v244
    %v539 = vpop.f32.mrf.mxu0
    %v540 = vadd.f32 %v203, %v539
    %v541 = vpop.f32.mrf.mxu0
    %v542 = vadd.f32 %v203, %v541
    %543 = vmatmul.bf16.gmra.mxu0 %v245
    %v544 = vpop.f32.mrf.mxu0
    %v545 = vadd.f32 %v203, %v544
    %v546 = vpop.f32.mrf.mxu0
    %v547 = vadd.f32 %v203, %v546
    %548 = vmatmul.bf16.gmra.mxu0 %v246
    %v549 = vpop.f32.mrf.mxu0
    %v550 = vadd.f32 %v203, %v549
    %v551 = vpop.f32.mrf.mxu0
    %v552 = vadd.f32 %v203, %v551
    %553 = vmatmul.bf16.gmra.mxu0 %v247
    %v554 = vpop.f32.mrf.mxu0
    %v555 = vadd.f32 %v203, %v554
    %v556 = vpop.f32.mrf.mxu0
    %v557 = vadd.f32 %v203, %v556
    %558 = vmatmul.bf16.gmra.mxu0 %v248
    %v559 = vpop.f32.mrf.mxu0
    %v560 = vadd.f32 %v203, %v559
    %v561 = vpop.f32.mrf.mxu0
    %v562 = vadd.f32 %v203, %v561
    %563 = vdwg.mxu0
    %564 = vmatpush.bf16.msra.mxu0 %v384
    %565 = vmatpush.bf16.msra.mxu0 %v380
    %566 = vmatpush.bf16.msra.mxu0 %v376
    %567 = vmatpush.bf16.msra.mxu0 %v372
    %568 = vmatpush.bf16.msra.mxu0 %v368
    %569 = vmatpush.bf16.msra.mxu0 %v364
    %570 = vmatpush.bf16.msra.mxu0 %v360
    %571 = vmatpush.bf16.msra.mxu0 %v356
    %572 = vmatmul.bf16.gmra.mxu0 %v241
    %v573 = vpop.f32.mrf.mxu0
    %v574 = vadd.f32 %v204, %v573
    %v575 = vpop.f32.mrf.mxu0
    %v576 = vadd.f32 %v204, %v575
    %577 = vmatmul.bf16.gmra.mxu0 %v242
    %v578 = vpop.f32.mrf.mxu0
    %v579 = vadd.f32 %v204, %v578
    %v580 = vpop.f32.mrf.mxu0
    %v581 = vadd.f32 %v204, %v580
    %582 = vmatmul.bf16.gmra.mxu0 %v243
    %v583 = vpop.f32.mrf.mxu0
    %v584 = vadd.f32 %v204, %v583
    %v585 = vpop.f32.mrf.mxu0
    %v586 = vadd.f32 %v204, %v585
    %587 = vmatmul.bf16.gmra.mxu0 %v244
    %v588 = vpop.f32.mrf.mxu0
    %v589 = vadd.f32 %v204, %v588
    %v590 = vpop.f32.mrf.mxu0
    %v591 = vadd.f32 %v204, %v590
    %592 = vmatmul.bf16.gmra.mxu0 %v245
    %v593 = vpop.f32.mrf.mxu0
    %v594 = vadd.f32 %v204, %v593
    %v595 = vpop.f32.mrf.mxu0
    %v596 = vadd.f32 %v204, %v595
    %597 = vmatmul.bf16.gmra.mxu0 %v246
    %v598 = vpop.f32.mrf.mxu0
    %v599 = vadd.f32 %v204, %v598
    %v600 = vpop.f32.mrf.mxu0
    %v601 = vadd.f32 %v204, %v600
    %602 = vmatmul.bf16.gmra.mxu0 %v247
    %v603 = vpop.f32.mrf.mxu0
    %v604 = vadd.f32 %v204, %v603
    %v605 = vpop.f32.mrf.mxu0
    %v606 = vadd.f32 %v204, %v605
    %607 = vmatmul.bf16.gmra.mxu0 %v248
    %v608 = vpop.f32.mrf.mxu0
    %v609 = vadd.f32 %v204, %v608
    %v610 = vpop.f32.mrf.mxu0
    %v611 = vadd.f32 %v204, %v610
    %612 = vdwg.mxu0
    %613 = vst [vmem:[#allocation5] sm:$0xff] %v427
    %614 = vst [vmem:[#allocation5 + $0x8] sm:$0xff] %v476
    %615 = vst [vmem:[#allocation5 + $0x10] sm:$0xff] %v525
    %616 = vst [vmem:[#allocation5 + $0x18] sm:$0xff] %v574
    %617 = vst [vmem:[#allocation5 + $0x20] sm:$0xff] %v429
    %618 = vst [vmem:[#allocation5 + $0x28] sm:$0xff] %v478
    %619 = vst [vmem:[#allocation5 + $0x30] sm:$0xff] %v527
    %620 = vst [vmem:[#allocation5 + $0x38] sm:$0xff] %v576
    %621 = vst [vmem:[#allocation5 + $0x40] sm:$0xff] %v432
    %622 = vst [vmem:[#allocation5 + $0x48] sm:$0xff] %v481
    %623 = vst [vmem:[#allocation5 + $0x50] sm:$0xff] %v530
    %624 = vst [vmem:[#allocation5 + $0x58] sm:$0xff] %v579
    %625 = vst [vmem:[#allocation5 + $0x60] sm:$0xff] %v434
    %626 = vst [vmem:[#allocation5 + $0x68] sm:$0xff] %v483
    %627 = vst [vmem:[#allocation5 + $0x70] sm:$0xff] %v532
    %628 = vst [vmem:[#allocation5 + $0x78] sm:$0xff] %v581
    %629 = vst [vmem:[#allocation5 + $0x80] sm:$0xff] %v437
    %630 = vst [vmem:[#allocation5 + $0x88] sm:$0xff] %v486
    %631 = vst [vmem:[#allocation5 + $0x90] sm:$0xff] %v535
    %632 = vst [vmem:[#allocation5 + $0x98] sm:$0xff] %v584
    %633 = vst [vmem:[#allocation5 + $0xa0] sm:$0xff] %v439
    %634 = vst [vmem:[#allocation5 + $0xa8] sm:$0xff] %v488
    %635 = vst [vmem:[#allocation5 + $0xb0] sm:$0xff] %v537
    %636 = vst [vmem:[#allocation5 + $0xb8] sm:$0xff] %v586
    %637 = vst [vmem:[#allocation5 + $0xc0] sm:$0xff] %v442
    %638 = vst [vmem:[#allocation5 + $0xc8] sm:$0xff] %v491
    %639 = vst [vmem:[#allocation5 + $0xd0] sm:$0xff] %v540
    %640 = vst [vmem:[#allocation5 + $0xd8] sm:$0xff] %v589
    %641 = vst [vmem:[#allocation5 + $0xe0] sm:$0xff] %v444
    %642 = vst [vmem:[#allocation5 + $0xe8] sm:$0xff] %v493
    %643 = vst [vmem:[#allocation5 + $0xf0] sm:$0xff] %v542
    %644 = vst [vmem:[#allocation5 + $0xf8] sm:$0xff] %v591
    %645 = vst [vmem:[#allocation5 + $0x100] sm:$0xff] %v447
    %646 = vst [vmem:[#allocation5 + $0x108] sm:$0xff] %v496
    %647 = vst [vmem:[#allocation5 + $0x110] sm:$0xff] %v545
    %648 = vst [vmem:[#allocation5 + $0x118] sm:$0xff] %v594
    %649 = vst [vmem:[#allocation5 + $0x120] sm:$0xff] %v449
    %650 = vst [vmem:[#allocation5 + $0x128] sm:$0xff] %v498
    %651 = vst [vmem:[#allocation5 + $0x130] sm:$0xff] %v547
    %652 = vst [vmem:[#allocation5 + $0x138] sm:$0xff] %v596
    %653 = vst [vmem:[#allocation5 + $0x140] sm:$0xff] %v452
    %654 = vst [vmem:[#allocation5 + $0x148] sm:$0xff] %v501
    %655 = vst [vmem:[#allocation5 + $0x150] sm:$0xff] %v550
    %656 = vst [vmem:[#allocation5 + $0x158] sm:$0xff] %v599
    %657 = vst [vmem:[#allocation5 + $0x160] sm:$0xff] %v454
    %658 = vst [vmem:[#allocation5 + $0x168] sm:$0xff] %v503
    %659 = vst [vmem:[#allocation5 + $0x170] sm:$0xff] %v552
    %660 = vst [vmem:[#allocation5 + $0x178] sm:$0xff] %v601
    %661 = vst [vmem:[#allocation5 + $0x180] sm:$0xff] %v457
    %662 = vst [vmem:[#allocation5 + $0x188] sm:$0xff] %v506
    %663 = vst [vmem:[#allocation5 + $0x190] sm:$0xff] %v555
    %664 = vst [vmem:[#allocation5 + $0x198] sm:$0xff] %v604
    %665 = vst [vmem:[#allocation5 + $0x1a0] sm:$0xff] %v459
    %666 = vst [vmem:[#allocation5 + $0x1a8] sm:$0xff] %v508
    %667 = vst [vmem:[#allocation5 + $0x1b0] sm:$0xff] %v557
    %668 = vst [vmem:[#allocation5 + $0x1b8] sm:$0xff] %v606
    %669 = vst [vmem:[#allocation5 + $0x1c0] sm:$0xff] %v462
    %670 = vst [vmem:[#allocation5 + $0x1c8] sm:$0xff] %v511
    %671 = vst [vmem:[#allocation5 + $0x1d0] sm:$0xff] %v560
    %672 = vst [vmem:[#allocation5 + $0x1d8] sm:$0xff] %v609
    %673 = vst [vmem:[#allocation5 + $0x1e0] sm:$0xff] %v464
    %674 = vst [vmem:[#allocation5 + $0x1e8] sm:$0xff] %v513
    %675 = vst [vmem:[#allocation5 + $0x1f0] sm:$0xff] %v562
    %676 = vst [vmem:[#allocation5 + $0x1f8] sm:$0xff] %v611
    %v677 = vld [vmem:[#allocation12] sm:$0xff]
    %v678 = vld [vmem:[#allocation12 + $0x8] sm:$0xff]
    %v679 = vld [vmem:[#allocation12 + $0x10] sm:$0xff]
    %v680 = vld [vmem:[#allocation12 + $0x18] sm:$0xff]
    %v681 = vld [vmem:[#allocation12 + $0x20] sm:$0xff]
    %v682 = vld [vmem:[#allocation12 + $0x28] sm:$0xff]
    %v683 = vld [vmem:[#allocation12 + $0x30] sm:$0xff]
    %v684 = vld [vmem:[#allocation12 + $0x38] sm:$0xff]
    %v685 = vld [vmem:[#allocation12 + $0x40] sm:$0xff]
    %v686 = vld [vmem:[#allocation12 + $0x48] sm:$0xff]
    %v687 = vld [vmem:[#allocation12 + $0x50] sm:$0xff]
    %v688 = vld [vmem:[#allocation12 + $0x58] sm:$0xff]
    %v689 = vld [vmem:[#allocation12 + $0x60] sm:$0xff]
    %v690 = vld [vmem:[#allocation12 + $0x68] sm:$0xff]
    %v691 = vld [vmem:[#allocation12 + $0x70] sm:$0xff]
    %v692 = vld [vmem:[#allocation12 + $0x78] sm:$0xff]
    %v693 = vld [vmem:[#allocation12 + $0x80] sm:$0xff]
    %v694 = vld [vmem:[#allocation12 + $0x88] sm:$0xff]
    %v695 = vld [vmem:[#allocation12 + $0x90] sm:$0xff]
    %v696 = vld [vmem:[#allocation12 + $0x98] sm:$0xff]
    %v697 = vld [vmem:[#allocation12 + $0xa0] sm:$0xff]
    %v698 = vld [vmem:[#allocation12 + $0xa8] sm:$0xff]
    %v699 = vld [vmem:[#allocation12 + $0xb0] sm:$0xff]
    %v700 = vld [vmem:[#allocation12 + $0xb8] sm:$0xff]
    %v701 = vld [vmem:[#allocation12 + $0xc0] sm:$0xff]
    %v702 = vld [vmem:[#allocation12 + $0xc8] sm:$0xff]
    %v703 = vld [vmem:[#allocation12 + $0xd0] sm:$0xff]
    %v704 = vld [vmem:[#allocation12 + $0xd8] sm:$0xff]
    %v705 = vld [vmem:[#allocation12 + $0xe0] sm:$0xff]
    %v706 = vld [vmem:[#allocation12 + $0xe8] sm:$0xff]
    %v707 = vld [vmem:[#allocation12 + $0xf0] sm:$0xff]
    %v708 = vld [vmem:[#allocation12 + $0xf8] sm:$0xff]
    %v709 = vld [vmem:[#allocation2] sm:$0xff]
    %v710 = vld [vmem:[#allocation2 + $0x8] sm:$0xff]
    %v711 = vld [vmem:[#allocation3] sm:$0xff]
    %v712 = vld [vmem:[#allocation3 + $0x8] sm:$0xff]
    %v713 = vld [vmem:[#allocation5] sm:$0xff]
    %v714 = vld [vmem:[#allocation5 + $0x8] sm:$0xff]
    %v715 = vld [vmem:[#allocation5 + $0x10] sm:$0xff]
    %v716 = vld [vmem:[#allocation5 + $0x18] sm:$0xff]
    %v717 = vld [vmem:[#allocation5 + $0x20] sm:$0xff]
    %v718 = vld [vmem:[#allocation5 + $0x28] sm:$0xff]
    %v719 = vld [vmem:[#allocation5 + $0x30] sm:$0xff]
    %v720 = vld [vmem:[#allocation5 + $0x38] sm:$0xff]
    %v721 = vpack.c.bf16 %v710, %v709
    %v754 = vunpack.c.l.b16 %v677
    %v755 = vunpack.c.h.b16 %v677
    %v756 = vunpack.c.l.b16 %v678
    %v757 = vunpack.c.h.b16 %v678
    %v758 = vunpack.c.l.b16 %v679
    %v759 = vunpack.c.h.b16 %v679
    %v760 = vunpack.c.l.b16 %v680
    %v761 = vunpack.c.h.b16 %v680
    %v762 = vunpack.c.l.b16 %v681
    %v763 = vunpack.c.h.b16 %v681
    %v764 = vunpack.c.l.b16 %v682
    %v765 = vunpack.c.h.b16 %v682
    %v766 = vunpack.c.l.b16 %v683
    %v767 = vunpack.c.h.b16 %v683
    %v768 = vunpack.c.l.b16 %v684
    %v769 = vunpack.c.h.b16 %v684
    %v770 = vunpack.c.l.b16 %v685
    %v771 = vunpack.c.h.b16 %v685
    %v772 = vunpack.c.l.b16 %v686
    %v773 = vunpack.c.h.b16 %v686
    %v774 = vunpack.c.l.b16 %v687
    %v775 = vunpack.c.h.b16 %v687
    %v776 = vunpack.c.l.b16 %v688
    %v777 = vunpack.c.h.b16 %v688
    %v778 = vunpack.c.l.b16 %v689
    %v779 = vunpack.c.h.b16 %v689
    %v780 = vunpack.c.l.b16 %v690
    %v781 = vunpack.c.h.b16 %v690
    %v782 = vunpack.c.l.b16 %v691
    %v783 = vunpack.c.h.b16 %v691
    %v784 = vunpack.c.l.b16 %v692
    %v785 = vunpack.c.h.b16 %v692
    %v786 = vunpack.c.l.b16 %v693
    %v787 = vunpack.c.h.b16 %v693
    %v788 = vunpack.c.l.b16 %v694
    %v789 = vunpack.c.h.b16 %v694
    %v790 = vunpack.c.l.b16 %v695
    %v791 = vunpack.c.h.b16 %v695
    %v792 = vunpack.c.l.b16 %v696
    %v793 = vunpack.c.h.b16 %v696
    %v794 = vunpack.c.l.b16 %v697
    %v795 = vunpack.c.h.b16 %v697
    %v796 = vunpack.c.l.b16 %v698
    %v797 = vunpack.c.h.b16 %v698
    %v798 = vunpack.c.l.b16 %v699
    %v799 = vunpack.c.h.b16 %v699
    %v800 = vunpack.c.l.b16 %v700
    %v801 = vunpack.c.h.b16 %v700
    %v802 = vunpack.c.l.b16 %v701
    %v803 = vunpack.c.h.b16 %v701
    %v804 = vunpack.c.l.b16 %v702
    %v805 = vunpack.c.h.b16 %v702
    %v806 = vunpack.c.l.b16 %v703
    %v807 = vunpack.c.h.b16 %v703
    %v808 = vunpack.c.l.b16 %v704
    %v809 = vunpack.c.h.b16 %v704
    %v810 = vunpack.c.l.b16 %v705
    %v811 = vunpack.c.h.b16 %v705
    %v812 = vunpack.c.l.b16 %v706
    %v813 = vunpack.c.h.b16 %v706
    %v814 = vunpack.c.l.b16 %v707
    %v815 = vunpack.c.h.b16 %v707
    %v816 = vunpack.c.l.b16 %v708
    %v817 = vunpack.c.h.b16 %v708
    %v818 = vpack.c.b16 %v758, %v754
    %v819 = vpack.c.b16 %v759, %v755
    %v820 = vpack.c.b16 %v760, %v756
    %v821 = vpack.c.b16 %v761, %v757
    %v822 = vpack.c.b16 %v766, %v762
    %v823 = vpack.c.b16 %v767, %v763
    %v824 = vpack.c.b16 %v768, %v764
    %v825 = vpack.c.b16 %v769, %v765
    %v826 = vpack.c.b16 %v774, %v770
    %v827 = vpack.c.b16 %v775, %v771
    %v828 = vpack.c.b16 %v776, %v772
    %v829 = vpack.c.b16 %v777, %v773
    %v830 = vpack.c.b16 %v782, %v778
    %v831 = vpack.c.b16 %v783, %v779
    %v832 = vpack.c.b16 %v784, %v780
    %v833 = vpack.c.b16 %v785, %v781
    %v834 = vpack.c.b16 %v790, %v786
    %v835 = vpack.c.b16 %v791, %v787
    %v836 = vpack.c.b16 %v792, %v788
    %v837 = vpack.c.b16 %v793, %v789
    %v838 = vpack.c.b16 %v798, %v794
    %v839 = vpack.c.b16 %v799, %v795
    %v840 = vpack.c.b16 %v800, %v796
    %v841 = vpack.c.b16 %v801, %v797
    %v842 = vpack.c.b16 %v806, %v802
    %v843 = vpack.c.b16 %v807, %v803
    %v844 = vpack.c.b16 %v808, %v804
    %v845 = vpack.c.b16 %v809, %v805
    %v846 = vpack.c.b16 %v814, %v810
    %v847 = vpack.c.b16 %v815, %v811
    %v848 = vpack.c.b16 %v816, %v812
    %v849 = vpack.c.b16 %v817, %v813
    %882 = vmatpush.bf16.msra.mxu0 %v846
    %883 = vmatpush.bf16.msra.mxu0 %v842
    %884 = vmatpush.bf16.msra.mxu0 %v838
    %885 = vmatpush.bf16.msra.mxu0 %v834
    %886 = vmatpush.bf16.msra.mxu0 %v830
    %887 = vmatpush.bf16.msra.mxu0 %v826
    %888 = vmatpush.bf16.msra.mxu0 %v822
    %889 = vmatpush.bf16.msra.mxu0 %v818
    %890 = vmatmul.bf16.gmra.mxu0 %v721
    %v891 = vpop.f32.mrf.mxu0
    %v892 = vadd.f32 0.0, %v891
    %v893 = vpop.f32.mrf.mxu0
    %v894 = vadd.f32 0.0, %v893
    %895 = vdwg.mxu0
    %896 = vmatpush.bf16.msra.mxu0 %v847
    %897 = vmatpush.bf16.msra.mxu0 %v843
    %898 = vmatpush.bf16.msra.mxu0 %v839
    %899 = vmatpush.bf16.msra.mxu0 %v835
    %900 = vmatpush.bf16.msra.mxu0 %v831
    %901 = vmatpush.bf16.msra.mxu0 %v827
    %902 = vmatpush.bf16.msra.mxu0 %v823
    %903 = vmatpush.bf16.msra.mxu0 %v819
    %904 = vmatmul.bf16.gmra.mxu0 %v721
    %v905 = vpop.f32.mrf.mxu0
    %v906 = vadd.f32 0.0, %v905
    %v907 = vpop.f32.mrf.mxu0
    %v908 = vadd.f32 0.0, %v907
    %909 = vdwg.mxu0
    %910 = vmatpush.bf16.msra.mxu0 %v848
    %911 = vmatpush.bf16.msra.mxu0 %v844
    %912 = vmatpush.bf16.msra.mxu0 %v840
    %913 = vmatpush.bf16.msra.mxu0 %v836
    %914 = vmatpush.bf16.msra.mxu0 %v832
    %915 = vmatpush.bf16.msra.mxu0 %v828
    %916 = vmatpush.bf16.msra.mxu0 %v824
    %917 = vmatpush.bf16.msra.mxu0 %v820
    %918 = vmatmul.bf16.gmra.mxu0 %v721
    %v919 = vpop.f32.mrf.mxu0
    %v920 = vadd.f32 0.0, %v919
    %v921 = vpop.f32.mrf.mxu0
    %v922 = vadd.f32 0.0, %v921
    %923 = vdwg.mxu0
    %924 = vmatpush.bf16.msra.mxu0 %v849
    %925 = vmatpush.bf16.msra.mxu0 %v845
    %926 = vmatpush.bf16.msra.mxu0 %v841
    %927 = vmatpush.bf16.msra.mxu0 %v837
    %928 = vmatpush.bf16.msra.mxu0 %v833
    %929 = vmatpush.bf16.msra.mxu0 %v829
    %930 = vmatpush.bf16.msra.mxu0 %v825
    %931 = vmatpush.bf16.msra.mxu0 %v821
    %932 = vmatmul.bf16.gmra.mxu0 %v721
    %v933 = vpop.f32.mrf.mxu0
    %v934 = vadd.f32 0.0, %v933
    %v935 = vpop.f32.mrf.mxu0
    %v936 = vadd.f32 0.0, %v935
    %937 = vdwg.mxu0
    %v938 = vadd.f32 %v713, %v892
    %v939 = vadd.f32 %v714, %v906
    %v940 = vadd.f32 %v715, %v920
    %v941 = vadd.f32 %v716, %v934
    %v942 = vadd.f32 %v717, %v894
    %v943 = vadd.f32 %v718, %v908
    %v944 = vadd.f32 %v719, %v922
    %v945 = vadd.f32 %v720, %v936
    %v946 = vmul.f32 %v938, 0.5
    %v947 = vmul.f32 %v942, 0.5
    %v948 = vtanh.pop %v946
    %v949 = vtanh.pop %v947
    %v950 = vmul.f32 %v948, 0.5
    %v951 = vmul.f32 %v949, 0.5
    %v952 = vadd.f32 %v950, 0.5
    %v953 = vadd.f32 %v951, 0.5
    %v954 = vmul.f32 %v939, 0.5
    %v955 = vmul.f32 %v943, 0.5
    %v956 = vtanh.pop %v954
    %v957 = vtanh.pop %v955
    %v958 = vmul.f32 %v956, 0.5
    %v959 = vmul.f32 %v957, 0.5
    %v960 = vadd.f32 %v958, 0.5
    %v961 = vadd.f32 %v959, 0.5
    %v962 = vtanh.pop %v940
    %v963 = vtanh.pop %v944
    %v964 = vmul.f32 %v941, 0.5
    %v965 = vmul.f32 %v945, 0.5
    %v966 = vtanh.pop %v964
    %v967 = vtanh.pop %v965
    %v968 = vmul.f32 %v966, 0.5
    %v969 = vmul.f32 %v967, 0.5
    %v970 = vadd.f32 %v968, 0.5
    %v971 = vadd.f32 %v969, 0.5
    %v972 = vmul.f32 %v960, %v711
    %v973 = vmul.f32 %v961, %v712
    %v974 = vmul.f32 %v952, %v962
    %v975 = vmul.f32 %v953, %v963
    %v976 = vadd.f32 %v972, %v974
    %v977 = vadd.f32 %v973, %v975
    %v978 = vtanh.pop %v976
    %v979 = vtanh.pop %v977
    %v980 = vmul.f32 %v970, %v978
    %v981 = vmul.f32 %v971, %v979
    %v982 = vpack.c.bf16 %v980, %v980
    %v983 = vpack.c.bf16 %v981, %v981
    %984 = vst [vmem:[#allocation4] sm:$0xf] %v982
    %985 = vst [vmem:[#allocation4 + $0x4] sm:$0xf] %v983
    %s986 = scalar_lea.vmem [#allocation5], 64
    %v987 = vld [vmem:[%s986] sm:$0xff]
    %v988 = vld [vmem:[%s986 + $0x8] sm:$0xff]
    %v989 = vld [vmem:[%s986 + $0x10] sm:$0xff]
    %v990 = vld [vmem:[%s986 + $0x18] sm:$0xff]
    %v991 = vld [vmem:[%s986 + $0x20] sm:$0xff]
    %v992 = vld [vmem:[%s986 + $0x28] sm:$0xff]
    %v993 = vld [vmem:[%s986 + $0x30] sm:$0xff]
    %v994 = vld [vmem:[%s986 + $0x38] sm:$0xff]
    %v997 = vunpack.c.l.b16 %v982
    %v998 = vunpack.c.l.b16 %v983
    %v999 = vpack.c.b16 %v998, %v997
    %1001 = vmatpush.bf16.msra.mxu0 %v846
    %1002 = vmatpush.bf16.msra.mxu0 %v842
    %1003 = vmatpush.bf16.msra.mxu0 %v838
    %1004 = vmatpush.bf16.msra.mxu0 %v834
    %1005 = vmatpush.bf16.msra.mxu0 %v830
    %1006 = vmatpush.bf16.msra.mxu0 %v826
    %1007 = vmatpush.bf16.msra.mxu0 %v822
    %1008 = vmatpush.bf16.msra.mxu0 %v818
    %1009 = vmatmul.bf16.gmra.mxu0 %v999
    %v1010 = vpop.f32.mrf.mxu0
    %v1011 = vadd.f32 0.0, %v1010
    %v1012 = vpop.f32.mrf.mxu0
    %v1013 = vadd.f32 0.0, %v1012
    %1014 = vdwg.mxu0
    %1015 = vmatpush.bf16.msra.mxu0 %v847
    %1016 = vmatpush.bf16.msra.mxu0 %v843
    %1017 = vmatpush.bf16.msra.mxu0 %v839
    %1018 = vmatpush.bf16.msra.mxu0 %v835
    %1019 = vmatpush.bf16.msra.mxu0 %v831
    %1020 = vmatpush.bf16.msra.mxu0 %v827
    %1021 = vmatpush.bf16.msra.mxu0 %v823
    %1022 = vmatpush.bf16.msra.mxu0 %v819
    %1023 = vmatmul.bf16.gmra.mxu0 %v999
    %v1024 = vpop.f32.mrf.mxu0
    %v1025 = vadd.f32 0.0, %v1024
    %v1026 = vpop.f32.mrf.mxu0
    %v1027 = vadd.f32 0.0, %v1026
    %1028 = vdwg.mxu0
    %1029 = vmatpush.bf16.msra.mxu0 %v848
    %1030 = vmatpush.bf16.msra.mxu0 %v844
    %1031 = vmatpush.bf16.msra.mxu0 %v840
    %1032 = vmatpush.bf16.msra.mxu0 %v836
    %1033 = vmatpush.bf16.msra.mxu0 %v832
    %1034 = vmatpush.bf16.msra.mxu0 %v828
    %1035 = vmatpush.bf16.msra.mxu0 %v824
    %1036 = vmatpush.bf16.msra.mxu0 %v820
    %1037 = vmatmul.bf16.gmra.mxu0 %v999
    %v1038 = vpop.f32.mrf.mxu0
    %v1039 = vadd.f32 0.0, %v1038
    %v1040 = vpop.f32.mrf.mxu0
    %v1041 = vadd.f32 0.0, %v1040
    %1042 = vdwg.mxu0
    %1043 = vmatpush.bf16.msra.mxu0 %v849
    %1044 = vmatpush.bf16.msra.mxu0 %v845
    %1045 = vmatpush.bf16.msra.mxu0 %v841
    %1046 = vmatpush.bf16.msra.mxu0 %v837
    %1047 = vmatpush.bf16.msra.mxu0 %v833
    %1048 = vmatpush.bf16.msra.mxu0 %v829
    %1049 = vmatpush.bf16.msra.mxu0 %v825
    %1050 = vmatpush.bf16.msra.mxu0 %v821
    %1051 = vmatmul.bf16.gmra.mxu0 %v999
    %v1052 = vpop.f32.mrf.mxu0
    %v1053 = vadd.f32 0.0, %v1052
    %v1054 = vpop.f32.mrf.mxu0
    %v1055 = vadd.f32 0.0, %v1054
    %1056 = vdwg.mxu0
    %v1057 = vadd.f32 %v987, %v1011
    %v1058 = vadd.f32 %v988, %v1025
    %v1059 = vadd.f32 %v989, %v1039
    %v1060 = vadd.f32 %v990, %v1053
    %v1061 = vadd.f32 %v991, %v1013
    %v1062 = vadd.f32 %v992, %v1027
    %v1063 = vadd.f32 %v993, %v1041
    %v1064 = vadd.f32 %v994, %v1055
    %v1065 = vmul.f32 %v1057, 0.5
    %v1066 = vmul.f32 %v1061, 0.5
    %v1067 = vtanh.pop %v1065
    %v1068 = vtanh.pop %v1066
    %v1069 = vmul.f32 %v1067, 0.5
    %v1070 = vmul.f32 %v1068, 0.5
    %v1071 = vadd.f32 %v1069, 0.5
    %v1072 = vadd.f32 %v1070, 0.5
    %v1073 = vmul.f32 %v1058, 0.5
    %v1074 = vmul.f32 %v1062, 0.5
    %v1075 = vtanh.pop %v1073
    %v1076 = vtanh.pop %v1074
    %v1077 = vmul.f32 %v1075, 0.5
    %v1078 = vmul.f32 %v1076, 0.5
    %v1079 = vadd.f32 %v1077, 0.5
    %v1080 = vadd.f32 %v1078, 0.5
    %v1081 = vtanh.pop %v1059
    %v1082 = vtanh.pop %v1063
    %v1083 = vmul.f32 %v1060, 0.5
    %v1084 = vmul.f32 %v1064, 0.5
    %v1085 = vtanh.pop %v1083
    %v1086 = vtanh.pop %v1084
    %v1087 = vmul.f32 %v1085, 0.5
    %v1088 = vmul.f32 %v1086, 0.5
    %v1089 = vadd.f32 %v1087, 0.5
    %v1090 = vadd.f32 %v1088, 0.5
    %v1091 = vmul.f32 %v1079, %v976
    %v1092 = vmul.f32 %v1080, %v977
    %v1093 = vmul.f32 %v1071, %v1081
    %v1094 = vmul.f32 %v1072, %v1082
    %v1095 = vadd.f32 %v1091, %v1093
    %v1096 = vadd.f32 %v1092, %v1094
    %v1097 = vtanh.pop %v1095
    %v1098 = vtanh.pop %v1096
    %v1099 = vmul.f32 %v1089, %v1097
    %v1100 = vmul.f32 %v1090, %v1098
    %v1101 = vpack.c.bf16 %v1099, %v1099
    %v1102 = vpack.c.bf16 %v1100, %v1100
    %s1103 = scalar_lea.vmem [#allocation4], 8
    %1104 = vst [vmem:[%s1103] sm:$0xf] %v1101
    %1105 = vst [vmem:[%s1103 + $0x4] sm:$0xf] %v1102
    %s1106 = scalar_lea.vmem [#allocation5], 128
    %v1107 = vld [vmem:[%s1106] sm:$0xff]
    %v1108 = vld [vmem:[%s1106 + $0x8] sm:$0xff]
    %v1109 = vld [vmem:[%s1106 + $0x10] sm:$0xff]
    %v1110 = vld [vmem:[%s1106 + $0x18] sm:$0xff]
    %v1111 = vld [vmem:[%s1106 + $0x20] sm:$0xff]
    %v1112 = vld [vmem:[%s1106 + $0x28] sm:$0xff]
    %v1113 = vld [vmem:[%s1106 + $0x30] sm:$0xff]
    %v1114 = vld [vmem:[%s1106 + $0x38] sm:$0xff]
    %v1117 = vunpack.c.l.b16 %v1101
    %v1118 = vunpack.c.l.b16 %v1102
    %v1119 = vpack.c.b16 %v1118, %v1117
    %1121 = vmatpush.bf16.msra.mxu0 %v846
    %1122 = vmatpush.bf16.msra.mxu0 %v842
    %1123 = vmatpush.bf16.msra.mxu0 %v838
    %1124 = vmatpush.bf16.msra.mxu0 %v834
    %1125 = vmatpush.bf16.msra.mxu0 %v830
    %1126 = vmatpush.bf16.msra.mxu0 %v826
    %1127 = vmatpush.bf16.msra.mxu0 %v822
    %1128 = vmatpush.bf16.msra.mxu0 %v818
    %1129 = vmatmul.bf16.gmra.mxu0 %v1119
    %v1130 = vpop.f32.mrf.mxu0
    %v1131 = vadd.f32 0.0, %v1130
    %v1132 = vpop.f32.mrf.mxu0
    %v1133 = vadd.f32 0.0, %v1132
    %1134 = vdwg.mxu0
    %1135 = vmatpush.bf16.msra.mxu0 %v847
    %1136 = vmatpush.bf16.msra.mxu0 %v843
    %1137 = vmatpush.bf16.msra.mxu0 %v839
    %1138 = vmatpush.bf16.msra.mxu0 %v835
    %1139 = vmatpush.bf16.msra.mxu0 %v831
    %1140 = vmatpush.bf16.msra.mxu0 %v827
    %1141 = vmatpush.bf16.msra.mxu0 %v823
    %1142 = vmatpush.bf16.msra.mxu0 %v819
    %1143 = vmatmul.bf16.gmra.mxu0 %v1119
    %v1144 = vpop.f32.mrf.mxu0
    %v1145 = vadd.f32 0.0, %v1144
    %v1146 = vpop.f32.mrf.mxu0
    %v1147 = vadd.f32 0.0, %v1146
    %1148 = vdwg.mxu0
    %1149 = vmatpush.bf16.msra.mxu0 %v848
    %1150 = vmatpush.bf16.msra.mxu0 %v844
    %1151 = vmatpush.bf16.msra.mxu0 %v840
    %1152 = vmatpush.bf16.msra.mxu0 %v836
    %1153 = vmatpush.bf16.msra.mxu0 %v832
    %1154 = vmatpush.bf16.msra.mxu0 %v828
    %1155 = vmatpush.bf16.msra.mxu0 %v824
    %1156 = vmatpush.bf16.msra.mxu0 %v820
    %1157 = vmatmul.bf16.gmra.mxu0 %v1119
    %v1158 = vpop.f32.mrf.mxu0
    %v1159 = vadd.f32 0.0, %v1158
    %v1160 = vpop.f32.mrf.mxu0
    %v1161 = vadd.f32 0.0, %v1160
    %1162 = vdwg.mxu0
    %1163 = vmatpush.bf16.msra.mxu0 %v849
    %1164 = vmatpush.bf16.msra.mxu0 %v845
    %1165 = vmatpush.bf16.msra.mxu0 %v841
    %1166 = vmatpush.bf16.msra.mxu0 %v837
    %1167 = vmatpush.bf16.msra.mxu0 %v833
    %1168 = vmatpush.bf16.msra.mxu0 %v829
    %1169 = vmatpush.bf16.msra.mxu0 %v825
    %1170 = vmatpush.bf16.msra.mxu0 %v821
    %1171 = vmatmul.bf16.gmra.mxu0 %v1119
    %v1172 = vpop.f32.mrf.mxu0
    %v1173 = vadd.f32 0.0, %v1172
    %v1174 = vpop.f32.mrf.mxu0
    %v1175 = vadd.f32 0.0, %v1174
    %1176 = vdwg.mxu0
    %v1177 = vadd.f32 %v1107, %v1131
    %v1178 = vadd.f32 %v1108, %v1145
    %v1179 = vadd.f32 %v1109, %v1159
    %v1180 = vadd.f32 %v1110, %v1173
    %v1181 = vadd.f32 %v1111, %v1133
    %v1182 = vadd.f32 %v1112, %v1147
    %v1183 = vadd.f32 %v1113, %v1161
    %v1184 = vadd.f32 %v1114, %v1175
    %v1185 = vmul.f32 %v1177, 0.5
    %v1186 = vmul.f32 %v1181, 0.5
    %v1187 = vtanh.pop %v1185
    %v1188 = vtanh.pop %v1186
    %v1189 = vmul.f32 %v1187, 0.5
    %v1190 = vmul.f32 %v1188, 0.5
    %v1191 = vadd.f32 %v1189, 0.5
    %v1192 = vadd.f32 %v1190, 0.5
    %v1193 = vmul.f32 %v1178, 0.5
    %v1194 = vmul.f32 %v1182, 0.5
    %v1195 = vtanh.pop %v1193
    %v1196 = vtanh.pop %v1194
    %v1197 = vmul.f32 %v1195, 0.5
    %v1198 = vmul.f32 %v1196, 0.5
    %v1199 = vadd.f32 %v1197, 0.5
    %v1200 = vadd.f32 %v1198, 0.5
    %v1201 = vtanh.pop %v1179
    %v1202 = vtanh.pop %v1183
    %v1203 = vmul.f32 %v1180, 0.5
    %v1204 = vmul.f32 %v1184, 0.5
    %v1205 = vtanh.pop %v1203
    %v1206 = vtanh.pop %v1204
    %v1207 = vmul.f32 %v1205, 0.5
    %v1208 = vmul.f32 %v1206, 0.5
    %v1209 = vadd.f32 %v1207, 0.5
    %v1210 = vadd.f32 %v1208, 0.5
    %v1211 = vmul.f32 %v1199, %v1095
    %v1212 = vmul.f32 %v1200, %v1096
    %v1213 = vmul.f32 %v1191, %v1201
    %v1214 = vmul.f32 %v1192, %v1202
    %v1215 = vadd.f32 %v1211, %v1213
    %v1216 = vadd.f32 %v1212, %v1214
    %v1217 = vtanh.pop %v1215
    %v1218 = vtanh.pop %v1216
    %v1219 = vmul.f32 %v1209, %v1217
    %v1220 = vmul.f32 %v1210, %v1218
    %v1221 = vpack.c.bf16 %v1219, %v1219
    %v1222 = vpack.c.bf16 %v1220, %v1220
    %s1223 = scalar_lea.vmem [#allocation4], 16
    %1224 = vst [vmem:[%s1223] sm:$0xf] %v1221
    %1225 = vst [vmem:[%s1223 + $0x4] sm:$0xf] %v1222
    %s1226 = scalar_lea.vmem [#allocation5], 192
    %v1227 = vld [vmem:[%s1226] sm:$0xff]
    %v1228 = vld [vmem:[%s1226 + $0x8] sm:$0xff]
    %v1229 = vld [vmem:[%s1226 + $0x10] sm:$0xff]
    %v1230 = vld [vmem:[%s1226 + $0x18] sm:$0xff]
    %v1231 = vld [vmem:[%s1226 + $0x20] sm:$0xff]
    %v1232 = vld [vmem:[%s1226 + $0x28] sm:$0xff]
    %v1233 = vld [vmem:[%s1226 + $0x30] sm:$0xff]
    %v1234 = vld [vmem:[%s1226 + $0x38] sm:$0xff]
    %v1237 = vunpack.c.l.b16 %v1221
    %v1238 = vunpack.c.l.b16 %v1222
    %v1239 = vpack.c.b16 %v1238, %v1237
    %1241 = vmatpush.bf16.msra.mxu0 %v846
    %1242 = vmatpush.bf16.msra.mxu0 %v842
    %1243 = vmatpush.bf16.msra.mxu0 %v838
    %1244 = vmatpush.bf16.msra.mxu0 %v834
    %1245 = vmatpush.bf16.msra.mxu0 %v830
    %1246 = vmatpush.bf16.msra.mxu0 %v826
    %1247 = vmatpush.bf16.msra.mxu0 %v822
    %1248 = vmatpush.bf16.msra.mxu0 %v818
    %1249 = vmatmul.bf16.gmra.mxu0 %v1239
    %v1250 = vpop.f32.mrf.mxu0
    %v1251 = vadd.f32 0.0, %v1250
    %v1252 = vpop.f32.mrf.mxu0
    %v1253 = vadd.f32 0.0, %v1252
    %1254 = vdwg.mxu0
    %1255 = vmatpush.bf16.msra.mxu0 %v847
    %1256 = vmatpush.bf16.msra.mxu0 %v843
    %1257 = vmatpush.bf16.msra.mxu0 %v839
    %1258 = vmatpush.bf16.msra.mxu0 %v835
    %1259 = vmatpush.bf16.msra.mxu0 %v831
    %1260 = vmatpush.bf16.msra.mxu0 %v827
    %1261 = vmatpush.bf16.msra.mxu0 %v823
    %1262 = vmatpush.bf16.msra.mxu0 %v819
    %1263 = vmatmul.bf16.gmra.mxu0 %v1239
    %v1264 = vpop.f32.mrf.mxu0
    %v1265 = vadd.f32 0.0, %v1264
    %v1266 = vpop.f32.mrf.mxu0
    %v1267 = vadd.f32 0.0, %v1266
    %1268 = vdwg.mxu0
    %1269 = vmatpush.bf16.msra.mxu0 %v848
    %1270 = vmatpush.bf16.msra.mxu0 %v844
    %1271 = vmatpush.bf16.msra.mxu0 %v840
    %1272 = vmatpush.bf16.msra.mxu0 %v836
    %1273 = vmatpush.bf16.msra.mxu0 %v832
    %1274 = vmatpush.bf16.msra.mxu0 %v828
    %1275 = vmatpush.bf16.msra.mxu0 %v824
    %1276 = vmatpush.bf16.msra.mxu0 %v820
    %1277 = vmatmul.bf16.gmra.mxu0 %v1239
    %v1278 = vpop.f32.mrf.mxu0
    %v1279 = vadd.f32 0.0, %v1278
    %v1280 = vpop.f32.mrf.mxu0
    %v1281 = vadd.f32 0.0, %v1280
    %1282 = vdwg.mxu0
    %1283 = vmatpush.bf16.msra.mxu0 %v849
    %1284 = vmatpush.bf16.msra.mxu0 %v845
    %1285 = vmatpush.bf16.msra.mxu0 %v841
    %1286 = vmatpush.bf16.msra.mxu0 %v837
    %1287 = vmatpush.bf16.msra.mxu0 %v833
    %1288 = vmatpush.bf16.msra.mxu0 %v829
    %1289 = vmatpush.bf16.msra.mxu0 %v825
    %1290 = vmatpush.bf16.msra.mxu0 %v821
    %1291 = vmatmul.bf16.gmra.mxu0 %v1239
    %v1292 = vpop.f32.mrf.mxu0
    %v1293 = vadd.f32 0.0, %v1292
    %v1294 = vpop.f32.mrf.mxu0
    %v1295 = vadd.f32 0.0, %v1294
    %1296 = vdwg.mxu0
    %v1297 = vadd.f32 %v1227, %v1251
    %v1298 = vadd.f32 %v1228, %v1265
    %v1299 = vadd.f32 %v1229, %v1279
    %v1300 = vadd.f32 %v1230, %v1293
    %v1301 = vadd.f32 %v1231, %v1253
    %v1302 = vadd.f32 %v1232, %v1267
    %v1303 = vadd.f32 %v1233, %v1281
    %v1304 = vadd.f32 %v1234, %v1295
    %v1305 = vmul.f32 %v1297, 0.5
    %v1306 = vmul.f32 %v1301, 0.5
    %v1307 = vtanh.pop %v1305
    %v1308 = vtanh.pop %v1306
    %v1309 = vmul.f32 %v1307, 0.5
    %v1310 = vmul.f32 %v1308, 0.5
    %v1311 = vadd.f32 %v1309, 0.5
    %v1312 = vadd.f32 %v1310, 0.5
    %v1313 = vmul.f32 %v1298, 0.5
    %v1314 = vmul.f32 %v1302, 0.5
    %v1315 = vtanh.pop %v1313
    %v1316 = vtanh.pop %v1314
    %v1317 = vmul.f32 %v1315, 0.5
    %v1318 = vmul.f32 %v1316, 0.5
    %v1319 = vadd.f32 %v1317, 0.5
    %v1320 = vadd.f32 %v1318, 0.5
    %v1321 = vtanh.pop %v1299
    %v1322 = vtanh.pop %v1303
    %v1323 = vmul.f32 %v1300, 0.5
    %v1324 = vmul.f32 %v1304, 0.5
    %v1325 = vtanh.pop %v1323
    %v1326 = vtanh.pop %v1324
    %v1327 = vmul.f32 %v1325, 0.5
    %v1328 = vmul.f32 %v1326, 0.5
    %v1329 = vadd.f32 %v1327, 0.5
    %v1330 = vadd.f32 %v1328, 0.5
    %v1331 = vmul.f32 %v1319, %v1215
    %v1332 = vmul.f32 %v1320, %v1216
    %v1333 = vmul.f32 %v1311, %v1321
    %v1334 = vmul.f32 %v1312, %v1322
    %v1335 = vadd.f32 %v1331, %v1333
    %v1336 = vadd.f32 %v1332, %v1334
    %v1337 = vtanh.pop %v1335
    %v1338 = vtanh.pop %v1336
    %v1339 = vmul.f32 %v1329, %v1337
    %v1340 = vmul.f32 %v1330, %v1338
    %v1341 = vpack.c.bf16 %v1339, %v1339
    %v1342 = vpack.c.bf16 %v1340, %v1340
    %s1343 = scalar_lea.vmem [#allocation4], 24
    %1344 = vst [vmem:[%s1343] sm:$0xf] %v1341
    %1345 = vst [vmem:[%s1343 + $0x4] sm:$0xf] %v1342
    %s1346 = scalar_lea.vmem [#allocation5], 256
    %v1347 = vld [vmem:[%s1346] sm:$0xff]
    %v1348 = vld [vmem:[%s1346 + $0x8] sm:$0xff]
    %v1349 = vld [vmem:[%s1346 + $0x10] sm:$0xff]
    %v1350 = vld [vmem:[%s1346 + $0x18] sm:$0xff]
    %v1351 = vld [vmem:[%s1346 + $0x20] sm:$0xff]
    %v1352 = vld [vmem:[%s1346 + $0x28] sm:$0xff]
    %v1353 = vld [vmem:[%s1346 + $0x30] sm:$0xff]
    %v1354 = vld [vmem:[%s1346 + $0x38] sm:$0xff]
    %v1357 = vunpack.c.l.b16 %v1341
    %v1358 = vunpack.c.l.b16 %v1342
    %v1359 = vpack.c.b16 %v1358, %v1357
    %1361 = vmatpush.bf16.msra.mxu0 %v846
    %1362 = vmatpush.bf16.msra.mxu0 %v842
    %1363 = vmatpush.bf16.msra.mxu0 %v838
    %1364 = vmatpush.bf16.msra.mxu0 %v834
    %1365 = vmatpush.bf16.msra.mxu0 %v830
    %1366 = vmatpush.bf16.msra.mxu0 %v826
    %1367 = vmatpush.bf16.msra.mxu0 %v822
    %1368 = vmatpush.bf16.msra.mxu0 %v818
    %1369 = vmatmul.bf16.gmra.mxu0 %v1359
    %v1370 = vpop.f32.mrf.mxu0
    %v1371 = vadd.f32 0.0, %v1370
    %v1372 = vpop.f32.mrf.mxu0
    %v1373 = vadd.f32 0.0, %v1372
    %1374 = vdwg.mxu0
    %1375 = vmatpush.bf16.msra.mxu0 %v847
    %1376 = vmatpush.bf16.msra.mxu0 %v843
    %1377 = vmatpush.bf16.msra.mxu0 %v839
    %1378 = vmatpush.bf16.msra.mxu0 %v835
    %1379 = vmatpush.bf16.msra.mxu0 %v831
    %1380 = vmatpush.bf16.msra.mxu0 %v827
    %1381 = vmatpush.bf16.msra.mxu0 %v823
    %1382 = vmatpush.bf16.msra.mxu0 %v819
    %1383 = vmatmul.bf16.gmra.mxu0 %v1359
    %v1384 = vpop.f32.mrf.mxu0
    %v1385 = vadd.f32 0.0, %v1384
    %v1386 = vpop.f32.mrf.mxu0
    %v1387 = vadd.f32 0.0, %v1386
    %1388 = vdwg.mxu0
    %1389 = vmatpush.bf16.msra.mxu0 %v848
    %1390 = vmatpush.bf16.msra.mxu0 %v844
    %1391 = vmatpush.bf16.msra.mxu0 %v840
    %1392 = vmatpush.bf16.msra.mxu0 %v836
    %1393 = vmatpush.bf16.msra.mxu0 %v832
    %1394 = vmatpush.bf16.msra.mxu0 %v828
    %1395 = vmatpush.bf16.msra.mxu0 %v824
    %1396 = vmatpush.bf16.msra.mxu0 %v820
    %1397 = vmatmul.bf16.gmra.mxu0 %v1359
    %v1398 = vpop.f32.mrf.mxu0
    %v1399 = vadd.f32 0.0, %v1398
    %v1400 = vpop.f32.mrf.mxu0
    %v1401 = vadd.f32 0.0, %v1400
    %1402 = vdwg.mxu0
    %1403 = vmatpush.bf16.msra.mxu0 %v849
    %1404 = vmatpush.bf16.msra.mxu0 %v845
    %1405 = vmatpush.bf16.msra.mxu0 %v841
    %1406 = vmatpush.bf16.msra.mxu0 %v837
    %1407 = vmatpush.bf16.msra.mxu0 %v833
    %1408 = vmatpush.bf16.msra.mxu0 %v829
    %1409 = vmatpush.bf16.msra.mxu0 %v825
    %1410 = vmatpush.bf16.msra.mxu0 %v821
    %1411 = vmatmul.bf16.gmra.mxu0 %v1359
    %v1412 = vpop.f32.mrf.mxu0
    %v1413 = vadd.f32 0.0, %v1412
    %v1414 = vpop.f32.mrf.mxu0
    %v1415 = vadd.f32 0.0, %v1414
    %1416 = vdwg.mxu0
    %v1417 = vadd.f32 %v1347, %v1371
    %v1418 = vadd.f32 %v1348, %v1385
    %v1419 = vadd.f32 %v1349, %v1399
    %v1420 = vadd.f32 %v1350, %v1413
    %v1421 = vadd.f32 %v1351, %v1373
    %v1422 = vadd.f32 %v1352, %v1387
    %v1423 = vadd.f32 %v1353, %v1401
    %v1424 = vadd.f32 %v1354, %v1415
    %v1425 = vmul.f32 %v1417, 0.5
    %v1426 = vmul.f32 %v1421, 0.5
    %v1427 = vtanh.pop %v1425
    %v1428 = vtanh.pop %v1426
    %v1429 = vmul.f32 %v1427, 0.5
    %v1430 = vmul.f32 %v1428, 0.5
    %v1431 = vadd.f32 %v1429, 0.5
    %v1432 = vadd.f32 %v1430, 0.5
    %v1433 = vmul.f32 %v1418, 0.5
    %v1434 = vmul.f32 %v1422, 0.5
    %v1435 = vtanh.pop %v1433
    %v1436 = vtanh.pop %v1434
    %v1437 = vmul.f32 %v1435, 0.5
    %v1438 = vmul.f32 %v1436, 0.5
    %v1439 = vadd.f32 %v1437, 0.5
    %v1440 = vadd.f32 %v1438, 0.5
    %v1441 = vtanh.pop %v1419
    %v1442 = vtanh.pop %v1423
    %v1443 = vmul.f32 %v1420, 0.5
    %v1444 = vmul.f32 %v1424, 0.5
    %v1445 = vtanh.pop %v1443
    %v1446 = vtanh.pop %v1444
    %v1447 = vmul.f32 %v1445, 0.5
    %v1448 = vmul.f32 %v1446, 0.5
    %v1449 = vadd.f32 %v1447, 0.5
    %v1450 = vadd.f32 %v1448, 0.5
    %v1451 = vmul.f32 %v1439, %v1335
    %v1452 = vmul.f32 %v1440, %v1336
    %v1453 = vmul.f32 %v1431, %v1441
    %v1454 = vmul.f32 %v1432, %v1442
    %v1455 = vadd.f32 %v1451, %v1453
    %v1456 = vadd.f32 %v1452, %v1454
    %v1457 = vtanh.pop %v1455
    %v1458 = vtanh.pop %v1456
    %v1459 = vmul.f32 %v1449, %v1457
    %v1460 = vmul.f32 %v1450, %v1458
    %v1461 = vpack.c.bf16 %v1459, %v1459
    %v1462 = vpack.c.bf16 %v1460, %v1460
    %s1463 = scalar_lea.vmem [#allocation4], 32
    %1464 = vst [vmem:[%s1463] sm:$0xf] %v1461
    %1465 = vst [vmem:[%s1463 + $0x4] sm:$0xf] %v1462
    %s1466 = scalar_lea.vmem [#allocation5], 320
    %v1467 = vld [vmem:[%s1466] sm:$0xff]
    %v1468 = vld [vmem:[%s1466 + $0x8] sm:$0xff]
    %v1469 = vld [vmem:[%s1466 + $0x10] sm:$0xff]
    %v1470 = vld [vmem:[%s1466 + $0x18] sm:$0xff]
    %v1471 = vld [vmem:[%s1466 + $0x20] sm:$0xff]
    %v1472 = vld [vmem:[%s1466 + $0x28] sm:$0xff]
    %v1473 = vld [vmem:[%s1466 + $0x30] sm:$0xff]
    %v1474 = vld [vmem:[%s1466 + $0x38] sm:$0xff]
    %v1477 = vunpack.c.l.b16 %v1461
    %v1478 = vunpack.c.l.b16 %v1462
    %v1479 = vpack.c.b16 %v1478, %v1477
    %1481 = vmatpush.bf16.msra.mxu0 %v846
    %1482 = vmatpush.bf16.msra.mxu0 %v842
    %1483 = vmatpush.bf16.msra.mxu0 %v838
    %1484 = vmatpush.bf16.msra.mxu0 %v834
    %1485 = vmatpush.bf16.msra.mxu0 %v830
    %1486 = vmatpush.bf16.msra.mxu0 %v826
    %1487 = vmatpush.bf16.msra.mxu0 %v822
    %1488 = vmatpush.bf16.msra.mxu0 %v818
    %1489 = vmatmul.bf16.gmra.mxu0 %v1479
    %v1490 = vpop.f32.mrf.mxu0
    %v1491 = vadd.f32 0.0, %v1490
    %v1492 = vpop.f32.mrf.mxu0
    %v1493 = vadd.f32 0.0, %v1492
    %1494 = vdwg.mxu0
    %1495 = vmatpush.bf16.msra.mxu0 %v847
    %1496 = vmatpush.bf16.msra.mxu0 %v843
    %1497 = vmatpush.bf16.msra.mxu0 %v839
    %1498 = vmatpush.bf16.msra.mxu0 %v835
    %1499 = vmatpush.bf16.msra.mxu0 %v831
    %1500 = vmatpush.bf16.msra.mxu0 %v827
    %1501 = vmatpush.bf16.msra.mxu0 %v823
    %1502 = vmatpush.bf16.msra.mxu0 %v819
    %1503 = vmatmul.bf16.gmra.mxu0 %v1479
    %v1504 = vpop.f32.mrf.mxu0
    %v1505 = vadd.f32 0.0, %v1504
    %v1506 = vpop.f32.mrf.mxu0
    %v1507 = vadd.f32 0.0, %v1506
    %1508 = vdwg.mxu0
    %1509 = vmatpush.bf16.msra.mxu0 %v848
    %1510 = vmatpush.bf16.msra.mxu0 %v844
    %1511 = vmatpush.bf16.msra.mxu0 %v840
    %1512 = vmatpush.bf16.msra.mxu0 %v836
    %1513 = vmatpush.bf16.msra.mxu0 %v832
    %1514 = vmatpush.bf16.msra.mxu0 %v828
    %1515 = vmatpush.bf16.msra.mxu0 %v824
    %1516 = vmatpush.bf16.msra.mxu0 %v820
    %1517 = vmatmul.bf16.gmra.mxu0 %v1479
    %v1518 = vpop.f32.mrf.mxu0
    %v1519 = vadd.f32 0.0, %v1518
    %v1520 = vpop.f32.mrf.mxu0
    %v1521 = vadd.f32 0.0, %v1520
    %1522 = vdwg.mxu0
    %1523 = vmatpush.bf16.msra.mxu0 %v849
    %1524 = vmatpush.bf16.msra.mxu0 %v845
    %1525 = vmatpush.bf16.msra.mxu0 %v841
    %1526 = vmatpush.bf16.msra.mxu0 %v837
    %1527 = vmatpush.bf16.msra.mxu0 %v833
    %1528 = vmatpush.bf16.msra.mxu0 %v829
    %1529 = vmatpush.bf16.msra.mxu0 %v825
    %1530 = vmatpush.bf16.msra.mxu0 %v821
    %1531 = vmatmul.bf16.gmra.mxu0 %v1479
    %v1532 = vpop.f32.mrf.mxu0
    %v1533 = vadd.f32 0.0, %v1532
    %v1534 = vpop.f32.mrf.mxu0
    %v1535 = vadd.f32 0.0, %v1534
    %1536 = vdwg.mxu0
    %v1537 = vadd.f32 %v1467, %v1491
    %v1538 = vadd.f32 %v1468, %v1505
    %v1539 = vadd.f32 %v1469, %v1519
    %v1540 = vadd.f32 %v1470, %v1533
    %v1541 = vadd.f32 %v1471, %v1493
    %v1542 = vadd.f32 %v1472, %v1507
    %v1543 = vadd.f32 %v1473, %v1521
    %v1544 = vadd.f32 %v1474, %v1535
    %v1545 = vmul.f32 %v1537, 0.5
    %v1546 = vmul.f32 %v1541, 0.5
    %v1547 = vtanh.pop %v1545
    %v1548 = vtanh.pop %v1546
    %v1549 = vmul.f32 %v1547, 0.5
    %v1550 = vmul.f32 %v1548, 0.5
    %v1551 = vadd.f32 %v1549, 0.5
    %v1552 = vadd.f32 %v1550, 0.5
    %v1553 = vmul.f32 %v1538, 0.5
    %v1554 = vmul.f32 %v1542, 0.5
    %v1555 = vtanh.pop %v1553
    %v1556 = vtanh.pop %v1554
    %v1557 = vmul.f32 %v1555, 0.5
    %v1558 = vmul.f32 %v1556, 0.5
    %v1559 = vadd.f32 %v1557, 0.5
    %v1560 = vadd.f32 %v1558, 0.5
    %v1561 = vtanh.pop %v1539
    %v1562 = vtanh.pop %v1543
    %v1563 = vmul.f32 %v1540, 0.5
    %v1564 = vmul.f32 %v1544, 0.5
    %v1565 = vtanh.pop %v1563
    %v1566 = vtanh.pop %v1564
    %v1567 = vmul.f32 %v1565, 0.5
    %v1568 = vmul.f32 %v1566, 0.5
    %v1569 = vadd.f32 %v1567, 0.5
    %v1570 = vadd.f32 %v1568, 0.5
    %v1571 = vmul.f32 %v1559, %v1455
    %v1572 = vmul.f32 %v1560, %v1456
    %v1573 = vmul.f32 %v1551, %v1561
    %v1574 = vmul.f32 %v1552, %v1562
    %v1575 = vadd.f32 %v1571, %v1573
    %v1576 = vadd.f32 %v1572, %v1574
    %v1577 = vtanh.pop %v1575
    %v1578 = vtanh.pop %v1576
    %v1579 = vmul.f32 %v1569, %v1577
    %v1580 = vmul.f32 %v1570, %v1578
    %v1581 = vpack.c.bf16 %v1579, %v1579
    %v1582 = vpack.c.bf16 %v1580, %v1580
    %s1583 = scalar_lea.vmem [#allocation4], 40
    %1584 = vst [vmem:[%s1583] sm:$0xf] %v1581
    %1585 = vst [vmem:[%s1583 + $0x4] sm:$0xf] %v1582
    %s1586 = scalar_lea.vmem [#allocation5], 384
    %v1587 = vld [vmem:[%s1586] sm:$0xff]
    %v1588 = vld [vmem:[%s1586 + $0x8] sm:$0xff]
    %v1589 = vld [vmem:[%s1586 + $0x10] sm:$0xff]
    %v1590 = vld [vmem:[%s1586 + $0x18] sm:$0xff]
    %v1591 = vld [vmem:[%s1586 + $0x20] sm:$0xff]
    %v1592 = vld [vmem:[%s1586 + $0x28] sm:$0xff]
    %v1593 = vld [vmem:[%s1586 + $0x30] sm:$0xff]
    %v1594 = vld [vmem:[%s1586 + $0x38] sm:$0xff]
    %v1597 = vunpack.c.l.b16 %v1581
    %v1598 = vunpack.c.l.b16 %v1582
    %v1599 = vpack.c.b16 %v1598, %v1597
    %1601 = vmatpush.bf16.msra.mxu0 %v846
    %1602 = vmatpush.bf16.msra.mxu0 %v842
    %1603 = vmatpush.bf16.msra.mxu0 %v838
    %1604 = vmatpush.bf16.msra.mxu0 %v834
    %1605 = vmatpush.bf16.msra.mxu0 %v830
    %1606 = vmatpush.bf16.msra.mxu0 %v826
    %1607 = vmatpush.bf16.msra.mxu0 %v822
    %1608 = vmatpush.bf16.msra.mxu0 %v818
    %1609 = vmatmul.bf16.gmra.mxu0 %v1599
    %v1610 = vpop.f32.mrf.mxu0
    %v1611 = vadd.f32 0.0, %v1610
    %v1612 = vpop.f32.mrf.mxu0
    %v1613 = vadd.f32 0.0, %v1612
    %1614 = vdwg.mxu0
    %1615 = vmatpush.bf16.msra.mxu0 %v847
    %1616 = vmatpush.bf16.msra.mxu0 %v843
    %1617 = vmatpush.bf16.msra.mxu0 %v839
    %1618 = vmatpush.bf16.msra.mxu0 %v835
    %1619 = vmatpush.bf16.msra.mxu0 %v831
    %1620 = vmatpush.bf16.msra.mxu0 %v827
    %1621 = vmatpush.bf16.msra.mxu0 %v823
    %1622 = vmatpush.bf16.msra.mxu0 %v819
    %1623 = vmatmul.bf16.gmra.mxu0 %v1599
    %v1624 = vpop.f32.mrf.mxu0
    %v1625 = vadd.f32 0.0, %v1624
    %v1626 = vpop.f32.mrf.mxu0
    %v1627 = vadd.f32 0.0, %v1626
    %1628 = vdwg.mxu0
    %1629 = vmatpush.bf16.msra.mxu0 %v848
    %1630 = vmatpush.bf16.msra.mxu0 %v844
    %1631 = vmatpush.bf16.msra.mxu0 %v840
    %1632 = vmatpush.bf16.msra.mxu0 %v836
    %1633 = vmatpush.bf16.msra.mxu0 %v832
    %1634 = vmatpush.bf16.msra.mxu0 %v828
    %1635 = vmatpush.bf16.msra.mxu0 %v824
    %1636 = vmatpush.bf16.msra.mxu0 %v820
    %1637 = vmatmul.bf16.gmra.mxu0 %v1599
    %v1638 = vpop.f32.mrf.mxu0
    %v1639 = vadd.f32 0.0, %v1638
    %v1640 = vpop.f32.mrf.mxu0
    %v1641 = vadd.f32 0.0, %v1640
    %1642 = vdwg.mxu0
    %1643 = vmatpush.bf16.msra.mxu0 %v849
    %1644 = vmatpush.bf16.msra.mxu0 %v845
    %1645 = vmatpush.bf16.msra.mxu0 %v841
    %1646 = vmatpush.bf16.msra.mxu0 %v837
    %1647 = vmatpush.bf16.msra.mxu0 %v833
    %1648 = vmatpush.bf16.msra.mxu0 %v829
    %1649 = vmatpush.bf16.msra.mxu0 %v825
    %1650 = vmatpush.bf16.msra.mxu0 %v821
    %1651 = vmatmul.bf16.gmra.mxu0 %v1599
    %v1652 = vpop.f32.mrf.mxu0
    %v1653 = vadd.f32 0.0, %v1652
    %v1654 = vpop.f32.mrf.mxu0
    %v1655 = vadd.f32 0.0, %v1654
    %1656 = vdwg.mxu0
    %v1657 = vadd.f32 %v1587, %v1611
    %v1658 = vadd.f32 %v1588, %v1625
    %v1659 = vadd.f32 %v1589, %v1639
    %v1660 = vadd.f32 %v1590, %v1653
    %v1661 = vadd.f32 %v1591, %v1613
    %v1662 = vadd.f32 %v1592, %v1627
    %v1663 = vadd.f32 %v1593, %v1641
    %v1664 = vadd.f32 %v1594, %v1655
    %v1665 = vmul.f32 %v1657, 0.5
    %v1666 = vmul.f32 %v1661, 0.5
    %v1667 = vtanh.pop %v1665
    %v1668 = vtanh.pop %v1666
    %v1669 = vmul.f32 %v1667, 0.5
    %v1670 = vmul.f32 %v1668, 0.5
    %v1671 = vadd.f32 %v1669, 0.5
    %v1672 = vadd.f32 %v1670, 0.5
    %v1673 = vmul.f32 %v1658, 0.5
    %v1674 = vmul.f32 %v1662, 0.5
    %v1675 = vtanh.pop %v1673
    %v1676 = vtanh.pop %v1674
    %v1677 = vmul.f32 %v1675, 0.5
    %v1678 = vmul.f32 %v1676, 0.5
    %v1679 = vadd.f32 %v1677, 0.5
    %v1680 = vadd.f32 %v1678, 0.5
    %v1681 = vtanh.pop %v1659
    %v1682 = vtanh.pop %v1663
    %v1683 = vmul.f32 %v1660, 0.5
    %v1684 = vmul.f32 %v1664, 0.5
    %v1685 = vtanh.pop %v1683
    %v1686 = vtanh.pop %v1684
    %v1687 = vmul.f32 %v1685, 0.5
    %v1688 = vmul.f32 %v1686, 0.5
    %v1689 = vadd.f32 %v1687, 0.5
    %v1690 = vadd.f32 %v1688, 0.5
    %v1691 = vmul.f32 %v1679, %v1575
    %v1692 = vmul.f32 %v1680, %v1576
    %v1693 = vmul.f32 %v1671, %v1681
    %v1694 = vmul.f32 %v1672, %v1682
    %v1695 = vadd.f32 %v1691, %v1693
    %v1696 = vadd.f32 %v1692, %v1694
    %v1697 = vtanh.pop %v1695
    %v1698 = vtanh.pop %v1696
    %v1699 = vmul.f32 %v1689, %v1697
    %v1700 = vmul.f32 %v1690, %v1698
    %v1701 = vpack.c.bf16 %v1699, %v1699
    %v1702 = vpack.c.bf16 %v1700, %v1700
    %s1703 = scalar_lea.vmem [#allocation4], 48
    %1704 = vst [vmem:[%s1703] sm:$0xf] %v1701
    %1705 = vst [vmem:[%s1703 + $0x4] sm:$0xf] %v1702
    %s1706 = scalar_lea.vmem [#allocation5], 448
    %v1707 = vld [vmem:[%s1706] sm:$0xff]
    %v1708 = vld [vmem:[%s1706 + $0x8] sm:$0xff]
    %v1709 = vld [vmem:[%s1706 + $0x10] sm:$0xff]
    %v1710 = vld [vmem:[%s1706 + $0x18] sm:$0xff]
    %v1711 = vld [vmem:[%s1706 + $0x20] sm:$0xff]
    %v1712 = vld [vmem:[%s1706 + $0x28] sm:$0xff]
    %v1713 = vld [vmem:[%s1706 + $0x30] sm:$0xff]
    %v1714 = vld [vmem:[%s1706 + $0x38] sm:$0xff]
    %v1717 = vunpack.c.l.b16 %v1701
    %v1718 = vunpack.c.l.b16 %v1702
    %v1719 = vpack.c.b16 %v1718, %v1717
    %1721 = vmatpush.bf16.msra.mxu0 %v846
    %1722 = vmatpush.bf16.msra.mxu0 %v842
    %1723 = vmatpush.bf16.msra.mxu0 %v838
    %1724 = vmatpush.bf16.msra.mxu0 %v834
    %1725 = vmatpush.bf16.msra.mxu0 %v830
    %1726 = vmatpush.bf16.msra.mxu0 %v826
    %1727 = vmatpush.bf16.msra.mxu0 %v822
    %1728 = vmatpush.bf16.msra.mxu0 %v818
    %1729 = vmatmul.bf16.gmra.mxu0 %v1719
    %v1730 = vpop.f32.mrf.mxu0
    %v1731 = vadd.f32 0.0, %v1730
    %v1732 = vpop.f32.mrf.mxu0
    %v1733 = vadd.f32 0.0, %v1732
    %1734 = vdwg.mxu0
    %1735 = vmatpush.bf16.msra.mxu0 %v847
    %1736 = vmatpush.bf16.msra.mxu0 %v843
    %1737 = vmatpush.bf16.msra.mxu0 %v839
    %1738 = vmatpush.bf16.msra.mxu0 %v835
    %1739 = vmatpush.bf16.msra.mxu0 %v831
    %1740 = vmatpush.bf16.msra.mxu0 %v827
    %1741 = vmatpush.bf16.msra.mxu0 %v823
    %1742 = vmatpush.bf16.msra.mxu0 %v819
    %1743 = vmatmul.bf16.gmra.mxu0 %v1719
    %v1744 = vpop.f32.mrf.mxu0
    %v1745 = vadd.f32 0.0, %v1744
    %v1746 = vpop.f32.mrf.mxu0
    %v1747 = vadd.f32 0.0, %v1746
    %1748 = vdwg.mxu0
    %1749 = vmatpush.bf16.msra.mxu0 %v848
    %1750 = vmatpush.bf16.msra.mxu0 %v844
    %1751 = vmatpush.bf16.msra.mxu0 %v840
    %1752 = vmatpush.bf16.msra.mxu0 %v836
    %1753 = vmatpush.bf16.msra.mxu0 %v832
    %1754 = vmatpush.bf16.msra.mxu0 %v828
    %1755 = vmatpush.bf16.msra.mxu0 %v824
    %1756 = vmatpush.bf16.msra.mxu0 %v820
    %1757 = vmatmul.bf16.gmra.mxu0 %v1719
    %v1758 = vpop.f32.mrf.mxu0
    %v1759 = vadd.f32 0.0, %v1758
    %v1760 = vpop.f32.mrf.mxu0
    %v1761 = vadd.f32 0.0, %v1760
    %1762 = vdwg.mxu0
    %1763 = vmatpush.bf16.msra.mxu0 %v849
    %1764 = vmatpush.bf16.msra.mxu0 %v845
    %1765 = vmatpush.bf16.msra.mxu0 %v841
    %1766 = vmatpush.bf16.msra.mxu0 %v837
    %1767 = vmatpush.bf16.msra.mxu0 %v833
    %1768 = vmatpush.bf16.msra.mxu0 %v829
    %1769 = vmatpush.bf16.msra.mxu0 %v825
    %1770 = vmatpush.bf16.msra.mxu0 %v821
    %1771 = vmatmul.bf16.gmra.mxu0 %v1719
    %v1772 = vpop.f32.mrf.mxu0
    %v1773 = vadd.f32 0.0, %v1772
    %v1774 = vpop.f32.mrf.mxu0
    %v1775 = vadd.f32 0.0, %v1774
    %1776 = vdwg.mxu0
    %v1777 = vadd.f32 %v1707, %v1731
    %v1778 = vadd.f32 %v1708, %v1745
    %v1779 = vadd.f32 %v1709, %v1759
    %v1780 = vadd.f32 %v1710, %v1773
    %v1781 = vadd.f32 %v1711, %v1733
    %v1782 = vadd.f32 %v1712, %v1747
    %v1783 = vadd.f32 %v1713, %v1761
    %v1784 = vadd.f32 %v1714, %v1775
    %v1785 = vmul.f32 %v1777, 0.5
    %v1786 = vmul.f32 %v1781, 0.5
    %v1787 = vtanh.pop %v1785
    %v1788 = vtanh.pop %v1786
    %v1789 = vmul.f32 %v1787, 0.5
    %v1790 = vmul.f32 %v1788, 0.5
    %v1791 = vadd.f32 %v1789, 0.5
    %v1792 = vadd.f32 %v1790, 0.5
    %v1793 = vmul.f32 %v1778, 0.5
    %v1794 = vmul.f32 %v1782, 0.5
    %v1795 = vtanh.pop %v1793
    %v1796 = vtanh.pop %v1794
    %v1797 = vmul.f32 %v1795, 0.5
    %v1798 = vmul.f32 %v1796, 0.5
    %v1799 = vadd.f32 %v1797, 0.5
    %v1800 = vadd.f32 %v1798, 0.5
    %v1801 = vtanh.pop %v1779
    %v1802 = vtanh.pop %v1783
    %v1803 = vmul.f32 %v1780, 0.5
    %v1804 = vmul.f32 %v1784, 0.5
    %v1805 = vtanh.pop %v1803
    %v1806 = vtanh.pop %v1804
    %v1807 = vmul.f32 %v1805, 0.5
    %v1808 = vmul.f32 %v1806, 0.5
    %v1809 = vadd.f32 %v1807, 0.5
    %v1810 = vadd.f32 %v1808, 0.5
    %v1811 = vmul.f32 %v1799, %v1695
    %v1812 = vmul.f32 %v1800, %v1696
    %v1813 = vmul.f32 %v1791, %v1801
    %v1814 = vmul.f32 %v1792, %v1802
    %v1815 = vadd.f32 %v1811, %v1813
    %v1816 = vadd.f32 %v1812, %v1814
    %v1817 = vtanh.pop %v1815
    %v1818 = vtanh.pop %v1816
    %v1819 = vmul.f32 %v1809, %v1817
    %v1820 = vmul.f32 %v1810, %v1818
    %v1821 = vpack.c.bf16 %v1819, %v1819
    %v1822 = vpack.c.bf16 %v1820, %v1820
    %s1823 = scalar_lea.vmem [#allocation4], 56
    %1824 = vst [vmem:[%s1823] sm:$0xf] %v1821
    %1825 = vst [vmem:[%s1823 + $0x4] sm:$0xf] %v1822
    %1826 = vst [vmem:[#allocation2] sm:$0xff] %v1819
    %1827 = vst [vmem:[#allocation2 + $0x8] sm:$0xff] %v1820
    %1828 = vst [vmem:[#allocation3] sm:$0xff] %v1815
    %1829 = vst [vmem:[#allocation3 + $0x8] sm:$0xff] %v1816
    %v1830 = vld [vmem:[#allocation4] sm:$0xf]
    %v1831 = vld [vmem:[#allocation4 + $0x4] sm:$0xf]
    %v1832 = vld [vmem:[#allocation4 + $0x8] sm:$0xf]
    %v1833 = vld [vmem:[#allocation4 + $0xc] sm:$0xf]
    %v1834 = vld [vmem:[#allocation4 + $0x10] sm:$0xf]
    %v1835 = vld [vmem:[#allocation4 + $0x14] sm:$0xf]
    %v1836 = vld [vmem:[#allocation4 + $0x18] sm:$0xf]
    %v1837 = vld [vmem:[#allocation4 + $0x1c] sm:$0xf]
    %v1838 = vld [vmem:[#allocation4 + $0x20] sm:$0xf]
    %v1839 = vld [vmem:[#allocation4 + $0x24] sm:$0xf]
    %v1840 = vld [vmem:[#allocation4 + $0x28] sm:$0xf]
    %v1841 = vld [vmem:[#allocation4 + $0x2c] sm:$0xf]
    %v1842 = vld [vmem:[#allocation4 + $0x30] sm:$0xf]
    %v1843 = vld [vmem:[#allocation4 + $0x34] sm:$0xf]
    %v1844 = vld [vmem:[#allocation4 + $0x38] sm:$0xf]
    %v1845 = vld [vmem:[#allocation4 + $0x3c] sm:$0xf]
    %v1846 = vld [vmem:[#allocation11] sm:$0xff]
    %v1847 = vld [vmem:[#allocation11 + $0x8] sm:$0xff]
    %v1848 = vld [vmem:[#allocation11 + $0x10] sm:$0xff]
    %v1849 = vld [vmem:[#allocation11 + $0x18] sm:$0xff]
    %v1850 = vld [vmem:[#allocation11 + $0x20] sm:$0xff]
    %v1851 = vld [vmem:[#allocation11 + $0x28] sm:$0xff]
    %v1852 = vld [vmem:[#allocation11 + $0x30] sm:$0xff]
    %v1853 = vld [vmem:[#allocation11 + $0x38] sm:$0xff]
    %v1854 = vld [vmem:[#allocation11 + $0x40] sm:$0xff]
    %v1855 = vld [vmem:[#allocation11 + $0x48] sm:$0xff]
    %v1856 = vld [vmem:[#allocation11 + $0x50] sm:$0xff]
    %v1857 = vld [vmem:[#allocation11 + $0x58] sm:$0xff]
    %v1858 = vld [vmem:[#allocation11 + $0x60] sm:$0xff]
    %v1859 = vld [vmem:[#allocation11 + $0x68] sm:$0xff]
    %v1860 = vld [vmem:[#allocation11 + $0x70] sm:$0xff]
    %v1861 = vld [vmem:[#allocation11 + $0x78] sm:$0xff]
    %v1862 = vld [vmem:[#allocation11 + $0x80] sm:$0xff]
    %v1863 = vld [vmem:[#allocation11 + $0x88] sm:$0xff]
    %v1864 = vld [vmem:[#allocation11 + $0x90] sm:$0xff]
    %v1865 = vld [vmem:[#allocation11 + $0x98] sm:$0xff]
    %v1866 = vld [vmem:[#allocation11 + $0xa0] sm:$0xff]
    %v1867 = vld [vmem:[#allocation11 + $0xa8] sm:$0xff]
    %v1868 = vld [vmem:[#allocation11 + $0xb0] sm:$0xff]
    %v1869 = vld [vmem:[#allocation11 + $0xb8] sm:$0xff]
    %v1870 = vld [vmem:[#allocation11 + $0xc0] sm:$0xff]
    %v1871 = vld [vmem:[#allocation11 + $0xc8] sm:$0xff]
    %v1872 = vld [vmem:[#allocation11 + $0xd0] sm:$0xff]
    %v1873 = vld [vmem:[#allocation11 + $0xd8] sm:$0xff]
    %v1874 = vld [vmem:[#allocation11 + $0xe0] sm:$0xff]
    %v1875 = vld [vmem:[#allocation11 + $0xe8] sm:$0xff]
    %v1876 = vld [vmem:[#allocation11 + $0xf0] sm:$0xff]
    %v1877 = vld [vmem:[#allocation11 + $0xf8] sm:$0xff]
    %s1878 = scalar_lea.vmem [#allocation15], 4
    %v1879 = vld [vmem:[%s1878] sm:$0xf]
    %v1881 = vperm.slane %v1879, 0
    %v1882 = vperm.slane %v1879, 1
    %v1883 = vperm.slane %v1879, 2
    %v1884 = vperm.slane %v1879, 3
    %v1905 = vunpack.c.l.b16 %v1830
    %v1906 = vunpack.c.l.b16 %v1831
    %v1907 = vunpack.c.l.b16 %v1832
    %v1908 = vunpack.c.l.b16 %v1833
    %v1909 = vunpack.c.l.b16 %v1834
    %v1910 = vunpack.c.l.b16 %v1835
    %v1911 = vunpack.c.l.b16 %v1836
    %v1912 = vunpack.c.l.b16 %v1837
    %v1913 = vunpack.c.l.b16 %v1838
    %v1914 = vunpack.c.l.b16 %v1839
    %v1915 = vunpack.c.l.b16 %v1840
    %v1916 = vunpack.c.l.b16 %v1841
    %v1917 = vunpack.c.l.b16 %v1842
    %v1918 = vunpack.c.l.b16 %v1843
    %v1919 = vunpack.c.l.b16 %v1844
    %v1920 = vunpack.c.l.b16 %v1845
    %v1921 = vpack.c.b16 %v1906, %v1905
    %v1922 = vpack.c.b16 %v1908, %v1907
    %v1923 = vpack.c.b16 %v1910, %v1909
    %v1924 = vpack.c.b16 %v1912, %v1911
    %v1925 = vpack.c.b16 %v1914, %v1913
    %v1926 = vpack.c.b16 %v1916, %v1915
    %v1927 = vpack.c.b16 %v1918, %v1917
    %v1928 = vpack.c.b16 %v1920, %v1919
    %v1969 = vunpack.c.l.b16 %v1846
    %v1970 = vunpack.c.h.b16 %v1846
    %v1971 = vunpack.c.l.b16 %v1847
    %v1972 = vunpack.c.h.b16 %v1847
    %v1973 = vunpack.c.l.b16 %v1848
    %v1974 = vunpack.c.h.b16 %v1848
    %v1975 = vunpack.c.l.b16 %v1849
    %v1976 = vunpack.c.h.b16 %v1849
    %v1977 = vunpack.c.l.b16 %v1850
    %v1978 = vunpack.c.h.b16 %v1850
    %v1979 = vunpack.c.l.b16 %v1851
    %v1980 = vunpack.c.h.b16 %v1851
    %v1981 = vunpack.c.l.b16 %v1852
    %v1982 = vunpack.c.h.b16 %v1852
    %v1983 = vunpack.c.l.b16 %v1853
    %v1984 = vunpack.c.h.b16 %v1853
    %v1985 = vunpack.c.l.b16 %v1854
    %v1986 = vunpack.c.h.b16 %v1854
    %v1987 = vunpack.c.l.b16 %v1855
    %v1988 = vunpack.c.h.b16 %v1855
    %v1989 = vunpack.c.l.b16 %v1856
    %v1990 = vunpack.c.h.b16 %v1856
    %v1991 = vunpack.c.l.b16 %v1857
    %v1992 = vunpack.c.h.b16 %v1857
    %v1993 = vunpack.c.l.b16 %v1858
    %v1994 = vunpack.c.h.b16 %v1858
    %v1995 = vunpack.c.l.b16 %v1859
    %v1996 = vunpack.c.h.b16 %v1859
    %v1997 = vunpack.c.l.b16 %v1860
    %v1998 = vunpack.c.h.b16 %v1860
    %v1999 = vunpack.c.l.b16 %v1861
    %v2000 = vunpack.c.h.b16 %v1861
    %v2001 = vunpack.c.l.b16 %v1862
    %v2002 = vunpack.c.h.b16 %v1862
    %v2003 = vunpack.c.l.b16 %v1863
    %v2004 = vunpack.c.h.b16 %v1863
    %v2005 = vunpack.c.l.b16 %v1864
    %v2006 = vunpack.c.h.b16 %v1864
    %v2007 = vunpack.c.l.b16 %v1865
    %v2008 = vunpack.c.h.b16 %v1865
    %v2009 = vunpack.c.l.b16 %v1866
    %v2010 = vunpack.c.h.b16 %v1866
    %v2011 = vunpack.c.l.b16 %v1867
    %v2012 = vunpack.c.h.b16 %v1867
    %v2013 = vunpack.c.l.b16 %v1868
    %v2014 = vunpack.c.h.b16 %v1868
    %v2015 = vunpack.c.l.b16 %v1869
    %v2016 = vunpack.c.h.b16 %v1869
    %v2017 = vunpack.c.l.b16 %v1870
    %v2018 = vunpack.c.h.b16 %v1870
    %v2019 = vunpack.c.l.b16 %v1871
    %v2020 = vunpack.c.h.b16 %v1871
    %v2021 = vunpack.c.l.b16 %v1872
    %v2022 = vunpack.c.h.b16 %v1872
    %v2023 = vunpack.c.l.b16 %v1873
    %v2024 = vunpack.c.h.b16 %v1873
    %v2025 = vunpack.c.l.b16 %v1874
    %v2026 = vunpack.c.h.b16 %v1874
    %v2027 = vunpack.c.l.b16 %v1875
    %v2028 = vunpack.c.h.b16 %v1875
    %v2029 = vunpack.c.l.b16 %v1876
    %v2030 = vunpack.c.h.b16 %v1876
    %v2031 = vunpack.c.l.b16 %v1877
    %v2032 = vunpack.c.h.b16 %v1877
    %v2033 = vpack.c.b16 %v1973, %v1969
    %v2034 = vpack.c.b16 %v1974, %v1970
    %v2035 = vpack.c.b16 %v1975, %v1971
    %v2036 = vpack.c.b16 %v1976, %v1972
    %v2037 = vpack.c.b16 %v1981, %v1977
    %v2038 = vpack.c.b16 %v1982, %v1978
    %v2039 = vpack.c.b16 %v1983, %v1979
    %v2040 = vpack.c.b16 %v1984, %v1980
    %v2041 = vpack.c.b16 %v1989, %v1985
    %v2042 = vpack.c.b16 %v1990, %v1986
    %v2043 = vpack.c.b16 %v1991, %v1987
    %v2044 = vpack.c.b16 %v1992, %v1988
    %v2045 = vpack.c.b16 %v1997, %v1993
    %v2046 = vpack.c.b16 %v1998, %v1994
    %v2047 = vpack.c.b16 %v1999, %v1995
    %v2048 = vpack.c.b16 %v2000, %v1996
    %v2049 = vpack.c.b16 %v2005, %v2001
    %v2050 = vpack.c.b16 %v2006, %v2002
    %v2051 = vpack.c.b16 %v2007, %v2003
    %v2052 = vpack.c.b16 %v2008, %v2004
    %v2053 = vpack.c.b16 %v2013, %v2009
    %v2054 = vpack.c.b16 %v2014, %v2010
    %v2055 = vpack.c.b16 %v2015, %v2011
    %v2056 = vpack.c.b16 %v2016, %v2012
    %v2057 = vpack.c.b16 %v2021, %v2017
    %v2058 = vpack.c.b16 %v2022, %v2018
    %v2059 = vpack.c.b16 %v2023, %v2019
    %v2060 = vpack.c.b16 %v2024, %v2020
    %v2061 = vpack.c.b16 %v2029, %v2025
    %v2062 = vpack.c.b16 %v2030, %v2026
    %v2063 = vpack.c.b16 %v2031, %v2027
    %v2064 = vpack.c.b16 %v2032, %v2028
    %2097 = vmatpush.bf16.msra.mxu0 %v2061
    %2098 = vmatpush.bf16.msra.mxu0 %v2057
    %2099 = vmatpush.bf16.msra.mxu0 %v2053
    %2100 = vmatpush.bf16.msra.mxu0 %v2049
    %2101 = vmatpush.bf16.msra.mxu0 %v2045
    %2102 = vmatpush.bf16.msra.mxu0 %v2041
    %2103 = vmatpush.bf16.msra.mxu0 %v2037
    %2104 = vmatpush.bf16.msra.mxu0 %v2033
    %2105 = vmatmul.bf16.gmra.mxu0 %v1921
    %v2106 = vpop.f32.mrf.mxu0
    %v2107 = vadd.f32 %v1881, %v2106
    %v2108 = vpop.f32.mrf.mxu0
    %v2109 = vadd.f32 %v1881, %v2108
    %2110 = vmatmul.bf16.gmra.mxu0 %v1922
    %v2111 = vpop.f32.mrf.mxu0
    %v2112 = vadd.f32 %v1881, %v2111
    %v2113 = vpop.f32.mrf.mxu0
    %v2114 = vadd.f32 %v1881, %v2113
    %2115 = vmatmul.bf16.gmra.mxu0 %v1923
    %v2116 = vpop.f32.mrf.mxu0
    %v2117 = vadd.f32 %v1881, %v2116
    %v2118 = vpop.f32.mrf.mxu0
    %v2119 = vadd.f32 %v1881, %v2118
    %2120 = vmatmul.bf16.gmra.mxu0 %v1924
    %v2121 = vpop.f32.mrf.mxu0
    %v2122 = vadd.f32 %v1881, %v2121
    %v2123 = vpop.f32.mrf.mxu0
    %v2124 = vadd.f32 %v1881, %v2123
    %2125 = vmatmul.bf16.gmra.mxu0 %v1925
    %v2126 = vpop.f32.mrf.mxu0
    %v2127 = vadd.f32 %v1881, %v2126
    %v2128 = vpop.f32.mrf.mxu0
    %v2129 = vadd.f32 %v1881, %v2128
    %2130 = vmatmul.bf16.gmra.mxu0 %v1926
    %v2131 = vpop.f32.mrf.mxu0
    %v2132 = vadd.f32 %v1881, %v2131
    %v2133 = vpop.f32.mrf.mxu0
    %v2134 = vadd.f32 %v1881, %v2133
    %2135 = vmatmul.bf16.gmra.mxu0 %v1927
    %v2136 = vpop.f32.mrf.mxu0
    %v2137 = vadd.f32 %v1881, %v2136
    %v2138 = vpop.f32.mrf.mxu0
    %v2139 = vadd.f32 %v1881, %v2138
    %2140 = vmatmul.bf16.gmra.mxu0 %v1928
    %v2141 = vpop.f32.mrf.mxu0
    %v2142 = vadd.f32 %v1881, %v2141
    %v2143 = vpop.f32.mrf.mxu0
    %v2144 = vadd.f32 %v1881, %v2143
    %2145 = vdwg.mxu0
    %2146 = vmatpush.bf16.msra.mxu0 %v2062
    %2147 = vmatpush.bf16.msra.mxu0 %v2058
    %2148 = vmatpush.bf16.msra.mxu0 %v2054
    %2149 = vmatpush.bf16.msra.mxu0 %v2050
    %2150 = vmatpush.bf16.msra.mxu0 %v2046
    %2151 = vmatpush.bf16.msra.mxu0 %v2042
    %2152 = vmatpush.bf16.msra.mxu0 %v2038
    %2153 = vmatpush.bf16.msra.mxu0 %v2034
    %2154 = vmatmul.bf16.gmra.mxu0 %v1921
    %v2155 = vpop.f32.mrf.mxu0
    %v2156 = vadd.f32 %v1882, %v2155
    %v2157 = vpop.f32.mrf.mxu0
    %v2158 = vadd.f32 %v1882, %v2157
    %2159 = vmatmul.bf16.gmra.mxu0 %v1922
    %v2160 = vpop.f32.mrf.mxu0
    %v2161 = vadd.f32 %v1882, %v2160
    %v2162 = vpop.f32.mrf.mxu0
    %v2163 = vadd.f32 %v1882, %v2162
    %2164 = vmatmul.bf16.gmra.mxu0 %v1923
    %v2165 = vpop.f32.mrf.mxu0
    %v2166 = vadd.f32 %v1882, %v2165
    %v2167 = vpop.f32.mrf.mxu0
    %v2168 = vadd.f32 %v1882, %v2167
    %2169 = vmatmul.bf16.gmra.mxu0 %v1924
    %v2170 = vpop.f32.mrf.mxu0
    %v2171 = vadd.f32 %v1882, %v2170
    %v2172 = vpop.f32.mrf.mxu0
    %v2173 = vadd.f32 %v1882, %v2172
    %2174 = vmatmul.bf16.gmra.mxu0 %v1925
    %v2175 = vpop.f32.mrf.mxu0
    %v2176 = vadd.f32 %v1882, %v2175
    %v2177 = vpop.f32.mrf.mxu0
    %v2178 = vadd.f32 %v1882, %v2177
    %2179 = vmatmul.bf16.gmra.mxu0 %v1926
    %v2180 = vpop.f32.mrf.mxu0
    %v2181 = vadd.f32 %v1882, %v2180
    %v2182 = vpop.f32.mrf.mxu0
    %v2183 = vadd.f32 %v1882, %v2182
    %2184 = vmatmul.bf16.gmra.mxu0 %v1927
    %v2185 = vpop.f32.mrf.mxu0
    %v2186 = vadd.f32 %v1882, %v2185
    %v2187 = vpop.f32.mrf.mxu0
    %v2188 = vadd.f32 %v1882, %v2187
    %2189 = vmatmul.bf16.gmra.mxu0 %v1928
    %v2190 = vpop.f32.mrf.mxu0
    %v2191 = vadd.f32 %v1882, %v2190
    %v2192 = vpop.f32.mrf.mxu0
    %v2193 = vadd.f32 %v1882, %v2192
    %2194 = vdwg.mxu0
    %2195 = vmatpush.bf16.msra.mxu0 %v2063
    %2196 = vmatpush.bf16.msra.mxu0 %v2059
    %2197 = vmatpush.bf16.msra.mxu0 %v2055
    %2198 = vmatpush.bf16.msra.mxu0 %v2051
    %2199 = vmatpush.bf16.msra.mxu0 %v2047
    %2200 = vmatpush.bf16.msra.mxu0 %v2043
    %2201 = vmatpush.bf16.msra.mxu0 %v2039
    %2202 = vmatpush.bf16.msra.mxu0 %v2035
    %2203 = vmatmul.bf16.gmra.mxu0 %v1921
    %v2204 = vpop.f32.mrf.mxu0
    %v2205 = vadd.f32 %v1883, %v2204
    %v2206 = vpop.f32.mrf.mxu0
    %v2207 = vadd.f32 %v1883, %v2206
    %2208 = vmatmul.bf16.gmra.mxu0 %v1922
    %v2209 = vpop.f32.mrf.mxu0
    %v2210 = vadd.f32 %v1883, %v2209
    %v2211 = vpop.f32.mrf.mxu0
    %v2212 = vadd.f32 %v1883, %v2211
    %2213 = vmatmul.bf16.gmra.mxu0 %v1923
    %v2214 = vpop.f32.mrf.mxu0
    %v2215 = vadd.f32 %v1883, %v2214
    %v2216 = vpop.f32.mrf.mxu0
    %v2217 = vadd.f32 %v1883, %v2216
    %2218 = vmatmul.bf16.gmra.mxu0 %v1924
    %v2219 = vpop.f32.mrf.mxu0
    %v2220 = vadd.f32 %v1883, %v2219
    %v2221 = vpop.f32.mrf.mxu0
    %v2222 = vadd.f32 %v1883, %v2221
    %2223 = vmatmul.bf16.gmra.mxu0 %v1925
    %v2224 = vpop.f32.mrf.mxu0
    %v2225 = vadd.f32 %v1883, %v2224
    %v2226 = vpop.f32.mrf.mxu0
    %v2227 = vadd.f32 %v1883, %v2226
    %2228 = vmatmul.bf16.gmra.mxu0 %v1926
    %v2229 = vpop.f32.mrf.mxu0
    %v2230 = vadd.f32 %v1883, %v2229
    %v2231 = vpop.f32.mrf.mxu0
    %v2232 = vadd.f32 %v1883, %v2231
    %2233 = vmatmul.bf16.gmra.mxu0 %v1927
    %v2234 = vpop.f32.mrf.mxu0
    %v2235 = vadd.f32 %v1883, %v2234
    %v2236 = vpop.f32.mrf.mxu0
    %v2237 = vadd.f32 %v1883, %v2236
    %2238 = vmatmul.bf16.gmra.mxu0 %v1928
    %v2239 = vpop.f32.mrf.mxu0
    %v2240 = vadd.f32 %v1883, %v2239
    %v2241 = vpop.f32.mrf.mxu0
    %v2242 = vadd.f32 %v1883, %v2241
    %2243 = vdwg.mxu0
    %2244 = vmatpush.bf16.msra.mxu0 %v2064
    %2245 = vmatpush.bf16.msra.mxu0 %v2060
    %2246 = vmatpush.bf16.msra.mxu0 %v2056
    %2247 = vmatpush.bf16.msra.mxu0 %v2052
    %2248 = vmatpush.bf16.msra.mxu0 %v2048
    %2249 = vmatpush.bf16.msra.mxu0 %v2044
    %2250 = vmatpush.bf16.msra.mxu0 %v2040
    %2251 = vmatpush.bf16.msra.mxu0 %v2036
    %2252 = vmatmul.bf16.gmra.mxu0 %v1921
    %v2253 = vpop.f32.mrf.mxu0
    %v2254 = vadd.f32 %v1884, %v2253
    %v2255 = vpop.f32.mrf.mxu0
    %v2256 = vadd.f32 %v1884, %v2255
    %2257 = vmatmul.bf16.gmra.mxu0 %v1922
    %v2258 = vpop.f32.mrf.mxu0
    %v2259 = vadd.f32 %v1884, %v2258
    %v2260 = vpop.f32.mrf.mxu0
    %v2261 = vadd.f32 %v1884, %v2260
    %2262 = vmatmul.bf16.gmra.mxu0 %v1923
    %v2263 = vpop.f32.mrf.mxu0
    %v2264 = vadd.f32 %v1884, %v2263
    %v2265 = vpop.f32.mrf.mxu0
    %v2266 = vadd.f32 %v1884, %v2265
    %2267 = vmatmul.bf16.gmra.mxu0 %v1924
    %v2268 = vpop.f32.mrf.mxu0
    %v2269 = vadd.f32 %v1884, %v2268
    %v2270 = vpop.f32.mrf.mxu0
    %v2271 = vadd.f32 %v1884, %v2270
    %2272 = vmatmul.bf16.gmra.mxu0 %v1925
    %v2273 = vpop.f32.mrf.mxu0
    %v2274 = vadd.f32 %v1884, %v2273
    %v2275 = vpop.f32.mrf.mxu0
    %v2276 = vadd.f32 %v1884, %v2275
    %2277 = vmatmul.bf16.gmra.mxu0 %v1926
    %v2278 = vpop.f32.mrf.mxu0
    %v2279 = vadd.f32 %v1884, %v2278
    %v2280 = vpop.f32.mrf.mxu0
    %v2281 = vadd.f32 %v1884, %v2280
    %2282 = vmatmul.bf16.gmra.mxu0 %v1927
    %v2283 = vpop.f32.mrf.mxu0
    %v2284 = vadd.f32 %v1884, %v2283
    %v2285 = vpop.f32.mrf.mxu0
    %v2286 = vadd.f32 %v1884, %v2285
    %2287 = vmatmul.bf16.gmra.mxu0 %v1928
    %v2288 = vpop.f32.mrf.mxu0
    %v2289 = vadd.f32 %v1884, %v2288
    %v2290 = vpop.f32.mrf.mxu0
    %v2291 = vadd.f32 %v1884, %v2290
    %2292 = vdwg.mxu0
    %2293 = vst [vmem:[#allocation5] sm:$0xff] %v2107
    %2294 = vst [vmem:[#allocation5 + $0x8] sm:$0xff] %v2156
    %2295 = vst [vmem:[#allocation5 + $0x10] sm:$0xff] %v2205
    %2296 = vst [vmem:[#allocation5 + $0x18] sm:$0xff] %v2254
    %2297 = vst [vmem:[#allocation5 + $0x20] sm:$0xff] %v2109
    %2298 = vst [vmem:[#allocation5 + $0x28] sm:$0xff] %v2158
    %2299 = vst [vmem:[#allocation5 + $0x30] sm:$0xff] %v2207
    %2300 = vst [vmem:[#allocation5 + $0x38] sm:$0xff] %v2256
    %2301 = vst [vmem:[#allocation5 + $0x40] sm:$0xff] %v2112
    %2302 = vst [vmem:[#allocation5 + $0x48] sm:$0xff] %v2161
    %2303 = vst [vmem:[#allocation5 + $0x50] sm:$0xff] %v2210
    %2304 = vst [vmem:[#allocation5 + $0x58] sm:$0xff] %v2259
    %2305 = vst [vmem:[#allocation5 + $0x60] sm:$0xff] %v2114
    %2306 = vst [vmem:[#allocation5 + $0x68] sm:$0xff] %v2163
    %2307 = vst [vmem:[#allocation5 + $0x70] sm:$0xff] %v2212
    %2308 = vst [vmem:[#allocation5 + $0x78] sm:$0xff] %v2261
    %2309 = vst [vmem:[#allocation5 + $0x80] sm:$0xff] %v2117
    %2310 = vst [vmem:[#allocation5 + $0x88] sm:$0xff] %v2166
    %2311 = vst [vmem:[#allocation5 + $0x90] sm:$0xff] %v2215
    %2312 = vst [vmem:[#allocation5 + $0x98] sm:$0xff] %v2264
    %2313 = vst [vmem:[#allocation5 + $0xa0] sm:$0xff] %v2119
    %2314 = vst [vmem:[#allocation5 + $0xa8] sm:$0xff] %v2168
    %2315 = vst [vmem:[#allocation5 + $0xb0] sm:$0xff] %v2217
    %2316 = vst [vmem:[#allocation5 + $0xb8] sm:$0xff] %v2266
    %2317 = vst [vmem:[#allocation5 + $0xc0] sm:$0xff] %v2122
    %2318 = vst [vmem:[#allocation5 + $0xc8] sm:$0xff] %v2171
    %2319 = vst [vmem:[#allocation5 + $0xd0] sm:$0xff] %v2220
    %2320 = vst [vmem:[#allocation5 + $0xd8] sm:$0xff] %v2269
    %2321 = vst [vmem:[#allocation5 + $0xe0] sm:$0xff] %v2124
    %2322 = vst [vmem:[#allocation5 + $0xe8] sm:$0xff] %v2173
    %2323 = vst [vmem:[#allocation5 + $0xf0] sm:$0xff] %v2222
    %2324 = vst [vmem:[#allocation5 + $0xf8] sm:$0xff] %v2271
    %2325 = vst [vmem:[#allocation5 + $0x100] sm:$0xff] %v2127
    %2326 = vst [vmem:[#allocation5 + $0x108] sm:$0xff] %v2176
    %2327 = vst [vmem:[#allocation5 + $0x110] sm:$0xff] %v2225
    %2328 = vst [vmem:[#allocation5 + $0x118] sm:$0xff] %v2274
    %2329 = vst [vmem:[#allocation5 + $0x120] sm:$0xff] %v2129
    %2330 = vst [vmem:[#allocation5 + $0x128] sm:$0xff] %v2178
    %2331 = vst [vmem:[#allocation5 + $0x130] sm:$0xff] %v2227
    %2332 = vst [vmem:[#allocation5 + $0x138] sm:$0xff] %v2276
    %2333 = vst [vmem:[#allocation5 + $0x140] sm:$0xff] %v2132
    %2334 = vst [vmem:[#allocation5 + $0x148] sm:$0xff] %v2181
    %2335 = vst [vmem:[#allocation5 + $0x150] sm:$0xff] %v2230
    %2336 = vst [vmem:[#allocation5 + $0x158] sm:$0xff] %v2279
    %2337 = vst [vmem:[#allocation5 + $0x160] sm:$0xff] %v2134
    %2338 = vst [vmem:[#allocation5 + $0x168] sm:$0xff] %v2183
    %2339 = vst [vmem:[#allocation5 + $0x170] sm:$0xff] %v2232
    %2340 = vst [vmem:[#allocation5 + $0x178] sm:$0xff] %v2281
    %2341 = vst [vmem:[#allocation5 + $0x180] sm:$0xff] %v2137
    %2342 = vst [vmem:[#allocation5 + $0x188] sm:$0xff] %v2186
    %2343 = vst [vmem:[#allocation5 + $0x190] sm:$0xff] %v2235
    %2344 = vst [vmem:[#allocation5 + $0x198] sm:$0xff] %v2284
    %2345 = vst [vmem:[#allocation5 + $0x1a0] sm:$0xff] %v2139
    %2346 = vst [vmem:[#allocation5 + $0x1a8] sm:$0xff] %v2188
    %2347 = vst [vmem:[#allocation5 + $0x1b0] sm:$0xff] %v2237
    %2348 = vst [vmem:[#allocation5 + $0x1b8] sm:$0xff] %v2286
    %2349 = vst [vmem:[#allocation5 + $0x1c0] sm:$0xff] %v2142
    %2350 = vst [vmem:[#allocation5 + $0x1c8] sm:$0xff] %v2191
    %2351 = vst [vmem:[#allocation5 + $0x1d0] sm:$0xff] %v2240
    %2352 = vst [vmem:[#allocation5 + $0x1d8] sm:$0xff] %v2289
    %2353 = vst [vmem:[#allocation5 + $0x1e0] sm:$0xff] %v2144
    %2354 = vst [vmem:[#allocation5 + $0x1e8] sm:$0xff] %v2193
    %2355 = vst [vmem:[#allocation5 + $0x1f0] sm:$0xff] %v2242
    %2356 = vst [vmem:[#allocation5 + $0x1f8] sm:$0xff] %v2291
    %v2357 = vld [vmem:[#allocation14] sm:$0xff]
    %v2358 = vld [vmem:[#allocation14 + $0x8] sm:$0xff]
    %v2359 = vld [vmem:[#allocation14 + $0x10] sm:$0xff]
    %v2360 = vld [vmem:[#allocation14 + $0x18] sm:$0xff]
    %v2361 = vld [vmem:[#allocation14 + $0x20] sm:$0xff]
    %v2362 = vld [vmem:[#allocation14 + $0x28] sm:$0xff]
    %v2363 = vld [vmem:[#allocation14 + $0x30] sm:$0xff]
    %v2364 = vld [vmem:[#allocation14 + $0x38] sm:$0xff]
    %v2365 = vld [vmem:[#allocation14 + $0x40] sm:$0xff]
    %v2366 = vld [vmem:[#allocation14 + $0x48] sm:$0xff]
    %v2367 = vld [vmem:[#allocation14 + $0x50] sm:$0xff]
    %v2368 = vld [vmem:[#allocation14 + $0x58] sm:$0xff]
    %v2369 = vld [vmem:[#allocation14 + $0x60] sm:$0xff]
    %v2370 = vld [vmem:[#allocation14 + $0x68] sm:$0xff]
    %v2371 = vld [vmem:[#allocation14 + $0x70] sm:$0xff]
    %v2372 = vld [vmem:[#allocation14 + $0x78] sm:$0xff]
    %v2373 = vld [vmem:[#allocation14 + $0x80] sm:$0xff]
    %v2374 = vld [vmem:[#allocation14 + $0x88] sm:$0xff]
    %v2375 = vld [vmem:[#allocation14 + $0x90] sm:$0xff]
    %v2376 = vld [vmem:[#allocation14 + $0x98] sm:$0xff]
    %v2377 = vld [vmem:[#allocation14 + $0xa0] sm:$0xff]
    %v2378 = vld [vmem:[#allocation14 + $0xa8] sm:$0xff]
    %v2379 = vld [vmem:[#allocation14 + $0xb0] sm:$0xff]
    %v2380 = vld [vmem:[#allocation14 + $0xb8] sm:$0xff]
    %v2381 = vld [vmem:[#allocation14 + $0xc0] sm:$0xff]
    %v2382 = vld [vmem:[#allocation14 + $0xc8] sm:$0xff]
    %v2383 = vld [vmem:[#allocation14 + $0xd0] sm:$0xff]
    %v2384 = vld [vmem:[#allocation14 + $0xd8] sm:$0xff]
    %v2385 = vld [vmem:[#allocation14 + $0xe0] sm:$0xff]
    %v2386 = vld [vmem:[#allocation14 + $0xe8] sm:$0xff]
    %v2387 = vld [vmem:[#allocation14 + $0xf0] sm:$0xff]
    %v2388 = vld [vmem:[#allocation14 + $0xf8] sm:$0xff]
    %s2389 = scalar_lea.vmem [#allocation2], 16
    %v2390 = vld [vmem:[%s2389] sm:$0xff]
    %v2391 = vld [vmem:[%s2389 + $0x8] sm:$0xff]
    %s2392 = scalar_lea.vmem [#allocation3], 16
    %v2393 = vld [vmem:[%s2392] sm:$0xff]
    %v2394 = vld [vmem:[%s2392 + $0x8] sm:$0xff]
    %v2395 = vld [vmem:[#allocation5] sm:$0xff]
    %v2396 = vld [vmem:[#allocation5 + $0x8] sm:$0xff]
    %v2397 = vld [vmem:[#allocation5 + $0x10] sm:$0xff]
    %v2398 = vld [vmem:[#allocation5 + $0x18] sm:$0xff]
    %v2399 = vld [vmem:[#allocation5 + $0x20] sm:$0xff]
    %v2400 = vld [vmem:[#allocation5 + $0x28] sm:$0xff]
    %v2401 = vld [vmem:[#allocation5 + $0x30] sm:$0xff]
    %v2402 = vld [vmem:[#allocation5 + $0x38] sm:$0xff]
    %v2403 = vpack.c.bf16 %v2391, %v2390
    %v2436 = vunpack.c.l.b16 %v2357
    %v2437 = vunpack.c.h.b16 %v2357
    %v2438 = vunpack.c.l.b16 %v2358
    %v2439 = vunpack.c.h.b16 %v2358
    %v2440 = vunpack.c.l.b16 %v2359
    %v2441 = vunpack.c.h.b16 %v2359
    %v2442 = vunpack.c.l.b16 %v2360
    %v2443 = vunpack.c.h.b16 %v2360
    %v2444 = vunpack.c.l.b16 %v2361
    %v2445 = vunpack.c.h.b16 %v2361
    %v2446 = vunpack.c.l.b16 %v2362
    %v2447 = vunpack.c.h.b16 %v2362
    %v2448 = vunpack.c.l.b16 %v2363
    %v2449 = vunpack.c.h.b16 %v2363
    %v2450 = vunpack.c.l.b16 %v2364
    %v2451 = vunpack.c.h.b16 %v2364
    %v2452 = vunpack.c.l.b16 %v2365
    %v2453 = vunpack.c.h.b16 %v2365
    %v2454 = vunpack.c.l.b16 %v2366
    %v2455 = vunpack.c.h.b16 %v2366
    %v2456 = vunpack.c.l.b16 %v2367
    %v2457 = vunpack.c.h.b16 %v2367
    %v2458 = vunpack.c.l.b16 %v2368
    %v2459 = vunpack.c.h.b16 %v2368
    %v2460 = vunpack.c.l.b16 %v2369
    %v2461 = vunpack.c.h.b16 %v2369
    %v2462 = vunpack.c.l.b16 %v2370
    %v2463 = vunpack.c.h.b16 %v2370
    %v2464 = vunpack.c.l.b16 %v2371
    %v2465 = vunpack.c.h.b16 %v2371
    %v2466 = vunpack.c.l.b16 %v2372
    %v2467 = vunpack.c.h.b16 %v2372
    %v2468 = vunpack.c.l.b16 %v2373
    %v2469 = vunpack.c.h.b16 %v2373
    %v2470 = vunpack.c.l.b16 %v2374
    %v2471 = vunpack.c.h.b16 %v2374
    %v2472 = vunpack.c.l.b16 %v2375
    %v2473 = vunpack.c.h.b16 %v2375
    %v2474 = vunpack.c.l.b16 %v2376
    %v2475 = vunpack.c.h.b16 %v2376
    %v2476 = vunpack.c.l.b16 %v2377
    %v2477 = vunpack.c.h.b16 %v2377
    %v2478 = vunpack.c.l.b16 %v2378
    %v2479 = vunpack.c.h.b16 %v2378
    %v2480 = vunpack.c.l.b16 %v2379
    %v2481 = vunpack.c.h.b16 %v2379
    %v2482 = vunpack.c.l.b16 %v2380
    %v2483 = vunpack.c.h.b16 %v2380
    %v2484 = vunpack.c.l.b16 %v2381
    %v2485 = vunpack.c.h.b16 %v2381
    %v2486 = vunpack.c.l.b16 %v2382
    %v2487 = vunpack.c.h.b16 %v2382
    %v2488 = vunpack.c.l.b16 %v2383
    %v2489 = vunpack.c.h.b16 %v2383
    %v2490 = vunpack.c.l.b16 %v2384
    %v2491 = vunpack.c.h.b16 %v2384
    %v2492 = vunpack.c.l.b16 %v2385
    %v2493 = vunpack.c.h.b16 %v2385
    %v2494 = vunpack.c.l.b16 %v2386
    %v2495 = vunpack.c.h.b16 %v2386
    %v2496 = vunpack.c.l.b16 %v2387
    %v2497 = vunpack.c.h.b16 %v2387
    %v2498 = vunpack.c.l.b16 %v2388
    %v2499 = vunpack.c.h.b16 %v2388
    %v2500 = vpack.c.b16 %v2440, %v2436
    %v2501 = vpack.c.b16 %v2441, %v2437
    %v2502 = vpack.c.b16 %v2442, %v2438
    %v2503 = vpack.c.b16 %v2443, %v2439
    %v2504 = vpack.c.b16 %v2448, %v2444
    %v2505 = vpack.c.b16 %v2449, %v2445
    %v2506 = vpack.c.b16 %v2450, %v2446
    %v2507 = vpack.c.b16 %v2451, %v2447
    %v2508 = vpack.c.b16 %v2456, %v2452
    %v2509 = vpack.c.b16 %v2457, %v2453
    %v2510 = vpack.c.b16 %v2458, %v2454
    %v2511 = vpack.c.b16 %v2459, %v2455
    %v2512 = vpack.c.b16 %v2464, %v2460
    %v2513 = vpack.c.b16 %v2465, %v2461
    %v2514 = vpack.c.b16 %v2466, %v2462
    %v2515 = vpack.c.b16 %v2467, %v2463
    %v2516 = vpack.c.b16 %v2472, %v2468
    %v2517 = vpack.c.b16 %v2473, %v2469
    %v2518 = vpack.c.b16 %v2474, %v2470
    %v2519 = vpack.c.b16 %v2475, %v2471
    %v2520 = vpack.c.b16 %v2480, %v2476
    %v2521 = vpack.c.b16 %v2481, %v2477
    %v2522 = vpack.c.b16 %v2482, %v2478
    %v2523 = vpack.c.b16 %v2483, %v2479
    %v2524 = vpack.c.b16 %v2488, %v2484
    %v2525 = vpack.c.b16 %v2489, %v2485
    %v2526 = vpack.c.b16 %v2490, %v2486
    %v2527 = vpack.c.b16 %v2491, %v2487
    %v2528 = vpack.c.b16 %v2496, %v2492
    %v2529 = vpack.c.b16 %v2497, %v2493
    %v2530 = vpack.c.b16 %v2498, %v2494
    %v2531 = vpack.c.b16 %v2499, %v2495
    %2564 = vmatpush.bf16.msra.mxu0 %v2528
    %2565 = vmatpush.bf16.msra.mxu0 %v2524
    %2566 = vmatpush.bf16.msra.mxu0 %v2520
    %2567 = vmatpush.bf16.msra.mxu0 %v2516
    %2568 = vmatpush.bf16.msra.mxu0 %v2512
    %2569 = vmatpush.bf16.msra.mxu0 %v2508
    %2570 = vmatpush.bf16.msra.mxu0 %v2504
    %2571 = vmatpush.bf16.msra.mxu0 %v2500
    %2572 = vmatmul.bf16.gmra.mxu0 %v2403
    %v2573 = vpop.f32.mrf.mxu0
    %v2574 = vadd.f32 0.0, %v2573
    %v2575 = vpop.f32.mrf.mxu0
    %v2576 = vadd.f32 0.0, %v2575
    %2577 = vdwg.mxu0
    %2578 = vmatpush.bf16.msra.mxu0 %v2529
    %2579 = vmatpush.bf16.msra.mxu0 %v2525
    %2580 = vmatpush.bf16.msra.mxu0 %v2521
    %2581 = vmatpush.bf16.msra.mxu0 %v2517
    %2582 = vmatpush.bf16.msra.mxu0 %v2513
    %2583 = vmatpush.bf16.msra.mxu0 %v2509
    %2584 = vmatpush.bf16.msra.mxu0 %v2505
    %2585 = vmatpush.bf16.msra.mxu0 %v2501
    %2586 = vmatmul.bf16.gmra.mxu0 %v2403
    %v2587 = vpop.f32.mrf.mxu0
    %v2588 = vadd.f32 0.0, %v2587
    %v2589 = vpop.f32.mrf.mxu0
    %v2590 = vadd.f32 0.0, %v2589
    %2591 = vdwg.mxu0
    %2592 = vmatpush.bf16.msra.mxu0 %v2530
    %2593 = vmatpush.bf16.msra.mxu0 %v2526
    %2594 = vmatpush.bf16.msra.mxu0 %v2522
    %2595 = vmatpush.bf16.msra.mxu0 %v2518
    %2596 = vmatpush.bf16.msra.mxu0 %v2514
    %2597 = vmatpush.bf16.msra.mxu0 %v2510
    %2598 = vmatpush.bf16.msra.mxu0 %v2506
    %2599 = vmatpush.bf16.msra.mxu0 %v2502
    %2600 = vmatmul.bf16.gmra.mxu0 %v2403
    %v2601 = vpop.f32.mrf.mxu0
    %v2602 = vadd.f32 0.0, %v2601
    %v2603 = vpop.f32.mrf.mxu0
    %v2604 = vadd.f32 0.0, %v2603
    %2605 = vdwg.mxu0
    %2606 = vmatpush.bf16.msra.mxu0 %v2531
    %2607 = vmatpush.bf16.msra.mxu0 %v2527
    %2608 = vmatpush.bf16.msra.mxu0 %v2523
    %2609 = vmatpush.bf16.msra.mxu0 %v2519
    %2610 = vmatpush.bf16.msra.mxu0 %v2515
    %2611 = vmatpush.bf16.msra.mxu0 %v2511
    %2612 = vmatpush.bf16.msra.mxu0 %v2507
    %2613 = vmatpush.bf16.msra.mxu0 %v2503
    %2614 = vmatmul.bf16.gmra.mxu0 %v2403
    %v2615 = vpop.f32.mrf.mxu0
    %v2616 = vadd.f32 0.0, %v2615
    %v2617 = vpop.f32.mrf.mxu0
    %v2618 = vadd.f32 0.0, %v2617
    %2619 = vdwg.mxu0
    %v2620 = vadd.f32 %v2395, %v2574
    %v2621 = vadd.f32 %v2396, %v2588
    %v2622 = vadd.f32 %v2397, %v2602
    %v2623 = vadd.f32 %v2398, %v2616
    %v2624 = vadd.f32 %v2399, %v2576
    %v2625 = vadd.f32 %v2400, %v2590
    %v2626 = vadd.f32 %v2401, %v2604
    %v2627 = vadd.f32 %v2402, %v2618
    %v2628 = vmul.f32 %v2620, 0.5
    %v2629 = vmul.f32 %v2624, 0.5
    %v2630 = vtanh.pop %v2628
    %v2631 = vtanh.pop %v2629
    %v2632 = vmul.f32 %v2630, 0.5
    %v2633 = vmul.f32 %v2631, 0.5
    %v2634 = vadd.f32 %v2632, 0.5
    %v2635 = vadd.f32 %v2633, 0.5
    %v2636 = vmul.f32 %v2621, 0.5
    %v2637 = vmul.f32 %v2625, 0.5
    %v2638 = vtanh.pop %v2636
    %v2639 = vtanh.pop %v2637
    %v2640 = vmul.f32 %v2638, 0.5
    %v2641 = vmul.f32 %v2639, 0.5
    %v2642 = vadd.f32 %v2640, 0.5
    %v2643 = vadd.f32 %v2641, 0.5
    %v2644 = vtanh.pop %v2622
    %v2645 = vtanh.pop %v2626
    %v2646 = vmul.f32 %v2623, 0.5
    %v2647 = vmul.f32 %v2627, 0.5
    %v2648 = vtanh.pop %v2646
    %v2649 = vtanh.pop %v2647
    %v2650 = vmul.f32 %v2648, 0.5
    %v2651 = vmul.f32 %v2649, 0.5
    %v2652 = vadd.f32 %v2650, 0.5
    %v2653 = vadd.f32 %v2651, 0.5
    %v2654 = vmul.f32 %v2642, %v2393
    %v2655 = vmul.f32 %v2643, %v2394
    %v2656 = vmul.f32 %v2634, %v2644
    %v2657 = vmul.f32 %v2635, %v2645
    %v2658 = vadd.f32 %v2654, %v2656
    %v2659 = vadd.f32 %v2655, %v2657
    %v2660 = vtanh.pop %v2658
    %v2661 = vtanh.pop %v2659
    %v2662 = vmul.f32 %v2652, %v2660
    %v2663 = vmul.f32 %v2653, %v2661
    %v2664 = vld [vmem:[%s986] sm:$0xff]
    %v2665 = vld [vmem:[%s986 + $0x8] sm:$0xff]
    %v2666 = vld [vmem:[%s986 + $0x10] sm:$0xff]
    %v2667 = vld [vmem:[%s986 + $0x18] sm:$0xff]
    %v2668 = vld [vmem:[%s986 + $0x20] sm:$0xff]
    %v2669 = vld [vmem:[%s986 + $0x28] sm:$0xff]
    %v2670 = vld [vmem:[%s986 + $0x30] sm:$0xff]
    %v2671 = vld [vmem:[%s986 + $0x38] sm:$0xff]
    %v2672 = vpack.c.bf16 %v2663, %v2662
    %2673 = vmatpush.bf16.msra.mxu0 %v2528
    %2674 = vmatpush.bf16.msra.mxu0 %v2524
    %2675 = vmatpush.bf16.msra.mxu0 %v2520
    %2676 = vmatpush.bf16.msra.mxu0 %v2516
    %2677 = vmatpush.bf16.msra.mxu0 %v2512
    %2678 = vmatpush.bf16.msra.mxu0 %v2508
    %2679 = vmatpush.bf16.msra.mxu0 %v2504
    %2680 = vmatpush.bf16.msra.mxu0 %v2500
    %2681 = vmatmul.bf16.gmra.mxu0 %v2672
    %v2682 = vpop.f32.mrf.mxu0
    %v2683 = vadd.f32 0.0, %v2682
    %v2684 = vpop.f32.mrf.mxu0
    %v2685 = vadd.f32 0.0, %v2684
    %2686 = vdwg.mxu0
    %2687 = vmatpush.bf16.msra.mxu0 %v2529
    %2688 = vmatpush.bf16.msra.mxu0 %v2525
    %2689 = vmatpush.bf16.msra.mxu0 %v2521
    %2690 = vmatpush.bf16.msra.mxu0 %v2517
    %2691 = vmatpush.bf16.msra.mxu0 %v2513
    %2692 = vmatpush.bf16.msra.mxu0 %v2509
    %2693 = vmatpush.bf16.msra.mxu0 %v2505
    %2694 = vmatpush.bf16.msra.mxu0 %v2501
    %2695 = vmatmul.bf16.gmra.mxu0 %v2672
    %v2696 = vpop.f32.mrf.mxu0
    %v2697 = vadd.f32 0.0, %v2696
    %v2698 = vpop.f32.mrf.mxu0
    %v2699 = vadd.f32 0.0, %v2698
    %2700 = vdwg.mxu0
    %2701 = vmatpush.bf16.msra.mxu0 %v2530
    %2702 = vmatpush.bf16.msra.mxu0 %v2526
    %2703 = vmatpush.bf16.msra.mxu0 %v2522
    %2704 = vmatpush.bf16.msra.mxu0 %v2518
    %2705 = vmatpush.bf16.msra.mxu0 %v2514
    %2706 = vmatpush.bf16.msra.mxu0 %v2510
    %2707 = vmatpush.bf16.msra.mxu0 %v2506
    %2708 = vmatpush.bf16.msra.mxu0 %v2502
    %2709 = vmatmul.bf16.gmra.mxu0 %v2672
    %v2710 = vpop.f32.mrf.mxu0
    %v2711 = vadd.f32 0.0, %v2710
    %v2712 = vpop.f32.mrf.mxu0
    %v2713 = vadd.f32 0.0, %v2712
    %2714 = vdwg.mxu0
    %2715 = vmatpush.bf16.msra.mxu0 %v2531
    %2716 = vmatpush.bf16.msra.mxu0 %v2527
    %2717 = vmatpush.bf16.msra.mxu0 %v2523
    %2718 = vmatpush.bf16.msra.mxu0 %v2519
    %2719 = vmatpush.bf16.msra.mxu0 %v2515
    %2720 = vmatpush.bf16.msra.mxu0 %v2511
    %2721 = vmatpush.bf16.msra.mxu0 %v2507
    %2722 = vmatpush.bf16.msra.mxu0 %v2503
    %2723 = vmatmul.bf16.gmra.mxu0 %v2672
    %v2724 = vpop.f32.mrf.mxu0
    %v2725 = vadd.f32 0.0, %v2724
    %v2726 = vpop.f32.mrf.mxu0
    %v2727 = vadd.f32 0.0, %v2726
    %2728 = vdwg.mxu0
    %v2729 = vadd.f32 %v2664, %v2683
    %v2730 = vadd.f32 %v2665, %v2697
    %v2731 = vadd.f32 %v2666, %v2711
    %v2732 = vadd.f32 %v2667, %v2725
    %v2733 = vadd.f32 %v2668, %v2685
    %v2734 = vadd.f32 %v2669, %v2699
    %v2735 = vadd.f32 %v2670, %v2713
    %v2736 = vadd.f32 %v2671, %v2727
    %v2737 = vmul.f32 %v2729, 0.5
    %v2738 = vmul.f32 %v2733, 0.5
    %v2739 = vtanh.pop %v2737
    %v2740 = vtanh.pop %v2738
    %v2741 = vmul.f32 %v2739, 0.5
    %v2742 = vmul.f32 %v2740, 0.5
    %v2743 = vadd.f32 %v2741, 0.5
    %v2744 = vadd.f32 %v2742, 0.5
    %v2745 = vmul.f32 %v2730, 0.5
    %v2746 = vmul.f32 %v2734, 0.5
    %v2747 = vtanh.pop %v2745
    %v2748 = vtanh.pop %v2746
    %v2749 = vmul.f32 %v2747, 0.5
    %v2750 = vmul.f32 %v2748, 0.5
    %v2751 = vadd.f32 %v2749, 0.5
    %v2752 = vadd.f32 %v2750, 0.5
    %v2753 = vtanh.pop %v2731
    %v2754 = vtanh.pop %v2735
    %v2755 = vmul.f32 %v2732, 0.5
    %v2756 = vmul.f32 %v2736, 0.5
    %v2757 = vtanh.pop %v2755
    %v2758 = vtanh.pop %v2756
    %v2759 = vmul.f32 %v2757, 0.5
    %v2760 = vmul.f32 %v2758, 0.5
    %v2761 = vadd.f32 %v2759, 0.5
    %v2762 = vadd.f32 %v2760, 0.5
    %v2763 = vmul.f32 %v2751, %v2658
    %v2764 = vmul.f32 %v2752, %v2659
    %v2765 = vmul.f32 %v2743, %v2753
    %v2766 = vmul.f32 %v2744, %v2754
    %v2767 = vadd.f32 %v2763, %v2765
    %v2768 = vadd.f32 %v2764, %v2766
    %v2769 = vtanh.pop %v2767
    %v2770 = vtanh.pop %v2768
    %v2771 = vmul.f32 %v2761, %v2769
    %v2772 = vmul.f32 %v2762, %v2770
    %v2773 = vld [vmem:[%s1106] sm:$0xff]
    %v2774 = vld [vmem:[%s1106 + $0x8] sm:$0xff]
    %v2775 = vld [vmem:[%s1106 + $0x10] sm:$0xff]
    %v2776 = vld [vmem:[%s1106 + $0x18] sm:$0xff]
    %v2777 = vld [vmem:[%s1106 + $0x20] sm:$0xff]
    %v2778 = vld [vmem:[%s1106 + $0x28] sm:$0xff]
    %v2779 = vld [vmem:[%s1106 + $0x30] sm:$0xff]
    %v2780 = vld [vmem:[%s1106 + $0x38] sm:$0xff]
    %v2781 = vpack.c.bf16 %v2772, %v2771
    %2782 = vmatpush.bf16.msra.mxu0 %v2528
    %2783 = vmatpush.bf16.msra.mxu0 %v2524
    %2784 = vmatpush.bf16.msra.mxu0 %v2520
    %2785 = vmatpush.bf16.msra.mxu0 %v2516
    %2786 = vmatpush.bf16.msra.mxu0 %v2512
    %2787 = vmatpush.bf16.msra.mxu0 %v2508
    %2788 = vmatpush.bf16.msra.mxu0 %v2504
    %2789 = vmatpush.bf16.msra.mxu0 %v2500
    %2790 = vmatmul.bf16.gmra.mxu0 %v2781
    %v2791 = vpop.f32.mrf.mxu0
    %v2792 = vadd.f32 0.0, %v2791
    %v2793 = vpop.f32.mrf.mxu0
    %v2794 = vadd.f32 0.0, %v2793
    %2795 = vdwg.mxu0
    %2796 = vmatpush.bf16.msra.mxu0 %v2529
    %2797 = vmatpush.bf16.msra.mxu0 %v2525
    %2798 = vmatpush.bf16.msra.mxu0 %v2521
    %2799 = vmatpush.bf16.msra.mxu0 %v2517
    %2800 = vmatpush.bf16.msra.mxu0 %v2513
    %2801 = vmatpush.bf16.msra.mxu0 %v2509
    %2802 = vmatpush.bf16.msra.mxu0 %v2505
    %2803 = vmatpush.bf16.msra.mxu0 %v2501
    %2804 = vmatmul.bf16.gmra.mxu0 %v2781
    %v2805 = vpop.f32.mrf.mxu0
    %v2806 = vadd.f32 0.0, %v2805
    %v2807 = vpop.f32.mrf.mxu0
    %v2808 = vadd.f32 0.0, %v2807
    %2809 = vdwg.mxu0
    %2810 = vmatpush.bf16.msra.mxu0 %v2530
    %2811 = vmatpush.bf16.msra.mxu0 %v2526
    %2812 = vmatpush.bf16.msra.mxu0 %v2522
    %2813 = vmatpush.bf16.msra.mxu0 %v2518
    %2814 = vmatpush.bf16.msra.mxu0 %v2514
    %2815 = vmatpush.bf16.msra.mxu0 %v2510
    %2816 = vmatpush.bf16.msra.mxu0 %v2506
    %2817 = vmatpush.bf16.msra.mxu0 %v2502
    %2818 = vmatmul.bf16.gmra.mxu0 %v2781
    %v2819 = vpop.f32.mrf.mxu0
    %v2820 = vadd.f32 0.0, %v2819
    %v2821 = vpop.f32.mrf.mxu0
    %v2822 = vadd.f32 0.0, %v2821
    %2823 = vdwg.mxu0
    %2824 = vmatpush.bf16.msra.mxu0 %v2531
    %2825 = vmatpush.bf16.msra.mxu0 %v2527
    %2826 = vmatpush.bf16.msra.mxu0 %v2523
    %2827 = vmatpush.bf16.msra.mxu0 %v2519
    %2828 = vmatpush.bf16.msra.mxu0 %v2515
    %2829 = vmatpush.bf16.msra.mxu0 %v2511
    %2830 = vmatpush.bf16.msra.mxu0 %v2507
    %2831 = vmatpush.bf16.msra.mxu0 %v2503
    %2832 = vmatmul.bf16.gmra.mxu0 %v2781
    %v2833 = vpop.f32.mrf.mxu0
    %v2834 = vadd.f32 0.0, %v2833
    %v2835 = vpop.f32.mrf.mxu0
    %v2836 = vadd.f32 0.0, %v2835
    %2837 = vdwg.mxu0
    %v2838 = vadd.f32 %v2773, %v2792
    %v2839 = vadd.f32 %v2774, %v2806
    %v2840 = vadd.f32 %v2775, %v2820
    %v2841 = vadd.f32 %v2776, %v2834
    %v2842 = vadd.f32 %v2777, %v2794
    %v2843 = vadd.f32 %v2778, %v2808
    %v2844 = vadd.f32 %v2779, %v2822
    %v2845 = vadd.f32 %v2780, %v2836
    %v2846 = vmul.f32 %v2838, 0.5
    %v2847 = vmul.f32 %v2842, 0.5
    %v2848 = vtanh.pop %v2846
    %v2849 = vtanh.pop %v2847
    %v2850 = vmul.f32 %v2848, 0.5
    %v2851 = vmul.f32 %v2849, 0.5
    %v2852 = vadd.f32 %v2850, 0.5
    %v2853 = vadd.f32 %v2851, 0.5
    %v2854 = vmul.f32 %v2839, 0.5
    %v2855 = vmul.f32 %v2843, 0.5
    %v2856 = vtanh.pop %v2854
    %v2857 = vtanh.pop %v2855
    %v2858 = vmul.f32 %v2856, 0.5
    %v2859 = vmul.f32 %v2857, 0.5
    %v2860 = vadd.f32 %v2858, 0.5
    %v2861 = vadd.f32 %v2859, 0.5
    %v2862 = vtanh.pop %v2840
    %v2863 = vtanh.pop %v2844
    %v2864 = vmul.f32 %v2841, 0.5
    %v2865 = vmul.f32 %v2845, 0.5
    %v2866 = vtanh.pop %v2864
    %v2867 = vtanh.pop %v2865
    %v2868 = vmul.f32 %v2866, 0.5
    %v2869 = vmul.f32 %v2867, 0.5
    %v2870 = vadd.f32 %v2868, 0.5
    %v2871 = vadd.f32 %v2869, 0.5
    %v2872 = vmul.f32 %v2860, %v2767
    %v2873 = vmul.f32 %v2861, %v2768
    %v2874 = vmul.f32 %v2852, %v2862
    %v2875 = vmul.f32 %v2853, %v2863
    %v2876 = vadd.f32 %v2872, %v2874
    %v2877 = vadd.f32 %v2873, %v2875
    %v2878 = vtanh.pop %v2876
    %v2879 = vtanh.pop %v2877
    %v2880 = vmul.f32 %v2870, %v2878
    %v2881 = vmul.f32 %v2871, %v2879
    %v2882 = vld [vmem:[%s1226] sm:$0xff]
    %v2883 = vld [vmem:[%s1226 + $0x8] sm:$0xff]
    %v2884 = vld [vmem:[%s1226 + $0x10] sm:$0xff]
    %v2885 = vld [vmem:[%s1226 + $0x18] sm:$0xff]
    %v2886 = vld [vmem:[%s1226 + $0x20] sm:$0xff]
    %v2887 = vld [vmem:[%s1226 + $0x28] sm:$0xff]
    %v2888 = vld [vmem:[%s1226 + $0x30] sm:$0xff]
    %v2889 = vld [vmem:[%s1226 + $0x38] sm:$0xff]
    %v2890 = vpack.c.bf16 %v2881, %v2880
    %2891 = vmatpush.bf16.msra.mxu0 %v2528
    %2892 = vmatpush.bf16.msra.mxu0 %v2524
    %2893 = vmatpush.bf16.msra.mxu0 %v2520
    %2894 = vmatpush.bf16.msra.mxu0 %v2516
    %2895 = vmatpush.bf16.msra.mxu0 %v2512
    %2896 = vmatpush.bf16.msra.mxu0 %v2508
    %2897 = vmatpush.bf16.msra.mxu0 %v2504
    %2898 = vmatpush.bf16.msra.mxu0 %v2500
    %2899 = vmatmul.bf16.gmra.mxu0 %v2890
    %v2900 = vpop.f32.mrf.mxu0
    %v2901 = vadd.f32 0.0, %v2900
    %v2902 = vpop.f32.mrf.mxu0
    %v2903 = vadd.f32 0.0, %v2902
    %2904 = vdwg.mxu0
    %2905 = vmatpush.bf16.msra.mxu0 %v2529
    %2906 = vmatpush.bf16.msra.mxu0 %v2525
    %2907 = vmatpush.bf16.msra.mxu0 %v2521
    %2908 = vmatpush.bf16.msra.mxu0 %v2517
    %2909 = vmatpush.bf16.msra.mxu0 %v2513
    %2910 = vmatpush.bf16.msra.mxu0 %v2509
    %2911 = vmatpush.bf16.msra.mxu0 %v2505
    %2912 = vmatpush.bf16.msra.mxu0 %v2501
    %2913 = vmatmul.bf16.gmra.mxu0 %v2890
    %v2914 = vpop.f32.mrf.mxu0
    %v2915 = vadd.f32 0.0, %v2914
    %v2916 = vpop.f32.mrf.mxu0
    %v2917 = vadd.f32 0.0, %v2916
    %2918 = vdwg.mxu0
    %2919 = vmatpush.bf16.msra.mxu0 %v2530
    %2920 = vmatpush.bf16.msra.mxu0 %v2526
    %2921 = vmatpush.bf16.msra.mxu0 %v2522
    %2922 = vmatpush.bf16.msra.mxu0 %v2518
    %2923 = vmatpush.bf16.msra.mxu0 %v2514
    %2924 = vmatpush.bf16.msra.mxu0 %v2510
    %2925 = vmatpush.bf16.msra.mxu0 %v2506
    %2926 = vmatpush.bf16.msra.mxu0 %v2502
    %2927 = vmatmul.bf16.gmra.mxu0 %v2890
    %v2928 = vpop.f32.mrf.mxu0
    %v2929 = vadd.f32 0.0, %v2928
    %v2930 = vpop.f32.mrf.mxu0
    %v2931 = vadd.f32 0.0, %v2930
    %2932 = vdwg.mxu0
    %2933 = vmatpush.bf16.msra.mxu0 %v2531
    %2934 = vmatpush.bf16.msra.mxu0 %v2527
    %2935 = vmatpush.bf16.msra.mxu0 %v2523
    %2936 = vmatpush.bf16.msra.mxu0 %v2519
    %2937 = vmatpush.bf16.msra.mxu0 %v2515
    %2938 = vmatpush.bf16.msra.mxu0 %v2511
    %2939 = vmatpush.bf16.msra.mxu0 %v2507
    %2940 = vmatpush.bf16.msra.mxu0 %v2503
    %2941 = vmatmul.bf16.gmra.mxu0 %v2890
    %v2942 = vpop.f32.mrf.mxu0
    %v2943 = vadd.f32 0.0, %v2942
    %v2944 = vpop.f32.mrf.mxu0
    %v2945 = vadd.f32 0.0, %v2944
    %2946 = vdwg.mxu0
    %v2947 = vadd.f32 %v2882, %v2901
    %v2948 = vadd.f32 %v2883, %v2915
    %v2949 = vadd.f32 %v2884, %v2929
    %v2950 = vadd.f32 %v2885, %v2943
    %v2951 = vadd.f32 %v2886, %v2903
    %v2952 = vadd.f32 %v2887, %v2917
    %v2953 = vadd.f32 %v2888, %v2931
    %v2954 = vadd.f32 %v2889, %v2945
    %v2955 = vmul.f32 %v2947, 0.5
    %v2956 = vmul.f32 %v2951, 0.5
    %v2957 = vtanh.pop %v2955
    %v2958 = vtanh.pop %v2956
    %v2959 = vmul.f32 %v2957, 0.5
    %v2960 = vmul.f32 %v2958, 0.5
    %v2961 = vadd.f32 %v2959, 0.5
    %v2962 = vadd.f32 %v2960, 0.5
    %v2963 = vmul.f32 %v2948, 0.5
    %v2964 = vmul.f32 %v2952, 0.5
    %v2965 = vtanh.pop %v2963
    %v2966 = vtanh.pop %v2964
    %v2967 = vmul.f32 %v2965, 0.5
    %v2968 = vmul.f32 %v2966, 0.5
    %v2969 = vadd.f32 %v2967, 0.5
    %v2970 = vadd.f32 %v2968, 0.5
    %v2971 = vtanh.pop %v2949
    %v2972 = vtanh.pop %v2953
    %v2973 = vmul.f32 %v2950, 0.5
    %v2974 = vmul.f32 %v2954, 0.5
    %v2975 = vtanh.pop %v2973
    %v2976 = vtanh.pop %v2974
    %v2977 = vmul.f32 %v2975, 0.5
    %v2978 = vmul.f32 %v2976, 0.5
    %v2979 = vadd.f32 %v2977, 0.5
    %v2980 = vadd.f32 %v2978, 0.5
    %v2981 = vmul.f32 %v2969, %v2876
    %v2982 = vmul.f32 %v2970, %v2877
    %v2983 = vmul.f32 %v2961, %v2971
    %v2984 = vmul.f32 %v2962, %v2972
    %v2985 = vadd.f32 %v2981, %v2983
    %v2986 = vadd.f32 %v2982, %v2984
    %v2987 = vtanh.pop %v2985
    %v2988 = vtanh.pop %v2986
    %v2989 = vmul.f32 %v2979, %v2987
    %v2990 = vmul.f32 %v2980, %v2988
    %v2991 = vld [vmem:[%s1346] sm:$0xff]
    %v2992 = vld [vmem:[%s1346 + $0x8] sm:$0xff]
    %v2993 = vld [vmem:[%s1346 + $0x10] sm:$0xff]
    %v2994 = vld [vmem:[%s1346 + $0x18] sm:$0xff]
    %v2995 = vld [vmem:[%s1346 + $0x20] sm:$0xff]
    %v2996 = vld [vmem:[%s1346 + $0x28] sm:$0xff]
    %v2997 = vld [vmem:[%s1346 + $0x30] sm:$0xff]
    %v2998 = vld [vmem:[%s1346 + $0x38] sm:$0xff]
    %v2999 = vpack.c.bf16 %v2990, %v2989
    %3000 = vmatpush.bf16.msra.mxu0 %v2528
    %3001 = vmatpush.bf16.msra.mxu0 %v2524
    %3002 = vmatpush.bf16.msra.mxu0 %v2520
    %3003 = vmatpush.bf16.msra.mxu0 %v2516
    %3004 = vmatpush.bf16.msra.mxu0 %v2512
    %3005 = vmatpush.bf16.msra.mxu0 %v2508
    %3006 = vmatpush.bf16.msra.mxu0 %v2504
    %3007 = vmatpush.bf16.msra.mxu0 %v2500
    %3008 = vmatmul.bf16.gmra.mxu0 %v2999
    %v3009 = vpop.f32.mrf.mxu0
    %v3010 = vadd.f32 0.0, %v3009
    %v3011 = vpop.f32.mrf.mxu0
    %v3012 = vadd.f32 0.0, %v3011
    %3013 = vdwg.mxu0
    %3014 = vmatpush.bf16.msra.mxu0 %v2529
    %3015 = vmatpush.bf16.msra.mxu0 %v2525
    %3016 = vmatpush.bf16.msra.mxu0 %v2521
    %3017 = vmatpush.bf16.msra.mxu0 %v2517
    %3018 = vmatpush.bf16.msra.mxu0 %v2513
    %3019 = vmatpush.bf16.msra.mxu0 %v2509
    %3020 = vmatpush.bf16.msra.mxu0 %v2505
    %3021 = vmatpush.bf16.msra.mxu0 %v2501
    %3022 = vmatmul.bf16.gmra.mxu0 %v2999
    %v3023 = vpop.f32.mrf.mxu0
    %v3024 = vadd.f32 0.0, %v3023
    %v3025 = vpop.f32.mrf.mxu0
    %v3026 = vadd.f32 0.0, %v3025
    %3027 = vdwg.mxu0
    %3028 = vmatpush.bf16.msra.mxu0 %v2530
    %3029 = vmatpush.bf16.msra.mxu0 %v2526
    %3030 = vmatpush.bf16.msra.mxu0 %v2522
    %3031 = vmatpush.bf16.msra.mxu0 %v2518
    %3032 = vmatpush.bf16.msra.mxu0 %v2514
    %3033 = vmatpush.bf16.msra.mxu0 %v2510
    %3034 = vmatpush.bf16.msra.mxu0 %v2506
    %3035 = vmatpush.bf16.msra.mxu0 %v2502
    %3036 = vmatmul.bf16.gmra.mxu0 %v2999
    %v3037 = vpop.f32.mrf.mxu0
    %v3038 = vadd.f32 0.0, %v3037
    %v3039 = vpop.f32.mrf.mxu0
    %v3040 = vadd.f32 0.0, %v3039
    %3041 = vdwg.mxu0
    %3042 = vmatpush.bf16.msra.mxu0 %v2531
    %3043 = vmatpush.bf16.msra.mxu0 %v2527
    %3044 = vmatpush.bf16.msra.mxu0 %v2523
    %3045 = vmatpush.bf16.msra.mxu0 %v2519
    %3046 = vmatpush.bf16.msra.mxu0 %v2515
    %3047 = vmatpush.bf16.msra.mxu0 %v2511
    %3048 = vmatpush.bf16.msra.mxu0 %v2507
    %3049 = vmatpush.bf16.msra.mxu0 %v2503
    %3050 = vmatmul.bf16.gmra.mxu0 %v2999
    %v3051 = vpop.f32.mrf.mxu0
    %v3052 = vadd.f32 0.0, %v3051
    %v3053 = vpop.f32.mrf.mxu0
    %v3054 = vadd.f32 0.0, %v3053
    %3055 = vdwg.mxu0
    %v3056 = vadd.f32 %v2991, %v3010
    %v3057 = vadd.f32 %v2992, %v3024
    %v3058 = vadd.f32 %v2993, %v3038
    %v3059 = vadd.f32 %v2994, %v3052
    %v3060 = vadd.f32 %v2995, %v3012
    %v3061 = vadd.f32 %v2996, %v3026
    %v3062 = vadd.f32 %v2997, %v3040
    %v3063 = vadd.f32 %v2998, %v3054
    %v3064 = vmul.f32 %v3056, 0.5
    %v3065 = vmul.f32 %v3060, 0.5
    %v3066 = vtanh.pop %v3064
    %v3067 = vtanh.pop %v3065
    %v3068 = vmul.f32 %v3066, 0.5
    %v3069 = vmul.f32 %v3067, 0.5
    %v3070 = vadd.f32 %v3068, 0.5
    %v3071 = vadd.f32 %v3069, 0.5
    %v3072 = vmul.f32 %v3057, 0.5
    %v3073 = vmul.f32 %v3061, 0.5
    %v3074 = vtanh.pop %v3072
    %v3075 = vtanh.pop %v3073
    %v3076 = vmul.f32 %v3074, 0.5
    %v3077 = vmul.f32 %v3075, 0.5
    %v3078 = vadd.f32 %v3076, 0.5
    %v3079 = vadd.f32 %v3077, 0.5
    %v3080 = vtanh.pop %v3058
    %v3081 = vtanh.pop %v3062
    %v3082 = vmul.f32 %v3059, 0.5
    %v3083 = vmul.f32 %v3063, 0.5
    %v3084 = vtanh.pop %v3082
    %v3085 = vtanh.pop %v3083
    %v3086 = vmul.f32 %v3084, 0.5
    %v3087 = vmul.f32 %v3085, 0.5
    %v3088 = vadd.f32 %v3086, 0.5
    %v3089 = vadd.f32 %v3087, 0.5
    %v3090 = vmul.f32 %v3078, %v2985
    %v3091 = vmul.f32 %v3079, %v2986
    %v3092 = vmul.f32 %v3070, %v3080
    %v3093 = vmul.f32 %v3071, %v3081
    %v3094 = vadd.f32 %v3090, %v3092
    %v3095 = vadd.f32 %v3091, %v3093
    %v3096 = vtanh.pop %v3094
    %v3097 = vtanh.pop %v3095
    %v3098 = vmul.f32 %v3088, %v3096
    %v3099 = vmul.f32 %v3089, %v3097
    %v3100 = vld [vmem:[%s1466] sm:$0xff]
    %v3101 = vld [vmem:[%s1466 + $0x8] sm:$0xff]
    %v3102 = vld [vmem:[%s1466 + $0x10] sm:$0xff]
    %v3103 = vld [vmem:[%s1466 + $0x18] sm:$0xff]
    %v3104 = vld [vmem:[%s1466 + $0x20] sm:$0xff]
    %v3105 = vld [vmem:[%s1466 + $0x28] sm:$0xff]
    %v3106 = vld [vmem:[%s1466 + $0x30] sm:$0xff]
    %v3107 = vld [vmem:[%s1466 + $0x38] sm:$0xff]
    %v3108 = vpack.c.bf16 %v3099, %v3098
    %3109 = vmatpush.bf16.msra.mxu0 %v2528
    %3110 = vmatpush.bf16.msra.mxu0 %v2524
    %3111 = vmatpush.bf16.msra.mxu0 %v2520
    %3112 = vmatpush.bf16.msra.mxu0 %v2516
    %3113 = vmatpush.bf16.msra.mxu0 %v2512
    %3114 = vmatpush.bf16.msra.mxu0 %v2508
    %3115 = vmatpush.bf16.msra.mxu0 %v2504
    %3116 = vmatpush.bf16.msra.mxu0 %v2500
    %3117 = vmatmul.bf16.gmra.mxu0 %v3108
    %v3118 = vpop.f32.mrf.mxu0
    %v3119 = vadd.f32 0.0, %v3118
    %v3120 = vpop.f32.mrf.mxu0
    %v3121 = vadd.f32 0.0, %v3120
    %3122 = vdwg.mxu0
    %3123 = vmatpush.bf16.msra.mxu0 %v2529
    %3124 = vmatpush.bf16.msra.mxu0 %v2525
    %3125 = vmatpush.bf16.msra.mxu0 %v2521
    %3126 = vmatpush.bf16.msra.mxu0 %v2517
    %3127 = vmatpush.bf16.msra.mxu0 %v2513
    %3128 = vmatpush.bf16.msra.mxu0 %v2509
    %3129 = vmatpush.bf16.msra.mxu0 %v2505
    %3130 = vmatpush.bf16.msra.mxu0 %v2501
    %3131 = vmatmul.bf16.gmra.mxu0 %v3108
    %v3132 = vpop.f32.mrf.mxu0
    %v3133 = vadd.f32 0.0, %v3132
    %v3134 = vpop.f32.mrf.mxu0
    %v3135 = vadd.f32 0.0, %v3134
    %3136 = vdwg.mxu0
    %3137 = vmatpush.bf16.msra.mxu0 %v2530
    %3138 = vmatpush.bf16.msra.mxu0 %v2526
    %3139 = vmatpush.bf16.msra.mxu0 %v2522
    %3140 = vmatpush.bf16.msra.mxu0 %v2518
    %3141 = vmatpush.bf16.msra.mxu0 %v2514
    %3142 = vmatpush.bf16.msra.mxu0 %v2510
    %3143 = vmatpush.bf16.msra.mxu0 %v2506
    %3144 = vmatpush.bf16.msra.mxu0 %v2502
    %3145 = vmatmul.bf16.gmra.mxu0 %v3108
    %v3146 = vpop.f32.mrf.mxu0
    %v3147 = vadd.f32 0.0, %v3146
    %v3148 = vpop.f32.mrf.mxu0
    %v3149 = vadd.f32 0.0, %v3148
    %3150 = vdwg.mxu0
    %3151 = vmatpush.bf16.msra.mxu0 %v2531
    %3152 = vmatpush.bf16.msra.mxu0 %v2527
    %3153 = vmatpush.bf16.msra.mxu0 %v2523
    %3154 = vmatpush.bf16.msra.mxu0 %v2519
    %3155 = vmatpush.bf16.msra.mxu0 %v2515
    %3156 = vmatpush.bf16.msra.mxu0 %v2511
    %3157 = vmatpush.bf16.msra.mxu0 %v2507
    %3158 = vmatpush.bf16.msra.mxu0 %v2503
    %3159 = vmatmul.bf16.gmra.mxu0 %v3108
    %v3160 = vpop.f32.mrf.mxu0
    %v3161 = vadd.f32 0.0, %v3160
    %v3162 = vpop.f32.mrf.mxu0
    %v3163 = vadd.f32 0.0, %v3162
    %3164 = vdwg.mxu0
    %v3165 = vadd.f32 %v3100, %v3119
    %v3166 = vadd.f32 %v3101, %v3133
    %v3167 = vadd.f32 %v3102, %v3147
    %v3168 = vadd.f32 %v3103, %v3161
    %v3169 = vadd.f32 %v3104, %v3121
    %v3170 = vadd.f32 %v3105, %v3135
    %v3171 = vadd.f32 %v3106, %v3149
    %v3172 = vadd.f32 %v3107, %v3163
    %v3173 = vmul.f32 %v3165, 0.5
    %v3174 = vmul.f32 %v3169, 0.5
    %v3175 = vtanh.pop %v3173
    %v3176 = vtanh.pop %v3174
    %v3177 = vmul.f32 %v3175, 0.5
    %v3178 = vmul.f32 %v3176, 0.5
    %v3179 = vadd.f32 %v3177, 0.5
    %v3180 = vadd.f32 %v3178, 0.5
    %v3181 = vmul.f32 %v3166, 0.5
    %v3182 = vmul.f32 %v3170, 0.5
    %v3183 = vtanh.pop %v3181
    %v3184 = vtanh.pop %v3182
    %v3185 = vmul.f32 %v3183, 0.5
    %v3186 = vmul.f32 %v3184, 0.5
    %v3187 = vadd.f32 %v3185, 0.5
    %v3188 = vadd.f32 %v3186, 0.5
    %v3189 = vtanh.pop %v3167
    %v3190 = vtanh.pop %v3171
    %v3191 = vmul.f32 %v3168, 0.5
    %v3192 = vmul.f32 %v3172, 0.5
    %v3193 = vtanh.pop %v3191
    %v3194 = vtanh.pop %v3192
    %v3195 = vmul.f32 %v3193, 0.5
    %v3196 = vmul.f32 %v3194, 0.5
    %v3197 = vadd.f32 %v3195, 0.5
    %v3198 = vadd.f32 %v3196, 0.5
    %v3199 = vmul.f32 %v3187, %v3094
    %v3200 = vmul.f32 %v3188, %v3095
    %v3201 = vmul.f32 %v3179, %v3189
    %v3202 = vmul.f32 %v3180, %v3190
    %v3203 = vadd.f32 %v3199, %v3201
    %v3204 = vadd.f32 %v3200, %v3202
    %v3205 = vtanh.pop %v3203
    %v3206 = vtanh.pop %v3204
    %v3207 = vmul.f32 %v3197, %v3205
    %v3208 = vmul.f32 %v3198, %v3206
    %v3209 = vld [vmem:[%s1586] sm:$0xff]
    %v3210 = vld [vmem:[%s1586 + $0x8] sm:$0xff]
    %v3211 = vld [vmem:[%s1586 + $0x10] sm:$0xff]
    %v3212 = vld [vmem:[%s1586 + $0x18] sm:$0xff]
    %v3213 = vld [vmem:[%s1586 + $0x20] sm:$0xff]
    %v3214 = vld [vmem:[%s1586 + $0x28] sm:$0xff]
    %v3215 = vld [vmem:[%s1586 + $0x30] sm:$0xff]
    %v3216 = vld [vmem:[%s1586 + $0x38] sm:$0xff]
    %v3217 = vpack.c.bf16 %v3208, %v3207
    %3218 = vmatpush.bf16.msra.mxu0 %v2528
    %3219 = vmatpush.bf16.msra.mxu0 %v2524
    %3220 = vmatpush.bf16.msra.mxu0 %v2520
    %3221 = vmatpush.bf16.msra.mxu0 %v2516
    %3222 = vmatpush.bf16.msra.mxu0 %v2512
    %3223 = vmatpush.bf16.msra.mxu0 %v2508
    %3224 = vmatpush.bf16.msra.mxu0 %v2504
    %3225 = vmatpush.bf16.msra.mxu0 %v2500
    %3226 = vmatmul.bf16.gmra.mxu0 %v3217
    %v3227 = vpop.f32.mrf.mxu0
    %v3228 = vadd.f32 0.0, %v3227
    %v3229 = vpop.f32.mrf.mxu0
    %v3230 = vadd.f32 0.0, %v3229
    %3231 = vdwg.mxu0
    %3232 = vmatpush.bf16.msra.mxu0 %v2529
    %3233 = vmatpush.bf16.msra.mxu0 %v2525
    %3234 = vmatpush.bf16.msra.mxu0 %v2521
    %3235 = vmatpush.bf16.msra.mxu0 %v2517
    %3236 = vmatpush.bf16.msra.mxu0 %v2513
    %3237 = vmatpush.bf16.msra.mxu0 %v2509
    %3238 = vmatpush.bf16.msra.mxu0 %v2505
    %3239 = vmatpush.bf16.msra.mxu0 %v2501
    %3240 = vmatmul.bf16.gmra.mxu0 %v3217
    %v3241 = vpop.f32.mrf.mxu0
    %v3242 = vadd.f32 0.0, %v3241
    %v3243 = vpop.f32.mrf.mxu0
    %v3244 = vadd.f32 0.0, %v3243
    %3245 = vdwg.mxu0
    %3246 = vmatpush.bf16.msra.mxu0 %v2530
    %3247 = vmatpush.bf16.msra.mxu0 %v2526
    %3248 = vmatpush.bf16.msra.mxu0 %v2522
    %3249 = vmatpush.bf16.msra.mxu0 %v2518
    %3250 = vmatpush.bf16.msra.mxu0 %v2514
    %3251 = vmatpush.bf16.msra.mxu0 %v2510
    %3252 = vmatpush.bf16.msra.mxu0 %v2506
    %3253 = vmatpush.bf16.msra.mxu0 %v2502
    %3254 = vmatmul.bf16.gmra.mxu0 %v3217
    %v3255 = vpop.f32.mrf.mxu0
    %v3256 = vadd.f32 0.0, %v3255
    %v3257 = vpop.f32.mrf.mxu0
    %v3258 = vadd.f32 0.0, %v3257
    %3259 = vdwg.mxu0
    %3260 = vmatpush.bf16.msra.mxu0 %v2531
    %3261 = vmatpush.bf16.msra.mxu0 %v2527
    %3262 = vmatpush.bf16.msra.mxu0 %v2523
    %3263 = vmatpush.bf16.msra.mxu0 %v2519
    %3264 = vmatpush.bf16.msra.mxu0 %v2515
    %3265 = vmatpush.bf16.msra.mxu0 %v2511
    %3266 = vmatpush.bf16.msra.mxu0 %v2507
    %3267 = vmatpush.bf16.msra.mxu0 %v2503
    %3268 = vmatmul.bf16.gmra.mxu0 %v3217
    %v3269 = vpop.f32.mrf.mxu0
    %v3270 = vadd.f32 0.0, %v3269
    %v3271 = vpop.f32.mrf.mxu0
    %v3272 = vadd.f32 0.0, %v3271
    %3273 = vdwg.mxu0
    %v3274 = vadd.f32 %v3209, %v3228
    %v3275 = vadd.f32 %v3210, %v3242
    %v3276 = vadd.f32 %v3211, %v3256
    %v3277 = vadd.f32 %v3212, %v3270
    %v3278 = vadd.f32 %v3213, %v3230
    %v3279 = vadd.f32 %v3214, %v3244
    %v3280 = vadd.f32 %v3215, %v3258
    %v3281 = vadd.f32 %v3216, %v3272
    %v3282 = vmul.f32 %v3274, 0.5
    %v3283 = vmul.f32 %v3278, 0.5
    %v3284 = vtanh.pop %v3282
    %v3285 = vtanh.pop %v3283
    %v3286 = vmul.f32 %v3284, 0.5
    %v3287 = vmul.f32 %v3285, 0.5
    %v3288 = vadd.f32 %v3286, 0.5
    %v3289 = vadd.f32 %v3287, 0.5
    %v3290 = vmul.f32 %v3275, 0.5
    %v3291 = vmul.f32 %v3279, 0.5
    %v3292 = vtanh.pop %v3290
    %v3293 = vtanh.pop %v3291
    %v3294 = vmul.f32 %v3292, 0.5
    %v3295 = vmul.f32 %v3293, 0.5
    %v3296 = vadd.f32 %v3294, 0.5
    %v3297 = vadd.f32 %v3295, 0.5
    %v3298 = vtanh.pop %v3276
    %v3299 = vtanh.pop %v3280
    %v3300 = vmul.f32 %v3277, 0.5
    %v3301 = vmul.f32 %v3281, 0.5
    %v3302 = vtanh.pop %v3300
    %v3303 = vtanh.pop %v3301
    %v3304 = vmul.f32 %v3302, 0.5
    %v3305 = vmul.f32 %v3303, 0.5
    %v3306 = vadd.f32 %v3304, 0.5
    %v3307 = vadd.f32 %v3305, 0.5
    %v3308 = vmul.f32 %v3296, %v3203
    %v3309 = vmul.f32 %v3297, %v3204
    %v3310 = vmul.f32 %v3288, %v3298
    %v3311 = vmul.f32 %v3289, %v3299
    %v3312 = vadd.f32 %v3308, %v3310
    %v3313 = vadd.f32 %v3309, %v3311
    %v3314 = vtanh.pop %v3312
    %v3315 = vtanh.pop %v3313
    %v3316 = vmul.f32 %v3306, %v3314
    %v3317 = vmul.f32 %v3307, %v3315
    %v3318 = vld [vmem:[%s1706] sm:$0xff]
    %v3319 = vld [vmem:[%s1706 + $0x8] sm:$0xff]
    %v3320 = vld [vmem:[%s1706 + $0x10] sm:$0xff]
    %v3321 = vld [vmem:[%s1706 + $0x18] sm:$0xff]
    %v3322 = vld [vmem:[%s1706 + $0x20] sm:$0xff]
    %v3323 = vld [vmem:[%s1706 + $0x28] sm:$0xff]
    %v3324 = vld [vmem:[%s1706 + $0x30] sm:$0xff]
    %v3325 = vld [vmem:[%s1706 + $0x38] sm:$0xff]
    %v3326 = vpack.c.bf16 %v3317, %v3316
    %3327 = vmatpush.bf16.msra.mxu0 %v2528
    %3328 = vmatpush.bf16.msra.mxu0 %v2524
    %3329 = vmatpush.bf16.msra.mxu0 %v2520
    %3330 = vmatpush.bf16.msra.mxu0 %v2516
    %3331 = vmatpush.bf16.msra.mxu0 %v2512
    %3332 = vmatpush.bf16.msra.mxu0 %v2508
    %3333 = vmatpush.bf16.msra.mxu0 %v2504
    %3334 = vmatpush.bf16.msra.mxu0 %v2500
    %3335 = vmatmul.bf16.gmra.mxu0 %v3326
    %v3336 = vpop.f32.mrf.mxu0
    %v3337 = vadd.f32 0.0, %v3336
    %v3338 = vpop.f32.mrf.mxu0
    %v3339 = vadd.f32 0.0, %v3338
    %3340 = vdwg.mxu0
    %3341 = vmatpush.bf16.msra.mxu0 %v2529
    %3342 = vmatpush.bf16.msra.mxu0 %v2525
    %3343 = vmatpush.bf16.msra.mxu0 %v2521
    %3344 = vmatpush.bf16.msra.mxu0 %v2517
    %3345 = vmatpush.bf16.msra.mxu0 %v2513
    %3346 = vmatpush.bf16.msra.mxu0 %v2509
    %3347 = vmatpush.bf16.msra.mxu0 %v2505
    %3348 = vmatpush.bf16.msra.mxu0 %v2501
    %3349 = vmatmul.bf16.gmra.mxu0 %v3326
    %v3350 = vpop.f32.mrf.mxu0
    %v3351 = vadd.f32 0.0, %v3350
    %v3352 = vpop.f32.mrf.mxu0
    %v3353 = vadd.f32 0.0, %v3352
    %3354 = vdwg.mxu0
    %3355 = vmatpush.bf16.msra.mxu0 %v2530
    %3356 = vmatpush.bf16.msra.mxu0 %v2526
    %3357 = vmatpush.bf16.msra.mxu0 %v2522
    %3358 = vmatpush.bf16.msra.mxu0 %v2518
    %3359 = vmatpush.bf16.msra.mxu0 %v2514
    %3360 = vmatpush.bf16.msra.mxu0 %v2510
    %3361 = vmatpush.bf16.msra.mxu0 %v2506
    %3362 = vmatpush.bf16.msra.mxu0 %v2502
    %3363 = vmatmul.bf16.gmra.mxu0 %v3326
    %v3364 = vpop.f32.mrf.mxu0
    %v3365 = vadd.f32 0.0, %v3364
    %v3366 = vpop.f32.mrf.mxu0
    %v3367 = vadd.f32 0.0, %v3366
    %3368 = vdwg.mxu0
    %3369 = vmatpush.bf16.msra.mxu0 %v2531
    %3370 = vmatpush.bf16.msra.mxu0 %v2527
    %3371 = vmatpush.bf16.msra.mxu0 %v2523
    %3372 = vmatpush.bf16.msra.mxu0 %v2519
    %3373 = vmatpush.bf16.msra.mxu0 %v2515
    %3374 = vmatpush.bf16.msra.mxu0 %v2511
    %3375 = vmatpush.bf16.msra.mxu0 %v2507
    %3376 = vmatpush.bf16.msra.mxu0 %v2503
    %3377 = vmatmul.bf16.gmra.mxu0 %v3326
    %v3378 = vpop.f32.mrf.mxu0
    %v3379 = vadd.f32 0.0, %v3378
    %v3380 = vpop.f32.mrf.mxu0
    %v3381 = vadd.f32 0.0, %v3380
    %3382 = vdwg.mxu0
    %v3383 = vadd.f32 %v3318, %v3337
    %v3384 = vadd.f32 %v3319, %v3351
    %v3385 = vadd.f32 %v3320, %v3365
    %v3386 = vadd.f32 %v3321, %v3379
    %v3387 = vadd.f32 %v3322, %v3339
    %v3388 = vadd.f32 %v3323, %v3353
    %v3389 = vadd.f32 %v3324, %v3367
    %v3390 = vadd.f32 %v3325, %v3381
    %v3391 = vmul.f32 %v3383, 0.5
    %v3392 = vmul.f32 %v3387, 0.5
    %v3393 = vtanh.pop %v3391
    %v3394 = vtanh.pop %v3392
    %v3395 = vmul.f32 %v3393, 0.5
    %v3396 = vmul.f32 %v3394, 0.5
    %v3397 = vadd.f32 %v3395, 0.5
    %v3398 = vadd.f32 %v3396, 0.5
    %v3399 = vmul.f32 %v3384, 0.5
    %v3400 = vmul.f32 %v3388, 0.5
    %v3401 = vtanh.pop %v3399
    %v3402 = vtanh.pop %v3400
    %v3403 = vmul.f32 %v3401, 0.5
    %v3404 = vmul.f32 %v3402, 0.5
    %v3405 = vadd.f32 %v3403, 0.5
    %v3406 = vadd.f32 %v3404, 0.5
    %v3407 = vtanh.pop %v3385
    %v3408 = vtanh.pop %v3389
    %v3409 = vmul.f32 %v3386, 0.5
    %v3410 = vmul.f32 %v3390, 0.5
    %v3411 = vtanh.pop %v3409
    %v3412 = vtanh.pop %v3410
    %v3413 = vmul.f32 %v3411, 0.5
    %v3414 = vmul.f32 %v3412, 0.5
    %v3415 = vadd.f32 %v3413, 0.5
    %v3416 = vadd.f32 %v3414, 0.5
    %v3417 = vmul.f32 %v3405, %v3312
    %v3418 = vmul.f32 %v3406, %v3313
    %v3419 = vmul.f32 %v3397, %v3407
    %v3420 = vmul.f32 %v3398, %v3408
    %v3421 = vadd.f32 %v3417, %v3419
    %v3422 = vadd.f32 %v3418, %v3420
    %v3423 = vtanh.pop %v3421
    %v3424 = vtanh.pop %v3422
    %v3425 = vmul.f32 %v3415, %v3423
    %v3426 = vmul.f32 %v3416, %v3424
    %3427 = vst [vmem:[%s2389] sm:$0xff] %v3425
    %3428 = vst [vmem:[%s2389 + $0x8] sm:$0xff] %v3426
    %3429 = vst [vmem:[%s2392] sm:$0xff] %v3421
    %3430 = vst [vmem:[%s2392 + $0x8] sm:$0xff] %v3422
    // Predicated region
    $region66: #{tpu_custom_call.1} parent=1 // pred_check
      %p3431 = pneg %p139
    $region67: #{tpu_custom_call.1} parent=1 // pred_check_branch
      %3433 = sbr.rel (%p3431) target = $region69
    $region68: #{tpu_custom_call.1} parent=1 // pred_region
      %v3434 = vld [vmem:[%s2389] sm:$0xff]
      %v3435 = vld [vmem:[%s2389 + $0x8] sm:$0xff]
      %v3436 = vld [vmem:[#allocation17] sm:$0xff]
      %v3437 = vld [vmem:[#allocation17 + $0x8] sm:$0xff]
      %v3438 = vld [vmem:[#allocation17 + $0x10] sm:$0xff]
      %v3439 = vld [vmem:[#allocation17 + $0x18] sm:$0xff]
      %v3440 = vld [vmem:[#allocation17 + $0x20] sm:$0xff]
      %v3441 = vld [vmem:[#allocation17 + $0x28] sm:$0xff]
      %v3442 = vld [vmem:[#allocation17 + $0x30] sm:$0xff]
      %v3443 = vld [vmem:[#allocation17 + $0x38] sm:$0xff]
      %v3444 = vld [vmem:[#allocation17 + $0x40] sm:$0xff]
      %v3445 = vld [vmem:[#allocation17 + $0x48] sm:$0xff]
      %v3446 = vld [vmem:[#allocation17 + $0x50] sm:$0xff]
      %v3447 = vld [vmem:[#allocation17 + $0x58] sm:$0xff]
      %v3448 = vld [vmem:[#allocation17 + $0x60] sm:$0xff]
      %v3449 = vld [vmem:[#allocation17 + $0x68] sm:$0xff]
      %v3450 = vld [vmem:[#allocation17 + $0x70] sm:$0xff]
      %v3451 = vld [vmem:[#allocation17 + $0x78] sm:$0xff]
      %v3452 = vld [vmem:[%s7] sm:$0x1]
      %v3454 = vperm.slane %v3452, 0
      %3456 = vmatpush.msra.mxu0 %v3451
      %3457 = vmatpush.msra.mxu0 %v3450
      %3458 = vmatpush.msra.mxu0 %v3449
      %3459 = vmatpush.msra.mxu0 %v3448
      %3460 = vmatpush.msra.mxu0 %v3447
      %3461 = vmatpush.msra.mxu0 %v3446
      %3462 = vmatpush.msra.mxu0 %v3445
      %3463 = vmatpush.msra.mxu0 %v3444
      %3464 = vmatpush.msra.mxu0 %v3443
      %3465 = vmatpush.msra.mxu0 %v3442
      %3466 = vmatpush.msra.mxu0 %v3441
      %3467 = vmatpush.msra.mxu0 %v3440
      %3468 = vmatpush.msra.mxu0 %v3439
      %3469 = vmatpush.msra.mxu0 %v3438
      %3470 = vmatpush.msra.mxu0 %v3437
      %3471 = vmatpush.msra.mxu0 %v3436
      %3472 = vmatmul.f32.gmra.mxu0 %v3434
      %v3473 = vpop.f32.mrf.mxu0
      %v3474 = vadd.f32 %v3454, %v3473
      %3475 = vmatmul.f32.gmra.mxu0 %v3435
      %v3476 = vpop.f32.mrf.mxu0
      %v3477 = vadd.f32 %v3454, %v3476
      %3478 = vdwg.mxu0
      %3479 = vst [vmem:[#allocation18] sm:$0xff] %v3474
      %3480 = vst [vmem:[#allocation18 + $0x8] sm:$0xff] %v3477
    $region69: #{tpu_custom_call.1} parent=1 // pred_fallthru
      _
    // Predicated region
    $region70: #{tpu_custom_call.1} parent=1 // pred_check
      _
    $region71: #{tpu_custom_call.1} parent=1 // pred_check_branch
      %3482 = sbr.rel (0) target = $region73
    $region72: #{tpu_custom_call.1} parent=1 // pred_region
      %3484 = vsyncadd [#allocation8], 0
      %s3485 = sshll.u32 [#allocation18], 4
      %s3486 = int_to_ptr.vmem [resolvable:$true] %s3485
      %s3487 = sshll.u32 %s8, 4
      %s3488 = int_to_ptr.hbm [resolvable:$true] %s3487
      %3493 = dma.vmem_to_hbm [thread:$0]  %s3486, 256, %s3488, [#allocation8], 128, 128, 8
    $region73: #{tpu_custom_call.1} parent=1 // pred_fallthru
      _
    // Predicated region
    $region74: #{tpu_custom_call.1} parent=1 // pred_check
      _
    $region75: #{tpu_custom_call.1} parent=1 // pred_check_branch
      %3495 = sbr.rel (0) target = $region77
    $region76: #{tpu_custom_call.1} parent=1 // pred_region
      %3497 = dma.done [#allocation8], 256
    $region77: #{tpu_custom_call.1} parent=1 // pred_fallthru
      _
    %3498 = vsyncpa [#allocation7], 1
    %3499 = vsyncpa [#allocation10], 1
    %3500 = vsyncpa [#allocation13], 1
    %3501 = vsyncpa [#allocation16], 1
    %3502 = vsyncpa [#allocation8], 1

</llo_original>
